<compile_context>
chip_gen: v7x
topology: tpu7x:2x2x1
jax: 0.10.0
libtpu: 0.0.40
codegen_flags: <defaults>
</compile_context>

<pallas_src>
import math
import numpy as np
import jax
import jax.numpy as jnp
from jax import lax
from jax.experimental import pallas as pl
from jax.experimental.pallas import tpu as pltpu

# ----------------------------- configuration ---------------------------------
B = 2                      # batch
C = 32                     # channels (divisible by 4; GroupNorm(4, C), groups=C//4)
T = 64                     # sequence length
DEPTH = 4                  # conv stack depth
K = 3                      # conv kernel size (padding = 1)
STYLE_DIM = 48             # style is an argument of forward() but is never used

# Mamba(d_model=C) defaults: expand=2, d_state=16, d_conv=4
D_INNER = 2 * C            # 64 per direction
DI2 = 2 * D_INNER          # 128: forward + backward stacked on the lane axis
D_STATE = 16
D_CONV = 4
DT_RANK = math.ceil(C / 16)
EPS = 1e-5

NC = 8                     # parallel scan chunks
LC = T // NC               # within-chunk (sequential) length
assert NC == LC            # makes the chunk-interleave permutation symmetric
SFLAT = D_STATE * DI2      # 2048: (state, channel) flattened onto the lane axis


# ------------------------------ small helpers ---------------------------------
def _silu(v):
    return v * pl.reciprocal(1.0 + jnp.exp(-v), approx=True)


def _softplus(v):
    return jnp.maximum(v, 0.0) + jnp.log1p(jnp.exp(-jnp.abs(v)))


def _shift_down(v, sh):
    """result[t] = v[t - sh] (zeros for t < sh); time on axis 0."""
    rolled = pltpu.roll(v, sh, 0)
    tidx = lax.broadcasted_iota(jnp.int32, v.shape, 0)
    return jnp.where(tidx >= sh, rolled, 0.0)


def _shift_up(v, sh):
    """result[t] = v[t + sh] (zeros for t >= T - sh); time on axis 0."""
    n = v.shape[0]
    rolled = pltpu.roll(v, (n - sh) % n, 0)
    tidx = lax.broadcasted_iota(jnp.int32, v.shape, 0)
    return jnp.where(tidx < n - sh, rolled, 0.0)


def _tile_lanes(v, reps):
    # [v | v | ... | v] along the lane axis (explicit concat keeps lowering trivial).
    return jnp.concatenate([v] * reps, axis=1)


# --------------------------------- kernel ------------------------------------
def encoder_kernel(x_ref, keep_ref,
                   w3_ref, cb_ref, gsel_ref, gnw_ref, gnb_ref,
                   rev_ref, perm_ref,
                   wxz_ref, mcw_ref, mcb_ref, wxp_ref, dtb_ref,
                   a2f_ref, emat_ref, d2_ref, wout_ref,
                   wg_ref, bg_ref, wca_ref, lnw_ref, lnb_ref, wfp_ref,
                   o_ref):
    f32 = jnp.float32
    xt = x_ref[0].astype(f32).T                # (T, C)  time-major
    keep = keep_ref[0].astype(f32)             # (T, 1)  1.0 = valid frame

    # ----- conv stack: weight_norm Conv1d(groups=C//4) + GroupNorm(4) + LeakyReLU(0.2)
    # Dropout is the identity in eval mode; x.masked_fill_(m, 0) after every block.
    gsel = gsel_ref[...]                       # (C, C) group-mean matrix (carries 1/(8*T))
    for d in range(DEPTH):
        x3 = jnp.concatenate([_shift_down(xt, 1), xt, _shift_up(xt, 1)], axis=1)  # (T, 3C)
        y = jnp.dot(x3, w3_ref[d], preferred_element_type=f32) + cb_ref[d]        # (T, C)
        gmean = jnp.sum(jnp.dot(y, gsel, preferred_element_type=f32),
                        axis=0, keepdims=True)                                    # (1, C)
        yc = y - gmean
        gvar = jnp.sum(jnp.dot(yc * yc, gsel, preferred_element_type=f32),
                       axis=0, keepdims=True)                                     # (1, C)
        y = yc * lax.rsqrt(gvar + EPS) * gnw_ref[d] + gnb_ref[d]
        y = jnp.maximum(y, 0.2 * y)            # LeakyReLU(0.2)
        xt = y * keep                          # masked_fill_

    # ----- bidirectional Mamba: forward + time-reversed backward, stacked on lanes ----
    rev = rev_ref[...]                         # (T, T) time reversal (permutation matrix)
    perm = perm_ref[...]                       # (T, T) chunk-interleave perm (symmetric)

    u2 = jnp.concatenate(
        [xt, jnp.dot(rev, xt, preferred_element_type=f32)], axis=1)               # (T, 2C)
    xz = jnp.dot(u2, wxz_ref[...], preferred_element_type=f32)                    # (T, 256)
    xm = xz[:, :DI2]                           # (T, 128)  [x_fwd | x_bwd]
    zg = xz[:, DI2:]                           # (T, 128)  [z_fwd | z_bwd]

    # causal depthwise conv (width 4) over time, both directions at once
    xc = xm * mcw_ref[D_CONV - 1]
    for k in range(D_CONV - 1):
        xc = xc + _shift_down(xm, D_CONV - 1 - k) * mcw_ref[k]
    xc = _silu(xc + mcb_ref[...])                                                 # (T, 128)

    # fused x_proj (dt precomposed with dt_proj): columns [dt(128) | B_f | B_b | C_f | C_b]
    xp = jnp.dot(xc, wxp_ref[...], preferred_element_type=f32)                    # (T, 192)
    delta = _softplus(xp[:, :DI2] + dtb_ref[...])                                 # (T, 128)
    bcat = xp[:, DI2:DI2 + 2 * D_STATE]        # (T, 32)  [B_f | B_b]
    ccat = xp[:, DI2 + 2 * D_STATE:]           # (T, 32)  [C_f | C_b]

    # --- chunk-parallel selective scan ------------------------------------------------
    # Time is permuted so rows [i*NC:(i+1)*NC] hold within-chunk step i of all NC chunks;
    # the (state, channel) pair is flattened onto the lane axis (width 2048).
    delta_p = jnp.dot(perm, delta, preferred_element_type=f32)                    # (T, 128)
    dx_p = jnp.dot(perm, delta * xc, preferred_element_type=f32)                  # (T, 128)
    bflat = jnp.dot(jnp.dot(perm, bcat, preferred_element_type=f32),
                    emat_ref[...], preferred_element_type=f32)                    # (T, 2048)
    cflat = jnp.dot(jnp.dot(perm, ccat, preferred_element_type=f32),
                    emat_ref[...], preferred_element_type=f32)                    # (T, 2048)
    dA = jnp.exp(_tile_lanes(delta_p, D_STATE) * a2f_ref[...])                    # (T, 2048)
    dBx = _tile_lanes(dx_p, D_STATE) * bflat                                      # (T, 2048)

    # pass 1: compose each chunk's transform (LC wide steps instead of T serial ones)
    ac = dA[0:NC, :]
    bc = dBx[0:NC, :]
    for i in range(1, LC):
        a_i = dA[i * NC:(i + 1) * NC, :]
        bc = bc * a_i + dBx[i * NC:(i + 1) * NC, :]
        ac = ac * a_i

    # pass 2: short serial scan over the NC chunk prefixes
    rows = [jnp.zeros((1, SFLAT), f32)]
    h = rows[0]
    for c_ in range(NC - 1):
        h = ac[c_:c_ + 1, :] * h + bc[c_:c_ + 1, :]
        rows.append(h)
    pref = jnp.concatenate(rows, axis=0)                                          # (NC, 2048)

    # pass 3: re-run every chunk in parallel and contract with C on the fly
    hcur = pref
    yslabs = []
    for i in range(LC):
        sl = slice(i * NC, (i + 1) * NC)
        hcur = dA[sl, :] * hcur + dBx[sl, :]
        p = hcur * cflat[sl, :]
        w = SFLAT
        while w > DI2:                          # sum over the 16 state blocks (log2 halving)
            w //= 2
            p = p[:, :w] + p[:, w:]
        yslabs.append(p)                                                          # (NC, 128)
    y = jnp.dot(perm, jnp.concatenate(yslabs, axis=0),
                preferred_element_type=f32)                                       # natural time
    y = (y + xc * d2_ref[...]) * _silu(zg)      # D skip + z gate

    yo = jnp.dot(y, wout_ref[...], preferred_element_type=f32)                    # (T, 2C)
    bidir = jnp.concatenate(
        [yo[:, :C], jnp.dot(rev, yo[:, C:], preferred_element_type=f32)], axis=1)  # (T, 2C)

    # ----- gate * features + cross_attention + LayerNorm + fusion_proj + final mask ----
    gpre = jnp.dot(bidir, wg_ref[...], preferred_element_type=f32) + bg_ref[...]
    gated = _silu(gpre) * bidir
    comb = jnp.dot(bidir, wca_ref[...], preferred_element_type=f32) + gated
    mu = jnp.mean(comb, axis=1, keepdims=True)
    var = jnp.mean((comb - mu) * (comb - mu), axis=1, keepdims=True)
    ln = (comb - mu) * lax.rsqrt(var + EPS) * lnw_ref[...] + lnb_ref[...]
    fused = jnp.dot(ln, wfp_ref[...], preferred_element_type=f32)                 # (T, C)
    o_ref[0] = (fused * keep).T                                                   # (C, T)


# ------------------------------ parameters -----------------------------------
def make_params(seed=0):
    rng = np.random.RandomState(seed)

    def rnd(shape, scale=0.1):
        return (scale * rng.standard_normal(shape)).astype(np.float32)

    DI, DS = D_INNER, D_STATE

    # conv stack (weight_norm(Conv1d) == plain conv weight at init); taps stacked on K dim
    w3 = np.zeros((DEPTH, 3 * C, C), np.float32)
    cb = np.zeros((DEPTH, 1, C), np.float32)
    for d in range(DEPTH):
        w = rnd((C, 4, K), 0.2)                   # (out, in/groups, k); groups = C // 4
        for oc in range(C):
            g = oc // 4
            for k in range(K):
                w3[d, k * C + 4 * g:k * C + 4 * g + 4, oc] = w[oc, :, k]
        cb[d, 0] = rnd((C,), 0.1)

    gsz = C // 4
    gsel = np.zeros((C, C), np.float32)           # GroupNorm(4, C) group-mean matrix
    for g in range(4):
        gsel[g * gsz:(g + 1) * gsz, g * gsz:(g + 1) * gsz] = 1.0 / (gsz * T)
    gnw = (1.0 + rnd((DEPTH, 1, C), 0.05)).astype(np.float32)
    gnb = rnd((DEPTH, 1, C), 0.05)

    # constant time permutations: reversal (backward SSM) and chunk interleave (scan)
    rev = np.zeros((T, T), np.float32)
    rev[np.arange(T), T - 1 - np.arange(T)] = 1.0
    perm = np.zeros((T, T), np.float32)
    r = np.arange(T)
    perm[r, (r % NC) * LC + r // NC] = 1.0        # symmetric (NC == LC)

    # two Mamba(d_model=C) blocks (forward / backward), fused along the feature axis
    def mamba():
        return dict(
            in_w=rnd((2 * DI, C), 0.15),
            conv_w=rnd((DI, D_CONV), 0.3),
            conv_b=rnd((DI,), 0.1),
            xproj=rnd((DT_RANK + 2 * DS, DI), 0.15),
            dt_w=rnd((DI, DT_RANK), 0.3),
            dt_b=rnd((DI,), 0.1),
            a_log=np.log(np.tile(np.arange(1, DS + 1, dtype=np.float32)[None, :], (DI, 1))),
            dpar=np.ones((DI,), np.float32),
            out_w=rnd((C, DI), 0.15),
        )
    mf, mb = mamba(), mamba()

    wxz = np.zeros((2 * C, 2 * DI2), np.float32)  # columns [x_f | x_b | z_f | z_b]
    wxz[:C, :DI] = mf['in_w'][:DI].T
    wxz[:C, DI2:DI2 + DI] = mf['in_w'][DI:].T
    wxz[C:, DI:DI2] = mb['in_w'][:DI].T
    wxz[C:, DI2 + DI:] = mb['in_w'][DI:].T

    mcw = np.zeros((D_CONV, 1, DI2), np.float32)
    mcw[:, 0, :DI] = mf['conv_w'].T
    mcw[:, 0, DI:] = mb['conv_w'].T
    mcb = np.concatenate([mf['conv_b'], mb['conv_b']])[None, :]

    # x_proj fused, dt low-rank precomposed: columns [dt(128) | B_f | B_b | C_f | C_b]
    wxp = np.zeros((DI2, DI2 + 4 * DS), np.float32)
    wxp[:DI, :DI] = mf['xproj'][:DT_RANK].T @ mf['dt_w'].T
    wxp[DI:, DI:DI2] = mb['xproj'][:DT_RANK].T @ mb['dt_w'].T
    wxp[:DI, DI2:DI2 + DS] = mf['xproj'][DT_RANK:DT_RANK + DS].T           # B_f
    wxp[DI:, DI2 + DS:DI2 + 2 * DS] = mb['xproj'][DT_RANK:DT_RANK + DS].T  # B_b
    wxp[:DI, DI2 + 2 * DS:DI2 + 3 * DS] = mf['xproj'][DT_RANK + DS:].T     # C_f
    wxp[DI:, DI2 + 3 * DS:] = mb['xproj'][DT_RANK + DS:].T                 # C_b
    dtb = np.concatenate([mf['dt_b'], mb['dt_b']])[None, :]

    # A = -exp(A_log), flattened so lane s*DI2 + j holds A_dir(j)[j, s]
    a_all = np.concatenate([-np.exp(mf['a_log']), -np.exp(mb['a_log'])], axis=0)  # (DI2, DS)
    a2f = np.ascontiguousarray(a_all.T).reshape(1, DS * DI2).astype(np.float32)

    # 0/1 expansion: [B_f | B_b] (or [C_f | C_b]) -> flattened (state, channel) lanes
    emat = np.zeros((2 * DS, DS * DI2), np.float32)
    for s in range(DS):
        emat[s, s * DI2:s * DI2 + DI] = 1.0
        emat[DS + s, s * DI2 + DI:(s + 1) * DI2] = 1.0

    d2 = np.concatenate([mf['dpar'], mb['dpar']])[None, :]
    wout = np.zeros((DI2, 2 * C), np.float32)
    wout[:DI, :C] = mf['out_w'].T
    wout[DI:, C:] = mb['out_w'].T

    # gate Conv1d(2C, 2C, 1, groups=2) + SiLU, cross_attention, LayerNorm, fusion_proj
    gw = rnd((2 * C, C), 0.15)
    wg = np.zeros((2 * C, 2 * C), np.float32)
    wg[:C, :C] = gw[:C].T
    wg[C:, C:] = gw[C:].T
    bg = rnd((2 * C,), 0.1)[None, :]
    wca = rnd((2 * C, 2 * C), 0.15)               # nn.Linear(2C, 2C, bias=False), (in, out)
    lnw = (1.0 + rnd((2 * C,), 0.05))[None, :].astype(np.float32)
    lnb = rnd((2 * C,), 0.05)[None, :]
    wfp = np.ascontiguousarray(rnd((C, 2 * C), 0.15).T)   # fusion_proj (in, out)

    params = [w3, cb, gsel, gnw, gnb, rev, perm, wxz, mcw, mcb, wxp, dtb,
              a2f, emat, d2, wout, wg, bg, wca, lnw, lnb, wfp]
    return [jnp.asarray(p, jnp.float32) for p in params]


# -------------------------------- wrapper -------------------------------------
def _const_map(nd):
    zeros = (0,) * nd
    return lambda b: zeros


def temporal_bi_mamba_encoder(x, style, m, params):
    # x: (B, C, T) f32; style: (B, STYLE_DIM) (unused by forward()); m: (B, T) bool, True = pad
    del style
    keep = (1.0 - m.astype(jnp.float32)).reshape(B, T, 1)

    in_specs = [
        pl.BlockSpec((1, C, T), lambda b: (b, 0, 0)),
        pl.BlockSpec((1, T, 1), lambda b: (b, 0, 0)),
    ] + [pl.BlockSpec(tuple(p.shape), _const_map(p.ndim)) for p in params]

    grid_spec = pltpu.PrefetchScalarGridSpec(
        num_scalar_prefetch=0,
        grid=(B,),
        in_specs=in_specs,
        out_specs=pl.BlockSpec((1, C, T), lambda b: (b, 0, 0)),
    )
    f = pl.pallas_call(
        encoder_kernel,
        out_shape=jax.ShapeDtypeStruct((B, C, T), jnp.float32),
        grid_spec=grid_spec,
        compiler_params=pltpu.CompilerParams(
            dimension_semantics=("parallel",),   # batch items are independent (v7x megacore)
            vmem_limit_bytes=16 << 20,           # actual footprint ~5 MiB
        ),
    )
    return f(x, keep, *params)


# ---------------------------------- main --------------------------------------
if __name__ == "__main__":
    key = jax.random.PRNGKey(0)
    kx, ks = jax.random.split(key)
    x = jax.random.normal(kx, (B, C, T), jnp.float32)
    style = jax.random.normal(ks, (B, STYLE_DIM), jnp.float32)   # never used by forward()

    # length_to_mask: True marks padded positions
    lengths = jnp.array([T, T - 16], dtype=jnp.int32)
    m = (jnp.arange(T)[None, :] + 1) > lengths[:, None]          # (B, T) bool

    params = make_params(seed=0)

    out = temporal_bi_mamba_encoder(x, style, m, params)
    out = jax.block_until_ready(out)

    assert out.shape == (B, C, T)
    assert bool(jnp.all(jnp.isfinite(out)))
    assert bool(jnp.all(out[1, :, T - 16:] == 0.0))   # padded positions are zeroed
    # TODO(synk): Dropout (train-time stochasticity) and gradient checkpointing are
    # training-only; this kernel implements the deterministic eval forward pass.
    # TODO(synk): nn.Linear / nn.LayerNorm in the reference are applied to (B, 2C, T);
    # the kernel uses the only shape-consistent reading (over the channel axis), with
    # Mamba applied time-major per batch element.
    print("KERNEL_OK")
</pallas_src>

<mosaic_0001>
module attributes {stable_mosaic.version = 11 : i64} {
  func.func @encoder_kernel(%arg0: i32, %arg1: memref<1x32x64xf32, #tpu.memory_space<vmem>>, %arg2: memref<1x64x1xf32, #tpu.memory_space<vmem>>, %arg3: memref<4x96x32xf32, #tpu.memory_space<vmem>>, %arg4: memref<4x1x32xf32, #tpu.memory_space<vmem>>, %arg5: memref<32x32xf32, #tpu.memory_space<vmem>>, %arg6: memref<4x1x32xf32, #tpu.memory_space<vmem>>, %arg7: memref<4x1x32xf32, #tpu.memory_space<vmem>>, %arg8: memref<64x64xf32, #tpu.memory_space<vmem>>, %arg9: memref<64x64xf32, #tpu.memory_space<vmem>>, %arg10: memref<64x256xf32, #tpu.memory_space<vmem>>, %arg11: memref<4x1x128xf32, #tpu.memory_space<vmem>>, %arg12: memref<1x128xf32, #tpu.memory_space<vmem>>, %arg13: memref<128x192xf32, #tpu.memory_space<vmem>>, %arg14: memref<1x128xf32, #tpu.memory_space<vmem>>, %arg15: memref<1x2048xf32, #tpu.memory_space<vmem>>, %arg16: memref<32x2048xf32, #tpu.memory_space<vmem>>, %arg17: memref<1x128xf32, #tpu.memory_space<vmem>>, %arg18: memref<128x64xf32, #tpu.memory_space<vmem>>, %arg19: memref<64x64xf32, #tpu.memory_space<vmem>>, %arg20: memref<1x64xf32, #tpu.memory_space<vmem>>, %arg21: memref<64x64xf32, #tpu.memory_space<vmem>>, %arg22: memref<1x64xf32, #tpu.memory_space<vmem>>, %arg23: memref<1x64xf32, #tpu.memory_space<vmem>>, %arg24: memref<64x32xf32, #tpu.memory_space<vmem>>, %arg25: memref<1x32x64xf32, #tpu.memory_space<vmem>>) attributes {dimension_semantics = [#tpu.dimension_semantics<parallel>], iteration_bounds = array<i64: 2>, scalar_prefetch = 0 : i64, scratch_operands = 0 : i64, tpu.core_type = #tpu.core_type<tc>, window_params = [{transform_indices = @transform_0, window_bounds = array<i64: 1, 32, 64>}, {transform_indices = @transform_1, window_bounds = array<i64: 1, 64, 1>}, {pipeline_mode = #tpu.pipeline_mode<synchronous>, transform_indices = @transform_2, window_bounds = array<i64: 4, 96, 32>}, {pipeline_mode = #tpu.pipeline_mode<synchronous>, transform_indices = @transform_3, window_bounds = array<i64: 4, 1, 32>}, {pipeline_mode = #tpu.pipeline_mode<synchronous>, transform_indices = @transform_4, window_bounds = array<i64: 32, 32>}, {pipeline_mode = #tpu.pipeline_mode<synchronous>, transform_indices = @transform_5, window_bounds = array<i64: 4, 1, 32>}, {pipeline_mode = #tpu.pipeline_mode<synchronous>, transform_indices = @transform_6, window_bounds = array<i64: 4, 1, 32>}, {pipeline_mode = #tpu.pipeline_mode<synchronous>, transform_indices = @transform_7, window_bounds = array<i64: 64, 64>}, {pipeline_mode = #tpu.pipeline_mode<synchronous>, transform_indices = @transform_8, window_bounds = array<i64: 64, 64>}, {pipeline_mode = #tpu.pipeline_mode<synchronous>, transform_indices = @transform_9, window_bounds = array<i64: 64, 256>}, {pipeline_mode = #tpu.pipeline_mode<synchronous>, transform_indices = @transform_10, window_bounds = array<i64: 4, 1, 128>}, {pipeline_mode = #tpu.pipeline_mode<synchronous>, transform_indices = @transform_11, window_bounds = array<i64: 1, 128>}, {pipeline_mode = #tpu.pipeline_mode<synchronous>, transform_indices = @transform_12, window_bounds = array<i64: 128, 192>}, {pipeline_mode = #tpu.pipeline_mode<synchronous>, transform_indices = @transform_13, window_bounds = array<i64: 1, 128>}, {pipeline_mode = #tpu.pipeline_mode<synchronous>, transform_indices = @transform_14, window_bounds = array<i64: 1, 2048>}, {pipeline_mode = #tpu.pipeline_mode<synchronous>, transform_indices = @transform_15, window_bounds = array<i64: 32, 2048>}, {pipeline_mode = #tpu.pipeline_mode<synchronous>, transform_indices = @transform_16, window_bounds = array<i64: 1, 128>}, {pipeline_mode = #tpu.pipeline_mode<synchronous>, transform_indices = @transform_17, window_bounds = array<i64: 128, 64>}, {pipeline_mode = #tpu.pipeline_mode<synchronous>, transform_indices = @transform_18, window_bounds = array<i64: 64, 64>}, {pipeline_mode = #tpu.pipeline_mode<synchronous>, transform_indices = @transform_19, window_bounds = array<i64: 1, 64>}, {pipeline_mode = #tpu.pipeline_mode<synchronous>, transform_indices = @transform_20, window_bounds = array<i64: 64, 64>}, {pipeline_mode = #tpu.pipeline_mode<synchronous>, transform_indices = @transform_21, window_bounds = array<i64: 1, 64>}, {pipeline_mode = #tpu.pipeline_mode<synchronous>, transform_indices = @transform_22, window_bounds = array<i64: 1, 64>}, {pipeline_mode = #tpu.pipeline_mode<synchronous>, transform_indices = @transform_23, window_bounds = array<i64: 64, 32>}, {transform_indices = @transform_24, window_bounds = array<i64: 1, 32, 64>}]} {
    %c0 = arith.constant 0 : index
    %c0_0 = arith.constant 0 : index
    %c0_1 = arith.constant 0 : index
    %0 = vector.load %arg1[%c0, %c0_0, %c0_1] : memref<1x32x64xf32, #tpu.memory_space<vmem>>, vector<1x32x64xf32>
    %1 = vector.shape_cast %0 : vector<1x32x64xf32> to vector<32x64xf32>
    %2 = tpu.transpose %1, [1, 0] : vector<32x64xf32> -> vector<64x32xf32>
    %c0_2 = arith.constant 0 : index
    %c0_3 = arith.constant 0 : index
    %c0_4 = arith.constant 0 : index
    %3 = vector.load %arg2[%c0_2, %c0_3, %c0_4] : memref<1x64x1xf32, #tpu.memory_space<vmem>>, vector<1x64x1xf32>
    %4 = vector.shape_cast %3 : vector<1x64x1xf32> to vector<64x1xf32>
    %c0_5 = arith.constant 0 : index
    %c0_6 = arith.constant 0 : index
    %5 = vector.load %arg5[%c0_5, %c0_6] : memref<32x32xf32, #tpu.memory_space<vmem>>, vector<32x32xf32>
    %c1_i32 = arith.constant 1 : i32
    %6 = tpu.dynamic_rotate %2 by %c1_i32 dim 0 : vector<64x32xf32>, i32 -> vector<64x32xf32>
    %7 = tpu.iota {dimensions = array<i32: 0>} : vector<64x32xi32>
    %c1_i32_7 = arith.constant 1 : i32
    %8 = vector.broadcast %c1_i32_7 : i32 to vector<64x32xi32>
    %9 = arith.cmpi sge, %7, %8 : vector<64x32xi32>
    %cst = arith.constant 0.000000e+00 : f32
    %10 = vector.broadcast %cst : f32 to vector<64x32xf32>
    %11 = arith.select %9, %6, %10 : vector<64x32xi1>, vector<64x32xf32>
    %c63_i32 = arith.constant 63 : i32
    %12 = tpu.dynamic_rotate %2 by %c63_i32 dim 0 : vector<64x32xf32>, i32 -> vector<64x32xf32>
    %13 = tpu.iota {dimensions = array<i32: 0>} : vector<64x32xi32>
    %c63_i32_8 = arith.constant 63 : i32
    %14 = vector.broadcast %c63_i32_8 : i32 to vector<64x32xi32>
    %15 = arith.cmpi slt, %13, %14 : vector<64x32xi32>
    %cst_9 = arith.constant 0.000000e+00 : f32
    %16 = vector.broadcast %cst_9 : f32 to vector<64x32xf32>
    %17 = arith.select %15, %12, %16 : vector<64x32xi1>, vector<64x32xf32>
    %18 = tpu.concatenate %11, %2, %17 in 1 : vector<64x32xf32>, vector<64x32xf32>, vector<64x32xf32> -> vector<64x96xf32>
    %c0_10 = arith.constant 0 : index
    %c0_11 = arith.constant 0 : index
    %c0_12 = arith.constant 0 : index
    %19 = vector.load %arg3[%c0_10, %c0_11, %c0_12] : memref<4x96x32xf32, #tpu.memory_space<vmem>>, vector<1x96x32xf32>
    %20 = vector.shape_cast %19 : vector<1x96x32xf32> to vector<96x32xf32>
    %cst_13 = arith.constant dense<0.000000e+00> : vector<64x32xf32>
    %21 = tpu.matmul %18, %20, %cst_13 {dimension_numbers = #tpu.dot_dimension_numbers<[1], [0], [0], [1], [0, 0, 1, 1], [], []>} : vector<64x96xf32>, vector<96x32xf32>, vector<64x32xf32> -> vector<64x32xf32>
    %c0_14 = arith.constant 0 : index
    %c0_15 = arith.constant 0 : index
    %c0_16 = arith.constant 0 : index
    %22 = vector.load %arg4[%c0_14, %c0_15, %c0_16] : memref<4x1x32xf32, #tpu.memory_space<vmem>>, vector<1x1x32xf32>
    %23 = vector.shape_cast %22 : vector<1x1x32xf32> to vector<1x32xf32>
    %24 = vector.broadcast %23 : vector<1x32xf32> to vector<64x32xf32>
    %25 = arith.addf %21, %24 : vector<64x32xf32>
    %cst_17 = arith.constant dense<0.000000e+00> : vector<64x32xf32>
    %26 = tpu.matmul %25, %5, %cst_17 {dimension_numbers = #tpu.dot_dimension_numbers<[1], [0], [0], [1], [0, 0, 1, 1], [], []>} : vector<64x32xf32>, vector<32x32xf32>, vector<64x32xf32> -> vector<64x32xf32>
    %cst_18 = arith.constant dense<0.000000e+00> : vector<32xf32>
    %27 = vector.multi_reduction <add>, %26, %cst_18 [0] : vector<64x32xf32> to vector<32xf32>
    %28 = vector.shape_cast %27 : vector<32xf32> to vector<1x32xf32>
    %29 = vector.broadcast %28 : vector<1x32xf32> to vector<64x32xf32>
    %30 = arith.subf %25, %29 : vector<64x32xf32>
    %31 = arith.mulf %30, %30 : vector<64x32xf32>
    %cst_19 = arith.constant dense<0.000000e+00> : vector<64x32xf32>
    %32 = tpu.matmul %31, %5, %cst_19 {dimension_numbers = #tpu.dot_dimension_numbers<[1], [0], [0], [1], [0, 0, 1, 1], [], []>} : vector<64x32xf32>, vector<32x32xf32>, vector<64x32xf32> -> vector<64x32xf32>
    %cst_20 = arith.constant dense<0.000000e+00> : vector<32xf32>
    %33 = vector.multi_reduction <add>, %32, %cst_20 [0] : vector<64x32xf32> to vector<32xf32>
    %34 = vector.shape_cast %33 : vector<32xf32> to vector<1x32xf32>
    %cst_21 = arith.constant 9.99999974E-6 : f32
    %35 = vector.broadcast %cst_21 : f32 to vector<1x32xf32>
    %36 = arith.addf %34, %35 : vector<1x32xf32>
    %37 = math.rsqrt %36 : vector<1x32xf32>
    %38 = vector.broadcast %37 : vector<1x32xf32> to vector<64x32xf32>
    %39 = arith.mulf %30, %38 : vector<64x32xf32>
    %c0_22 = arith.constant 0 : index
    %c0_23 = arith.constant 0 : index
    %c0_24 = arith.constant 0 : index
    %40 = vector.load %arg6[%c0_22, %c0_23, %c0_24] : memref<4x1x32xf32, #tpu.memory_space<vmem>>, vector<1x1x32xf32>
    %41 = vector.shape_cast %40 : vector<1x1x32xf32> to vector<1x32xf32>
    %42 = vector.broadcast %41 : vector<1x32xf32> to vector<64x32xf32>
    %43 = arith.mulf %39, %42 : vector<64x32xf32>
    %c0_25 = arith.constant 0 : index
    %c0_26 = arith.constant 0 : index
    %c0_27 = arith.constant 0 : index
    %44 = vector.load %arg7[%c0_25, %c0_26, %c0_27] : memref<4x1x32xf32, #tpu.memory_space<vmem>>, vector<1x1x32xf32>
    %45 = vector.shape_cast %44 : vector<1x1x32xf32> to vector<1x32xf32>
    %46 = vector.broadcast %45 : vector<1x32xf32> to vector<64x32xf32>
    %47 = arith.addf %43, %46 : vector<64x32xf32>
    %cst_28 = arith.constant 2.000000e-01 : f32
    %48 = vector.broadcast %cst_28 : f32 to vector<64x32xf32>
    %49 = arith.mulf %48, %47 : vector<64x32xf32>
    %50 = arith.maximumf %47, %49 : vector<64x32xf32>
    %51 = vector.broadcast %4 : vector<64x1xf32> to vector<64x32xf32>
    %52 = arith.mulf %50, %51 : vector<64x32xf32>
    %c1_i32_29 = arith.constant 1 : i32
    %53 = tpu.dynamic_rotate %52 by %c1_i32_29 dim 0 : vector<64x32xf32>, i32 -> vector<64x32xf32>
    %54 = tpu.iota {dimensions = array<i32: 0>} : vector<64x32xi32>
    %c1_i32_30 = arith.constant 1 : i32
    %55 = vector.broadcast %c1_i32_30 : i32 to vector<64x32xi32>
    %56 = arith.cmpi sge, %54, %55 : vector<64x32xi32>
    %cst_31 = arith.constant 0.000000e+00 : f32
    %57 = vector.broadcast %cst_31 : f32 to vector<64x32xf32>
    %58 = arith.select %56, %53, %57 : vector<64x32xi1>, vector<64x32xf32>
    %c63_i32_32 = arith.constant 63 : i32
    %59 = tpu.dynamic_rotate %52 by %c63_i32_32 dim 0 : vector<64x32xf32>, i32 -> vector<64x32xf32>
    %60 = tpu.iota {dimensions = array<i32: 0>} : vector<64x32xi32>
    %c63_i32_33 = arith.constant 63 : i32
    %61 = vector.broadcast %c63_i32_33 : i32 to vector<64x32xi32>
    %62 = arith.cmpi slt, %60, %61 : vector<64x32xi32>
    %cst_34 = arith.constant 0.000000e+00 : f32
    %63 = vector.broadcast %cst_34 : f32 to vector<64x32xf32>
    %64 = arith.select %62, %59, %63 : vector<64x32xi1>, vector<64x32xf32>
    %65 = tpu.concatenate %58, %52, %64 in 1 : vector<64x32xf32>, vector<64x32xf32>, vector<64x32xf32> -> vector<64x96xf32>
    %c1 = arith.constant 1 : index
    %c0_35 = arith.constant 0 : index
    %c0_36 = arith.constant 0 : index
    %66 = vector.load %arg3[%c1, %c0_35, %c0_36] : memref<4x96x32xf32, #tpu.memory_space<vmem>>, vector<1x96x32xf32>
    %67 = vector.shape_cast %66 : vector<1x96x32xf32> to vector<96x32xf32>
    %cst_37 = arith.constant dense<0.000000e+00> : vector<64x32xf32>
    %68 = tpu.matmul %65, %67, %cst_37 {dimension_numbers = #tpu.dot_dimension_numbers<[1], [0], [0], [1], [0, 0, 1, 1], [], []>} : vector<64x96xf32>, vector<96x32xf32>, vector<64x32xf32> -> vector<64x32xf32>
    %c1_38 = arith.constant 1 : index
    %c0_39 = arith.constant 0 : index
    %c0_40 = arith.constant 0 : index
    %69 = vector.load %arg4[%c1_38, %c0_39, %c0_40] : memref<4x1x32xf32, #tpu.memory_space<vmem>>, vector<1x1x32xf32>
    %70 = vector.shape_cast %69 : vector<1x1x32xf32> to vector<1x32xf32>
    %71 = vector.broadcast %70 : vector<1x32xf32> to vector<64x32xf32>
    %72 = arith.addf %68, %71 : vector<64x32xf32>
    %cst_41 = arith.constant dense<0.000000e+00> : vector<64x32xf32>
    %73 = tpu.matmul %72, %5, %cst_41 {dimension_numbers = #tpu.dot_dimension_numbers<[1], [0], [0], [1], [0, 0, 1, 1], [], []>} : vector<64x32xf32>, vector<32x32xf32>, vector<64x32xf32> -> vector<64x32xf32>
    %cst_42 = arith.constant dense<0.000000e+00> : vector<32xf32>
    %74 = vector.multi_reduction <add>, %73, %cst_42 [0] : vector<64x32xf32> to vector<32xf32>
    %75 = vector.shape_cast %74 : vector<32xf32> to vector<1x32xf32>
    %76 = vector.broadcast %75 : vector<1x32xf32> to vector<64x32xf32>
    %77 = arith.subf %72, %76 : vector<64x32xf32>
    %78 = arith.mulf %77, %77 : vector<64x32xf32>
    %cst_43 = arith.constant dense<0.000000e+00> : vector<64x32xf32>
    %79 = tpu.matmul %78, %5, %cst_43 {dimension_numbers = #tpu.dot_dimension_numbers<[1], [0], [0], [1], [0, 0, 1, 1], [], []>} : vector<64x32xf32>, vector<32x32xf32>, vector<64x32xf32> -> vector<64x32xf32>
    %cst_44 = arith.constant dense<0.000000e+00> : vector<32xf32>
    %80 = vector.multi_reduction <add>, %79, %cst_44 [0] : vector<64x32xf32> to vector<32xf32>
    %81 = vector.shape_cast %80 : vector<32xf32> to vector<1x32xf32>
    %cst_45 = arith.constant 9.99999974E-6 : f32
    %82 = vector.broadcast %cst_45 : f32 to vector<1x32xf32>
    %83 = arith.addf %81, %82 : vector<1x32xf32>
    %84 = math.rsqrt %83 : vector<1x32xf32>
    %85 = vector.broadcast %84 : vector<1x32xf32> to vector<64x32xf32>
    %86 = arith.mulf %77, %85 : vector<64x32xf32>
    %c1_46 = arith.constant 1 : index
    %c0_47 = arith.constant 0 : index
    %c0_48 = arith.constant 0 : index
    %87 = vector.load %arg6[%c1_46, %c0_47, %c0_48] : memref<4x1x32xf32, #tpu.memory_space<vmem>>, vector<1x1x32xf32>
    %88 = vector.shape_cast %87 : vector<1x1x32xf32> to vector<1x32xf32>
    %89 = vector.broadcast %88 : vector<1x32xf32> to vector<64x32xf32>
    %90 = arith.mulf %86, %89 : vector<64x32xf32>
    %c1_49 = arith.constant 1 : index
    %c0_50 = arith.constant 0 : index
    %c0_51 = arith.constant 0 : index
    %91 = vector.load %arg7[%c1_49, %c0_50, %c0_51] : memref<4x1x32xf32, #tpu.memory_space<vmem>>, vector<1x1x32xf32>
    %92 = vector.shape_cast %91 : vector<1x1x32xf32> to vector<1x32xf32>
    %93 = vector.broadcast %92 : vector<1x32xf32> to vector<64x32xf32>
    %94 = arith.addf %90, %93 : vector<64x32xf32>
    %cst_52 = arith.constant 2.000000e-01 : f32
    %95 = vector.broadcast %cst_52 : f32 to vector<64x32xf32>
    %96 = arith.mulf %95, %94 : vector<64x32xf32>
    %97 = arith.maximumf %94, %96 : vector<64x32xf32>
    %98 = vector.broadcast %4 : vector<64x1xf32> to vector<64x32xf32>
    %99 = arith.mulf %97, %98 : vector<64x32xf32>
    %c1_i32_53 = arith.constant 1 : i32
    %100 = tpu.dynamic_rotate %99 by %c1_i32_53 dim 0 : vector<64x32xf32>, i32 -> vector<64x32xf32>
    %101 = tpu.iota {dimensions = array<i32: 0>} : vector<64x32xi32>
    %c1_i32_54 = arith.constant 1 : i32
    %102 = vector.broadcast %c1_i32_54 : i32 to vector<64x32xi32>
    %103 = arith.cmpi sge, %101, %102 : vector<64x32xi32>
    %cst_55 = arith.constant 0.000000e+00 : f32
    %104 = vector.broadcast %cst_55 : f32 to vector<64x32xf32>
    %105 = arith.select %103, %100, %104 : vector<64x32xi1>, vector<64x32xf32>
    %c63_i32_56 = arith.constant 63 : i32
    %106 = tpu.dynamic_rotate %99 by %c63_i32_56 dim 0 : vector<64x32xf32>, i32 -> vector<64x32xf32>
    %107 = tpu.iota {dimensions = array<i32: 0>} : vector<64x32xi32>
    %c63_i32_57 = arith.constant 63 : i32
    %108 = vector.broadcast %c63_i32_57 : i32 to vector<64x32xi32>
    %109 = arith.cmpi slt, %107, %108 : vector<64x32xi32>
    %cst_58 = arith.constant 0.000000e+00 : f32
    %110 = vector.broadcast %cst_58 : f32 to vector<64x32xf32>
    %111 = arith.select %109, %106, %110 : vector<64x32xi1>, vector<64x32xf32>
    %112 = tpu.concatenate %105, %99, %111 in 1 : vector<64x32xf32>, vector<64x32xf32>, vector<64x32xf32> -> vector<64x96xf32>
    %c2 = arith.constant 2 : index
    %c0_59 = arith.constant 0 : index
    %c0_60 = arith.constant 0 : index
    %113 = vector.load %arg3[%c2, %c0_59, %c0_60] : memref<4x96x32xf32, #tpu.memory_space<vmem>>, vector<1x96x32xf32>
    %114 = vector.shape_cast %113 : vector<1x96x32xf32> to vector<96x32xf32>
    %cst_61 = arith.constant dense<0.000000e+00> : vector<64x32xf32>
    %115 = tpu.matmul %112, %114, %cst_61 {dimension_numbers = #tpu.dot_dimension_numbers<[1], [0], [0], [1], [0, 0, 1, 1], [], []>} : vector<64x96xf32>, vector<96x32xf32>, vector<64x32xf32> -> vector<64x32xf32>
    %c2_62 = arith.constant 2 : index
    %c0_63 = arith.constant 0 : index
    %c0_64 = arith.constant 0 : index
    %116 = vector.load %arg4[%c2_62, %c0_63, %c0_64] : memref<4x1x32xf32, #tpu.memory_space<vmem>>, vector<1x1x32xf32>
    %117 = vector.shape_cast %116 : vector<1x1x32xf32> to vector<1x32xf32>
    %118 = vector.broadcast %117 : vector<1x32xf32> to vector<64x32xf32>
    %119 = arith.addf %115, %118 : vector<64x32xf32>
    %cst_65 = arith.constant dense<0.000000e+00> : vector<64x32xf32>
    %120 = tpu.matmul %119, %5, %cst_65 {dimension_numbers = #tpu.dot_dimension_numbers<[1], [0], [0], [1], [0, 0, 1, 1], [], []>} : vector<64x32xf32>, vector<32x32xf32>, vector<64x32xf32> -> vector<64x32xf32>
    %cst_66 = arith.constant dense<0.000000e+00> : vector<32xf32>
    %121 = vector.multi_reduction <add>, %120, %cst_66 [0] : vector<64x32xf32> to vector<32xf32>
    %122 = vector.shape_cast %121 : vector<32xf32> to vector<1x32xf32>
    %123 = vector.broadcast %122 : vector<1x32xf32> to vector<64x32xf32>
    %124 = arith.subf %119, %123 : vector<64x32xf32>
    %125 = arith.mulf %124, %124 : vector<64x32xf32>
    %cst_67 = arith.constant dense<0.000000e+00> : vector<64x32xf32>
    %126 = tpu.matmul %125, %5, %cst_67 {dimension_numbers = #tpu.dot_dimension_numbers<[1], [0], [0], [1], [0, 0, 1, 1], [], []>} : vector<64x32xf32>, vector<32x32xf32>, vector<64x32xf32> -> vector<64x32xf32>
    %cst_68 = arith.constant dense<0.000000e+00> : vector<32xf32>
    %127 = vector.multi_reduction <add>, %126, %cst_68 [0] : vector<64x32xf32> to vector<32xf32>
    %128 = vector.shape_cast %127 : vector<32xf32> to vector<1x32xf32>
    %cst_69 = arith.constant 9.99999974E-6 : f32
    %129 = vector.broadcast %cst_69 : f32 to vector<1x32xf32>
    %130 = arith.addf %128, %129 : vector<1x32xf32>
    %131 = math.rsqrt %130 : vector<1x32xf32>
    %132 = vector.broadcast %131 : vector<1x32xf32> to vector<64x32xf32>
    %133 = arith.mulf %124, %132 : vector<64x32xf32>
    %c2_70 = arith.constant 2 : index
    %c0_71 = arith.constant 0 : index
    %c0_72 = arith.constant 0 : index
    %134 = vector.load %arg6[%c2_70, %c0_71, %c0_72] : memref<4x1x32xf32, #tpu.memory_space<vmem>>, vector<1x1x32xf32>
    %135 = vector.shape_cast %134 : vector<1x1x32xf32> to vector<1x32xf32>
    %136 = vector.broadcast %135 : vector<1x32xf32> to vector<64x32xf32>
    %137 = arith.mulf %133, %136 : vector<64x32xf32>
    %c2_73 = arith.constant 2 : index
    %c0_74 = arith.constant 0 : index
    %c0_75 = arith.constant 0 : index
    %138 = vector.load %arg7[%c2_73, %c0_74, %c0_75] : memref<4x1x32xf32, #tpu.memory_space<vmem>>, vector<1x1x32xf32>
    %139 = vector.shape_cast %138 : vector<1x1x32xf32> to vector<1x32xf32>
    %140 = vector.broadcast %139 : vector<1x32xf32> to vector<64x32xf32>
    %141 = arith.addf %137, %140 : vector<64x32xf32>
    %cst_76 = arith.constant 2.000000e-01 : f32
    %142 = vector.broadcast %cst_76 : f32 to vector<64x32xf32>
    %143 = arith.mulf %142, %141 : vector<64x32xf32>
    %144 = arith.maximumf %141, %143 : vector<64x32xf32>
    %145 = vector.broadcast %4 : vector<64x1xf32> to vector<64x32xf32>
    %146 = arith.mulf %144, %145 : vector<64x32xf32>
    %c1_i32_77 = arith.constant 1 : i32
    %147 = tpu.dynamic_rotate %146 by %c1_i32_77 dim 0 : vector<64x32xf32>, i32 -> vector<64x32xf32>
    %148 = tpu.iota {dimensions = array<i32: 0>} : vector<64x32xi32>
    %c1_i32_78 = arith.constant 1 : i32
    %149 = vector.broadcast %c1_i32_78 : i32 to vector<64x32xi32>
    %150 = arith.cmpi sge, %148, %149 : vector<64x32xi32>
    %cst_79 = arith.constant 0.000000e+00 : f32
    %151 = vector.broadcast %cst_79 : f32 to vector<64x32xf32>
    %152 = arith.select %150, %147, %151 : vector<64x32xi1>, vector<64x32xf32>
    %c63_i32_80 = arith.constant 63 : i32
    %153 = tpu.dynamic_rotate %146 by %c63_i32_80 dim 0 : vector<64x32xf32>, i32 -> vector<64x32xf32>
    %154 = tpu.iota {dimensions = array<i32: 0>} : vector<64x32xi32>
    %c63_i32_81 = arith.constant 63 : i32
    %155 = vector.broadcast %c63_i32_81 : i32 to vector<64x32xi32>
    %156 = arith.cmpi slt, %154, %155 : vector<64x32xi32>
    %cst_82 = arith.constant 0.000000e+00 : f32
    %157 = vector.broadcast %cst_82 : f32 to vector<64x32xf32>
    %158 = arith.select %156, %153, %157 : vector<64x32xi1>, vector<64x32xf32>
    %159 = tpu.concatenate %152, %146, %158 in 1 : vector<64x32xf32>, vector<64x32xf32>, vector<64x32xf32> -> vector<64x96xf32>
    %c3 = arith.constant 3 : index
    %c0_83 = arith.constant 0 : index
    %c0_84 = arith.constant 0 : index
    %160 = vector.load %arg3[%c3, %c0_83, %c0_84] : memref<4x96x32xf32, #tpu.memory_space<vmem>>, vector<1x96x32xf32>
    %161 = vector.shape_cast %160 : vector<1x96x32xf32> to vector<96x32xf32>
    %cst_85 = arith.constant dense<0.000000e+00> : vector<64x32xf32>
    %162 = tpu.matmul %159, %161, %cst_85 {dimension_numbers = #tpu.dot_dimension_numbers<[1], [0], [0], [1], [0, 0, 1, 1], [], []>} : vector<64x96xf32>, vector<96x32xf32>, vector<64x32xf32> -> vector<64x32xf32>
    %c3_86 = arith.constant 3 : index
    %c0_87 = arith.constant 0 : index
    %c0_88 = arith.constant 0 : index
    %163 = vector.load %arg4[%c3_86, %c0_87, %c0_88] : memref<4x1x32xf32, #tpu.memory_space<vmem>>, vector<1x1x32xf32>
    %164 = vector.shape_cast %163 : vector<1x1x32xf32> to vector<1x32xf32>
    %165 = vector.broadcast %164 : vector<1x32xf32> to vector<64x32xf32>
    %166 = arith.addf %162, %165 : vector<64x32xf32>
    %cst_89 = arith.constant dense<0.000000e+00> : vector<64x32xf32>
    %167 = tpu.matmul %166, %5, %cst_89 {dimension_numbers = #tpu.dot_dimension_numbers<[1], [0], [0], [1], [0, 0, 1, 1], [], []>} : vector<64x32xf32>, vector<32x32xf32>, vector<64x32xf32> -> vector<64x32xf32>
    %cst_90 = arith.constant dense<0.000000e+00> : vector<32xf32>
    %168 = vector.multi_reduction <add>, %167, %cst_90 [0] : vector<64x32xf32> to vector<32xf32>
    %169 = vector.shape_cast %168 : vector<32xf32> to vector<1x32xf32>
    %170 = vector.broadcast %169 : vector<1x32xf32> to vector<64x32xf32>
    %171 = arith.subf %166, %170 : vector<64x32xf32>
    %172 = arith.mulf %171, %171 : vector<64x32xf32>
    %cst_91 = arith.constant dense<0.000000e+00> : vector<64x32xf32>
    %173 = tpu.matmul %172, %5, %cst_91 {dimension_numbers = #tpu.dot_dimension_numbers<[1], [0], [0], [1], [0, 0, 1, 1], [], []>} : vector<64x32xf32>, vector<32x32xf32>, vector<64x32xf32> -> vector<64x32xf32>
    %cst_92 = arith.constant dense<0.000000e+00> : vector<32xf32>
    %174 = vector.multi_reduction <add>, %173, %cst_92 [0] : vector<64x32xf32> to vector<32xf32>
    %175 = vector.shape_cast %174 : vector<32xf32> to vector<1x32xf32>
    %cst_93 = arith.constant 9.99999974E-6 : f32
    %176 = vector.broadcast %cst_93 : f32 to vector<1x32xf32>
    %177 = arith.addf %175, %176 : vector<1x32xf32>
    %178 = math.rsqrt %177 : vector<1x32xf32>
    %179 = vector.broadcast %178 : vector<1x32xf32> to vector<64x32xf32>
    %180 = arith.mulf %171, %179 : vector<64x32xf32>
    %c3_94 = arith.constant 3 : index
    %c0_95 = arith.constant 0 : index
    %c0_96 = arith.constant 0 : index
    %181 = vector.load %arg6[%c3_94, %c0_95, %c0_96] : memref<4x1x32xf32, #tpu.memory_space<vmem>>, vector<1x1x32xf32>
    %182 = vector.shape_cast %181 : vector<1x1x32xf32> to vector<1x32xf32>
    %183 = vector.broadcast %182 : vector<1x32xf32> to vector<64x32xf32>
    %184 = arith.mulf %180, %183 : vector<64x32xf32>
    %c3_97 = arith.constant 3 : index
    %c0_98 = arith.constant 0 : index
    %c0_99 = arith.constant 0 : index
    %185 = vector.load %arg7[%c3_97, %c0_98, %c0_99] : memref<4x1x32xf32, #tpu.memory_space<vmem>>, vector<1x1x32xf32>
    %186 = vector.shape_cast %185 : vector<1x1x32xf32> to vector<1x32xf32>
    %187 = vector.broadcast %186 : vector<1x32xf32> to vector<64x32xf32>
    %188 = arith.addf %184, %187 : vector<64x32xf32>
    %cst_100 = arith.constant 2.000000e-01 : f32
    %189 = vector.broadcast %cst_100 : f32 to vector<64x32xf32>
    %190 = arith.mulf %189, %188 : vector<64x32xf32>
    %191 = arith.maximumf %188, %190 : vector<64x32xf32>
    %192 = vector.broadcast %4 : vector<64x1xf32> to vector<64x32xf32>
    %193 = arith.mulf %191, %192 : vector<64x32xf32>
    %c0_101 = arith.constant 0 : index
    %c0_102 = arith.constant 0 : index
    %194 = vector.load %arg8[%c0_101, %c0_102] : memref<64x64xf32, #tpu.memory_space<vmem>>, vector<64x64xf32>
    %c0_103 = arith.constant 0 : index
    %c0_104 = arith.constant 0 : index
    %195 = vector.load %arg9[%c0_103, %c0_104] : memref<64x64xf32, #tpu.memory_space<vmem>>, vector<64x64xf32>
    %cst_105 = arith.constant dense<0.000000e+00> : vector<64x32xf32>
    %196 = tpu.matmul %194, %193, %cst_105 {dimension_numbers = #tpu.dot_dimension_numbers<[1], [0], [0], [1], [0, 0, 1, 1], [], []>} : vector<64x64xf32>, vector<64x32xf32>, vector<64x32xf32> -> vector<64x32xf32>
    %197 = tpu.concatenate %193, %196 in 1 : vector<64x32xf32>, vector<64x32xf32> -> vector<64x64xf32>
    %c0_106 = arith.constant 0 : index
    %c0_107 = arith.constant 0 : index
    %198 = vector.load %arg10[%c0_106, %c0_107] : memref<64x256xf32, #tpu.memory_space<vmem>>, vector<64x256xf32>
    %cst_108 = arith.constant dense<0.000000e+00> : vector<64x256xf32>
    %199 = tpu.matmul %197, %198, %cst_108 {dimension_numbers = #tpu.dot_dimension_numbers<[1], [0], [0], [1], [0, 0, 1, 1], [], []>} : vector<64x64xf32>, vector<64x256xf32>, vector<64x256xf32> -> vector<64x256xf32>
    %200 = vector.extract_strided_slice %199 {offsets = [0, 0], sizes = [64, 128], strides = [1, 1]} : vector<64x256xf32> to vector<64x128xf32>
    %201 = vector.extract_strided_slice %199 {offsets = [0, 128], sizes = [64, 128], strides = [1, 1]} : vector<64x256xf32> to vector<64x128xf32>
    %c3_109 = arith.constant 3 : index
    %c0_110 = arith.constant 0 : index
    %c0_111 = arith.constant 0 : index
    %202 = vector.load %arg11[%c3_109, %c0_110, %c0_111] : memref<4x1x128xf32, #tpu.memory_space<vmem>>, vector<1x1x128xf32>
    %203 = vector.shape_cast %202 : vector<1x1x128xf32> to vector<1x128xf32>
    %204 = vector.broadcast %203 : vector<1x128xf32> to vector<64x128xf32>
    %205 = arith.mulf %200, %204 : vector<64x128xf32>
    %c3_i32 = arith.constant 3 : i32
    %206 = tpu.dynamic_rotate %200 by %c3_i32 dim 0 : vector<64x128xf32>, i32 -> vector<64x128xf32>
    %207 = tpu.iota {dimensions = array<i32: 0>} : vector<64x128xi32>
    %c3_i32_112 = arith.constant 3 : i32
    %208 = vector.broadcast %c3_i32_112 : i32 to vector<64x128xi32>
    %209 = arith.cmpi sge, %207, %208 : vector<64x128xi32>
    %cst_113 = arith.constant 0.000000e+00 : f32
    %210 = vector.broadcast %cst_113 : f32 to vector<64x128xf32>
    %211 = arith.select %209, %206, %210 : vector<64x128xi1>, vector<64x128xf32>
    %c0_114 = arith.constant 0 : index
    %c0_115 = arith.constant 0 : index
    %c0_116 = arith.constant 0 : index
    %212 = vector.load %arg11[%c0_114, %c0_115, %c0_116] : memref<4x1x128xf32, #tpu.memory_space<vmem>>, vector<1x1x128xf32>
    %213 = vector.shape_cast %212 : vector<1x1x128xf32> to vector<1x128xf32>
    %214 = vector.broadcast %213 : vector<1x128xf32> to vector<64x128xf32>
    %215 = arith.mulf %211, %214 : vector<64x128xf32>
    %216 = arith.addf %205, %215 : vector<64x128xf32>
    %c2_i32 = arith.constant 2 : i32
    %217 = tpu.dynamic_rotate %200 by %c2_i32 dim 0 : vector<64x128xf32>, i32 -> vector<64x128xf32>
    %218 = tpu.iota {dimensions = array<i32: 0>} : vector<64x128xi32>
    %c2_i32_117 = arith.constant 2 : i32
    %219 = vector.broadcast %c2_i32_117 : i32 to vector<64x128xi32>
    %220 = arith.cmpi sge, %218, %219 : vector<64x128xi32>
    %cst_118 = arith.constant 0.000000e+00 : f32
    %221 = vector.broadcast %cst_118 : f32 to vector<64x128xf32>
    %222 = arith.select %220, %217, %221 : vector<64x128xi1>, vector<64x128xf32>
    %c1_119 = arith.constant 1 : index
    %c0_120 = arith.constant 0 : index
    %c0_121 = arith.constant 0 : index
    %223 = vector.load %arg11[%c1_119, %c0_120, %c0_121] : memref<4x1x128xf32, #tpu.memory_space<vmem>>, vector<1x1x128xf32>
    %224 = vector.shape_cast %223 : vector<1x1x128xf32> to vector<1x128xf32>
    %225 = vector.broadcast %224 : vector<1x128xf32> to vector<64x128xf32>
    %226 = arith.mulf %222, %225 : vector<64x128xf32>
    %227 = arith.addf %216, %226 : vector<64x128xf32>
    %c1_i32_122 = arith.constant 1 : i32
    %228 = tpu.dynamic_rotate %200 by %c1_i32_122 dim 0 : vector<64x128xf32>, i32 -> vector<64x128xf32>
    %229 = tpu.iota {dimensions = array<i32: 0>} : vector<64x128xi32>
    %c1_i32_123 = arith.constant 1 : i32
    %230 = vector.broadcast %c1_i32_123 : i32 to vector<64x128xi32>
    %231 = arith.cmpi sge, %229, %230 : vector<64x128xi32>
    %cst_124 = arith.constant 0.000000e+00 : f32
    %232 = vector.broadcast %cst_124 : f32 to vector<64x128xf32>
    %233 = arith.select %231, %228, %232 : vector<64x128xi1>, vector<64x128xf32>
    %c2_125 = arith.constant 2 : index
    %c0_126 = arith.constant 0 : index
    %c0_127 = arith.constant 0 : index
    %234 = vector.load %arg11[%c2_125, %c0_126, %c0_127] : memref<4x1x128xf32, #tpu.memory_space<vmem>>, vector<1x1x128xf32>
    %235 = vector.shape_cast %234 : vector<1x1x128xf32> to vector<1x128xf32>
    %236 = vector.broadcast %235 : vector<1x128xf32> to vector<64x128xf32>
    %237 = arith.mulf %233, %236 : vector<64x128xf32>
    %238 = arith.addf %227, %237 : vector<64x128xf32>
    %c0_128 = arith.constant 0 : index
    %c0_129 = arith.constant 0 : index
    %239 = vector.load %arg12[%c0_128, %c0_129] : memref<1x128xf32, #tpu.memory_space<vmem>>, vector<1x128xf32>
    %240 = vector.broadcast %239 : vector<1x128xf32> to vector<64x128xf32>
    %241 = arith.addf %238, %240 : vector<64x128xf32>
    %cst_130 = arith.constant 0.000000e+00 : f32
    %242 = vector.broadcast %cst_130 : f32 to vector<64x128xf32>
    %243 = arith.subf %242, %241 : vector<64x128xf32>
    %244 = math.exp %243 : vector<64x128xf32>
    %cst_131 = arith.constant 1.000000e+00 : f32
    %245 = vector.broadcast %cst_131 : f32 to vector<64x128xf32>
    %246 = arith.addf %245, %244 : vector<64x128xf32>
    %247 = tpu.reciprocal %246 {approx = true} : vector<64x128xf32> -> vector<64x128xf32>
    %248 = arith.mulf %241, %247 : vector<64x128xf32>
    %c0_132 = arith.constant 0 : index
    %c0_133 = arith.constant 0 : index
    %249 = vector.load %arg13[%c0_132, %c0_133] : memref<128x192xf32, #tpu.memory_space<vmem>>, vector<128x192xf32>
    %cst_134 = arith.constant dense<0.000000e+00> : vector<64x192xf32>
    %250 = tpu.matmul %248, %249, %cst_134 {dimension_numbers = #tpu.dot_dimension_numbers<[1], [0], [0], [1], [0, 0, 1, 1], [], []>} : vector<64x128xf32>, vector<128x192xf32>, vector<64x192xf32> -> vector<64x192xf32>
    %251 = vector.extract_strided_slice %250 {offsets = [0, 0], sizes = [64, 128], strides = [1, 1]} : vector<64x192xf32> to vector<64x128xf32>
    %c0_135 = arith.constant 0 : index
    %c0_136 = arith.constant 0 : index
    %252 = vector.load %arg14[%c0_135, %c0_136] : memref<1x128xf32, #tpu.memory_space<vmem>>, vector<1x128xf32>
    %253 = vector.broadcast %252 : vector<1x128xf32> to vector<64x128xf32>
    %254 = arith.addf %251, %253 : vector<64x128xf32>
    %cst_137 = arith.constant 0.000000e+00 : f32
    %255 = vector.broadcast %cst_137 : f32 to vector<64x128xf32>
    %256 = arith.maximumf %254, %255 : vector<64x128xf32>
    %257 = math.absf %254 : vector<64x128xf32>
    %cst_138 = arith.constant 0.000000e+00 : f32
    %258 = vector.broadcast %cst_138 : f32 to vector<64x128xf32>
    %259 = arith.subf %258, %257 : vector<64x128xf32>
    %260 = math.exp %259 : vector<64x128xf32>
    %261 = math.log1p %260 : vector<64x128xf32>
    %262 = arith.addf %256, %261 : vector<64x128xf32>
    %263 = vector.extract_strided_slice %250 {offsets = [0, 128], sizes = [64, 32], strides = [1, 1]} : vector<64x192xf32> to vector<64x32xf32>
    %264 = vector.extract_strided_slice %250 {offsets = [0, 160], sizes = [64, 32], strides = [1, 1]} : vector<64x192xf32> to vector<64x32xf32>
    %cst_139 = arith.constant dense<0.000000e+00> : vector<64x128xf32>
    %265 = tpu.matmul %195, %262, %cst_139 {dimension_numbers = #tpu.dot_dimension_numbers<[1], [0], [0], [1], [0, 0, 1, 1], [], []>} : vector<64x64xf32>, vector<64x128xf32>, vector<64x128xf32> -> vector<64x128xf32>
    %266 = arith.mulf %262, %248 : vector<64x128xf32>
    %cst_140 = arith.constant dense<0.000000e+00> : vector<64x128xf32>
    %267 = tpu.matmul %195, %266, %cst_140 {dimension_numbers = #tpu.dot_dimension_numbers<[1], [0], [0], [1], [0, 0, 1, 1], [], []>} : vector<64x64xf32>, vector<64x128xf32>, vector<64x128xf32> -> vector<64x128xf32>
    %cst_141 = arith.constant dense<0.000000e+00> : vector<64x32xf32>
    %268 = tpu.matmul %195, %263, %cst_141 {dimension_numbers = #tpu.dot_dimension_numbers<[1], [0], [0], [1], [0, 0, 1, 1], [], []>} : vector<64x64xf32>, vector<64x32xf32>, vector<64x32xf32> -> vector<64x32xf32>
    %c0_142 = arith.constant 0 : index
    %c0_143 = arith.constant 0 : index
    %269 = vector.load %arg16[%c0_142, %c0_143] : memref<32x2048xf32, #tpu.memory_space<vmem>>, vector<32x2048xf32>
    %cst_144 = arith.constant dense<0.000000e+00> : vector<64x2048xf32>
    %270 = tpu.matmul %268, %269, %cst_144 {dimension_numbers = #tpu.dot_dimension_numbers<[1], [0], [0], [1], [0, 0, 1, 1], [], []>} : vector<64x32xf32>, vector<32x2048xf32>, vector<64x2048xf32> -> vector<64x2048xf32>
    %cst_145 = arith.constant dense<0.000000e+00> : vector<64x32xf32>
    %271 = tpu.matmul %195, %264, %cst_145 {dimension_numbers = #tpu.dot_dimension_numbers<[1], [0], [0], [1], [0, 0, 1, 1], [], []>} : vector<64x64xf32>, vector<64x32xf32>, vector<64x32xf32> -> vector<64x32xf32>
    %c0_146 = arith.constant 0 : index
    %c0_147 = arith.constant 0 : index
    %272 = vector.load %arg16[%c0_146, %c0_147] : memref<32x2048xf32, #tpu.memory_space<vmem>>, vector<32x2048xf32>
    %cst_148 = arith.constant dense<0.000000e+00> : vector<64x2048xf32>
    %273 = tpu.matmul %271, %272, %cst_148 {dimension_numbers = #tpu.dot_dimension_numbers<[1], [0], [0], [1], [0, 0, 1, 1], [], []>} : vector<64x32xf32>, vector<32x2048xf32>, vector<64x2048xf32> -> vector<64x2048xf32>
    %274 = tpu.concatenate %265, %265, %265, %265, %265, %265, %265, %265, %265, %265, %265, %265, %265, %265, %265, %265 in 1 : vector<64x128xf32>, vector<64x128xf32>, vector<64x128xf32>, vector<64x128xf32>, vector<64x128xf32>, vector<64x128xf32>, vector<64x128xf32>, vector<64x128xf32>, vector<64x128xf32>, vector<64x128xf32>, vector<64x128xf32>, vector<64x128xf32>, vector<64x128xf32>, vector<64x128xf32>, vector<64x128xf32>, vector<64x128xf32> -> vector<64x2048xf32>
    %c0_149 = arith.constant 0 : index
    %c0_150 = arith.constant 0 : index
    %275 = vector.load %arg15[%c0_149, %c0_150] : memref<1x2048xf32, #tpu.memory_space<vmem>>, vector<1x2048xf32>
    %276 = vector.broadcast %275 : vector<1x2048xf32> to vector<64x2048xf32>
    %277 = arith.mulf %274, %276 : vector<64x2048xf32>
    %278 = math.exp %277 : vector<64x2048xf32>
    %279 = tpu.concatenate %267, %267, %267, %267, %267, %267, %267, %267, %267, %267, %267, %267, %267, %267, %267, %267 in 1 : vector<64x128xf32>, vector<64x128xf32>, vector<64x128xf32>, vector<64x128xf32>, vector<64x128xf32>, vector<64x128xf32>, vector<64x128xf32>, vector<64x128xf32>, vector<64x128xf32>, vector<64x128xf32>, vector<64x128xf32>, vector<64x128xf32>, vector<64x128xf32>, vector<64x128xf32>, vector<64x128xf32>, vector<64x128xf32> -> vector<64x2048xf32>
    %280 = arith.mulf %279, %270 : vector<64x2048xf32>
    %281 = vector.extract_strided_slice %278 {offsets = [0, 0], sizes = [8, 2048], strides = [1, 1]} : vector<64x2048xf32> to vector<8x2048xf32>
    %282 = vector.extract_strided_slice %280 {offsets = [0, 0], sizes = [8, 2048], strides = [1, 1]} : vector<64x2048xf32> to vector<8x2048xf32>
    %283 = vector.extract_strided_slice %278 {offsets = [8, 0], sizes = [8, 2048], strides = [1, 1]} : vector<64x2048xf32> to vector<8x2048xf32>
    %284 = arith.mulf %282, %283 : vector<8x2048xf32>
    %285 = vector.extract_strided_slice %280 {offsets = [8, 0], sizes = [8, 2048], strides = [1, 1]} : vector<64x2048xf32> to vector<8x2048xf32>
    %286 = arith.addf %284, %285 : vector<8x2048xf32>
    %287 = arith.mulf %281, %283 : vector<8x2048xf32>
    %288 = vector.extract_strided_slice %278 {offsets = [16, 0], sizes = [8, 2048], strides = [1, 1]} : vector<64x2048xf32> to vector<8x2048xf32>
    %289 = arith.mulf %286, %288 : vector<8x2048xf32>
    %290 = vector.extract_strided_slice %280 {offsets = [16, 0], sizes = [8, 2048], strides = [1, 1]} : vector<64x2048xf32> to vector<8x2048xf32>
    %291 = arith.addf %289, %290 : vector<8x2048xf32>
    %292 = arith.mulf %287, %288 : vector<8x2048xf32>
    %293 = vector.extract_strided_slice %278 {offsets = [24, 0], sizes = [8, 2048], strides = [1, 1]} : vector<64x2048xf32> to vector<8x2048xf32>
    %294 = arith.mulf %291, %293 : vector<8x2048xf32>
    %295 = vector.extract_strided_slice %280 {offsets = [24, 0], sizes = [8, 2048], strides = [1, 1]} : vector<64x2048xf32> to vector<8x2048xf32>
    %296 = arith.addf %294, %295 : vector<8x2048xf32>
    %297 = arith.mulf %292, %293 : vector<8x2048xf32>
    %298 = vector.extract_strided_slice %278 {offsets = [32, 0], sizes = [8, 2048], strides = [1, 1]} : vector<64x2048xf32> to vector<8x2048xf32>
    %299 = arith.mulf %296, %298 : vector<8x2048xf32>
    %300 = vector.extract_strided_slice %280 {offsets = [32, 0], sizes = [8, 2048], strides = [1, 1]} : vector<64x2048xf32> to vector<8x2048xf32>
    %301 = arith.addf %299, %300 : vector<8x2048xf32>
    %302 = arith.mulf %297, %298 : vector<8x2048xf32>
    %303 = vector.extract_strided_slice %278 {offsets = [40, 0], sizes = [8, 2048], strides = [1, 1]} : vector<64x2048xf32> to vector<8x2048xf32>
    %304 = arith.mulf %301, %303 : vector<8x2048xf32>
    %305 = vector.extract_strided_slice %280 {offsets = [40, 0], sizes = [8, 2048], strides = [1, 1]} : vector<64x2048xf32> to vector<8x2048xf32>
    %306 = arith.addf %304, %305 : vector<8x2048xf32>
    %307 = arith.mulf %302, %303 : vector<8x2048xf32>
    %308 = vector.extract_strided_slice %278 {offsets = [48, 0], sizes = [8, 2048], strides = [1, 1]} : vector<64x2048xf32> to vector<8x2048xf32>
    %309 = arith.mulf %306, %308 : vector<8x2048xf32>
    %310 = vector.extract_strided_slice %280 {offsets = [48, 0], sizes = [8, 2048], strides = [1, 1]} : vector<64x2048xf32> to vector<8x2048xf32>
    %311 = arith.addf %309, %310 : vector<8x2048xf32>
    %312 = arith.mulf %307, %308 : vector<8x2048xf32>
    %313 = vector.extract_strided_slice %278 {offsets = [56, 0], sizes = [8, 2048], strides = [1, 1]} : vector<64x2048xf32> to vector<8x2048xf32>
    %314 = arith.mulf %311, %313 : vector<8x2048xf32>
    %315 = vector.extract_strided_slice %280 {offsets = [56, 0], sizes = [8, 2048], strides = [1, 1]} : vector<64x2048xf32> to vector<8x2048xf32>
    %316 = arith.addf %314, %315 : vector<8x2048xf32>
    %317 = arith.mulf %312, %313 : vector<8x2048xf32>
    %cst_151 = arith.constant 0.000000e+00 : f32
    %318 = vector.broadcast %cst_151 : f32 to vector<1x2048xf32>
    %319 = vector.extract_strided_slice %317 {offsets = [0, 0], sizes = [1, 2048], strides = [1, 1]} : vector<8x2048xf32> to vector<1x2048xf32>
    %320 = arith.mulf %319, %318 : vector<1x2048xf32>
    %321 = vector.extract_strided_slice %316 {offsets = [0, 0], sizes = [1, 2048], strides = [1, 1]} : vector<8x2048xf32> to vector<1x2048xf32>
    %322 = arith.addf %320, %321 : vector<1x2048xf32>
    %323 = vector.extract_strided_slice %317 {offsets = [1, 0], sizes = [1, 2048], strides = [1, 1]} : vector<8x2048xf32> to vector<1x2048xf32>
    %324 = arith.mulf %323, %322 : vector<1x2048xf32>
    %325 = vector.extract_strided_slice %316 {offsets = [1, 0], sizes = [1, 2048], strides = [1, 1]} : vector<8x2048xf32> to vector<1x2048xf32>
    %326 = arith.addf %324, %325 : vector<1x2048xf32>
    %327 = vector.extract_strided_slice %317 {offsets = [2, 0], sizes = [1, 2048], strides = [1, 1]} : vector<8x2048xf32> to vector<1x2048xf32>
    %328 = arith.mulf %327, %326 : vector<1x2048xf32>
    %329 = vector.extract_strided_slice %316 {offsets = [2, 0], sizes = [1, 2048], strides = [1, 1]} : vector<8x2048xf32> to vector<1x2048xf32>
    %330 = arith.addf %328, %329 : vector<1x2048xf32>
    %331 = vector.extract_strided_slice %317 {offsets = [3, 0], sizes = [1, 2048], strides = [1, 1]} : vector<8x2048xf32> to vector<1x2048xf32>
    %332 = arith.mulf %331, %330 : vector<1x2048xf32>
    %333 = vector.extract_strided_slice %316 {offsets = [3, 0], sizes = [1, 2048], strides = [1, 1]} : vector<8x2048xf32> to vector<1x2048xf32>
    %334 = arith.addf %332, %333 : vector<1x2048xf32>
    %335 = vector.extract_strided_slice %317 {offsets = [4, 0], sizes = [1, 2048], strides = [1, 1]} : vector<8x2048xf32> to vector<1x2048xf32>
    %336 = arith.mulf %335, %334 : vector<1x2048xf32>
    %337 = vector.extract_strided_slice %316 {offsets = [4, 0], sizes = [1, 2048], strides = [1, 1]} : vector<8x2048xf32> to vector<1x2048xf32>
    %338 = arith.addf %336, %337 : vector<1x2048xf32>
    %339 = vector.extract_strided_slice %317 {offsets = [5, 0], sizes = [1, 2048], strides = [1, 1]} : vector<8x2048xf32> to vector<1x2048xf32>
    %340 = arith.mulf %339, %338 : vector<1x2048xf32>
    %341 = vector.extract_strided_slice %316 {offsets = [5, 0], sizes = [1, 2048], strides = [1, 1]} : vector<8x2048xf32> to vector<1x2048xf32>
    %342 = arith.addf %340, %341 : vector<1x2048xf32>
    %343 = vector.extract_strided_slice %317 {offsets = [6, 0], sizes = [1, 2048], strides = [1, 1]} : vector<8x2048xf32> to vector<1x2048xf32>
    %344 = arith.mulf %343, %342 : vector<1x2048xf32>
    %345 = vector.extract_strided_slice %316 {offsets = [6, 0], sizes = [1, 2048], strides = [1, 1]} : vector<8x2048xf32> to vector<1x2048xf32>
    %346 = arith.addf %344, %345 : vector<1x2048xf32>
    %347 = tpu.concatenate %318, %322, %326, %330, %334, %338, %342, %346 in 0 : vector<1x2048xf32>, vector<1x2048xf32>, vector<1x2048xf32>, vector<1x2048xf32>, vector<1x2048xf32>, vector<1x2048xf32>, vector<1x2048xf32>, vector<1x2048xf32> -> vector<8x2048xf32>
    %348 = vector.extract_strided_slice %278 {offsets = [0, 0], sizes = [8, 2048], strides = [1, 1]} : vector<64x2048xf32> to vector<8x2048xf32>
    %349 = arith.mulf %348, %347 : vector<8x2048xf32>
    %350 = vector.extract_strided_slice %280 {offsets = [0, 0], sizes = [8, 2048], strides = [1, 1]} : vector<64x2048xf32> to vector<8x2048xf32>
    %351 = arith.addf %349, %350 : vector<8x2048xf32>
    %352 = vector.extract_strided_slice %273 {offsets = [0, 0], sizes = [8, 2048], strides = [1, 1]} : vector<64x2048xf32> to vector<8x2048xf32>
    %353 = arith.mulf %351, %352 : vector<8x2048xf32>
    %354 = vector.extract_strided_slice %353 {offsets = [0, 0], sizes = [8, 1024], strides = [1, 1]} : vector<8x2048xf32> to vector<8x1024xf32>
    %355 = vector.extract_strided_slice %353 {offsets = [0, 1024], sizes = [8, 1024], strides = [1, 1]} : vector<8x2048xf32> to vector<8x1024xf32>
    %356 = arith.addf %354, %355 : vector<8x1024xf32>
    %357 = vector.extract_strided_slice %356 {offsets = [0, 0], sizes = [8, 512], strides = [1, 1]} : vector<8x1024xf32> to vector<8x512xf32>
    %358 = vector.extract_strided_slice %356 {offsets = [0, 512], sizes = [8, 512], strides = [1, 1]} : vector<8x1024xf32> to vector<8x512xf32>
    %359 = arith.addf %357, %358 : vector<8x512xf32>
    %360 = vector.extract_strided_slice %359 {offsets = [0, 0], sizes = [8, 256], strides = [1, 1]} : vector<8x512xf32> to vector<8x256xf32>
    %361 = vector.extract_strided_slice %359 {offsets = [0, 256], sizes = [8, 256], strides = [1, 1]} : vector<8x512xf32> to vector<8x256xf32>
    %362 = arith.addf %360, %361 : vector<8x256xf32>
    %363 = vector.extract_strided_slice %362 {offsets = [0, 0], sizes = [8, 128], strides = [1, 1]} : vector<8x256xf32> to vector<8x128xf32>
    %364 = vector.extract_strided_slice %362 {offsets = [0, 128], sizes = [8, 128], strides = [1, 1]} : vector<8x256xf32> to vector<8x128xf32>
    %365 = arith.addf %363, %364 : vector<8x128xf32>
    %366 = vector.extract_strided_slice %278 {offsets = [8, 0], sizes = [8, 2048], strides = [1, 1]} : vector<64x2048xf32> to vector<8x2048xf32>
    %367 = arith.mulf %366, %351 : vector<8x2048xf32>
    %368 = vector.extract_strided_slice %280 {offsets = [8, 0], sizes = [8, 2048], strides = [1, 1]} : vector<64x2048xf32> to vector<8x2048xf32>
    %369 = arith.addf %367, %368 : vector<8x2048xf32>
    %370 = vector.extract_strided_slice %273 {offsets = [8, 0], sizes = [8, 2048], strides = [1, 1]} : vector<64x2048xf32> to vector<8x2048xf32>
    %371 = arith.mulf %369, %370 : vector<8x2048xf32>
    %372 = vector.extract_strided_slice %371 {offsets = [0, 0], sizes = [8, 1024], strides = [1, 1]} : vector<8x2048xf32> to vector<8x1024xf32>
    %373 = vector.extract_strided_slice %371 {offsets = [0, 1024], sizes = [8, 1024], strides = [1, 1]} : vector<8x2048xf32> to vector<8x1024xf32>
    %374 = arith.addf %372, %373 : vector<8x1024xf32>
    %375 = vector.extract_strided_slice %374 {offsets = [0, 0], sizes = [8, 512], strides = [1, 1]} : vector<8x1024xf32> to vector<8x512xf32>
    %376 = vector.extract_strided_slice %374 {offsets = [0, 512], sizes = [8, 512], strides = [1, 1]} : vector<8x1024xf32> to vector<8x512xf32>
    %377 = arith.addf %375, %376 : vector<8x512xf32>
    %378 = vector.extract_strided_slice %377 {offsets = [0, 0], sizes = [8, 256], strides = [1, 1]} : vector<8x512xf32> to vector<8x256xf32>
    %379 = vector.extract_strided_slice %377 {offsets = [0, 256], sizes = [8, 256], strides = [1, 1]} : vector<8x512xf32> to vector<8x256xf32>
    %380 = arith.addf %378, %379 : vector<8x256xf32>
    %381 = vector.extract_strided_slice %380 {offsets = [0, 0], sizes = [8, 128], strides = [1, 1]} : vector<8x256xf32> to vector<8x128xf32>
    %382 = vector.extract_strided_slice %380 {offsets = [0, 128], sizes = [8, 128], strides = [1, 1]} : vector<8x256xf32> to vector<8x128xf32>
    %383 = arith.addf %381, %382 : vector<8x128xf32>
    %384 = vector.extract_strided_slice %278 {offsets = [16, 0], sizes = [8, 2048], strides = [1, 1]} : vector<64x2048xf32> to vector<8x2048xf32>
    %385 = arith.mulf %384, %369 : vector<8x2048xf32>
    %386 = vector.extract_strided_slice %280 {offsets = [16, 0], sizes = [8, 2048], strides = [1, 1]} : vector<64x2048xf32> to vector<8x2048xf32>
    %387 = arith.addf %385, %386 : vector<8x2048xf32>
    %388 = vector.extract_strided_slice %273 {offsets = [16, 0], sizes = [8, 2048], strides = [1, 1]} : vector<64x2048xf32> to vector<8x2048xf32>
    %389 = arith.mulf %387, %388 : vector<8x2048xf32>
    %390 = vector.extract_strided_slice %389 {offsets = [0, 0], sizes = [8, 1024], strides = [1, 1]} : vector<8x2048xf32> to vector<8x1024xf32>
    %391 = vector.extract_strided_slice %389 {offsets = [0, 1024], sizes = [8, 1024], strides = [1, 1]} : vector<8x2048xf32> to vector<8x1024xf32>
    %392 = arith.addf %390, %391 : vector<8x1024xf32>
    %393 = vector.extract_strided_slice %392 {offsets = [0, 0], sizes = [8, 512], strides = [1, 1]} : vector<8x1024xf32> to vector<8x512xf32>
    %394 = vector.extract_strided_slice %392 {offsets = [0, 512], sizes = [8, 512], strides = [1, 1]} : vector<8x1024xf32> to vector<8x512xf32>
    %395 = arith.addf %393, %394 : vector<8x512xf32>
    %396 = vector.extract_strided_slice %395 {offsets = [0, 0], sizes = [8, 256], strides = [1, 1]} : vector<8x512xf32> to vector<8x256xf32>
    %397 = vector.extract_strided_slice %395 {offsets = [0, 256], sizes = [8, 256], strides = [1, 1]} : vector<8x512xf32> to vector<8x256xf32>
    %398 = arith.addf %396, %397 : vector<8x256xf32>
    %399 = vector.extract_strided_slice %398 {offsets = [0, 0], sizes = [8, 128], strides = [1, 1]} : vector<8x256xf32> to vector<8x128xf32>
    %400 = vector.extract_strided_slice %398 {offsets = [0, 128], sizes = [8, 128], strides = [1, 1]} : vector<8x256xf32> to vector<8x128xf32>
    %401 = arith.addf %399, %400 : vector<8x128xf32>
    %402 = vector.extract_strided_slice %278 {offsets = [24, 0], sizes = [8, 2048], strides = [1, 1]} : vector<64x2048xf32> to vector<8x2048xf32>
    %403 = arith.mulf %402, %387 : vector<8x2048xf32>
    %404 = vector.extract_strided_slice %280 {offsets = [24, 0], sizes = [8, 2048], strides = [1, 1]} : vector<64x2048xf32> to vector<8x2048xf32>
    %405 = arith.addf %403, %404 : vector<8x2048xf32>
    %406 = vector.extract_strided_slice %273 {offsets = [24, 0], sizes = [8, 2048], strides = [1, 1]} : vector<64x2048xf32> to vector<8x2048xf32>
    %407 = arith.mulf %405, %406 : vector<8x2048xf32>
    %408 = vector.extract_strided_slice %407 {offsets = [0, 0], sizes = [8, 1024], strides = [1, 1]} : vector<8x2048xf32> to vector<8x1024xf32>
    %409 = vector.extract_strided_slice %407 {offsets = [0, 1024], sizes = [8, 1024], strides = [1, 1]} : vector<8x2048xf32> to vector<8x1024xf32>
    %410 = arith.addf %408, %409 : vector<8x1024xf32>
    %411 = vector.extract_strided_slice %410 {offsets = [0, 0], sizes = [8, 512], strides = [1, 1]} : vector<8x1024xf32> to vector<8x512xf32>
    %412 = vector.extract_strided_slice %410 {offsets = [0, 512], sizes = [8, 512], strides = [1, 1]} : vector<8x1024xf32> to vector<8x512xf32>
    %413 = arith.addf %411, %412 : vector<8x512xf32>
    %414 = vector.extract_strided_slice %413 {offsets = [0, 0], sizes = [8, 256], strides = [1, 1]} : vector<8x512xf32> to vector<8x256xf32>
    %415 = vector.extract_strided_slice %413 {offsets = [0, 256], sizes = [8, 256], strides = [1, 1]} : vector<8x512xf32> to vector<8x256xf32>
    %416 = arith.addf %414, %415 : vector<8x256xf32>
    %417 = vector.extract_strided_slice %416 {offsets = [0, 0], sizes = [8, 128], strides = [1, 1]} : vector<8x256xf32> to vector<8x128xf32>
    %418 = vector.extract_strided_slice %416 {offsets = [0, 128], sizes = [8, 128], strides = [1, 1]} : vector<8x256xf32> to vector<8x128xf32>
    %419 = arith.addf %417, %418 : vector<8x128xf32>
    %420 = vector.extract_strided_slice %278 {offsets = [32, 0], sizes = [8, 2048], strides = [1, 1]} : vector<64x2048xf32> to vector<8x2048xf32>
    %421 = arith.mulf %420, %405 : vector<8x2048xf32>
    %422 = vector.extract_strided_slice %280 {offsets = [32, 0], sizes = [8, 2048], strides = [1, 1]} : vector<64x2048xf32> to vector<8x2048xf32>
    %423 = arith.addf %421, %422 : vector<8x2048xf32>
    %424 = vector.extract_strided_slice %273 {offsets = [32, 0], sizes = [8, 2048], strides = [1, 1]} : vector<64x2048xf32> to vector<8x2048xf32>
    %425 = arith.mulf %423, %424 : vector<8x2048xf32>
    %426 = vector.extract_strided_slice %425 {offsets = [0, 0], sizes = [8, 1024], strides = [1, 1]} : vector<8x2048xf32> to vector<8x1024xf32>
    %427 = vector.extract_strided_slice %425 {offsets = [0, 1024], sizes = [8, 1024], strides = [1, 1]} : vector<8x2048xf32> to vector<8x1024xf32>
    %428 = arith.addf %426, %427 : vector<8x1024xf32>
    %429 = vector.extract_strided_slice %428 {offsets = [0, 0], sizes = [8, 512], strides = [1, 1]} : vector<8x1024xf32> to vector<8x512xf32>
    %430 = vector.extract_strided_slice %428 {offsets = [0, 512], sizes = [8, 512], strides = [1, 1]} : vector<8x1024xf32> to vector<8x512xf32>
    %431 = arith.addf %429, %430 : vector<8x512xf32>
    %432 = vector.extract_strided_slice %431 {offsets = [0, 0], sizes = [8, 256], strides = [1, 1]} : vector<8x512xf32> to vector<8x256xf32>
    %433 = vector.extract_strided_slice %431 {offsets = [0, 256], sizes = [8, 256], strides = [1, 1]} : vector<8x512xf32> to vector<8x256xf32>
    %434 = arith.addf %432, %433 : vector<8x256xf32>
    %435 = vector.extract_strided_slice %434 {offsets = [0, 0], sizes = [8, 128], strides = [1, 1]} : vector<8x256xf32> to vector<8x128xf32>
    %436 = vector.extract_strided_slice %434 {offsets = [0, 128], sizes = [8, 128], strides = [1, 1]} : vector<8x256xf32> to vector<8x128xf32>
    %437 = arith.addf %435, %436 : vector<8x128xf32>
    %438 = vector.extract_strided_slice %278 {offsets = [40, 0], sizes = [8, 2048], strides = [1, 1]} : vector<64x2048xf32> to vector<8x2048xf32>
    %439 = arith.mulf %438, %423 : vector<8x2048xf32>
    %440 = vector.extract_strided_slice %280 {offsets = [40, 0], sizes = [8, 2048], strides = [1, 1]} : vector<64x2048xf32> to vector<8x2048xf32>
    %441 = arith.addf %439, %440 : vector<8x2048xf32>
    %442 = vector.extract_strided_slice %273 {offsets = [40, 0], sizes = [8, 2048], strides = [1, 1]} : vector<64x2048xf32> to vector<8x2048xf32>
    %443 = arith.mulf %441, %442 : vector<8x2048xf32>
    %444 = vector.extract_strided_slice %443 {offsets = [0, 0], sizes = [8, 1024], strides = [1, 1]} : vector<8x2048xf32> to vector<8x1024xf32>
    %445 = vector.extract_strided_slice %443 {offsets = [0, 1024], sizes = [8, 1024], strides = [1, 1]} : vector<8x2048xf32> to vector<8x1024xf32>
    %446 = arith.addf %444, %445 : vector<8x1024xf32>
    %447 = vector.extract_strided_slice %446 {offsets = [0, 0], sizes = [8, 512], strides = [1, 1]} : vector<8x1024xf32> to vector<8x512xf32>
    %448 = vector.extract_strided_slice %446 {offsets = [0, 512], sizes = [8, 512], strides = [1, 1]} : vector<8x1024xf32> to vector<8x512xf32>
    %449 = arith.addf %447, %448 : vector<8x512xf32>
    %450 = vector.extract_strided_slice %449 {offsets = [0, 0], sizes = [8, 256], strides = [1, 1]} : vector<8x512xf32> to vector<8x256xf32>
    %451 = vector.extract_strided_slice %449 {offsets = [0, 256], sizes = [8, 256], strides = [1, 1]} : vector<8x512xf32> to vector<8x256xf32>
    %452 = arith.addf %450, %451 : vector<8x256xf32>
    %453 = vector.extract_strided_slice %452 {offsets = [0, 0], sizes = [8, 128], strides = [1, 1]} : vector<8x256xf32> to vector<8x128xf32>
    %454 = vector.extract_strided_slice %452 {offsets = [0, 128], sizes = [8, 128], strides = [1, 1]} : vector<8x256xf32> to vector<8x128xf32>
    %455 = arith.addf %453, %454 : vector<8x128xf32>
    %456 = vector.extract_strided_slice %278 {offsets = [48, 0], sizes = [8, 2048], strides = [1, 1]} : vector<64x2048xf32> to vector<8x2048xf32>
    %457 = arith.mulf %456, %441 : vector<8x2048xf32>
    %458 = vector.extract_strided_slice %280 {offsets = [48, 0], sizes = [8, 2048], strides = [1, 1]} : vector<64x2048xf32> to vector<8x2048xf32>
    %459 = arith.addf %457, %458 : vector<8x2048xf32>
    %460 = vector.extract_strided_slice %273 {offsets = [48, 0], sizes = [8, 2048], strides = [1, 1]} : vector<64x2048xf32> to vector<8x2048xf32>
    %461 = arith.mulf %459, %460 : vector<8x2048xf32>
    %462 = vector.extract_strided_slice %461 {offsets = [0, 0], sizes = [8, 1024], strides = [1, 1]} : vector<8x2048xf32> to vector<8x1024xf32>
    %463 = vector.extract_strided_slice %461 {offsets = [0, 1024], sizes = [8, 1024], strides = [1, 1]} : vector<8x2048xf32> to vector<8x1024xf32>
    %464 = arith.addf %462, %463 : vector<8x1024xf32>
    %465 = vector.extract_strided_slice %464 {offsets = [0, 0], sizes = [8, 512], strides = [1, 1]} : vector<8x1024xf32> to vector<8x512xf32>
    %466 = vector.extract_strided_slice %464 {offsets = [0, 512], sizes = [8, 512], strides = [1, 1]} : vector<8x1024xf32> to vector<8x512xf32>
    %467 = arith.addf %465, %466 : vector<8x512xf32>
    %468 = vector.extract_strided_slice %467 {offsets = [0, 0], sizes = [8, 256], strides = [1, 1]} : vector<8x512xf32> to vector<8x256xf32>
    %469 = vector.extract_strided_slice %467 {offsets = [0, 256], sizes = [8, 256], strides = [1, 1]} : vector<8x512xf32> to vector<8x256xf32>
    %470 = arith.addf %468, %469 : vector<8x256xf32>
    %471 = vector.extract_strided_slice %470 {offsets = [0, 0], sizes = [8, 128], strides = [1, 1]} : vector<8x256xf32> to vector<8x128xf32>
    %472 = vector.extract_strided_slice %470 {offsets = [0, 128], sizes = [8, 128], strides = [1, 1]} : vector<8x256xf32> to vector<8x128xf32>
    %473 = arith.addf %471, %472 : vector<8x128xf32>
    %474 = vector.extract_strided_slice %278 {offsets = [56, 0], sizes = [8, 2048], strides = [1, 1]} : vector<64x2048xf32> to vector<8x2048xf32>
    %475 = arith.mulf %474, %459 : vector<8x2048xf32>
    %476 = vector.extract_strided_slice %280 {offsets = [56, 0], sizes = [8, 2048], strides = [1, 1]} : vector<64x2048xf32> to vector<8x2048xf32>
    %477 = arith.addf %475, %476 : vector<8x2048xf32>
    %478 = vector.extract_strided_slice %273 {offsets = [56, 0], sizes = [8, 2048], strides = [1, 1]} : vector<64x2048xf32> to vector<8x2048xf32>
    %479 = arith.mulf %477, %478 : vector<8x2048xf32>
    %480 = vector.extract_strided_slice %479 {offsets = [0, 0], sizes = [8, 1024], strides = [1, 1]} : vector<8x2048xf32> to vector<8x1024xf32>
    %481 = vector.extract_strided_slice %479 {offsets = [0, 1024], sizes = [8, 1024], strides = [1, 1]} : vector<8x2048xf32> to vector<8x1024xf32>
    %482 = arith.addf %480, %481 : vector<8x1024xf32>
    %483 = vector.extract_strided_slice %482 {offsets = [0, 0], sizes = [8, 512], strides = [1, 1]} : vector<8x1024xf32> to vector<8x512xf32>
    %484 = vector.extract_strided_slice %482 {offsets = [0, 512], sizes = [8, 512], strides = [1, 1]} : vector<8x1024xf32> to vector<8x512xf32>
    %485 = arith.addf %483, %484 : vector<8x512xf32>
    %486 = vector.extract_strided_slice %485 {offsets = [0, 0], sizes = [8, 256], strides = [1, 1]} : vector<8x512xf32> to vector<8x256xf32>
    %487 = vector.extract_strided_slice %485 {offsets = [0, 256], sizes = [8, 256], strides = [1, 1]} : vector<8x512xf32> to vector<8x256xf32>
    %488 = arith.addf %486, %487 : vector<8x256xf32>
    %489 = vector.extract_strided_slice %488 {offsets = [0, 0], sizes = [8, 128], strides = [1, 1]} : vector<8x256xf32> to vector<8x128xf32>
    %490 = vector.extract_strided_slice %488 {offsets = [0, 128], sizes = [8, 128], strides = [1, 1]} : vector<8x256xf32> to vector<8x128xf32>
    %491 = arith.addf %489, %490 : vector<8x128xf32>
    %492 = tpu.concatenate %365, %383, %401, %419, %437, %455, %473, %491 in 0 : vector<8x128xf32>, vector<8x128xf32>, vector<8x128xf32>, vector<8x128xf32>, vector<8x128xf32>, vector<8x128xf32>, vector<8x128xf32>, vector<8x128xf32> -> vector<64x128xf32>
    %cst_152 = arith.constant dense<0.000000e+00> : vector<64x128xf32>
    %493 = tpu.matmul %195, %492, %cst_152 {dimension_numbers = #tpu.dot_dimension_numbers<[1], [0], [0], [1], [0, 0, 1, 1], [], []>} : vector<64x64xf32>, vector<64x128xf32>, vector<64x128xf32> -> vector<64x128xf32>
    %c0_153 = arith.constant 0 : index
    %c0_154 = arith.constant 0 : index
    %494 = vector.load %arg17[%c0_153, %c0_154] : memref<1x128xf32, #tpu.memory_space<vmem>>, vector<1x128xf32>
    %495 = vector.broadcast %494 : vector<1x128xf32> to vector<64x128xf32>
    %496 = arith.mulf %248, %495 : vector<64x128xf32>
    %497 = arith.addf %493, %496 : vector<64x128xf32>
    %cst_155 = arith.constant 0.000000e+00 : f32
    %498 = vector.broadcast %cst_155 : f32 to vector<64x128xf32>
    %499 = arith.subf %498, %201 : vector<64x128xf32>
    %500 = math.exp %499 : vector<64x128xf32>
    %cst_156 = arith.constant 1.000000e+00 : f32
    %501 = vector.broadcast %cst_156 : f32 to vector<64x128xf32>
    %502 = arith.addf %501, %500 : vector<64x128xf32>
    %503 = tpu.reciprocal %502 {approx = true} : vector<64x128xf32> -> vector<64x128xf32>
    %504 = arith.mulf %201, %503 : vector<64x128xf32>
    %505 = arith.mulf %497, %504 : vector<64x128xf32>
    %c0_157 = arith.constant 0 : index
    %c0_158 = arith.constant 0 : index
    %506 = vector.load %arg18[%c0_157, %c0_158] : memref<128x64xf32, #tpu.memory_space<vmem>>, vector<128x64xf32>
    %cst_159 = arith.constant dense<0.000000e+00> : vector<64x64xf32>
    %507 = tpu.matmul %505, %506, %cst_159 {dimension_numbers = #tpu.dot_dimension_numbers<[1], [0], [0], [1], [0, 0, 1, 1], [], []>} : vector<64x128xf32>, vector<128x64xf32>, vector<64x64xf32> -> vector<64x64xf32>
    %508 = vector.extract_strided_slice %507 {offsets = [0, 0], sizes = [64, 32], strides = [1, 1]} : vector<64x64xf32> to vector<64x32xf32>
    %509 = vector.extract_strided_slice %507 {offsets = [0, 32], sizes = [64, 32], strides = [1, 1]} : vector<64x64xf32> to vector<64x32xf32>
    %cst_160 = arith.constant dense<0.000000e+00> : vector<64x32xf32>
    %510 = tpu.matmul %194, %509, %cst_160 {dimension_numbers = #tpu.dot_dimension_numbers<[1], [0], [0], [1], [0, 0, 1, 1], [], []>} : vector<64x64xf32>, vector<64x32xf32>, vector<64x32xf32> -> vector<64x32xf32>
    %511 = tpu.concatenate %508, %510 in 1 : vector<64x32xf32>, vector<64x32xf32> -> vector<64x64xf32>
    %c0_161 = arith.constant 0 : index
    %c0_162 = arith.constant 0 : index
    %512 = vector.load %arg19[%c0_161, %c0_162] : memref<64x64xf32, #tpu.memory_space<vmem>>, vector<64x64xf32>
    %cst_163 = arith.constant dense<0.000000e+00> : vector<64x64xf32>
    %513 = tpu.matmul %511, %512, %cst_163 {dimension_numbers = #tpu.dot_dimension_numbers<[1], [0], [0], [1], [0, 0, 1, 1], [], []>} : vector<64x64xf32>, vector<64x64xf32>, vector<64x64xf32> -> vector<64x64xf32>
    %c0_164 = arith.constant 0 : index
    %c0_165 = arith.constant 0 : index
    %514 = vector.load %arg20[%c0_164, %c0_165] : memref<1x64xf32, #tpu.memory_space<vmem>>, vector<1x64xf32>
    %515 = vector.broadcast %514 : vector<1x64xf32> to vector<64x64xf32>
    %516 = arith.addf %513, %515 : vector<64x64xf32>
    %cst_166 = arith.constant 0.000000e+00 : f32
    %517 = vector.broadcast %cst_166 : f32 to vector<64x64xf32>
    %518 = arith.subf %517, %516 : vector<64x64xf32>
    %519 = math.exp %518 : vector<64x64xf32>
    %cst_167 = arith.constant 1.000000e+00 : f32
    %520 = vector.broadcast %cst_167 : f32 to vector<64x64xf32>
    %521 = arith.addf %520, %519 : vector<64x64xf32>
    %522 = tpu.reciprocal %521 {approx = true} : vector<64x64xf32> -> vector<64x64xf32>
    %523 = arith.mulf %516, %522 : vector<64x64xf32>
    %524 = arith.mulf %523, %511 : vector<64x64xf32>
    %c0_168 = arith.constant 0 : index
    %c0_169 = arith.constant 0 : index
    %525 = vector.load %arg21[%c0_168, %c0_169] : memref<64x64xf32, #tpu.memory_space<vmem>>, vector<64x64xf32>
    %cst_170 = arith.constant dense<0.000000e+00> : vector<64x64xf32>
    %526 = tpu.matmul %511, %525, %cst_170 {dimension_numbers = #tpu.dot_dimension_numbers<[1], [0], [0], [1], [0, 0, 1, 1], [], []>} : vector<64x64xf32>, vector<64x64xf32>, vector<64x64xf32> -> vector<64x64xf32>
    %527 = arith.addf %526, %524 : vector<64x64xf32>
    %cst_171 = arith.constant dense<0.000000e+00> : vector<64xf32>
    %528 = vector.multi_reduction <add>, %527, %cst_171 [1] : vector<64x64xf32> to vector<64xf32>
    %529 = vector.shape_cast %528 : vector<64xf32> to vector<64x1xf32>
    %cst_172 = arith.constant 6.400000e+01 : f32
    %530 = vector.broadcast %cst_172 : f32 to vector<64x1xf32>
    %531 = arith.divf %529, %530 : vector<64x1xf32>
    %532 = vector.broadcast %531 : vector<64x1xf32> to vector<64x64xf32>
    %533 = arith.subf %527, %532 : vector<64x64xf32>
    %534 = vector.broadcast %531 : vector<64x1xf32> to vector<64x64xf32>
    %535 = arith.subf %527, %534 : vector<64x64xf32>
    %536 = arith.mulf %533, %535 : vector<64x64xf32>
    %cst_173 = arith.constant dense<0.000000e+00> : vector<64xf32>
    %537 = vector.multi_reduction <add>, %536, %cst_173 [1] : vector<64x64xf32> to vector<64xf32>
    %538 = vector.shape_cast %537 : vector<64xf32> to vector<64x1xf32>
    %cst_174 = arith.constant 6.400000e+01 : f32
    %539 = vector.broadcast %cst_174 : f32 to vector<64x1xf32>
    %540 = arith.divf %538, %539 : vector<64x1xf32>
    %541 = vector.broadcast %531 : vector<64x1xf32> to vector<64x64xf32>
    %542 = arith.subf %527, %541 : vector<64x64xf32>
    %cst_175 = arith.constant 9.99999974E-6 : f32
    %543 = vector.broadcast %cst_175 : f32 to vector<64x1xf32>
    %544 = arith.addf %540, %543 : vector<64x1xf32>
    %545 = math.rsqrt %544 : vector<64x1xf32>
    %546 = vector.broadcast %545 : vector<64x1xf32> to vector<64x64xf32>
    %547 = arith.mulf %542, %546 : vector<64x64xf32>
    %c0_176 = arith.constant 0 : index
    %c0_177 = arith.constant 0 : index
    %548 = vector.load %arg22[%c0_176, %c0_177] : memref<1x64xf32, #tpu.memory_space<vmem>>, vector<1x64xf32>
    %549 = vector.broadcast %548 : vector<1x64xf32> to vector<64x64xf32>
    %550 = arith.mulf %547, %549 : vector<64x64xf32>
    %c0_178 = arith.constant 0 : index
    %c0_179 = arith.constant 0 : index
    %551 = vector.load %arg23[%c0_178, %c0_179] : memref<1x64xf32, #tpu.memory_space<vmem>>, vector<1x64xf32>
    %552 = vector.broadcast %551 : vector<1x64xf32> to vector<64x64xf32>
    %553 = arith.addf %550, %552 : vector<64x64xf32>
    %c0_180 = arith.constant 0 : index
    %c0_181 = arith.constant 0 : index
    %554 = vector.load %arg24[%c0_180, %c0_181] : memref<64x32xf32, #tpu.memory_space<vmem>>, vector<64x32xf32>
    %cst_182 = arith.constant dense<0.000000e+00> : vector<64x32xf32>
    %555 = tpu.matmul %553, %554, %cst_182 {dimension_numbers = #tpu.dot_dimension_numbers<[1], [0], [0], [1], [0, 0, 1, 1], [], []>} : vector<64x64xf32>, vector<64x32xf32>, vector<64x32xf32> -> vector<64x32xf32>
    %556 = vector.broadcast %4 : vector<64x1xf32> to vector<64x32xf32>
    %557 = arith.mulf %555, %556 : vector<64x32xf32>
    %558 = tpu.transpose %557, [1, 0] : vector<64x32xf32> -> vector<32x64xf32>
    %c0_183 = arith.constant 0 : index
    %c0_184 = arith.constant 0 : index
    %c0_185 = arith.constant 0 : index
    %559 = vector.load %arg25[%c0_183, %c0_184, %c0_185] : memref<1x32x64xf32, #tpu.memory_space<vmem>>, vector<1x32x64xf32>
    %560 = vector.shape_cast %559 : vector<1x32x64xf32> to vector<32x64xf32>
    %561 = vector.shape_cast %558 : vector<32x64xf32> to vector<1x32x64xf32>
    tpu.vector_store %arg25[%c0_183, %c0_184, %c0_185], %561 {strides = array<i32>} : memref<1x32x64xf32, #tpu.memory_space<vmem>>, vector<1x32x64xf32>,
    return
  }
  func.func @transform_0(%arg0: i32) -> (i32, i32, i32) {
    %c0_i32 = arith.constant 0 : i32
    %c0_i32_0 = arith.constant 0 : i32
    %c0_i32_1 = arith.constant 0 : i32
    return %arg0, %c0_i32, %c0_i32_0 : i32, i32, i32
  }
  func.func @transform_1(%arg0: i32) -> (i32, i32, i32) {
    %c0_i32 = arith.constant 0 : i32
    %c0_i32_0 = arith.constant 0 : i32
    %c0_i32_1 = arith.constant 0 : i32
    return %arg0, %c0_i32, %c0_i32_0 : i32, i32, i32
  }
  func.func @transform_2(%arg0: i32) -> (i32, i32, i32) {
    %c0_i32 = arith.constant 0 : i32
    %c0_i32_0 = arith.constant 0 : i32
    %c0_i32_1 = arith.constant 0 : i32
    %c0_i32_2 = arith.constant 0 : i32
    return %c0_i32, %c0_i32_0, %c0_i32_1 : i32, i32, i32
  }
  func.func @transform_3(%arg0: i32) -> (i32, i32, i32) {
    %c0_i32 = arith.constant 0 : i32
    %c0_i32_0 = arith.constant 0 : i32
    %c0_i32_1 = arith.constant 0 : i32
    %c0_i32_2 = arith.constant 0 : i32
    return %c0_i32, %c0_i32_0, %c0_i32_1 : i32, i32, i32
  }
  func.func @transform_4(%arg0: i32) -> (i32, i32) {
    %c0_i32 = arith.constant 0 : i32
    %c0_i32_0 = arith.constant 0 : i32
    %c0_i32_1 = arith.constant 0 : i32
    return %c0_i32, %c0_i32_0 : i32, i32
  }
  func.func @transform_5(%arg0: i32) -> (i32, i32, i32) {
    %c0_i32 = arith.constant 0 : i32
    %c0_i32_0 = arith.constant 0 : i32
    %c0_i32_1 = arith.constant 0 : i32
    %c0_i32_2 = arith.constant 0 : i32
    return %c0_i32, %c0_i32_0, %c0_i32_1 : i32, i32, i32
  }
  func.func @transform_6(%arg0: i32) -> (i32, i32, i32) {
    %c0_i32 = arith.constant 0 : i32
    %c0_i32_0 = arith.constant 0 : i32
    %c0_i32_1 = arith.constant 0 : i32
    %c0_i32_2 = arith.constant 0 : i32
    return %c0_i32, %c0_i32_0, %c0_i32_1 : i32, i32, i32
  }
  func.func @transform_7(%arg0: i32) -> (i32, i32) {
    %c0_i32 = arith.constant 0 : i32
    %c0_i32_0 = arith.constant 0 : i32
    %c0_i32_1 = arith.constant 0 : i32
    return %c0_i32, %c0_i32_0 : i32, i32
  }
  func.func @transform_8(%arg0: i32) -> (i32, i32) {
    %c0_i32 = arith.constant 0 : i32
    %c0_i32_0 = arith.constant 0 : i32
    %c0_i32_1 = arith.constant 0 : i32
    return %c0_i32, %c0_i32_0 : i32, i32
  }
  func.func @transform_9(%arg0: i32) -> (i32, i32) {
    %c0_i32 = arith.constant 0 : i32
    %c0_i32_0 = arith.constant 0 : i32
    %c0_i32_1 = arith.constant 0 : i32
    return %c0_i32, %c0_i32_0 : i32, i32
  }
  func.func @transform_10(%arg0: i32) -> (i32, i32, i32) {
    %c0_i32 = arith.constant 0 : i32
    %c0_i32_0 = arith.constant 0 : i32
    %c0_i32_1 = arith.constant 0 : i32
    %c0_i32_2 = arith.constant 0 : i32
    return %c0_i32, %c0_i32_0, %c0_i32_1 : i32, i32, i32
  }
  func.func @transform_11(%arg0: i32) -> (i32, i32) {
    %c0_i32 = arith.constant 0 : i32
    %c0_i32_0 = arith.constant 0 : i32
    %c0_i32_1 = arith.constant 0 : i32
    return %c0_i32, %c0_i32_0 : i32, i32
  }
  func.func @transform_12(%arg0: i32) -> (i32, i32) {
    %c0_i32 = arith.constant 0 : i32
    %c0_i32_0 = arith.constant 0 : i32
    %c0_i32_1 = arith.constant 0 : i32
    return %c0_i32, %c0_i32_0 : i32, i32
  }
  func.func @transform_13(%arg0: i32) -> (i32, i32) {
    %c0_i32 = arith.constant 0 : i32
    %c0_i32_0 = arith.constant 0 : i32
    %c0_i32_1 = arith.constant 0 : i32
    return %c0_i32, %c0_i32_0 : i32, i32
  }
  func.func @transform_14(%arg0: i32) -> (i32, i32) {
    %c0_i32 = arith.constant 0 : i32
    %c0_i32_0 = arith.constant 0 : i32
    %c0_i32_1 = arith.constant 0 : i32
    return %c0_i32, %c0_i32_0 : i32, i32
  }
  func.func @transform_15(%arg0: i32) -> (i32, i32) {
    %c0_i32 = arith.constant 0 : i32
    %c0_i32_0 = arith.constant 0 : i32
    %c0_i32_1 = arith.constant 0 : i32
    return %c0_i32, %c0_i32_0 : i32, i32
  }
  func.func @transform_16(%arg0: i32) -> (i32, i32) {
    %c0_i32 = arith.constant 0 : i32
    %c0_i32_0 = arith.constant 0 : i32
    %c0_i32_1 = arith.constant 0 : i32
    return %c0_i32, %c0_i32_0 : i32, i32
  }
  func.func @transform_17(%arg0: i32) -> (i32, i32) {
    %c0_i32 = arith.constant 0 : i32
    %c0_i32_0 = arith.constant 0 : i32
    %c0_i32_1 = arith.constant 0 : i32
    return %c0_i32, %c0_i32_0 : i32, i32
  }
  func.func @transform_18(%arg0: i32) -> (i32, i32) {
    %c0_i32 = arith.constant 0 : i32
    %c0_i32_0 = arith.constant 0 : i32
    %c0_i32_1 = arith.constant 0 : i32
    return %c0_i32, %c0_i32_0 : i32, i32
  }
  func.func @transform_19(%arg0: i32) -> (i32, i32) {
    %c0_i32 = arith.constant 0 : i32
    %c0_i32_0 = arith.constant 0 : i32
    %c0_i32_1 = arith.constant 0 : i32
    return %c0_i32, %c0_i32_0 : i32, i32
  }
  func.func @transform_20(%arg0: i32) -> (i32, i32) {
    %c0_i32 = arith.constant 0 : i32
    %c0_i32_0 = arith.constant 0 : i32
    %c0_i32_1 = arith.constant 0 : i32
    return %c0_i32, %c0_i32_0 : i32, i32
  }
  func.func @transform_21(%arg0: i32) -> (i32, i32) {
    %c0_i32 = arith.constant 0 : i32
    %c0_i32_0 = arith.constant 0 : i32
    %c0_i32_1 = arith.constant 0 : i32
    return %c0_i32, %c0_i32_0 : i32, i32
  }
  func.func @transform_22(%arg0: i32) -> (i32, i32) {
    %c0_i32 = arith.constant 0 : i32
    %c0_i32_0 = arith.constant 0 : i32
    %c0_i32_1 = arith.constant 0 : i32
    return %c0_i32, %c0_i32_0 : i32, i32
  }
  func.func @transform_23(%arg0: i32) -> (i32, i32) {
    %c0_i32 = arith.constant 0 : i32
    %c0_i32_0 = arith.constant 0 : i32
    %c0_i32_1 = arith.constant 0 : i32
    return %c0_i32, %c0_i32_0 : i32, i32
  }
  func.func @transform_24(%arg0: i32) -> (i32, i32, i32) {
    %c0_i32 = arith.constant 0 : i32
    %c0_i32_0 = arith.constant 0 : i32
    %c0_i32_1 = arith.constant 0 : i32
    return %arg0, %c0_i32, %c0_i32_0 : i32, i32, i32
  }
}

</mosaic_0001>

<llo_original>
// kernel: tpu_custom_call.1
$region0: #{tpu_custom_call.1}
  #allocation0 [shape = 'u32[]', space=smem, size = 0x4, offset = 0x4, fixed_abs, tag = 'smem constant byte address 0x4 - core index']
  #allocation1 [shape = 'u32[144,128]{1,0:T(1,128)}', space=vmem, size = 0x12000, scoped, tag = 'internal scratch']
  %s0 = inlined_call_operand.vmem [shape: f32[2,32,64], index: 0, kind: input, shape index: {}]
  %s1 = inlined_call_operand.vmem [shape: f32[2,64,1], index: 1, kind: input, shape index: {}]
  %s2 = inlined_call_operand.vmem [shape: f32[4,96,32], index: 2, kind: input, shape index: {}]
  %s3 = inlined_call_operand.hbm [shape: f32[4,1,32], index: 3, kind: input, shape index: {}]
  %s4 = inlined_call_operand.vmem [shape: f32[32,32], index: 4, kind: input, shape index: {}]
  %s5 = inlined_call_operand.hbm [shape: f32[4,1,32], index: 5, kind: input, shape index: {}]
  %s6 = inlined_call_operand.hbm [shape: f32[4,1,32], index: 6, kind: input, shape index: {}]
  %s7 = inlined_call_operand.vmem [shape: f32[64,64], index: 7, kind: input, shape index: {}]
  %s8 = inlined_call_operand.vmem [shape: f32[64,64], index: 8, kind: input, shape index: {}]
  %s9 = inlined_call_operand.vmem [shape: f32[64,256], index: 9, kind: input, shape index: {}]
  %s10 = inlined_call_operand.vmem [shape: f32[4,1,128], index: 10, kind: input, shape index: {}]
  %s11 = inlined_call_operand.vmem [shape: f32[1,128], index: 11, kind: input, shape index: {}]
  %s12 = inlined_call_operand.vmem [shape: f32[128,192], index: 12, kind: input, shape index: {}]
  %s13 = inlined_call_operand.vmem [shape: f32[1,128], index: 13, kind: input, shape index: {}]
  %s14 = inlined_call_operand.vmem [shape: f32[1,2048], index: 14, kind: input, shape index: {}]
  %s15 = inlined_call_operand.vmem [shape: f32[32,2048], index: 15, kind: input, shape index: {}]
  %s16 = inlined_call_operand.vmem [shape: f32[1,128], index: 16, kind: input, shape index: {}]
  %s17 = inlined_call_operand.vmem [shape: f32[128,64], index: 17, kind: input, shape index: {}]
  %s18 = inlined_call_operand.vmem [shape: f32[64,64], index: 18, kind: input, shape index: {}]
  %s19 = inlined_call_operand.vmem [shape: f32[1,64], index: 19, kind: input, shape index: {}]
  %s20 = inlined_call_operand.vmem [shape: f32[64,64], index: 20, kind: input, shape index: {}]
  %s21 = inlined_call_operand.vmem [shape: f32[1,64], index: 21, kind: input, shape index: {}]
  %s22 = inlined_call_operand.vmem [shape: f32[1,64], index: 22, kind: input, shape index: {}]
  %s23 = inlined_call_operand.vmem [shape: f32[64,32], index: 23, kind: input, shape index: {}]
  %s24 = inlined_call_operand.hbm [shape: f32[2,32,64], index: 24, kind: output, shape index: {}]
  %s25 = sld [smem:[#allocation0]]
  $region141: #{tpu_custom_call.1} parent=0
    _
  %s27 = ssub.s32 1, %s25
  %s28 = scalar_select 0, %s27, %s25
  $region1: #{tpu_custom_call.1} parent=0
    #allocation2 [shape = 'u8[2048]{0}', space=vmem, size = 0x800, scoped, tag = 'input window, operand 3, single buffered']
    #allocation3 [shape = 's32[2]{0}', space=sflag, size = 0x8, scoped, tag = 'scoped memory for tpu_custom_call.1']
    #allocation4 [shape = 's32[2]{0}', space=sflag, size = 0x8, scoped, tag = 'scoped memory for tpu_custom_call.1']
    #allocation5 [shape = 'u8[2048]{0}', space=vmem, size = 0x800, scoped, tag = 'input window, operand 5, single buffered']
    #allocation6 [shape = 's32[1]{0}', space=sflag, size = 0x4, scoped, tag = 'scoped memory for tpu_custom_call.1']
    #allocation7 [shape = 'u8[2048]{0}', space=vmem, size = 0x800, scoped, tag = 'input window, operand 6, single buffered']
    #allocation8 [shape = 'u8[32768]{0}', space=vmem, size = 0x8000, scoped, tag = 'output window, operand 0']
    %29 = vsyncpa [#allocation3], 0
    %30 = vsyncpa [#allocation6], 0
    %31 = vsyncpa [#allocation4], 0
    %s32 = scalar_lea.sflag [#allocation4], 1
    %33 = vsyncpa %s32, 0
    loop: start=0, step=1, limit=4
    $region2: #{tpu_custom_call.1} parent=1 // loop_pre_header
      _
    $region3: #{tpu_custom_call.1} parent=1 // loop_header
      %s35 = sphi 0, %s39
      %p36 = scmp.ge.s32.totalorder %s35, 4
      %s45 = sphi 0, %s47
      %s48 = sphi 0, %s45
      %s49 = sphi 0, %s48
      %s65 = sphi 0, %s49
      %s71 = sphi 0, %s73
      %s74 = sphi 0, %s71
      %s75 = sphi 0, %s74
      %s91 = sphi 0, %s75
      %s95 = sphi 0, %s95
      %s97 = sphi 0, %s95
      %s98 = sphi 0, %s97
      %s112 = sphi 0, %s98
      %s116 = sphi 0, %s116
      %s118 = sphi 0, %s116
      %s119 = sphi 0, %s118
      %s133 = sphi 0, %s119
      %s137 = sphi 0, %s137
      %s139 = sphi 0, %s137
      %s140 = sphi 0, %s139
      %s154 = sphi 0, %s140
      %s158 = sphi 0, %s158
      %s160 = sphi 0, %s158
      %s161 = sphi 0, %s160
      %s175 = sphi 0, %s161
      %s179 = sphi 0, %s179
      %s181 = sphi 0, %s179
      %s182 = sphi 0, %s181
      %s196 = sphi 0, %s182
      %s200 = sphi 0, %s200
      %s202 = sphi 0, %s200
      %s203 = sphi 0, %s202
      %s217 = sphi 0, %s203
      %s221 = sphi 0, %s221
      %s223 = sphi 0, %s221
      %s224 = sphi 0, %s223
      %s238 = sphi 0, %s224
      %s242 = sphi 0, %s242
      %s244 = sphi 0, %s242
      %s245 = sphi 0, %s244
      %s259 = sphi 0, %s245
      %s263 = sphi 0, %s263
      %s265 = sphi 0, %s263
      %s266 = sphi 0, %s265
      %s280 = sphi 0, %s266
      %s284 = sphi 0, %s284
      %s286 = sphi 0, %s284
      %s287 = sphi 0, %s286
      %s301 = sphi 0, %s287
      %s305 = sphi 0, %s305
      %s307 = sphi 0, %s305
      %s308 = sphi 0, %s307
      %s322 = sphi 0, %s308
      %s326 = sphi 0, %s326
      %s328 = sphi 0, %s326
      %s329 = sphi 0, %s328
      %s343 = sphi 0, %s329
      %s347 = sphi 0, %s347
      %s349 = sphi 0, %s347
      %s350 = sphi 0, %s349
      %s364 = sphi 0, %s350
      %s368 = sphi 0, %s368
      %s370 = sphi 0, %s368
      %s371 = sphi 0, %s370
      %s385 = sphi 0, %s371
      %s389 = sphi 0, %s389
      %s391 = sphi 0, %s389
      %s392 = sphi 0, %s391
      %s406 = sphi 0, %s392
      %s410 = sphi 0, %s410
      %s412 = sphi 0, %s410
      %s413 = sphi 0, %s412
      %s427 = sphi 0, %s413
      %s431 = sphi 0, %s431
      %s433 = sphi 0, %s431
      %s434 = sphi 0, %s433
      %s448 = sphi 0, %s434
      %s452 = sphi 0, %s452
      %s454 = sphi 0, %s452
      %s455 = sphi 0, %s454
      %s469 = sphi 0, %s455
      %s473 = sphi 0, %s473
      %s475 = sphi 0, %s473
      %s476 = sphi 0, %s475
      %s490 = sphi 0, %s476
      %s494 = sphi 0, %s494
      %s496 = sphi 0, %s494
      %s497 = sphi 0, %s496
      %s511 = sphi 0, %s497
      %s515 = sphi 0, %s515
      %s517 = sphi 0, %s515
      %s518 = sphi 0, %s517
      %s532 = sphi 0, %s518
      %s536 = sphi 0, %s536
      %s538 = sphi 0, %s536
      %s539 = sphi 0, %s538
      %s553 = sphi 0, %s539
      %s559 = sphi 0, %s561
      %s562 = sphi 0, %s559
      %s563 = sphi 0, %s562
      %s579 = sphi 0, %s563
    $region4: #{tpu_custom_call.1} parent=1 // loop_header_branch
      %38 = sbr.rel (%p36) target = $region8
    $region5: #{tpu_custom_call.1} parent=1 // loop_body
      %s40 = ssub.s32 %s35, 1
      %s41 = ssub.s32 %s35, 2
      %s42 = sadd.s32 %s35, 1
      %s43 = ssub.s32 %s35, %s42
      %p44 = scmp.eq.s32.totalorder %s43, 0
      %s46 = sadd.s32 %s45, 1
      %s47 = scalar_select %p44, %s45, %s46
      %p50 = pneg %p44
      %p51 = scmp.eq.s32.totalorder %s35, 1
      %p52 = por %p50, %p51
      %p53 = scmp.ne.s32.totalorder %s45, %s48
      %p54 = scmp.eq.s32.totalorder %s35, 0
      %p55 = por %p53, %p54
      %p56 = scmp.ne.s32.totalorder %s45, %s48
      %p57 = scmp.eq.s32.totalorder %s40, 1
      %p58 = por %p56, %p57
      %p59 = scmp.ne.s32.totalorder %s48, %s49
      %p60 = scmp.eq.s32.totalorder %s40, 0
      %p61 = por %p59, %p60
      %p62 = scmp.ne.s32.totalorder %s48, %s49
      %p63 = scmp.eq.s32.totalorder %s41, 1
      %p64 = por %p62, %p63
      %p66 = scmp.ne.s32.totalorder %s49, %s65
      %p67 = scmp.eq.s32.totalorder %s41, 0
      %p68 = por %p66, %p67
      %s69 = ssub.s32 %s35, %s42
      %p70 = scmp.eq.s32.totalorder %s69, 0
      %s72 = sadd.s32 %s71, 1
      %s73 = scalar_select %p70, %s71, %s72
      %p76 = pneg %p70
      %p77 = scmp.eq.s32.totalorder %s35, 1
      %p78 = por %p76, %p77
      %p79 = scmp.ne.s32.totalorder %s71, %s74
      %p80 = scmp.eq.s32.totalorder %s35, 0
      %p81 = por %p79, %p80
      %p82 = scmp.ne.s32.totalorder %s71, %s74
      %p83 = scmp.eq.s32.totalorder %s40, 1
      %p84 = por %p82, %p83
      %p85 = scmp.ne.s32.totalorder %s74, %s75
      %p86 = scmp.eq.s32.totalorder %s40, 0
      %p87 = por %p85, %p86
      %p88 = scmp.ne.s32.totalorder %s74, %s75
      %p89 = scmp.eq.s32.totalorder %s41, 1
      %p90 = por %p88, %p89
      %p92 = scmp.ne.s32.totalorder %s75, %s91
      %p93 = scmp.eq.s32.totalorder %s41, 0
      %p94 = por %p92, %p93
      %s96 = sadd.s32 %s95, 1
      %p99 = scmp.eq.s32.totalorder %s35, 1
      %p100 = scmp.ne.s32.totalorder %s95, %s97
      %p101 = scmp.eq.s32.totalorder %s35, 0
      %p102 = por %p100, %p101
      %p103 = scmp.ne.s32.totalorder %s95, %s97
      %p104 = scmp.eq.s32.totalorder %s40, 1
      %p105 = por %p103, %p104
      %p106 = scmp.ne.s32.totalorder %s97, %s98
      %p107 = scmp.eq.s32.totalorder %s40, 0
      %p108 = por %p106, %p107
      %p109 = scmp.ne.s32.totalorder %s97, %s98
      %p110 = scmp.eq.s32.totalorder %s41, 1
      %p111 = por %p109, %p110
      %p113 = scmp.ne.s32.totalorder %s98, %s112
      %p114 = scmp.eq.s32.totalorder %s41, 0
      %p115 = por %p113, %p114
      %s117 = sadd.s32 %s116, 1
      %p120 = scmp.eq.s32.totalorder %s35, 1
      %p121 = scmp.ne.s32.totalorder %s116, %s118
      %p122 = scmp.eq.s32.totalorder %s35, 0
      %p123 = por %p121, %p122
      %p124 = scmp.ne.s32.totalorder %s116, %s118
      %p125 = scmp.eq.s32.totalorder %s40, 1
      %p126 = por %p124, %p125
      %p127 = scmp.ne.s32.totalorder %s118, %s119
      %p128 = scmp.eq.s32.totalorder %s40, 0
      %p129 = por %p127, %p128
      %p130 = scmp.ne.s32.totalorder %s118, %s119
      %p131 = scmp.eq.s32.totalorder %s41, 1
      %p132 = por %p130, %p131
      %p134 = scmp.ne.s32.totalorder %s119, %s133
      %p135 = scmp.eq.s32.totalorder %s41, 0
      %p136 = por %p134, %p135
      %s138 = sadd.s32 %s137, 1
      %p141 = scmp.eq.s32.totalorder %s35, 1
      %p142 = scmp.ne.s32.totalorder %s137, %s139
      %p143 = scmp.eq.s32.totalorder %s35, 0
      %p144 = por %p142, %p143
      %p145 = scmp.ne.s32.totalorder %s137, %s139
      %p146 = scmp.eq.s32.totalorder %s40, 1
      %p147 = por %p145, %p146
      %p148 = scmp.ne.s32.totalorder %s139, %s140
      %p149 = scmp.eq.s32.totalorder %s40, 0
      %p150 = por %p148, %p149
      %p151 = scmp.ne.s32.totalorder %s139, %s140
      %p152 = scmp.eq.s32.totalorder %s41, 1
      %p153 = por %p151, %p152
      %p155 = scmp.ne.s32.totalorder %s140, %s154
      %p156 = scmp.eq.s32.totalorder %s41, 0
      %p157 = por %p155, %p156
      %s159 = sadd.s32 %s158, 1
      %p162 = scmp.eq.s32.totalorder %s35, 1
      %p163 = scmp.ne.s32.totalorder %s158, %s160
      %p164 = scmp.eq.s32.totalorder %s35, 0
      %p165 = por %p163, %p164
      %p166 = scmp.ne.s32.totalorder %s158, %s160
      %p167 = scmp.eq.s32.totalorder %s40, 1
      %p168 = por %p166, %p167
      %p169 = scmp.ne.s32.totalorder %s160, %s161
      %p170 = scmp.eq.s32.totalorder %s40, 0
      %p171 = por %p169, %p170
      %p172 = scmp.ne.s32.totalorder %s160, %s161
      %p173 = scmp.eq.s32.totalorder %s41, 1
      %p174 = por %p172, %p173
      %p176 = scmp.ne.s32.totalorder %s161, %s175
      %p177 = scmp.eq.s32.totalorder %s41, 0
      %p178 = por %p176, %p177
      %s180 = sadd.s32 %s179, 1
      %p183 = scmp.eq.s32.totalorder %s35, 1
      %p184 = scmp.ne.s32.totalorder %s179, %s181
      %p185 = scmp.eq.s32.totalorder %s35, 0
      %p186 = por %p184, %p185
      %p187 = scmp.ne.s32.totalorder %s179, %s181
      %p188 = scmp.eq.s32.totalorder %s40, 1
      %p189 = por %p187, %p188
      %p190 = scmp.ne.s32.totalorder %s181, %s182
      %p191 = scmp.eq.s32.totalorder %s40, 0
      %p192 = por %p190, %p191
      %p193 = scmp.ne.s32.totalorder %s181, %s182
      %p194 = scmp.eq.s32.totalorder %s41, 1
      %p195 = por %p193, %p194
      %p197 = scmp.ne.s32.totalorder %s182, %s196
      %p198 = scmp.eq.s32.totalorder %s41, 0
      %p199 = por %p197, %p198
      %s201 = sadd.s32 %s200, 1
      %p204 = scmp.eq.s32.totalorder %s35, 1
      %p205 = scmp.ne.s32.totalorder %s200, %s202
      %p206 = scmp.eq.s32.totalorder %s35, 0
      %p207 = por %p205, %p206
      %p208 = scmp.ne.s32.totalorder %s200, %s202
      %p209 = scmp.eq.s32.totalorder %s40, 1
      %p210 = por %p208, %p209
      %p211 = scmp.ne.s32.totalorder %s202, %s203
      %p212 = scmp.eq.s32.totalorder %s40, 0
      %p213 = por %p211, %p212
      %p214 = scmp.ne.s32.totalorder %s202, %s203
      %p215 = scmp.eq.s32.totalorder %s41, 1
      %p216 = por %p214, %p215
      %p218 = scmp.ne.s32.totalorder %s203, %s217
      %p219 = scmp.eq.s32.totalorder %s41, 0
      %p220 = por %p218, %p219
      %s222 = sadd.s32 %s221, 1
      %p225 = scmp.eq.s32.totalorder %s35, 1
      %p226 = scmp.ne.s32.totalorder %s221, %s223
      %p227 = scmp.eq.s32.totalorder %s35, 0
      %p228 = por %p226, %p227
      %p229 = scmp.ne.s32.totalorder %s221, %s223
      %p230 = scmp.eq.s32.totalorder %s40, 1
      %p231 = por %p229, %p230
      %p232 = scmp.ne.s32.totalorder %s223, %s224
      %p233 = scmp.eq.s32.totalorder %s40, 0
      %p234 = por %p232, %p233
      %p235 = scmp.ne.s32.totalorder %s223, %s224
      %p236 = scmp.eq.s32.totalorder %s41, 1
      %p237 = por %p235, %p236
      %p239 = scmp.ne.s32.totalorder %s224, %s238
      %p240 = scmp.eq.s32.totalorder %s41, 0
      %p241 = por %p239, %p240
      %s243 = sadd.s32 %s242, 1
      %p246 = scmp.eq.s32.totalorder %s35, 1
      %p247 = scmp.ne.s32.totalorder %s242, %s244
      %p248 = scmp.eq.s32.totalorder %s35, 0
      %p249 = por %p247, %p248
      %p250 = scmp.ne.s32.totalorder %s242, %s244
      %p251 = scmp.eq.s32.totalorder %s40, 1
      %p252 = por %p250, %p251
      %p253 = scmp.ne.s32.totalorder %s244, %s245
      %p254 = scmp.eq.s32.totalorder %s40, 0
      %p255 = por %p253, %p254
      %p256 = scmp.ne.s32.totalorder %s244, %s245
      %p257 = scmp.eq.s32.totalorder %s41, 1
      %p258 = por %p256, %p257
      %p260 = scmp.ne.s32.totalorder %s245, %s259
      %p261 = scmp.eq.s32.totalorder %s41, 0
      %p262 = por %p260, %p261
      %s264 = sadd.s32 %s263, 1
      %p267 = scmp.eq.s32.totalorder %s35, 1
      %p268 = scmp.ne.s32.totalorder %s263, %s265
      %p269 = scmp.eq.s32.totalorder %s35, 0
      %p270 = por %p268, %p269
      %p271 = scmp.ne.s32.totalorder %s263, %s265
      %p272 = scmp.eq.s32.totalorder %s40, 1
      %p273 = por %p271, %p272
      %p274 = scmp.ne.s32.totalorder %s265, %s266
      %p275 = scmp.eq.s32.totalorder %s40, 0
      %p276 = por %p274, %p275
      %p277 = scmp.ne.s32.totalorder %s265, %s266
      %p278 = scmp.eq.s32.totalorder %s41, 1
      %p279 = por %p277, %p278
      %p281 = scmp.ne.s32.totalorder %s266, %s280
      %p282 = scmp.eq.s32.totalorder %s41, 0
      %p283 = por %p281, %p282
      %s285 = sadd.s32 %s284, 1
      %p288 = scmp.eq.s32.totalorder %s35, 1
      %p289 = scmp.ne.s32.totalorder %s284, %s286
      %p290 = scmp.eq.s32.totalorder %s35, 0
      %p291 = por %p289, %p290
      %p292 = scmp.ne.s32.totalorder %s284, %s286
      %p293 = scmp.eq.s32.totalorder %s40, 1
      %p294 = por %p292, %p293
      %p295 = scmp.ne.s32.totalorder %s286, %s287
      %p296 = scmp.eq.s32.totalorder %s40, 0
      %p297 = por %p295, %p296
      %p298 = scmp.ne.s32.totalorder %s286, %s287
      %p299 = scmp.eq.s32.totalorder %s41, 1
      %p300 = por %p298, %p299
      %p302 = scmp.ne.s32.totalorder %s287, %s301
      %p303 = scmp.eq.s32.totalorder %s41, 0
      %p304 = por %p302, %p303
      %s306 = sadd.s32 %s305, 1
      %p309 = scmp.eq.s32.totalorder %s35, 1
      %p310 = scmp.ne.s32.totalorder %s305, %s307
      %p311 = scmp.eq.s32.totalorder %s35, 0
      %p312 = por %p310, %p311
      %p313 = scmp.ne.s32.totalorder %s305, %s307
      %p314 = scmp.eq.s32.totalorder %s40, 1
      %p315 = por %p313, %p314
      %p316 = scmp.ne.s32.totalorder %s307, %s308
      %p317 = scmp.eq.s32.totalorder %s40, 0
      %p318 = por %p316, %p317
      %p319 = scmp.ne.s32.totalorder %s307, %s308
      %p320 = scmp.eq.s32.totalorder %s41, 1
      %p321 = por %p319, %p320
      %p323 = scmp.ne.s32.totalorder %s308, %s322
      %p324 = scmp.eq.s32.totalorder %s41, 0
      %p325 = por %p323, %p324
      %s327 = sadd.s32 %s326, 1
      %p330 = scmp.eq.s32.totalorder %s35, 1
      %p331 = scmp.ne.s32.totalorder %s326, %s328
      %p332 = scmp.eq.s32.totalorder %s35, 0
      %p333 = por %p331, %p332
      %p334 = scmp.ne.s32.totalorder %s326, %s328
      %p335 = scmp.eq.s32.totalorder %s40, 1
      %p336 = por %p334, %p335
      %p337 = scmp.ne.s32.totalorder %s328, %s329
      %p338 = scmp.eq.s32.totalorder %s40, 0
      %p339 = por %p337, %p338
      %p340 = scmp.ne.s32.totalorder %s328, %s329
      %p341 = scmp.eq.s32.totalorder %s41, 1
      %p342 = por %p340, %p341
      %p344 = scmp.ne.s32.totalorder %s329, %s343
      %p345 = scmp.eq.s32.totalorder %s41, 0
      %p346 = por %p344, %p345
      %s348 = sadd.s32 %s347, 1
      %p351 = scmp.eq.s32.totalorder %s35, 1
      %p352 = scmp.ne.s32.totalorder %s347, %s349
      %p353 = scmp.eq.s32.totalorder %s35, 0
      %p354 = por %p352, %p353
      %p355 = scmp.ne.s32.totalorder %s347, %s349
      %p356 = scmp.eq.s32.totalorder %s40, 1
      %p357 = por %p355, %p356
      %p358 = scmp.ne.s32.totalorder %s349, %s350
      %p359 = scmp.eq.s32.totalorder %s40, 0
      %p360 = por %p358, %p359
      %p361 = scmp.ne.s32.totalorder %s349, %s350
      %p362 = scmp.eq.s32.totalorder %s41, 1
      %p363 = por %p361, %p362
      %p365 = scmp.ne.s32.totalorder %s350, %s364
      %p366 = scmp.eq.s32.totalorder %s41, 0
      %p367 = por %p365, %p366
      %s369 = sadd.s32 %s368, 1
      %p372 = scmp.eq.s32.totalorder %s35, 1
      %p373 = scmp.ne.s32.totalorder %s368, %s370
      %p374 = scmp.eq.s32.totalorder %s35, 0
      %p375 = por %p373, %p374
      %p376 = scmp.ne.s32.totalorder %s368, %s370
      %p377 = scmp.eq.s32.totalorder %s40, 1
      %p378 = por %p376, %p377
      %p379 = scmp.ne.s32.totalorder %s370, %s371
      %p380 = scmp.eq.s32.totalorder %s40, 0
      %p381 = por %p379, %p380
      %p382 = scmp.ne.s32.totalorder %s370, %s371
      %p383 = scmp.eq.s32.totalorder %s41, 1
      %p384 = por %p382, %p383
      %p386 = scmp.ne.s32.totalorder %s371, %s385
      %p387 = scmp.eq.s32.totalorder %s41, 0
      %p388 = por %p386, %p387
      %s390 = sadd.s32 %s389, 1
      %p393 = scmp.eq.s32.totalorder %s35, 1
      %p394 = scmp.ne.s32.totalorder %s389, %s391
      %p395 = scmp.eq.s32.totalorder %s35, 0
      %p396 = por %p394, %p395
      %p397 = scmp.ne.s32.totalorder %s389, %s391
      %p398 = scmp.eq.s32.totalorder %s40, 1
      %p399 = por %p397, %p398
      %p400 = scmp.ne.s32.totalorder %s391, %s392
      %p401 = scmp.eq.s32.totalorder %s40, 0
      %p402 = por %p400, %p401
      %p403 = scmp.ne.s32.totalorder %s391, %s392
      %p404 = scmp.eq.s32.totalorder %s41, 1
      %p405 = por %p403, %p404
      %p407 = scmp.ne.s32.totalorder %s392, %s406
      %p408 = scmp.eq.s32.totalorder %s41, 0
      %p409 = por %p407, %p408
      %s411 = sadd.s32 %s410, 1
      %p414 = scmp.eq.s32.totalorder %s35, 1
      %p415 = scmp.ne.s32.totalorder %s410, %s412
      %p416 = scmp.eq.s32.totalorder %s35, 0
      %p417 = por %p415, %p416
      %p418 = scmp.ne.s32.totalorder %s410, %s412
      %p419 = scmp.eq.s32.totalorder %s40, 1
      %p420 = por %p418, %p419
      %p421 = scmp.ne.s32.totalorder %s412, %s413
      %p422 = scmp.eq.s32.totalorder %s40, 0
      %p423 = por %p421, %p422
      %p424 = scmp.ne.s32.totalorder %s412, %s413
      %p425 = scmp.eq.s32.totalorder %s41, 1
      %p426 = por %p424, %p425
      %p428 = scmp.ne.s32.totalorder %s413, %s427
      %p429 = scmp.eq.s32.totalorder %s41, 0
      %p430 = por %p428, %p429
      %s432 = sadd.s32 %s431, 1
      %p435 = scmp.eq.s32.totalorder %s35, 1
      %p436 = scmp.ne.s32.totalorder %s431, %s433
      %p437 = scmp.eq.s32.totalorder %s35, 0
      %p438 = por %p436, %p437
      %p439 = scmp.ne.s32.totalorder %s431, %s433
      %p440 = scmp.eq.s32.totalorder %s40, 1
      %p441 = por %p439, %p440
      %p442 = scmp.ne.s32.totalorder %s433, %s434
      %p443 = scmp.eq.s32.totalorder %s40, 0
      %p444 = por %p442, %p443
      %p445 = scmp.ne.s32.totalorder %s433, %s434
      %p446 = scmp.eq.s32.totalorder %s41, 1
      %p447 = por %p445, %p446
      %p449 = scmp.ne.s32.totalorder %s434, %s448
      %p450 = scmp.eq.s32.totalorder %s41, 0
      %p451 = por %p449, %p450
      %s453 = sadd.s32 %s452, 1
      %p456 = scmp.eq.s32.totalorder %s35, 1
      %p457 = scmp.ne.s32.totalorder %s452, %s454
      %p458 = scmp.eq.s32.totalorder %s35, 0
      %p459 = por %p457, %p458
      %p460 = scmp.ne.s32.totalorder %s452, %s454
      %p461 = scmp.eq.s32.totalorder %s40, 1
      %p462 = por %p460, %p461
      %p463 = scmp.ne.s32.totalorder %s454, %s455
      %p464 = scmp.eq.s32.totalorder %s40, 0
      %p465 = por %p463, %p464
      %p466 = scmp.ne.s32.totalorder %s454, %s455
      %p467 = scmp.eq.s32.totalorder %s41, 1
      %p468 = por %p466, %p467
      %p470 = scmp.ne.s32.totalorder %s455, %s469
      %p471 = scmp.eq.s32.totalorder %s41, 0
      %p472 = por %p470, %p471
      %s474 = sadd.s32 %s473, 1
      %p477 = scmp.eq.s32.totalorder %s35, 1
      %p478 = scmp.ne.s32.totalorder %s473, %s475
      %p479 = scmp.eq.s32.totalorder %s35, 0
      %p480 = por %p478, %p479
      %p481 = scmp.ne.s32.totalorder %s473, %s475
      %p482 = scmp.eq.s32.totalorder %s40, 1
      %p483 = por %p481, %p482
      %p484 = scmp.ne.s32.totalorder %s475, %s476
      %p485 = scmp.eq.s32.totalorder %s40, 0
      %p486 = por %p484, %p485
      %p487 = scmp.ne.s32.totalorder %s475, %s476
      %p488 = scmp.eq.s32.totalorder %s41, 1
      %p489 = por %p487, %p488
      %p491 = scmp.ne.s32.totalorder %s476, %s490
      %p492 = scmp.eq.s32.totalorder %s41, 0
      %p493 = por %p491, %p492
      %s495 = sadd.s32 %s494, 1
      %p498 = scmp.eq.s32.totalorder %s35, 1
      %p499 = scmp.ne.s32.totalorder %s494, %s496
      %p500 = scmp.eq.s32.totalorder %s35, 0
      %p501 = por %p499, %p500
      %p502 = scmp.ne.s32.totalorder %s494, %s496
      %p503 = scmp.eq.s32.totalorder %s40, 1
      %p504 = por %p502, %p503
      %p505 = scmp.ne.s32.totalorder %s496, %s497
      %p506 = scmp.eq.s32.totalorder %s40, 0
      %p507 = por %p505, %p506
      %p508 = scmp.ne.s32.totalorder %s496, %s497
      %p509 = scmp.eq.s32.totalorder %s41, 1
      %p510 = por %p508, %p509
      %p512 = scmp.ne.s32.totalorder %s497, %s511
      %p513 = scmp.eq.s32.totalorder %s41, 0
      %p514 = por %p512, %p513
      %s516 = sadd.s32 %s515, 1
      %p519 = scmp.eq.s32.totalorder %s35, 1
      %p520 = scmp.ne.s32.totalorder %s515, %s517
      %p521 = scmp.eq.s32.totalorder %s35, 0
      %p522 = por %p520, %p521
      %p523 = scmp.ne.s32.totalorder %s515, %s517
      %p524 = scmp.eq.s32.totalorder %s40, 1
      %p525 = por %p523, %p524
      %p526 = scmp.ne.s32.totalorder %s517, %s518
      %p527 = scmp.eq.s32.totalorder %s40, 0
      %p528 = por %p526, %p527
      %p529 = scmp.ne.s32.totalorder %s517, %s518
      %p530 = scmp.eq.s32.totalorder %s41, 1
      %p531 = por %p529, %p530
      %p533 = scmp.ne.s32.totalorder %s518, %s532
      %p534 = scmp.eq.s32.totalorder %s41, 0
      %p535 = por %p533, %p534
      %s537 = sadd.s32 %s536, 1
      %p540 = scmp.eq.s32.totalorder %s35, 1
      %p541 = scmp.ne.s32.totalorder %s536, %s538
      %p542 = scmp.eq.s32.totalorder %s35, 0
      %p543 = por %p541, %p542
      %p544 = scmp.ne.s32.totalorder %s536, %s538
      %p545 = scmp.eq.s32.totalorder %s40, 1
      %p546 = por %p544, %p545
      %p547 = scmp.ne.s32.totalorder %s538, %s539
      %p548 = scmp.eq.s32.totalorder %s40, 0
      %p549 = por %p547, %p548
      %p550 = scmp.ne.s32.totalorder %s538, %s539
      %p551 = scmp.eq.s32.totalorder %s41, 1
      %p552 = por %p550, %p551
      %p554 = scmp.ne.s32.totalorder %s539, %s553
      %p555 = scmp.eq.s32.totalorder %s41, 0
      %p556 = por %p554, %p555
      %s557 = ssub.s32 %s35, %s42
      %p558 = scmp.eq.s32.totalorder %s557, 0
      %s560 = sadd.s32 %s559, 1
      %s561 = scalar_select %p558, %s559, %s560
      %p564 = pneg %p558
      %p565 = scmp.eq.s32.totalorder %s35, 1
      %p566 = por %p564, %p565
      %p567 = scmp.ne.s32.totalorder %s559, %s562
      %p568 = scmp.eq.s32.totalorder %s35, 0
      %p569 = por %p567, %p568
      %p570 = scmp.ne.s32.totalorder %s559, %s562
      %p571 = scmp.eq.s32.totalorder %s40, 1
      %p572 = por %p570, %p571
      %p573 = scmp.ne.s32.totalorder %s562, %s563
      %p574 = scmp.eq.s32.totalorder %s40, 0
      %p575 = por %p573, %p574
      %p576 = scmp.ne.s32.totalorder %s562, %s563
      %p577 = scmp.eq.s32.totalorder %s41, 1
      %p578 = por %p576, %p577
      %p580 = scmp.ne.s32.totalorder %s563, %s579
      %p581 = scmp.eq.s32.totalorder %s41, 0
      %p582 = por %p580, %p581
      %p583 = scmp.le.s32.totalorder 1, %s35
      %p584 = scmp.lt.s32.totalorder %s35, 3
      %p585 = pnand %p583, %p584
      %p586 = pneg %p585
      // Predicated region
      $region9: #{tpu_custom_call.1} parent=5 // pred_check
        _
      $region10: #{tpu_custom_call.1} parent=5 // pred_check_branch
        %588 = sbr.rel (%p585) target = $region12
      $region11: #{tpu_custom_call.1} parent=5 // pred_region
        %s589 = ssub.s32 %s35, 1
        // Predicated region
        $region13: #{tpu_custom_call.1} parent=11 // pred_check
          %p590 = pneg %p108
        $region14: #{tpu_custom_call.1} parent=11 // pred_check_branch
          %592 = sbr.rel (%p590) target = $region16
        $region15: #{tpu_custom_call.1} parent=11 // pred_region
          _
        $region16: #{tpu_custom_call.1} parent=11 // pred_fallthru
          _
        // Predicated region
        $region17: #{tpu_custom_call.1} parent=11 // pred_check
          %p593 = pneg %p129
        $region18: #{tpu_custom_call.1} parent=11 // pred_check_branch
          %595 = sbr.rel (%p593) target = $region20
        $region19: #{tpu_custom_call.1} parent=11 // pred_region
          %s597 = ssub.s32 64, 64
          %598 = vsyncadd [#allocation3], %s597
          %s599 = sshll.u32 [#allocation2], 4
          %s600 = int_to_ptr.vmem [resolvable:$true] %s599
          %605 = dma.hbm_to_vmem [thread:$0]  %s3, 64, %s600, [#allocation3], 16, 16, 1
        $region20: #{tpu_custom_call.1} parent=11 // pred_fallthru
          _
        // Predicated region
        $region21: #{tpu_custom_call.1} parent=11 // pred_check
          %p606 = pneg %p150
        $region22: #{tpu_custom_call.1} parent=11 // pred_check_branch
          %608 = sbr.rel (%p606) target = $region24
        $region23: #{tpu_custom_call.1} parent=11 // pred_region
          _
        $region24: #{tpu_custom_call.1} parent=11 // pred_fallthru
          _
        // Predicated region
        $region25: #{tpu_custom_call.1} parent=11 // pred_check
          %p609 = pneg %p171
        $region26: #{tpu_custom_call.1} parent=11 // pred_check_branch
          %611 = sbr.rel (%p609) target = $region28
        $region27: #{tpu_custom_call.1} parent=11 // pred_region
          %s613 = ssub.s32 64, 64
          %614 = vsyncadd [#allocation6], %s613
          %s615 = sshll.u32 [#allocation5], 4
          %s616 = int_to_ptr.vmem [resolvable:$true] %s615
          %621 = dma.hbm_to_vmem [thread:$0]  %s5, 64, %s616, [#allocation6], 16, 16, 1
        $region28: #{tpu_custom_call.1} parent=11 // pred_fallthru
          _
        // Predicated region
        $region29: #{tpu_custom_call.1} parent=11 // pred_check
          %p622 = pneg %p192
        $region30: #{tpu_custom_call.1} parent=11 // pred_check_branch
          %624 = sbr.rel (%p622) target = $region32
        $region31: #{tpu_custom_call.1} parent=11 // pred_region
          %s626 = ssub.s32 64, 64
          %627 = vsyncadd [#allocation6], %s626
          %s628 = sshll.u32 [#allocation7], 4
          %s629 = int_to_ptr.vmem [resolvable:$true] %s628
          %634 = dma.hbm_to_vmem [thread:$0]  %s6, 64, %s629, [#allocation6], 16, 16, 1
        $region32: #{tpu_custom_call.1} parent=11 // pred_fallthru
          _
        // Predicated region
        $region33: #{tpu_custom_call.1} parent=11 // pred_check
          %p635 = pneg %p213
        $region34: #{tpu_custom_call.1} parent=11 // pred_check_branch
          %637 = sbr.rel (%p635) target = $region36
        $region35: #{tpu_custom_call.1} parent=11 // pred_region
          _
        $region36: #{tpu_custom_call.1} parent=11 // pred_fallthru
          _
        // Predicated region
        $region37: #{tpu_custom_call.1} parent=11 // pred_check
          %p638 = pneg %p234
        $region38: #{tpu_custom_call.1} parent=11 // pred_check_branch
          %640 = sbr.rel (%p638) target = $region40
        $region39: #{tpu_custom_call.1} parent=11 // pred_region
          _
        $region40: #{tpu_custom_call.1} parent=11 // pred_fallthru
          _
        // Predicated region
        $region41: #{tpu_custom_call.1} parent=11 // pred_check
          %p641 = pneg %p255
        $region42: #{tpu_custom_call.1} parent=11 // pred_check_branch
          %643 = sbr.rel (%p641) target = $region44
        $region43: #{tpu_custom_call.1} parent=11 // pred_region
          _
        $region44: #{tpu_custom_call.1} parent=11 // pred_fallthru
          _
        // Predicated region
        $region45: #{tpu_custom_call.1} parent=11 // pred_check
          %p644 = pneg %p276
        $region46: #{tpu_custom_call.1} parent=11 // pred_check_branch
          %646 = sbr.rel (%p644) target = $region48
        $region47: #{tpu_custom_call.1} parent=11 // pred_region
          _
        $region48: #{tpu_custom_call.1} parent=11 // pred_fallthru
          _
        // Predicated region
        $region49: #{tpu_custom_call.1} parent=11 // pred_check
          %p647 = pneg %p297
        $region50: #{tpu_custom_call.1} parent=11 // pred_check_branch
          %649 = sbr.rel (%p647) target = $region52
        $region51: #{tpu_custom_call.1} parent=11 // pred_region
          _
        $region52: #{tpu_custom_call.1} parent=11 // pred_fallthru
          _
        // Predicated region
        $region53: #{tpu_custom_call.1} parent=11 // pred_check
          %p650 = pneg %p318
        $region54: #{tpu_custom_call.1} parent=11 // pred_check_branch
          %652 = sbr.rel (%p650) target = $region56
        $region55: #{tpu_custom_call.1} parent=11 // pred_region
          _
        $region56: #{tpu_custom_call.1} parent=11 // pred_fallthru
          _
        // Predicated region
        $region57: #{tpu_custom_call.1} parent=11 // pred_check
          %p653 = pneg %p339
        $region58: #{tpu_custom_call.1} parent=11 // pred_check_branch
          %655 = sbr.rel (%p653) target = $region60
        $region59: #{tpu_custom_call.1} parent=11 // pred_region
          _
        $region60: #{tpu_custom_call.1} parent=11 // pred_fallthru
          _
        // Predicated region
        $region61: #{tpu_custom_call.1} parent=11 // pred_check
          %p656 = pneg %p360
        $region62: #{tpu_custom_call.1} parent=11 // pred_check_branch
          %658 = sbr.rel (%p656) target = $region64
        $region63: #{tpu_custom_call.1} parent=11 // pred_region
          _
        $region64: #{tpu_custom_call.1} parent=11 // pred_fallthru
          _
        // Predicated region
        $region65: #{tpu_custom_call.1} parent=11 // pred_check
          %p659 = pneg %p381
        $region66: #{tpu_custom_call.1} parent=11 // pred_check_branch
          %661 = sbr.rel (%p659) target = $region68
        $region67: #{tpu_custom_call.1} parent=11 // pred_region
          _
        $region68: #{tpu_custom_call.1} parent=11 // pred_fallthru
          _
        // Predicated region
        $region69: #{tpu_custom_call.1} parent=11 // pred_check
          %p662 = pneg %p402
        $region70: #{tpu_custom_call.1} parent=11 // pred_check_branch
          %664 = sbr.rel (%p662) target = $region72
        $region71: #{tpu_custom_call.1} parent=11 // pred_region
          _
        $region72: #{tpu_custom_call.1} parent=11 // pred_fallthru
          _
        // Predicated region
        $region73: #{tpu_custom_call.1} parent=11 // pred_check
          %p665 = pneg %p423
        $region74: #{tpu_custom_call.1} parent=11 // pred_check_branch
          %667 = sbr.rel (%p665) target = $region76
        $region75: #{tpu_custom_call.1} parent=11 // pred_region
          _
        $region76: #{tpu_custom_call.1} parent=11 // pred_fallthru
          _
        // Predicated region
        $region77: #{tpu_custom_call.1} parent=11 // pred_check
          %p668 = pneg %p444
        $region78: #{tpu_custom_call.1} parent=11 // pred_check_branch
          %670 = sbr.rel (%p668) target = $region80
        $region79: #{tpu_custom_call.1} parent=11 // pred_region
          _
        $region80: #{tpu_custom_call.1} parent=11 // pred_fallthru
          _
        // Predicated region
        $region81: #{tpu_custom_call.1} parent=11 // pred_check
          %p671 = pneg %p465
        $region82: #{tpu_custom_call.1} parent=11 // pred_check_branch
          %673 = sbr.rel (%p671) target = $region84
        $region83: #{tpu_custom_call.1} parent=11 // pred_region
          _
        $region84: #{tpu_custom_call.1} parent=11 // pred_fallthru
          _
        // Predicated region
        $region85: #{tpu_custom_call.1} parent=11 // pred_check
          %p674 = pneg %p486
        $region86: #{tpu_custom_call.1} parent=11 // pred_check_branch
          %676 = sbr.rel (%p674) target = $region88
        $region87: #{tpu_custom_call.1} parent=11 // pred_region
          _
        $region88: #{tpu_custom_call.1} parent=11 // pred_fallthru
          _
        // Predicated region
        $region89: #{tpu_custom_call.1} parent=11 // pred_check
          %p677 = pneg %p507
        $region90: #{tpu_custom_call.1} parent=11 // pred_check_branch
          %679 = sbr.rel (%p677) target = $region92
        $region91: #{tpu_custom_call.1} parent=11 // pred_region
          _
        $region92: #{tpu_custom_call.1} parent=11 // pred_fallthru
          _
        // Predicated region
        $region93: #{tpu_custom_call.1} parent=11 // pred_check
          %p680 = pneg %p528
        $region94: #{tpu_custom_call.1} parent=11 // pred_check_branch
          %682 = sbr.rel (%p680) target = $region96
        $region95: #{tpu_custom_call.1} parent=11 // pred_region
          _
        $region96: #{tpu_custom_call.1} parent=11 // pred_fallthru
          _
        // Predicated region
        $region97: #{tpu_custom_call.1} parent=11 // pred_check
          %p683 = pneg %p549
        $region98: #{tpu_custom_call.1} parent=11 // pred_check_branch
          %685 = sbr.rel (%p683) target = $region100
        $region99: #{tpu_custom_call.1} parent=11 // pred_region
          _
        $region100: #{tpu_custom_call.1} parent=11 // pred_fallthru
          _
      $region12: #{tpu_custom_call.1} parent=5 // pred_fallthru
        _
      %p686 = scmp.lt.s32.totalorder %s35, 2
      // Predicated region
      $region101: #{tpu_custom_call.1} parent=5 // pred_check
        %p687 = pneg %p686
      $region102: #{tpu_custom_call.1} parent=5 // pred_check_branch
        %689 = sbr.rel (%p687) target = $region104
      $region103: #{tpu_custom_call.1} parent=5 // pred_region
        // Predicated region
        $region105: #{tpu_custom_call.1} parent=103 // pred_check
          %p690 = pneg %p55
        $region106: #{tpu_custom_call.1} parent=103 // pred_check_branch
          %692 = sbr.rel (%p690) target = $region108
        $region107: #{tpu_custom_call.1} parent=103 // pred_region
          %p693 = scmp.lt.s32.totalorder %s35, 1
          %s694 = scalar_select %p693, %s35, 1
          %s695 = smul.addr %s694, 4
          %s696 = smul.addr %s695, 8
          %s697 = scalar_lea.vmem %s0, %s696
        $region108: #{tpu_custom_call.1} parent=103 // pred_fallthru
          _
        // Predicated region
        $region109: #{tpu_custom_call.1} parent=103 // pred_check
          %p698 = pneg %p81
        $region110: #{tpu_custom_call.1} parent=103 // pred_check_branch
          %700 = sbr.rel (%p698) target = $region112
        $region111: #{tpu_custom_call.1} parent=103 // pred_region
          %p701 = scmp.lt.s32.totalorder %s35, 1
          %s702 = scalar_select %p701, %s35, 1
          %s703 = smul.addr %s702, 8
          %s704 = smul.addr %s703, 8
          %s705 = scalar_lea.vmem %s1, %s704
        $region112: #{tpu_custom_call.1} parent=103 // pred_fallthru
          _
      $region104: #{tpu_custom_call.1} parent=5 // pred_fallthru
        _
      %p706 = scmp.le.s32.totalorder 1, %s35
      %p707 = scmp.lt.s32.totalorder %s35, 3
      %p708 = pnand %p706, %p707
      %p709 = pneg %p708
      // Predicated region
      $region113: #{tpu_custom_call.1} parent=5 // pred_check
        _
      $region114: #{tpu_custom_call.1} parent=5 // pred_check_branch
        %711 = sbr.rel (%p708) target = $region116
      $region115: #{tpu_custom_call.1} parent=5 // pred_region
        %s712 = ssub.s32 %s35, 1
        // Predicated region
        $region117: #{tpu_custom_call.1} parent=115 // pred_check
          %p713 = pneg %p129
        $region118: #{tpu_custom_call.1} parent=115 // pred_check_branch
          %715 = sbr.rel (%p713) target = $region120
        $region119: #{tpu_custom_call.1} parent=115 // pred_region
          %716 = dma.done [#allocation3], 64
        $region120: #{tpu_custom_call.1} parent=115 // pred_fallthru
          _
        // Predicated region
        $region121: #{tpu_custom_call.1} parent=115 // pred_check
          %p717 = pneg %p171
        $region122: #{tpu_custom_call.1} parent=115 // pred_check_branch
          %719 = sbr.rel (%p717) target = $region124
        $region123: #{tpu_custom_call.1} parent=115 // pred_region
          %720 = dma.done [#allocation6], 64
        $region124: #{tpu_custom_call.1} parent=115 // pred_fallthru
          _
        // Predicated region
        $region125: #{tpu_custom_call.1} parent=115 // pred_check
          %p721 = pneg %p192
        $region126: #{tpu_custom_call.1} parent=115 // pred_check_branch
          %723 = sbr.rel (%p721) target = $region128
        $region127: #{tpu_custom_call.1} parent=115 // pred_region
          %724 = dma.done [#allocation6], 64
        $region128: #{tpu_custom_call.1} parent=115 // pred_fallthru
          _
        %p725 = scmp.lt.s32.totalorder %s40, 1
        %s726 = scalar_select %p725, %s40, 1
        %s727 = smul.addr %s726, 4
        %s728 = smul.addr %s727, 8
        %s729 = scalar_lea.vmem %s0, %s728
        %p730 = pneg %p61
        %p731 = pneg %p58
        %p732 = scmp.lt.s32.totalorder %s40, 1
        %s733 = scalar_select %p732, %s40, 1
        %s734 = smul.addr %s733, 8
        %s735 = smul.addr %s734, 8
        %s736 = scalar_lea.vmem %s1, %s735
        %p737 = pneg %p87
        %p738 = pneg %p84
        %p739 = pneg %p108
        %p740 = pneg %p105
        %p741 = pneg %p129
        %p742 = pneg %p126
        %p743 = pneg %p150
        %p744 = pneg %p147
        %p745 = pneg %p171
        %p746 = pneg %p168
        %p747 = pneg %p192
        %p748 = pneg %p189
        %p749 = pneg %p213
        %p750 = pneg %p210
        %p751 = pneg %p234
        %p752 = pneg %p231
        %p753 = pneg %p255
        %p754 = pneg %p252
        %p755 = pneg %p276
        %p756 = pneg %p273
        %p757 = pneg %p297
        %p758 = pneg %p294
        %p759 = pneg %p318
        %p760 = pneg %p315
        %p761 = pneg %p339
        %p762 = pneg %p336
        %p763 = pneg %p360
        %p764 = pneg %p357
        %p765 = pneg %p381
        %p766 = pneg %p378
        %p767 = pneg %p402
        %p768 = pneg %p399
        %p769 = pneg %p423
        %p770 = pneg %p420
        %p771 = pneg %p444
        %p772 = pneg %p441
        %p773 = pneg %p465
        %p774 = pneg %p462
        %p775 = pneg %p486
        %p776 = pneg %p483
        %p777 = pneg %p507
        %p778 = pneg %p504
        %p779 = pneg %p528
        %p780 = pneg %p525
        %p781 = pneg %p549
        %p782 = pneg %p546
        %p783 = pneg %p575
        %p784 = pneg %p572
        %s785 = sand.u32 %s562, 1
        %s786 = scalar_lea.sflag [#allocation4], %s785
        %s787 = sand.u32 %s562, 1
        %s788 = smul.addr %s787, 32
        %s789 = scalar_lea.vmem [#allocation8], %s788
        %p790 = scmp.lt.s32.totalorder %s40, 1
        %s791 = scalar_select %p790, %s40, 1
        %s792 = smul.addr %s791, 4
        %s793 = smul.addr %s792, 8
        %s794 = scalar_lea.vmem %s0, %s793
        %p795 = scmp.lt.s32.totalorder %s40, 1
        %s796 = scalar_select %p795, %s40, 1
        %s797 = smul.addr %s796, 8
        %s798 = smul.addr %s797, 8
        %s799 = scalar_lea.vmem %s1, %s798
        %v800 = vld [vmem:[%s794] sm:$0xff]
        %v801 = vld [vmem:[%s794 + $0x8] sm:$0xff]
        %v802 = vld [vmem:[%s794 + $0x10] sm:$0xff]
        %v803 = vld [vmem:[%s794 + $0x18] sm:$0xff]
        %804 = vxpose.xlu0.b32.start [1/16] %v800, 128
        %805 = vxpose.xlu0.b32.cont [2/16] %v801, 128
        %806 = vxpose.xlu0.b32.cont [3/16] %v802, 128
        %807 = vxpose.xlu0.b32.cont [4/16] %v803, 128
        %808 = vxpose.xlu0.b32.cont [5/16] 0.0, 128
        %809 = vxpose.xlu0.b32.cont [6/16] 0.0, 128
        %810 = vxpose.xlu0.b32.cont [7/16] 0.0, 128
        %811 = vxpose.xlu0.b32.cont [8/16] 0.0, 128
        %812 = vxpose.xlu0.b32.cont [9/16] 0.0, 128
        %813 = vxpose.xlu0.b32.cont [10/16] 0.0, 128
        %814 = vxpose.xlu0.b32.cont [11/16] 0.0, 128
        %815 = vxpose.xlu0.b32.cont [12/16] 0.0, 128
        %816 = vxpose.xlu0.b32.cont [13/16] 0.0, 128
        %817 = vxpose.xlu0.b32.cont [14/16] 0.0, 128
        %818 = vxpose.xlu0.b32.cont [15/16] 0.0, 128
        %819 = vxpose.xlu0.b32.end [16/16] 0.0, 128
        %v820 = vpop.trf.xlu0
        %v821 = vpop.trf.xlu0
        %v822 = vpop.trf.xlu0
        %v823 = vpop.trf.xlu0
        %v824 = vpop.trf.xlu0
        %v825 = vpop.trf.xlu0
        %v826 = vpop.trf.xlu0
        %v827 = vpop.trf.xlu0
        %v828 = vpop.trf.xlu0
        %v829 = vpop.trf.xlu0
        %v830 = vpop.trf.xlu0
        %v831 = vpop.trf.xlu0
        %v832 = vpop.trf.xlu0
        %v833 = vpop.trf.xlu0
        %v834 = vpop.trf.xlu0
        %v835 = vpop.trf.xlu0
        %v836 = vld [vmem:[%s799] sm:$0xff]
        %v837 = vld [vmem:[%s799 + $0x8] sm:$0xff]
        %v838 = vld [vmem:[%s799 + $0x10] sm:$0xff]
        %v839 = vld [vmem:[%s799 + $0x18] sm:$0xff]
        %v840 = vld [vmem:[%s799 + $0x20] sm:$0xff]
        %v841 = vld [vmem:[%s799 + $0x28] sm:$0xff]
        %v842 = vld [vmem:[%s799 + $0x30] sm:$0xff]
        %v843 = vld [vmem:[%s799 + $0x38] sm:$0xff]
        %v844 = vld [vmem:[%s4] sm:$0xff]
        %v845 = vld [vmem:[%s4 + $0x8] sm:$0xff]
        %v846 = vld [vmem:[%s4 + $0x10] sm:$0xff]
        %v847 = vld [vmem:[%s4 + $0x18] sm:$0xff]
        %v848 = vrot.slane %v820, 7
        %v849 = vrot.slane %v821, 7
        %v850 = vrot.slane %v822, 7
        %v851 = vrot.slane %v823, 7
        %v852 = vrot.slane %v824, 7
        %v853 = vrot.slane %v825, 7
        %v854 = vrot.slane %v826, 7
        %v855 = vrot.slane %v827, 7
        %v856 = vlaneseq
        %v857 = vshrl.u32 %v856, 7
        %vm858 = vcmp.lt.s32.totalorder %v857, 1
        %v859 = vsel %vm858, %v854, %v855
        %v860 = vsel %vm858, %v853, %v854
        %v861 = vsel %vm858, %v852, %v853
        %v862 = vsel %vm858, %v851, %v852
        %v863 = vsel %vm858, %v850, %v851
        %v864 = vsel %vm858, %v849, %v850
        %v865 = vsel %vm858, %v848, %v849
        %v866 = vsel %vm858, %v855, %v848
        %v867 = vadd.s32 %v857, 8
        %v868 = vadd.s32 %v857, 16
        %v869 = vadd.s32 %v857, 24
        %v870 = vadd.s32 %v857, 32
        %v871 = vadd.s32 %v857, 40
        %v872 = vadd.s32 %v857, 48
        %v873 = vadd.s32 %v857, 56
        %vm874 = vcmp.ge.s32.totalorder %v857, 1
        %vm875 = vcmp.ge.s32.totalorder %v867, 1
        %vm876 = vcmp.ge.s32.totalorder %v868, 1
        %vm877 = vcmp.ge.s32.totalorder %v869, 1
        %vm878 = vcmp.ge.s32.totalorder %v870, 1
        %vm879 = vcmp.ge.s32.totalorder %v871, 1
        %vm880 = vcmp.ge.s32.totalorder %v872, 1
        %vm881 = vcmp.ge.s32.totalorder %v873, 1
        %v882 = vsel %vm874, %v866, 0.0
        %v883 = vsel %vm875, %v865, 0.0
        %v884 = vsel %vm876, %v864, 0.0
        %v885 = vsel %vm877, %v863, 0.0
        %v886 = vsel %vm878, %v862, 0.0
        %v887 = vsel %vm879, %v861, 0.0
        %v888 = vsel %vm880, %v860, 0.0
        %v889 = vsel %vm881, %v859, 0.0
        %v890 = vrot.slane %v820, 1
        %v891 = vrot.slane %v821, 1
        %v892 = vrot.slane %v822, 1
        %v893 = vrot.slane %v823, 1
        %v894 = vrot.slane %v824, 1
        %v895 = vrot.slane %v825, 1
        %v896 = vrot.slane %v826, 1
        %v897 = vrot.slane %v827, 1
        %vm898 = vcmp.lt.s32.totalorder %v857, 7
        %v899 = vsel %vm898, %v896, %v897
        %v900 = vsel %vm898, %v895, %v896
        %v901 = vsel %vm898, %v894, %v895
        %v902 = vsel %vm898, %v893, %v894
        %v903 = vsel %vm898, %v892, %v893
        %v904 = vsel %vm898, %v891, %v892
        %v905 = vsel %vm898, %v890, %v891
        %v906 = vsel %vm898, %v897, %v890
        %vm907 = vcmp.lt.s32.totalorder %v857, 63
        %vm908 = vcmp.lt.s32.totalorder %v867, 63
        %vm909 = vcmp.lt.s32.totalorder %v868, 63
        %vm910 = vcmp.lt.s32.totalorder %v869, 63
        %vm911 = vcmp.lt.s32.totalorder %v870, 63
        %vm912 = vcmp.lt.s32.totalorder %v871, 63
        %vm913 = vcmp.lt.s32.totalorder %v872, 63
        %vm914 = vcmp.lt.s32.totalorder %v873, 63
        %v915 = vsel %vm907, %v905, 0.0
        %v916 = vsel %vm908, %v904, 0.0
        %v917 = vsel %vm909, %v903, 0.0
        %v918 = vsel %vm910, %v902, 0.0
        %v919 = vsel %vm911, %v901, 0.0
        %v920 = vsel %vm912, %v900, 0.0
        %v921 = vsel %vm913, %v899, 0.0
        %v922 = vsel %vm914, %v906, 0.0
        %931 = vrot.lane.b32.xlu0 %v820, 32
        %v932 = vpop.permute.xlu0 %931
        %933 = vrot.lane.b32.xlu0 %v821, 32
        %v934 = vpop.permute.xlu0 %933
        %935 = vrot.lane.b32.xlu0 %v822, 32
        %v936 = vpop.permute.xlu0 %935
        %937 = vrot.lane.b32.xlu0 %v823, 32
        %v938 = vpop.permute.xlu0 %937
        %939 = vrot.lane.b32.xlu0 %v824, 32
        %v940 = vpop.permute.xlu0 %939
        %941 = vrot.lane.b32.xlu0 %v825, 32
        %v942 = vpop.permute.xlu0 %941
        %943 = vrot.lane.b32.xlu0 %v826, 32
        %v944 = vpop.permute.xlu0 %943
        %945 = vrot.lane.b32.xlu0 %v827, 32
        %v946 = vpop.permute.xlu0 %945
        %963 = vrot.lane.b32.xlu0 %v915, 64
        %v964 = vpop.permute.xlu0 %963
        %965 = vrot.lane.b32.xlu0 %v916, 64
        %v966 = vpop.permute.xlu0 %965
        %967 = vrot.lane.b32.xlu0 %v917, 64
        %v968 = vpop.permute.xlu0 %967
        %969 = vrot.lane.b32.xlu0 %v918, 64
        %v970 = vpop.permute.xlu0 %969
        %971 = vrot.lane.b32.xlu0 %v919, 64
        %v972 = vpop.permute.xlu0 %971
        %973 = vrot.lane.b32.xlu0 %v920, 64
        %v974 = vpop.permute.xlu0 %973
        %975 = vrot.lane.b32.xlu0 %v921, 64
        %v976 = vpop.permute.xlu0 %975
        %977 = vrot.lane.b32.xlu0 %v922, 64
        %v978 = vpop.permute.xlu0 %977
        %vm987 = vcmask 261120
        %v988 = vsel %vm987, %v882, %v932
        %v989 = vsel %vm987, %v883, %v934
        %v990 = vsel %vm987, %v884, %v936
        %v991 = vsel %vm987, %v885, %v938
        %v992 = vsel %vm987, %v886, %v940
        %v993 = vsel %vm987, %v887, %v942
        %v994 = vsel %vm987, %v888, %v944
        %v995 = vsel %vm987, %v889, %v946
        %vm996 = vcmask 523264
        %v997 = vsel %vm996, %v988, %v964
        %v998 = vsel %vm996, %v989, %v966
        %v999 = vsel %vm996, %v990, %v968
        %v1000 = vsel %vm996, %v991, %v970
        %v1001 = vsel %vm996, %v992, %v972
        %v1002 = vsel %vm996, %v993, %v974
        %v1003 = vsel %vm996, %v994, %v976
        %v1004 = vsel %vm996, %v995, %v978
        %v1005 = vld [vmem:[%s2] sm:$0xff]
        %v1006 = vld [vmem:[%s2 + $0x8] sm:$0xff]
        %v1007 = vld [vmem:[%s2 + $0x10] sm:$0xff]
        %v1008 = vld [vmem:[%s2 + $0x18] sm:$0xff]
        %v1009 = vld [vmem:[%s2 + $0x20] sm:$0xff]
        %v1010 = vld [vmem:[%s2 + $0x28] sm:$0xff]
        %v1011 = vld [vmem:[%s2 + $0x30] sm:$0xff]
        %v1012 = vld [vmem:[%s2 + $0x38] sm:$0xff]
        %v1013 = vld [vmem:[%s2 + $0x40] sm:$0xff]
        %v1014 = vld [vmem:[%s2 + $0x48] sm:$0xff]
        %v1015 = vld [vmem:[%s2 + $0x50] sm:$0xff]
        %v1016 = vld [vmem:[%s2 + $0x58] sm:$0xff]
        %v1017 = vld [vmem:[#allocation2] sm:$0x1]
        %v1019 = vlaneseq
        %v1020 = vshrl.u32 %v1019, 7
        %v1021 = vsub.s32 0, %v1020
        %v1022 = vrot.slane %v1017, %v1021
        %vm1024 = vcmask 785408
        %v1026 = vsel %vm1024, %v997, 0
        %v1029 = vsel %vm1024, %v998, 0
        %v1032 = vsel %vm1024, %v999, 0
        %v1035 = vsel %vm1024, %v1000, 0
        %v1038 = vsel %vm1024, %v1001, 0
        %v1041 = vsel %vm1024, %v1002, 0
        %v1044 = vsel %vm1024, %v1003, 0
        %v1047 = vsel %vm1024, %v1004, 0
        %1049 = vmatprep.subr.mxu0 0.0
        %1050 = vmatpush1.msra.mxu0 %v1005
        %1051 = vmatprep.subr.mxu0 0.0
        %1052 = vmatpush1.msra.mxu0 %v1006
        %1053 = vmatprep.subr.mxu0 0.0
        %1054 = vmatpush1.msra.mxu0 %v1007
        %1055 = vmatprep.subr.mxu0 0.0
        %1056 = vmatpush1.msra.mxu0 %v1008
        %1057 = vmatprep.subr.mxu0 0.0
        %1058 = vmatpush1.msra.mxu0 %v1009
        %1059 = vmatprep.subr.mxu0 0.0
        %1060 = vmatpush1.msra.mxu0 %v1010
        %1061 = vmatprep.subr.mxu0 0.0
        %1062 = vmatpush1.msra.mxu0 %v1011
        %1063 = vmatprep.subr.mxu0 0.0
        %1064 = vmatpush1.msra.mxu0 %v1012
        %1065 = vmatprep.subr.mxu0 0.0
        %1066 = vmatpush1.msra.mxu0 %v1013
        %1067 = vmatprep.subr.mxu0 0.0
        %1068 = vmatpush1.msra.mxu0 %v1014
        %1069 = vmatprep.subr.mxu0 0.0
        %1070 = vmatpush1.msra.mxu0 %v1015
        %1071 = vmatprep.subr.mxu0 0.0
        %1072 = vmatpush1.msra.mxu0 %v1016
        %1073 = vmatprep.subr.mxu0 0.0
        %1074 = vmatpush1.msra.mxu0 0.0
        %1075 = vmatprep.subr.mxu0 0.0
        %1076 = vmatpush1.msra.mxu0 0.0
        %1077 = vmatprep.subr.mxu0 0.0
        %1078 = vmatpush1.msra.mxu0 0.0
        %1079 = vmatprep.subr.mxu0 0.0
        %1080 = vmatpush1.msra.mxu0 0.0
        %1081 = vmatprep.subr.mxu0 0.0
        %1082 = vmatpush1.msra.mxu0 0.0
        %1083 = vmatprep.subr.mxu0 0.0
        %1084 = vmatpush1.msra.mxu0 0.0
        %1085 = vmatprep.subr.mxu0 0.0
        %1086 = vmatpush1.msra.mxu0 0.0
        %1087 = vmatprep.subr.mxu0 0.0
        %1088 = vmatpush1.msra.mxu0 0.0
        %1089 = vmatprep.subr.mxu0 0.0
        %1090 = vmatpush1.msra.mxu0 0.0
        %1091 = vmatprep.subr.mxu0 0.0
        %1092 = vmatpush1.msra.mxu0 0.0
        %1093 = vmatprep.subr.mxu0 0.0
        %1094 = vmatpush1.msra.mxu0 0.0
        %1095 = vmatprep.subr.mxu0 0.0
        %1096 = vmatpush1.msra.mxu0 0.0
        %1097 = vmatprep.subr.mxu0 0.0
        %1098 = vmatpush1.msra.mxu0 0.0
        %1099 = vmatprep.subr.mxu0 0.0
        %1100 = vmatpush1.msra.mxu0 0.0
        %1101 = vmatprep.subr.mxu0 0.0
        %1102 = vmatpush1.msra.mxu0 0.0
        %1103 = vmatprep.subr.mxu0 0.0
        %1104 = vmatpush1.msra.mxu0 0.0
        %1105 = vmatprep.subr.mxu0 0.0
        %1106 = vmatpush1.msra.mxu0 0.0
        %1107 = vmatprep.subr.mxu0 0.0
        %1108 = vmatpush1.msra.mxu0 0.0
        %1109 = vmatprep.subr.mxu0 0.0
        %1110 = vmatpush1.msra.mxu0 0.0
        %1111 = vmatprep.subr.mxu0 0.0
        %1112 = vmatpush1.msra.mxu0 0.0
        %1113 = vmatprep.mubr.f32.mxu0 0.0
        %1114 = vmatmul.mubr.f32.gmra.mrb[0].mxu0 %v1026
        %v1115 = vpop.f32.mrb[0].mxu0
        %v1116 = vadd.f32 %v1022, %v1115
        %v1117 = vpop.f32.mrb[0].mxu0
        %1118 = vmatprep.mubr.f32.mxu0 0.0
        %1119 = vmatmul.mubr.f32.gmra.mrb[0].mxu0 %v1029
        %v1120 = vpop.f32.mrb[0].mxu0
        %v1121 = vadd.f32 %v1022, %v1120
        %v1122 = vpop.f32.mrb[0].mxu0
        %1123 = vmatprep.mubr.f32.mxu0 0.0
        %1124 = vmatmul.mubr.f32.gmra.mrb[0].mxu0 %v1032
        %v1125 = vpop.f32.mrb[0].mxu0
        %v1126 = vadd.f32 %v1022, %v1125
        %v1127 = vpop.f32.mrb[0].mxu0
        %1128 = vmatprep.mubr.f32.mxu0 0.0
        %1129 = vmatmul.mubr.f32.gmra.mrb[0].mxu0 %v1035
        %v1130 = vpop.f32.mrb[0].mxu0
        %v1131 = vadd.f32 %v1022, %v1130
        %v1132 = vpop.f32.mrb[0].mxu0
        %1133 = vmatprep.mubr.f32.mxu0 0.0
        %1134 = vmatmul.mubr.f32.gmra.mrb[0].mxu0 %v1038
        %v1135 = vpop.f32.mrb[0].mxu0
        %v1136 = vadd.f32 %v1022, %v1135
        %v1137 = vpop.f32.mrb[0].mxu0
        %1138 = vmatprep.mubr.f32.mxu0 0.0
        %1139 = vmatmul.mubr.f32.gmra.mrb[0].mxu0 %v1041
        %v1140 = vpop.f32.mrb[0].mxu0
        %v1141 = vadd.f32 %v1022, %v1140
        %v1142 = vpop.f32.mrb[0].mxu0
        %1143 = vmatprep.mubr.f32.mxu0 0.0
        %1144 = vmatmul.mubr.f32.gmra.mrb[0].mxu0 %v1044
        %v1145 = vpop.f32.mrb[0].mxu0
        %v1146 = vadd.f32 %v1022, %v1145
        %v1147 = vpop.f32.mrb[0].mxu0
        %1148 = vmatprep.mubr.f32.mxu0 0.0
        %1149 = vmatmul.mubr.f32.gmra.mrb[0].mxu0 %v1047
        %v1150 = vpop.f32.mrb[0].mxu0
        %v1151 = vadd.f32 %v1022, %v1150
        %v1152 = vpop.f32.mrb[0].mxu0
        %1153 = vdwg.mxu0
        %v1155 = vsel %vm987, %v1116, 0
        %v1158 = vsel %vm987, %v1121, 0
        %v1161 = vsel %vm987, %v1126, 0
        %v1164 = vsel %vm987, %v1131, 0
        %v1167 = vsel %vm987, %v1136, 0
        %v1170 = vsel %vm987, %v1141, 0
        %v1173 = vsel %vm987, %v1146, 0
        %v1176 = vsel %vm987, %v1151, 0
        %1178 = vmatprep.subr.mxu0 0.0
        %1179 = vmatpush1.msra.mxu0 %v844
        %1180 = vmatprep.subr.mxu0 0.0
        %1181 = vmatpush1.msra.mxu0 %v845
        %1182 = vmatprep.subr.mxu0 0.0
        %1183 = vmatpush1.msra.mxu0 %v846
        %1184 = vmatprep.subr.mxu0 0.0
        %1185 = vmatpush1.msra.mxu0 %v847
        %1186 = vmatprep.subr.mxu0 0.0
        %1187 = vmatpush1.msra.mxu0 0.0
        %1188 = vmatprep.subr.mxu0 0.0
        %1189 = vmatpush1.msra.mxu0 0.0
        %1190 = vmatprep.subr.mxu0 0.0
        %1191 = vmatpush1.msra.mxu0 0.0
        %1192 = vmatprep.subr.mxu0 0.0
        %1193 = vmatpush1.msra.mxu0 0.0
        %1194 = vmatprep.subr.mxu0 0.0
        %1195 = vmatpush1.msra.mxu0 0.0
        %1196 = vmatprep.subr.mxu0 0.0
        %1197 = vmatpush1.msra.mxu0 0.0
        %1198 = vmatprep.subr.mxu0 0.0
        %1199 = vmatpush1.msra.mxu0 0.0
        %1200 = vmatprep.subr.mxu0 0.0
        %1201 = vmatpush1.msra.mxu0 0.0
        %1202 = vmatprep.subr.mxu0 0.0
        %1203 = vmatpush1.msra.mxu0 0.0
        %1204 = vmatprep.subr.mxu0 0.0
        %1205 = vmatpush1.msra.mxu0 0.0
        %1206 = vmatprep.subr.mxu0 0.0
        %1207 = vmatpush1.msra.mxu0 0.0
        %1208 = vmatprep.subr.mxu0 0.0
        %1209 = vmatpush1.msra.mxu0 0.0
        %1210 = vmatprep.subr.mxu0 0.0
        %1211 = vmatpush1.msra.mxu0 0.0
        %1212 = vmatprep.subr.mxu0 0.0
        %1213 = vmatpush1.msra.mxu0 0.0
        %1214 = vmatprep.subr.mxu0 0.0
        %1215 = vmatpush1.msra.mxu0 0.0
        %1216 = vmatprep.subr.mxu0 0.0
        %1217 = vmatpush1.msra.mxu0 0.0
        %1218 = vmatprep.subr.mxu0 0.0
        %1219 = vmatpush1.msra.mxu0 0.0
        %1220 = vmatprep.subr.mxu0 0.0
        %1221 = vmatpush1.msra.mxu0 0.0
        %1222 = vmatprep.subr.mxu0 0.0
        %1223 = vmatpush1.msra.mxu0 0.0
        %1224 = vmatprep.subr.mxu0 0.0
        %1225 = vmatpush1.msra.mxu0 0.0
        %1226 = vmatprep.subr.mxu0 0.0
        %1227 = vmatpush1.msra.mxu0 0.0
        %1228 = vmatprep.subr.mxu0 0.0
        %1229 = vmatpush1.msra.mxu0 0.0
        %1230 = vmatprep.subr.mxu0 0.0
        %1231 = vmatpush1.msra.mxu0 0.0
        %1232 = vmatprep.subr.mxu0 0.0
        %1233 = vmatpush1.msra.mxu0 0.0
        %1234 = vmatprep.subr.mxu0 0.0
        %1235 = vmatpush1.msra.mxu0 0.0
        %1236 = vmatprep.subr.mxu0 0.0
        %1237 = vmatpush1.msra.mxu0 0.0
        %1238 = vmatprep.subr.mxu0 0.0
        %1239 = vmatpush1.msra.mxu0 0.0
        %1240 = vmatprep.subr.mxu0 0.0
        %1241 = vmatpush1.msra.mxu0 0.0
        %1242 = vmatprep.mubr.f32.mxu0 0.0
        %1243 = vmatmul.mubr.f32.gmra.mrb[0].mxu0 %v1155
        %v1244 = vpop.f32.mrb[0].mxu0
        %v1245 = vadd.f32 0.0, %v1244
        %v1246 = vpop.f32.mrb[0].mxu0
        %1247 = vmatprep.mubr.f32.mxu0 0.0
        %1248 = vmatmul.mubr.f32.gmra.mrb[0].mxu0 %v1158
        %v1249 = vpop.f32.mrb[0].mxu0
        %v1250 = vadd.f32 0.0, %v1249
        %v1251 = vpop.f32.mrb[0].mxu0
        %1252 = vmatprep.mubr.f32.mxu0 0.0
        %1253 = vmatmul.mubr.f32.gmra.mrb[0].mxu0 %v1161
        %v1254 = vpop.f32.mrb[0].mxu0
        %v1255 = vadd.f32 0.0, %v1254
        %v1256 = vpop.f32.mrb[0].mxu0
        %1257 = vmatprep.mubr.f32.mxu0 0.0
        %1258 = vmatmul.mubr.f32.gmra.mrb[0].mxu0 %v1164
        %v1259 = vpop.f32.mrb[0].mxu0
        %v1260 = vadd.f32 0.0, %v1259
        %v1261 = vpop.f32.mrb[0].mxu0
        %1262 = vmatprep.mubr.f32.mxu0 0.0
        %1263 = vmatmul.mubr.f32.gmra.mrb[0].mxu0 %v1167
        %v1264 = vpop.f32.mrb[0].mxu0
        %v1265 = vadd.f32 0.0, %v1264
        %v1266 = vpop.f32.mrb[0].mxu0
        %1267 = vmatprep.mubr.f32.mxu0 0.0
        %1268 = vmatmul.mubr.f32.gmra.mrb[0].mxu0 %v1170
        %v1269 = vpop.f32.mrb[0].mxu0
        %v1270 = vadd.f32 0.0, %v1269
        %v1271 = vpop.f32.mrb[0].mxu0
        %1272 = vmatprep.mubr.f32.mxu0 0.0
        %1273 = vmatmul.mubr.f32.gmra.mrb[0].mxu0 %v1173
        %v1274 = vpop.f32.mrb[0].mxu0
        %v1275 = vadd.f32 0.0, %v1274
        %v1276 = vpop.f32.mrb[0].mxu0
        %1277 = vmatprep.mubr.f32.mxu0 0.0
        %1278 = vmatmul.mubr.f32.gmra.mrb[0].mxu0 %v1176
        %v1279 = vpop.f32.mrb[0].mxu0
        %v1280 = vadd.f32 0.0, %v1279
        %v1281 = vpop.f32.mrb[0].mxu0
        %1282 = vdwg.mxu0
        %v1283 = vsel %vm987, %v1245, 0.0
        %v1284 = vsel %vm987, %v1250, 0.0
        %v1285 = vadd.f32 %v1283, %v1284
        %v1286 = vsel %vm987, %v1255, 0.0
        %v1287 = vadd.f32 %v1285, %v1286
        %v1288 = vsel %vm987, %v1260, 0.0
        %v1289 = vadd.f32 %v1287, %v1288
        %v1290 = vsel %vm987, %v1265, 0.0
        %v1291 = vadd.f32 %v1289, %v1290
        %v1292 = vsel %vm987, %v1270, 0.0
        %v1293 = vadd.f32 %v1291, %v1292
        %v1294 = vsel %vm987, %v1275, 0.0
        %v1295 = vadd.f32 %v1293, %v1294
        %v1296 = vsel %vm987, %v1280, 0.0
        %v1297 = vadd.f32 %v1295, %v1296
        %v1298 = vrot.slane %v1297, 4
        %v1299 = vadd.f32 %v1297, %v1298
        %v1300 = vrot.slane %v1299, 2
        %v1301 = vadd.f32 %v1299, %v1300
        %v1302 = vrot.slane %v1301, 1
        %v1303 = vadd.f32 %v1301, %v1302
        %v1304 = vsub.f32 %v1116, %v1303
        %v1305 = vsub.f32 %v1121, %v1303
        %v1306 = vsub.f32 %v1126, %v1303
        %v1307 = vsub.f32 %v1131, %v1303
        %v1308 = vsub.f32 %v1136, %v1303
        %v1309 = vsub.f32 %v1141, %v1303
        %v1310 = vsub.f32 %v1146, %v1303
        %v1311 = vsub.f32 %v1151, %v1303
        %v1312 = vmul.f32 %v1304, %v1304
        %v1313 = vmul.f32 %v1305, %v1305
        %v1314 = vmul.f32 %v1306, %v1306
        %v1315 = vmul.f32 %v1307, %v1307
        %v1316 = vmul.f32 %v1308, %v1308
        %v1317 = vmul.f32 %v1309, %v1309
        %v1318 = vmul.f32 %v1310, %v1310
        %v1319 = vmul.f32 %v1311, %v1311
        %v1321 = vsel %vm987, %v1312, 0
        %v1324 = vsel %vm987, %v1313, 0
        %v1327 = vsel %vm987, %v1314, 0
        %v1330 = vsel %vm987, %v1315, 0
        %v1333 = vsel %vm987, %v1316, 0
        %v1336 = vsel %vm987, %v1317, 0
        %v1339 = vsel %vm987, %v1318, 0
        %v1342 = vsel %vm987, %v1319, 0
        %1344 = vmatprep.subr.mxu0 0.0
        %1345 = vmatpush1.msra.mxu0 %v844
        %1346 = vmatprep.subr.mxu0 0.0
        %1347 = vmatpush1.msra.mxu0 %v845
        %1348 = vmatprep.subr.mxu0 0.0
        %1349 = vmatpush1.msra.mxu0 %v846
        %1350 = vmatprep.subr.mxu0 0.0
        %1351 = vmatpush1.msra.mxu0 %v847
        %1352 = vmatprep.subr.mxu0 0.0
        %1353 = vmatpush1.msra.mxu0 0.0
        %1354 = vmatprep.subr.mxu0 0.0
        %1355 = vmatpush1.msra.mxu0 0.0
        %1356 = vmatprep.subr.mxu0 0.0
        %1357 = vmatpush1.msra.mxu0 0.0
        %1358 = vmatprep.subr.mxu0 0.0
        %1359 = vmatpush1.msra.mxu0 0.0
        %1360 = vmatprep.subr.mxu0 0.0
        %1361 = vmatpush1.msra.mxu0 0.0
        %1362 = vmatprep.subr.mxu0 0.0
        %1363 = vmatpush1.msra.mxu0 0.0
        %1364 = vmatprep.subr.mxu0 0.0
        %1365 = vmatpush1.msra.mxu0 0.0
        %1366 = vmatprep.subr.mxu0 0.0
        %1367 = vmatpush1.msra.mxu0 0.0
        %1368 = vmatprep.subr.mxu0 0.0
        %1369 = vmatpush1.msra.mxu0 0.0
        %1370 = vmatprep.subr.mxu0 0.0
        %1371 = vmatpush1.msra.mxu0 0.0
        %1372 = vmatprep.subr.mxu0 0.0
        %1373 = vmatpush1.msra.mxu0 0.0
        %1374 = vmatprep.subr.mxu0 0.0
        %1375 = vmatpush1.msra.mxu0 0.0
        %1376 = vmatprep.subr.mxu0 0.0
        %1377 = vmatpush1.msra.mxu0 0.0
        %1378 = vmatprep.subr.mxu0 0.0
        %1379 = vmatpush1.msra.mxu0 0.0
        %1380 = vmatprep.subr.mxu0 0.0
        %1381 = vmatpush1.msra.mxu0 0.0
        %1382 = vmatprep.subr.mxu0 0.0
        %1383 = vmatpush1.msra.mxu0 0.0
        %1384 = vmatprep.subr.mxu0 0.0
        %1385 = vmatpush1.msra.mxu0 0.0
        %1386 = vmatprep.subr.mxu0 0.0
        %1387 = vmatpush1.msra.mxu0 0.0
        %1388 = vmatprep.subr.mxu0 0.0
        %1389 = vmatpush1.msra.mxu0 0.0
        %1390 = vmatprep.subr.mxu0 0.0
        %1391 = vmatpush1.msra.mxu0 0.0
        %1392 = vmatprep.subr.mxu0 0.0
        %1393 = vmatpush1.msra.mxu0 0.0
        %1394 = vmatprep.subr.mxu0 0.0
        %1395 = vmatpush1.msra.mxu0 0.0
        %1396 = vmatprep.subr.mxu0 0.0
        %1397 = vmatpush1.msra.mxu0 0.0
        %1398 = vmatprep.subr.mxu0 0.0
        %1399 = vmatpush1.msra.mxu0 0.0
        %1400 = vmatprep.subr.mxu0 0.0
        %1401 = vmatpush1.msra.mxu0 0.0
        %1402 = vmatprep.subr.mxu0 0.0
        %1403 = vmatpush1.msra.mxu0 0.0
        %1404 = vmatprep.subr.mxu0 0.0
        %1405 = vmatpush1.msra.mxu0 0.0
        %1406 = vmatprep.subr.mxu0 0.0
        %1407 = vmatpush1.msra.mxu0 0.0
        %1408 = vmatprep.mubr.f32.mxu0 0.0
        %1409 = vmatmul.mubr.f32.gmra.mrb[0].mxu0 %v1321
        %v1410 = vpop.f32.mrb[0].mxu0
        %v1411 = vadd.f32 0.0, %v1410
        %v1412 = vpop.f32.mrb[0].mxu0
        %1413 = vmatprep.mubr.f32.mxu0 0.0
        %1414 = vmatmul.mubr.f32.gmra.mrb[0].mxu0 %v1324
        %v1415 = vpop.f32.mrb[0].mxu0
        %v1416 = vadd.f32 0.0, %v1415
        %v1417 = vpop.f32.mrb[0].mxu0
        %1418 = vmatprep.mubr.f32.mxu0 0.0
        %1419 = vmatmul.mubr.f32.gmra.mrb[0].mxu0 %v1327
        %v1420 = vpop.f32.mrb[0].mxu0
        %v1421 = vadd.f32 0.0, %v1420
        %v1422 = vpop.f32.mrb[0].mxu0
        %1423 = vmatprep.mubr.f32.mxu0 0.0
        %1424 = vmatmul.mubr.f32.gmra.mrb[0].mxu0 %v1330
        %v1425 = vpop.f32.mrb[0].mxu0
        %v1426 = vadd.f32 0.0, %v1425
        %v1427 = vpop.f32.mrb[0].mxu0
        %1428 = vmatprep.mubr.f32.mxu0 0.0
        %1429 = vmatmul.mubr.f32.gmra.mrb[0].mxu0 %v1333
        %v1430 = vpop.f32.mrb[0].mxu0
        %v1431 = vadd.f32 0.0, %v1430
        %v1432 = vpop.f32.mrb[0].mxu0
        %1433 = vmatprep.mubr.f32.mxu0 0.0
        %1434 = vmatmul.mubr.f32.gmra.mrb[0].mxu0 %v1336
        %v1435 = vpop.f32.mrb[0].mxu0
        %v1436 = vadd.f32 0.0, %v1435
        %v1437 = vpop.f32.mrb[0].mxu0
        %1438 = vmatprep.mubr.f32.mxu0 0.0
        %1439 = vmatmul.mubr.f32.gmra.mrb[0].mxu0 %v1339
        %v1440 = vpop.f32.mrb[0].mxu0
        %v1441 = vadd.f32 0.0, %v1440
        %v1442 = vpop.f32.mrb[0].mxu0
        %1443 = vmatprep.mubr.f32.mxu0 0.0
        %1444 = vmatmul.mubr.f32.gmra.mrb[0].mxu0 %v1342
        %v1445 = vpop.f32.mrb[0].mxu0
        %v1446 = vadd.f32 0.0, %v1445
        %v1447 = vpop.f32.mrb[0].mxu0
        %1448 = vdwg.mxu0
        %v1449 = vsel %vm987, %v1411, 0.0
        %v1450 = vsel %vm987, %v1416, 0.0
        %v1451 = vadd.f32 %v1449, %v1450
        %v1452 = vsel %vm987, %v1421, 0.0
        %v1453 = vadd.f32 %v1451, %v1452
        %v1454 = vsel %vm987, %v1426, 0.0
        %v1455 = vadd.f32 %v1453, %v1454
        %v1456 = vsel %vm987, %v1431, 0.0
        %v1457 = vadd.f32 %v1455, %v1456
        %v1458 = vsel %vm987, %v1436, 0.0
        %v1459 = vadd.f32 %v1457, %v1458
        %v1460 = vsel %vm987, %v1441, 0.0
        %v1461 = vadd.f32 %v1459, %v1460
        %v1462 = vsel %vm987, %v1446, 0.0
        %v1463 = vadd.f32 %v1461, %v1462
        %v1464 = vrot.slane %v1463, 4
        %v1465 = vadd.f32 %v1463, %v1464
        %v1466 = vrot.slane %v1465, 2
        %v1467 = vadd.f32 %v1465, %v1466
        %v1468 = vrot.slane %v1467, 1
        %v1469 = vadd.f32 %v1467, %v1468
        %v1470 = vadd.f32 %v1469, 1e-05
        %v1471 = vrsqrt.pop %v1470
        %v1472 = vmul.f32 %v1304, %v1471
        %v1473 = vmul.f32 %v1305, %v1471
        %v1474 = vmul.f32 %v1306, %v1471
        %v1475 = vmul.f32 %v1307, %v1471
        %v1476 = vmul.f32 %v1308, %v1471
        %v1477 = vmul.f32 %v1309, %v1471
        %v1478 = vmul.f32 %v1310, %v1471
        %v1479 = vmul.f32 %v1311, %v1471
        %v1480 = vld [vmem:[#allocation5] sm:$0x1]
        %v1482 = vlaneseq
        %v1483 = vshrl.u32 %v1482, 7
        %v1484 = vsub.s32 0, %v1483
        %v1485 = vrot.slane %v1480, %v1484
        %v1487 = vmul.f32 %v1472, %v1485
        %v1488 = vmul.f32 %v1473, %v1485
        %v1489 = vmul.f32 %v1474, %v1485
        %v1490 = vmul.f32 %v1475, %v1485
        %v1491 = vmul.f32 %v1476, %v1485
        %v1492 = vmul.f32 %v1477, %v1485
        %v1493 = vmul.f32 %v1478, %v1485
        %v1494 = vmul.f32 %v1479, %v1485
        %v1495 = vld [vmem:[#allocation7] sm:$0x1]
        %v1497 = vlaneseq
        %v1498 = vshrl.u32 %v1497, 7
        %v1499 = vsub.s32 0, %v1498
        %v1500 = vrot.slane %v1495, %v1499
        %v1502 = vadd.f32 %v1487, %v1500
        %v1503 = vadd.f32 %v1488, %v1500
        %v1504 = vadd.f32 %v1489, %v1500
        %v1505 = vadd.f32 %v1490, %v1500
        %v1506 = vadd.f32 %v1491, %v1500
        %v1507 = vadd.f32 %v1492, %v1500
        %v1508 = vadd.f32 %v1493, %v1500
        %v1509 = vadd.f32 %v1494, %v1500
        %v1510 = vmul.f32 %v1502, 0.2
        %v1511 = vmul.f32 %v1503, 0.2
        %v1512 = vmul.f32 %v1504, 0.2
        %v1513 = vmul.f32 %v1505, 0.2
        %v1514 = vmul.f32 %v1506, 0.2
        %v1515 = vmul.f32 %v1507, 0.2
        %v1516 = vmul.f32 %v1508, 0.2
        %v1517 = vmul.f32 %v1509, 0.2
        %v1518 = vmax.f32 %v1502, %v1510
        %v1519 = vmax.f32 %v1503, %v1511
        %v1520 = vmax.f32 %v1504, %v1512
        %v1521 = vmax.f32 %v1505, %v1513
        %v1522 = vmax.f32 %v1506, %v1514
        %v1523 = vmax.f32 %v1507, %v1515
        %v1524 = vmax.f32 %v1508, %v1516
        %v1525 = vmax.f32 %v1509, %v1517
        %1527 = vset.pattern.permute.xlu0 0
        %1528 = vperm.xlu0 %1527, %v836
        %v1529 = vpop.permute.xlu0 %1528
        %1532 = vset.pattern.permute.xlu0 0
        %1533 = vperm.xlu0 %1532, %v837
        %v1534 = vpop.permute.xlu0 %1533
        %1537 = vset.pattern.permute.xlu0 0
        %1538 = vperm.xlu0 %1537, %v838
        %v1539 = vpop.permute.xlu0 %1538
        %1542 = vset.pattern.permute.xlu0 0
        %1543 = vperm.xlu0 %1542, %v839
        %v1544 = vpop.permute.xlu0 %1543
        %1547 = vset.pattern.permute.xlu0 0
        %1548 = vperm.xlu0 %1547, %v840
        %v1549 = vpop.permute.xlu0 %1548
        %1552 = vset.pattern.permute.xlu0 0
        %1553 = vperm.xlu0 %1552, %v841
        %v1554 = vpop.permute.xlu0 %1553
        %1557 = vset.pattern.permute.xlu0 0
        %1558 = vperm.xlu0 %1557, %v842
        %v1559 = vpop.permute.xlu0 %1558
        %1562 = vset.pattern.permute.xlu0 0
        %1563 = vperm.xlu0 %1562, %v843
        %v1564 = vpop.permute.xlu0 %1563
        %v1566 = vmul.f32 %v1518, %v1529
        %v1567 = vmul.f32 %v1519, %v1534
        %v1568 = vmul.f32 %v1520, %v1539
        %v1569 = vmul.f32 %v1521, %v1544
        %v1570 = vmul.f32 %v1522, %v1549
        %v1571 = vmul.f32 %v1523, %v1554
        %v1572 = vmul.f32 %v1524, %v1559
        %v1573 = vmul.f32 %v1525, %v1564
        %v1574 = vrot.slane %v1566, 7
        %v1575 = vrot.slane %v1567, 7
        %v1576 = vrot.slane %v1568, 7
        %v1577 = vrot.slane %v1569, 7
        %v1578 = vrot.slane %v1570, 7
        %v1579 = vrot.slane %v1571, 7
        %v1580 = vrot.slane %v1572, 7
        %v1581 = vrot.slane %v1573, 7
        %v1582 = vsel %vm858, %v1580, %v1581
        %v1583 = vsel %vm858, %v1579, %v1580
        %v1584 = vsel %vm858, %v1578, %v1579
        %v1585 = vsel %vm858, %v1577, %v1578
        %v1586 = vsel %vm858, %v1576, %v1577
        %v1587 = vsel %vm858, %v1575, %v1576
        %v1588 = vsel %vm858, %v1574, %v1575
        %v1589 = vsel %vm858, %v1581, %v1574
        %v1590 = vsel %vm874, %v1589, 0.0
        %v1591 = vsel %vm875, %v1588, 0.0
        %v1592 = vsel %vm876, %v1587, 0.0
        %v1593 = vsel %vm877, %v1586, 0.0
        %v1594 = vsel %vm878, %v1585, 0.0
        %v1595 = vsel %vm879, %v1584, 0.0
        %v1596 = vsel %vm880, %v1583, 0.0
        %v1597 = vsel %vm881, %v1582, 0.0
        %v1598 = vrot.slane %v1566, 1
        %v1599 = vrot.slane %v1567, 1
        %v1600 = vrot.slane %v1568, 1
        %v1601 = vrot.slane %v1569, 1
        %v1602 = vrot.slane %v1570, 1
        %v1603 = vrot.slane %v1571, 1
        %v1604 = vrot.slane %v1572, 1
        %v1605 = vrot.slane %v1573, 1
        %v1606 = vsel %vm898, %v1604, %v1605
        %v1607 = vsel %vm898, %v1603, %v1604
        %v1608 = vsel %vm898, %v1602, %v1603
        %v1609 = vsel %vm898, %v1601, %v1602
        %v1610 = vsel %vm898, %v1600, %v1601
        %v1611 = vsel %vm898, %v1599, %v1600
        %v1612 = vsel %vm898, %v1598, %v1599
        %v1613 = vsel %vm898, %v1605, %v1598
        %v1614 = vsel %vm907, %v1612, 0.0
        %v1615 = vsel %vm908, %v1611, 0.0
        %v1616 = vsel %vm909, %v1610, 0.0
        %v1617 = vsel %vm910, %v1609, 0.0
        %v1618 = vsel %vm911, %v1608, 0.0
        %v1619 = vsel %vm912, %v1607, 0.0
        %v1620 = vsel %vm913, %v1606, 0.0
        %v1621 = vsel %vm914, %v1613, 0.0
        %1630 = vrot.lane.b32.xlu0 %v1566, 32
        %v1631 = vpop.permute.xlu0 %1630
        %1632 = vrot.lane.b32.xlu0 %v1567, 32
        %v1633 = vpop.permute.xlu0 %1632
        %1634 = vrot.lane.b32.xlu0 %v1568, 32
        %v1635 = vpop.permute.xlu0 %1634
        %1636 = vrot.lane.b32.xlu0 %v1569, 32
        %v1637 = vpop.permute.xlu0 %1636
        %1638 = vrot.lane.b32.xlu0 %v1570, 32
        %v1639 = vpop.permute.xlu0 %1638
        %1640 = vrot.lane.b32.xlu0 %v1571, 32
        %v1641 = vpop.permute.xlu0 %1640
        %1642 = vrot.lane.b32.xlu0 %v1572, 32
        %v1643 = vpop.permute.xlu0 %1642
        %1644 = vrot.lane.b32.xlu0 %v1573, 32
        %v1645 = vpop.permute.xlu0 %1644
        %1662 = vrot.lane.b32.xlu0 %v1614, 64
        %v1663 = vpop.permute.xlu0 %1662
        %1664 = vrot.lane.b32.xlu0 %v1615, 64
        %v1665 = vpop.permute.xlu0 %1664
        %1666 = vrot.lane.b32.xlu0 %v1616, 64
        %v1667 = vpop.permute.xlu0 %1666
        %1668 = vrot.lane.b32.xlu0 %v1617, 64
        %v1669 = vpop.permute.xlu0 %1668
        %1670 = vrot.lane.b32.xlu0 %v1618, 64
        %v1671 = vpop.permute.xlu0 %1670
        %1672 = vrot.lane.b32.xlu0 %v1619, 64
        %v1673 = vpop.permute.xlu0 %1672
        %1674 = vrot.lane.b32.xlu0 %v1620, 64
        %v1675 = vpop.permute.xlu0 %1674
        %1676 = vrot.lane.b32.xlu0 %v1621, 64
        %v1677 = vpop.permute.xlu0 %1676
        %v1686 = vsel %vm987, %v1590, %v1631
        %v1687 = vsel %vm987, %v1591, %v1633
        %v1688 = vsel %vm987, %v1592, %v1635
        %v1689 = vsel %vm987, %v1593, %v1637
        %v1690 = vsel %vm987, %v1594, %v1639
        %v1691 = vsel %vm987, %v1595, %v1641
        %v1692 = vsel %vm987, %v1596, %v1643
        %v1693 = vsel %vm987, %v1597, %v1645
        %v1694 = vsel %vm996, %v1686, %v1663
        %v1695 = vsel %vm996, %v1687, %v1665
        %v1696 = vsel %vm996, %v1688, %v1667
        %v1697 = vsel %vm996, %v1689, %v1669
        %v1698 = vsel %vm996, %v1690, %v1671
        %v1699 = vsel %vm996, %v1691, %v1673
        %v1700 = vsel %vm996, %v1692, %v1675
        %v1701 = vsel %vm996, %v1693, %v1677
        %s1702 = scalar_lea.vmem %s2, 96
        %v1703 = vld [vmem:[%s1702] sm:$0xff]
        %v1704 = vld [vmem:[%s1702 + $0x8] sm:$0xff]
        %v1705 = vld [vmem:[%s1702 + $0x10] sm:$0xff]
        %v1706 = vld [vmem:[%s1702 + $0x18] sm:$0xff]
        %v1707 = vld [vmem:[%s1702 + $0x20] sm:$0xff]
        %v1708 = vld [vmem:[%s1702 + $0x28] sm:$0xff]
        %v1709 = vld [vmem:[%s1702 + $0x30] sm:$0xff]
        %v1710 = vld [vmem:[%s1702 + $0x38] sm:$0xff]
        %v1711 = vld [vmem:[%s1702 + $0x40] sm:$0xff]
        %v1712 = vld [vmem:[%s1702 + $0x48] sm:$0xff]
        %v1713 = vld [vmem:[%s1702 + $0x50] sm:$0xff]
        %v1714 = vld [vmem:[%s1702 + $0x58] sm:$0xff]
        %s1715 = scalar_lea.vmem [#allocation2], 1
        %v1716 = vld [vmem:[%s1715] sm:$0x1]
        %v1718 = vlaneseq
        %v1719 = vshrl.u32 %v1718, 7
        %v1720 = vsub.s32 0, %v1719
        %v1721 = vrot.slane %v1716, %v1720
        %v1724 = vsel %vm1024, %v1694, 0
        %v1727 = vsel %vm1024, %v1695, 0
        %v1730 = vsel %vm1024, %v1696, 0
        %v1733 = vsel %vm1024, %v1697, 0
        %v1736 = vsel %vm1024, %v1698, 0
        %v1739 = vsel %vm1024, %v1699, 0
        %v1742 = vsel %vm1024, %v1700, 0
        %v1745 = vsel %vm1024, %v1701, 0
        %1747 = vmatprep.subr.mxu0 0.0
        %1748 = vmatpush1.msra.mxu0 %v1703
        %1749 = vmatprep.subr.mxu0 0.0
        %1750 = vmatpush1.msra.mxu0 %v1704
        %1751 = vmatprep.subr.mxu0 0.0
        %1752 = vmatpush1.msra.mxu0 %v1705
        %1753 = vmatprep.subr.mxu0 0.0
        %1754 = vmatpush1.msra.mxu0 %v1706
        %1755 = vmatprep.subr.mxu0 0.0
        %1756 = vmatpush1.msra.mxu0 %v1707
        %1757 = vmatprep.subr.mxu0 0.0
        %1758 = vmatpush1.msra.mxu0 %v1708
        %1759 = vmatprep.subr.mxu0 0.0
        %1760 = vmatpush1.msra.mxu0 %v1709
        %1761 = vmatprep.subr.mxu0 0.0
        %1762 = vmatpush1.msra.mxu0 %v1710
        %1763 = vmatprep.subr.mxu0 0.0
        %1764 = vmatpush1.msra.mxu0 %v1711
        %1765 = vmatprep.subr.mxu0 0.0
        %1766 = vmatpush1.msra.mxu0 %v1712
        %1767 = vmatprep.subr.mxu0 0.0
        %1768 = vmatpush1.msra.mxu0 %v1713
        %1769 = vmatprep.subr.mxu0 0.0
        %1770 = vmatpush1.msra.mxu0 %v1714
        %1771 = vmatprep.subr.mxu0 0.0
        %1772 = vmatpush1.msra.mxu0 0.0
        %1773 = vmatprep.subr.mxu0 0.0
        %1774 = vmatpush1.msra.mxu0 0.0
        %1775 = vmatprep.subr.mxu0 0.0
        %1776 = vmatpush1.msra.mxu0 0.0
        %1777 = vmatprep.subr.mxu0 0.0
        %1778 = vmatpush1.msra.mxu0 0.0
        %1779 = vmatprep.subr.mxu0 0.0
        %1780 = vmatpush1.msra.mxu0 0.0
        %1781 = vmatprep.subr.mxu0 0.0
        %1782 = vmatpush1.msra.mxu0 0.0
        %1783 = vmatprep.subr.mxu0 0.0
        %1784 = vmatpush1.msra.mxu0 0.0
        %1785 = vmatprep.subr.mxu0 0.0
        %1786 = vmatpush1.msra.mxu0 0.0
        %1787 = vmatprep.subr.mxu0 0.0
        %1788 = vmatpush1.msra.mxu0 0.0
        %1789 = vmatprep.subr.mxu0 0.0
        %1790 = vmatpush1.msra.mxu0 0.0
        %1791 = vmatprep.subr.mxu0 0.0
        %1792 = vmatpush1.msra.mxu0 0.0
        %1793 = vmatprep.subr.mxu0 0.0
        %1794 = vmatpush1.msra.mxu0 0.0
        %1795 = vmatprep.subr.mxu0 0.0
        %1796 = vmatpush1.msra.mxu0 0.0
        %1797 = vmatprep.subr.mxu0 0.0
        %1798 = vmatpush1.msra.mxu0 0.0
        %1799 = vmatprep.subr.mxu0 0.0
        %1800 = vmatpush1.msra.mxu0 0.0
        %1801 = vmatprep.subr.mxu0 0.0
        %1802 = vmatpush1.msra.mxu0 0.0
        %1803 = vmatprep.subr.mxu0 0.0
        %1804 = vmatpush1.msra.mxu0 0.0
        %1805 = vmatprep.subr.mxu0 0.0
        %1806 = vmatpush1.msra.mxu0 0.0
        %1807 = vmatprep.subr.mxu0 0.0
        %1808 = vmatpush1.msra.mxu0 0.0
        %1809 = vmatprep.subr.mxu0 0.0
        %1810 = vmatpush1.msra.mxu0 0.0
        %1811 = vmatprep.mubr.f32.mxu0 0.0
        %1812 = vmatmul.mubr.f32.gmra.mrb[0].mxu0 %v1724
        %v1813 = vpop.f32.mrb[0].mxu0
        %v1814 = vadd.f32 %v1721, %v1813
        %v1815 = vpop.f32.mrb[0].mxu0
        %1816 = vmatprep.mubr.f32.mxu0 0.0
        %1817 = vmatmul.mubr.f32.gmra.mrb[0].mxu0 %v1727
        %v1818 = vpop.f32.mrb[0].mxu0
        %v1819 = vadd.f32 %v1721, %v1818
        %v1820 = vpop.f32.mrb[0].mxu0
        %1821 = vmatprep.mubr.f32.mxu0 0.0
        %1822 = vmatmul.mubr.f32.gmra.mrb[0].mxu0 %v1730
        %v1823 = vpop.f32.mrb[0].mxu0
        %v1824 = vadd.f32 %v1721, %v1823
        %v1825 = vpop.f32.mrb[0].mxu0
        %1826 = vmatprep.mubr.f32.mxu0 0.0
        %1827 = vmatmul.mubr.f32.gmra.mrb[0].mxu0 %v1733
        %v1828 = vpop.f32.mrb[0].mxu0
        %v1829 = vadd.f32 %v1721, %v1828
        %v1830 = vpop.f32.mrb[0].mxu0
        %1831 = vmatprep.mubr.f32.mxu0 0.0
        %1832 = vmatmul.mubr.f32.gmra.mrb[0].mxu0 %v1736
        %v1833 = vpop.f32.mrb[0].mxu0
        %v1834 = vadd.f32 %v1721, %v1833
        %v1835 = vpop.f32.mrb[0].mxu0
        %1836 = vmatprep.mubr.f32.mxu0 0.0
        %1837 = vmatmul.mubr.f32.gmra.mrb[0].mxu0 %v1739
        %v1838 = vpop.f32.mrb[0].mxu0
        %v1839 = vadd.f32 %v1721, %v1838
        %v1840 = vpop.f32.mrb[0].mxu0
        %1841 = vmatprep.mubr.f32.mxu0 0.0
        %1842 = vmatmul.mubr.f32.gmra.mrb[0].mxu0 %v1742
        %v1843 = vpop.f32.mrb[0].mxu0
        %v1844 = vadd.f32 %v1721, %v1843
        %v1845 = vpop.f32.mrb[0].mxu0
        %1846 = vmatprep.mubr.f32.mxu0 0.0
        %1847 = vmatmul.mubr.f32.gmra.mrb[0].mxu0 %v1745
        %v1848 = vpop.f32.mrb[0].mxu0
        %v1849 = vadd.f32 %v1721, %v1848
        %v1850 = vpop.f32.mrb[0].mxu0
        %1851 = vdwg.mxu0
        %v1853 = vsel %vm987, %v1814, 0
        %v1856 = vsel %vm987, %v1819, 0
        %v1859 = vsel %vm987, %v1824, 0
        %v1862 = vsel %vm987, %v1829, 0
        %v1865 = vsel %vm987, %v1834, 0
        %v1868 = vsel %vm987, %v1839, 0
        %v1871 = vsel %vm987, %v1844, 0
        %v1874 = vsel %vm987, %v1849, 0
        %1876 = vmatprep.subr.mxu0 0.0
        %1877 = vmatpush1.msra.mxu0 %v844
        %1878 = vmatprep.subr.mxu0 0.0
        %1879 = vmatpush1.msra.mxu0 %v845
        %1880 = vmatprep.subr.mxu0 0.0
        %1881 = vmatpush1.msra.mxu0 %v846
        %1882 = vmatprep.subr.mxu0 0.0
        %1883 = vmatpush1.msra.mxu0 %v847
        %1884 = vmatprep.subr.mxu0 0.0
        %1885 = vmatpush1.msra.mxu0 0.0
        %1886 = vmatprep.subr.mxu0 0.0
        %1887 = vmatpush1.msra.mxu0 0.0
        %1888 = vmatprep.subr.mxu0 0.0
        %1889 = vmatpush1.msra.mxu0 0.0
        %1890 = vmatprep.subr.mxu0 0.0
        %1891 = vmatpush1.msra.mxu0 0.0
        %1892 = vmatprep.subr.mxu0 0.0
        %1893 = vmatpush1.msra.mxu0 0.0
        %1894 = vmatprep.subr.mxu0 0.0
        %1895 = vmatpush1.msra.mxu0 0.0
        %1896 = vmatprep.subr.mxu0 0.0
        %1897 = vmatpush1.msra.mxu0 0.0
        %1898 = vmatprep.subr.mxu0 0.0
        %1899 = vmatpush1.msra.mxu0 0.0
        %1900 = vmatprep.subr.mxu0 0.0
        %1901 = vmatpush1.msra.mxu0 0.0
        %1902 = vmatprep.subr.mxu0 0.0
        %1903 = vmatpush1.msra.mxu0 0.0
        %1904 = vmatprep.subr.mxu0 0.0
        %1905 = vmatpush1.msra.mxu0 0.0
        %1906 = vmatprep.subr.mxu0 0.0
        %1907 = vmatpush1.msra.mxu0 0.0
        %1908 = vmatprep.subr.mxu0 0.0
        %1909 = vmatpush1.msra.mxu0 0.0
        %1910 = vmatprep.subr.mxu0 0.0
        %1911 = vmatpush1.msra.mxu0 0.0
        %1912 = vmatprep.subr.mxu0 0.0
        %1913 = vmatpush1.msra.mxu0 0.0
        %1914 = vmatprep.subr.mxu0 0.0
        %1915 = vmatpush1.msra.mxu0 0.0
        %1916 = vmatprep.subr.mxu0 0.0
        %1917 = vmatpush1.msra.mxu0 0.0
        %1918 = vmatprep.subr.mxu0 0.0
        %1919 = vmatpush1.msra.mxu0 0.0
        %1920 = vmatprep.subr.mxu0 0.0
        %1921 = vmatpush1.msra.mxu0 0.0
        %1922 = vmatprep.subr.mxu0 0.0
        %1923 = vmatpush1.msra.mxu0 0.0
        %1924 = vmatprep.subr.mxu0 0.0
        %1925 = vmatpush1.msra.mxu0 0.0
        %1926 = vmatprep.subr.mxu0 0.0
        %1927 = vmatpush1.msra.mxu0 0.0
        %1928 = vmatprep.subr.mxu0 0.0
        %1929 = vmatpush1.msra.mxu0 0.0
        %1930 = vmatprep.subr.mxu0 0.0
        %1931 = vmatpush1.msra.mxu0 0.0
        %1932 = vmatprep.subr.mxu0 0.0
        %1933 = vmatpush1.msra.mxu0 0.0
        %1934 = vmatprep.subr.mxu0 0.0
        %1935 = vmatpush1.msra.mxu0 0.0
        %1936 = vmatprep.subr.mxu0 0.0
        %1937 = vmatpush1.msra.mxu0 0.0
        %1938 = vmatprep.subr.mxu0 0.0
        %1939 = vmatpush1.msra.mxu0 0.0
        %1940 = vmatprep.mubr.f32.mxu0 0.0
        %1941 = vmatmul.mubr.f32.gmra.mrb[0].mxu0 %v1853
        %v1942 = vpop.f32.mrb[0].mxu0
        %v1943 = vadd.f32 0.0, %v1942
        %v1944 = vpop.f32.mrb[0].mxu0
        %1945 = vmatprep.mubr.f32.mxu0 0.0
        %1946 = vmatmul.mubr.f32.gmra.mrb[0].mxu0 %v1856
        %v1947 = vpop.f32.mrb[0].mxu0
        %v1948 = vadd.f32 0.0, %v1947
        %v1949 = vpop.f32.mrb[0].mxu0
        %1950 = vmatprep.mubr.f32.mxu0 0.0
        %1951 = vmatmul.mubr.f32.gmra.mrb[0].mxu0 %v1859
        %v1952 = vpop.f32.mrb[0].mxu0
        %v1953 = vadd.f32 0.0, %v1952
        %v1954 = vpop.f32.mrb[0].mxu0
        %1955 = vmatprep.mubr.f32.mxu0 0.0
        %1956 = vmatmul.mubr.f32.gmra.mrb[0].mxu0 %v1862
        %v1957 = vpop.f32.mrb[0].mxu0
        %v1958 = vadd.f32 0.0, %v1957
        %v1959 = vpop.f32.mrb[0].mxu0
        %1960 = vmatprep.mubr.f32.mxu0 0.0
        %1961 = vmatmul.mubr.f32.gmra.mrb[0].mxu0 %v1865
        %v1962 = vpop.f32.mrb[0].mxu0
        %v1963 = vadd.f32 0.0, %v1962
        %v1964 = vpop.f32.mrb[0].mxu0
        %1965 = vmatprep.mubr.f32.mxu0 0.0
        %1966 = vmatmul.mubr.f32.gmra.mrb[0].mxu0 %v1868
        %v1967 = vpop.f32.mrb[0].mxu0
        %v1968 = vadd.f32 0.0, %v1967
        %v1969 = vpop.f32.mrb[0].mxu0
        %1970 = vmatprep.mubr.f32.mxu0 0.0
        %1971 = vmatmul.mubr.f32.gmra.mrb[0].mxu0 %v1871
        %v1972 = vpop.f32.mrb[0].mxu0
        %v1973 = vadd.f32 0.0, %v1972
        %v1974 = vpop.f32.mrb[0].mxu0
        %1975 = vmatprep.mubr.f32.mxu0 0.0
        %1976 = vmatmul.mubr.f32.gmra.mrb[0].mxu0 %v1874
        %v1977 = vpop.f32.mrb[0].mxu0
        %v1978 = vadd.f32 0.0, %v1977
        %v1979 = vpop.f32.mrb[0].mxu0
        %1980 = vdwg.mxu0
        %v1981 = vsel %vm987, %v1943, 0.0
        %v1982 = vsel %vm987, %v1948, 0.0
        %v1983 = vadd.f32 %v1981, %v1982
        %v1984 = vsel %vm987, %v1953, 0.0
        %v1985 = vadd.f32 %v1983, %v1984
        %v1986 = vsel %vm987, %v1958, 0.0
        %v1987 = vadd.f32 %v1985, %v1986
        %v1988 = vsel %vm987, %v1963, 0.0
        %v1989 = vadd.f32 %v1987, %v1988
        %v1990 = vsel %vm987, %v1968, 0.0
        %v1991 = vadd.f32 %v1989, %v1990
        %v1992 = vsel %vm987, %v1973, 0.0
        %v1993 = vadd.f32 %v1991, %v1992
        %v1994 = vsel %vm987, %v1978, 0.0
        %v1995 = vadd.f32 %v1993, %v1994
        %v1996 = vrot.slane %v1995, 4
        %v1997 = vadd.f32 %v1995, %v1996
        %v1998 = vrot.slane %v1997, 2
        %v1999 = vadd.f32 %v1997, %v1998
        %v2000 = vrot.slane %v1999, 1
        %v2001 = vadd.f32 %v1999, %v2000
        %v2002 = vsub.f32 %v1814, %v2001
        %v2003 = vsub.f32 %v1819, %v2001
        %v2004 = vsub.f32 %v1824, %v2001
        %v2005 = vsub.f32 %v1829, %v2001
        %v2006 = vsub.f32 %v1834, %v2001
        %v2007 = vsub.f32 %v1839, %v2001
        %v2008 = vsub.f32 %v1844, %v2001
        %v2009 = vsub.f32 %v1849, %v2001
        %v2010 = vmul.f32 %v2002, %v2002
        %v2011 = vmul.f32 %v2003, %v2003
        %v2012 = vmul.f32 %v2004, %v2004
        %v2013 = vmul.f32 %v2005, %v2005
        %v2014 = vmul.f32 %v2006, %v2006
        %v2015 = vmul.f32 %v2007, %v2007
        %v2016 = vmul.f32 %v2008, %v2008
        %v2017 = vmul.f32 %v2009, %v2009
        %v2019 = vsel %vm987, %v2010, 0
        %v2022 = vsel %vm987, %v2011, 0
        %v2025 = vsel %vm987, %v2012, 0
        %v2028 = vsel %vm987, %v2013, 0
        %v2031 = vsel %vm987, %v2014, 0
        %v2034 = vsel %vm987, %v2015, 0
        %v2037 = vsel %vm987, %v2016, 0
        %v2040 = vsel %vm987, %v2017, 0
        %2042 = vmatprep.subr.mxu0 0.0
        %2043 = vmatpush1.msra.mxu0 %v844
        %2044 = vmatprep.subr.mxu0 0.0
        %2045 = vmatpush1.msra.mxu0 %v845
        %2046 = vmatprep.subr.mxu0 0.0
        %2047 = vmatpush1.msra.mxu0 %v846
        %2048 = vmatprep.subr.mxu0 0.0
        %2049 = vmatpush1.msra.mxu0 %v847
        %2050 = vmatprep.subr.mxu0 0.0
        %2051 = vmatpush1.msra.mxu0 0.0
        %2052 = vmatprep.subr.mxu0 0.0
        %2053 = vmatpush1.msra.mxu0 0.0
        %2054 = vmatprep.subr.mxu0 0.0
        %2055 = vmatpush1.msra.mxu0 0.0
        %2056 = vmatprep.subr.mxu0 0.0
        %2057 = vmatpush1.msra.mxu0 0.0
        %2058 = vmatprep.subr.mxu0 0.0
        %2059 = vmatpush1.msra.mxu0 0.0
        %2060 = vmatprep.subr.mxu0 0.0
        %2061 = vmatpush1.msra.mxu0 0.0
        %2062 = vmatprep.subr.mxu0 0.0
        %2063 = vmatpush1.msra.mxu0 0.0
        %2064 = vmatprep.subr.mxu0 0.0
        %2065 = vmatpush1.msra.mxu0 0.0
        %2066 = vmatprep.subr.mxu0 0.0
        %2067 = vmatpush1.msra.mxu0 0.0
        %2068 = vmatprep.subr.mxu0 0.0
        %2069 = vmatpush1.msra.mxu0 0.0
        %2070 = vmatprep.subr.mxu0 0.0
        %2071 = vmatpush1.msra.mxu0 0.0
        %2072 = vmatprep.subr.mxu0 0.0
        %2073 = vmatpush1.msra.mxu0 0.0
        %2074 = vmatprep.subr.mxu0 0.0
        %2075 = vmatpush1.msra.mxu0 0.0
        %2076 = vmatprep.subr.mxu0 0.0
        %2077 = vmatpush1.msra.mxu0 0.0
        %2078 = vmatprep.subr.mxu0 0.0
        %2079 = vmatpush1.msra.mxu0 0.0
        %2080 = vmatprep.subr.mxu0 0.0
        %2081 = vmatpush1.msra.mxu0 0.0
        %2082 = vmatprep.subr.mxu0 0.0
        %2083 = vmatpush1.msra.mxu0 0.0
        %2084 = vmatprep.subr.mxu0 0.0
        %2085 = vmatpush1.msra.mxu0 0.0
        %2086 = vmatprep.subr.mxu0 0.0
        %2087 = vmatpush1.msra.mxu0 0.0
        %2088 = vmatprep.subr.mxu0 0.0
        %2089 = vmatpush1.msra.mxu0 0.0
        %2090 = vmatprep.subr.mxu0 0.0
        %2091 = vmatpush1.msra.mxu0 0.0
        %2092 = vmatprep.subr.mxu0 0.0
        %2093 = vmatpush1.msra.mxu0 0.0
        %2094 = vmatprep.subr.mxu0 0.0
        %2095 = vmatpush1.msra.mxu0 0.0
        %2096 = vmatprep.subr.mxu0 0.0
        %2097 = vmatpush1.msra.mxu0 0.0
        %2098 = vmatprep.subr.mxu0 0.0
        %2099 = vmatpush1.msra.mxu0 0.0
        %2100 = vmatprep.subr.mxu0 0.0
        %2101 = vmatpush1.msra.mxu0 0.0
        %2102 = vmatprep.subr.mxu0 0.0
        %2103 = vmatpush1.msra.mxu0 0.0
        %2104 = vmatprep.subr.mxu0 0.0
        %2105 = vmatpush1.msra.mxu0 0.0
        %2106 = vmatprep.mubr.f32.mxu0 0.0
        %2107 = vmatmul.mubr.f32.gmra.mrb[0].mxu0 %v2019
        %v2108 = vpop.f32.mrb[0].mxu0
        %v2109 = vadd.f32 0.0, %v2108
        %v2110 = vpop.f32.mrb[0].mxu0
        %2111 = vmatprep.mubr.f32.mxu0 0.0
        %2112 = vmatmul.mubr.f32.gmra.mrb[0].mxu0 %v2022
        %v2113 = vpop.f32.mrb[0].mxu0
        %v2114 = vadd.f32 0.0, %v2113
        %v2115 = vpop.f32.mrb[0].mxu0
        %2116 = vmatprep.mubr.f32.mxu0 0.0
        %2117 = vmatmul.mubr.f32.gmra.mrb[0].mxu0 %v2025
        %v2118 = vpop.f32.mrb[0].mxu0
        %v2119 = vadd.f32 0.0, %v2118
        %v2120 = vpop.f32.mrb[0].mxu0
        %2121 = vmatprep.mubr.f32.mxu0 0.0
        %2122 = vmatmul.mubr.f32.gmra.mrb[0].mxu0 %v2028
        %v2123 = vpop.f32.mrb[0].mxu0
        %v2124 = vadd.f32 0.0, %v2123
        %v2125 = vpop.f32.mrb[0].mxu0
        %2126 = vmatprep.mubr.f32.mxu0 0.0
        %2127 = vmatmul.mubr.f32.gmra.mrb[0].mxu0 %v2031
        %v2128 = vpop.f32.mrb[0].mxu0
        %v2129 = vadd.f32 0.0, %v2128
        %v2130 = vpop.f32.mrb[0].mxu0
        %2131 = vmatprep.mubr.f32.mxu0 0.0
        %2132 = vmatmul.mubr.f32.gmra.mrb[0].mxu0 %v2034
        %v2133 = vpop.f32.mrb[0].mxu0
        %v2134 = vadd.f32 0.0, %v2133
        %v2135 = vpop.f32.mrb[0].mxu0
        %2136 = vmatprep.mubr.f32.mxu0 0.0
        %2137 = vmatmul.mubr.f32.gmra.mrb[0].mxu0 %v2037
        %v2138 = vpop.f32.mrb[0].mxu0
        %v2139 = vadd.f32 0.0, %v2138
        %v2140 = vpop.f32.mrb[0].mxu0
        %2141 = vmatprep.mubr.f32.mxu0 0.0
        %2142 = vmatmul.mubr.f32.gmra.mrb[0].mxu0 %v2040
        %v2143 = vpop.f32.mrb[0].mxu0
        %v2144 = vadd.f32 0.0, %v2143
        %v2145 = vpop.f32.mrb[0].mxu0
        %2146 = vdwg.mxu0
        %v2147 = vsel %vm987, %v2109, 0.0
        %v2148 = vsel %vm987, %v2114, 0.0
        %v2149 = vadd.f32 %v2147, %v2148
        %v2150 = vsel %vm987, %v2119, 0.0
        %v2151 = vadd.f32 %v2149, %v2150
        %v2152 = vsel %vm987, %v2124, 0.0
        %v2153 = vadd.f32 %v2151, %v2152
        %v2154 = vsel %vm987, %v2129, 0.0
        %v2155 = vadd.f32 %v2153, %v2154
        %v2156 = vsel %vm987, %v2134, 0.0
        %v2157 = vadd.f32 %v2155, %v2156
        %v2158 = vsel %vm987, %v2139, 0.0
        %v2159 = vadd.f32 %v2157, %v2158
        %v2160 = vsel %vm987, %v2144, 0.0
        %v2161 = vadd.f32 %v2159, %v2160
        %v2162 = vrot.slane %v2161, 4
        %v2163 = vadd.f32 %v2161, %v2162
        %v2164 = vrot.slane %v2163, 2
        %v2165 = vadd.f32 %v2163, %v2164
        %v2166 = vrot.slane %v2165, 1
        %v2167 = vadd.f32 %v2165, %v2166
        %v2168 = vadd.f32 %v2167, 1e-05
        %v2169 = vrsqrt.pop %v2168
        %v2170 = vmul.f32 %v2002, %v2169
        %v2171 = vmul.f32 %v2003, %v2169
        %v2172 = vmul.f32 %v2004, %v2169
        %v2173 = vmul.f32 %v2005, %v2169
        %v2174 = vmul.f32 %v2006, %v2169
        %v2175 = vmul.f32 %v2007, %v2169
        %v2176 = vmul.f32 %v2008, %v2169
        %v2177 = vmul.f32 %v2009, %v2169
        %s2178 = scalar_lea.vmem [#allocation5], 1
        %v2179 = vld [vmem:[%s2178] sm:$0x1]
        %v2181 = vlaneseq
        %v2182 = vshrl.u32 %v2181, 7
        %v2183 = vsub.s32 0, %v2182
        %v2184 = vrot.slane %v2179, %v2183
        %v2186 = vmul.f32 %v2170, %v2184
        %v2187 = vmul.f32 %v2171, %v2184
        %v2188 = vmul.f32 %v2172, %v2184
        %v2189 = vmul.f32 %v2173, %v2184
        %v2190 = vmul.f32 %v2174, %v2184
        %v2191 = vmul.f32 %v2175, %v2184
        %v2192 = vmul.f32 %v2176, %v2184
        %v2193 = vmul.f32 %v2177, %v2184
        %s2194 = scalar_lea.vmem [#allocation7], 1
        %v2195 = vld [vmem:[%s2194] sm:$0x1]
        %v2197 = vlaneseq
        %v2198 = vshrl.u32 %v2197, 7
        %v2199 = vsub.s32 0, %v2198
        %v2200 = vrot.slane %v2195, %v2199
        %v2202 = vadd.f32 %v2186, %v2200
        %v2203 = vadd.f32 %v2187, %v2200
        %v2204 = vadd.f32 %v2188, %v2200
        %v2205 = vadd.f32 %v2189, %v2200
        %v2206 = vadd.f32 %v2190, %v2200
        %v2207 = vadd.f32 %v2191, %v2200
        %v2208 = vadd.f32 %v2192, %v2200
        %v2209 = vadd.f32 %v2193, %v2200
        %v2210 = vmul.f32 %v2202, 0.2
        %v2211 = vmul.f32 %v2203, 0.2
        %v2212 = vmul.f32 %v2204, 0.2
        %v2213 = vmul.f32 %v2205, 0.2
        %v2214 = vmul.f32 %v2206, 0.2
        %v2215 = vmul.f32 %v2207, 0.2
        %v2216 = vmul.f32 %v2208, 0.2
        %v2217 = vmul.f32 %v2209, 0.2
        %v2218 = vmax.f32 %v2202, %v2210
        %v2219 = vmax.f32 %v2203, %v2211
        %v2220 = vmax.f32 %v2204, %v2212
        %v2221 = vmax.f32 %v2205, %v2213
        %v2222 = vmax.f32 %v2206, %v2214
        %v2223 = vmax.f32 %v2207, %v2215
        %v2224 = vmax.f32 %v2208, %v2216
        %v2225 = vmax.f32 %v2209, %v2217
        %v2226 = vmul.f32 %v2218, %v1529
        %v2227 = vmul.f32 %v2219, %v1534
        %v2228 = vmul.f32 %v2220, %v1539
        %v2229 = vmul.f32 %v2221, %v1544
        %v2230 = vmul.f32 %v2222, %v1549
        %v2231 = vmul.f32 %v2223, %v1554
        %v2232 = vmul.f32 %v2224, %v1559
        %v2233 = vmul.f32 %v2225, %v1564
        %v2234 = vrot.slane %v2226, 7
        %v2235 = vrot.slane %v2227, 7
        %v2236 = vrot.slane %v2228, 7
        %v2237 = vrot.slane %v2229, 7
        %v2238 = vrot.slane %v2230, 7
        %v2239 = vrot.slane %v2231, 7
        %v2240 = vrot.slane %v2232, 7
        %v2241 = vrot.slane %v2233, 7
        %v2242 = vsel %vm858, %v2240, %v2241
        %v2243 = vsel %vm858, %v2239, %v2240
        %v2244 = vsel %vm858, %v2238, %v2239
        %v2245 = vsel %vm858, %v2237, %v2238
        %v2246 = vsel %vm858, %v2236, %v2237
        %v2247 = vsel %vm858, %v2235, %v2236
        %v2248 = vsel %vm858, %v2234, %v2235
        %v2249 = vsel %vm858, %v2241, %v2234
        %v2250 = vsel %vm874, %v2249, 0.0
        %v2251 = vsel %vm875, %v2248, 0.0
        %v2252 = vsel %vm876, %v2247, 0.0
        %v2253 = vsel %vm877, %v2246, 0.0
        %v2254 = vsel %vm878, %v2245, 0.0
        %v2255 = vsel %vm879, %v2244, 0.0
        %v2256 = vsel %vm880, %v2243, 0.0
        %v2257 = vsel %vm881, %v2242, 0.0
        %v2258 = vrot.slane %v2226, 1
        %v2259 = vrot.slane %v2227, 1
        %v2260 = vrot.slane %v2228, 1
        %v2261 = vrot.slane %v2229, 1
        %v2262 = vrot.slane %v2230, 1
        %v2263 = vrot.slane %v2231, 1
        %v2264 = vrot.slane %v2232, 1
        %v2265 = vrot.slane %v2233, 1
        %v2266 = vsel %vm898, %v2264, %v2265
        %v2267 = vsel %vm898, %v2263, %v2264
        %v2268 = vsel %vm898, %v2262, %v2263
        %v2269 = vsel %vm898, %v2261, %v2262
        %v2270 = vsel %vm898, %v2260, %v2261
        %v2271 = vsel %vm898, %v2259, %v2260
        %v2272 = vsel %vm898, %v2258, %v2259
        %v2273 = vsel %vm898, %v2265, %v2258
        %v2274 = vsel %vm907, %v2272, 0.0
        %v2275 = vsel %vm908, %v2271, 0.0
        %v2276 = vsel %vm909, %v2270, 0.0
        %v2277 = vsel %vm910, %v2269, 0.0
        %v2278 = vsel %vm911, %v2268, 0.0
        %v2279 = vsel %vm912, %v2267, 0.0
        %v2280 = vsel %vm913, %v2266, 0.0
        %v2281 = vsel %vm914, %v2273, 0.0
        %2290 = vrot.lane.b32.xlu0 %v2226, 32
        %v2291 = vpop.permute.xlu0 %2290
        %2292 = vrot.lane.b32.xlu0 %v2227, 32
        %v2293 = vpop.permute.xlu0 %2292
        %2294 = vrot.lane.b32.xlu0 %v2228, 32
        %v2295 = vpop.permute.xlu0 %2294
        %2296 = vrot.lane.b32.xlu0 %v2229, 32
        %v2297 = vpop.permute.xlu0 %2296
        %2298 = vrot.lane.b32.xlu0 %v2230, 32
        %v2299 = vpop.permute.xlu0 %2298
        %2300 = vrot.lane.b32.xlu0 %v2231, 32
        %v2301 = vpop.permute.xlu0 %2300
        %2302 = vrot.lane.b32.xlu0 %v2232, 32
        %v2303 = vpop.permute.xlu0 %2302
        %2304 = vrot.lane.b32.xlu0 %v2233, 32
        %v2305 = vpop.permute.xlu0 %2304
        %2322 = vrot.lane.b32.xlu0 %v2274, 64
        %v2323 = vpop.permute.xlu0 %2322
        %2324 = vrot.lane.b32.xlu0 %v2275, 64
        %v2325 = vpop.permute.xlu0 %2324
        %2326 = vrot.lane.b32.xlu0 %v2276, 64
        %v2327 = vpop.permute.xlu0 %2326
        %2328 = vrot.lane.b32.xlu0 %v2277, 64
        %v2329 = vpop.permute.xlu0 %2328
        %2330 = vrot.lane.b32.xlu0 %v2278, 64
        %v2331 = vpop.permute.xlu0 %2330
        %2332 = vrot.lane.b32.xlu0 %v2279, 64
        %v2333 = vpop.permute.xlu0 %2332
        %2334 = vrot.lane.b32.xlu0 %v2280, 64
        %v2335 = vpop.permute.xlu0 %2334
        %2336 = vrot.lane.b32.xlu0 %v2281, 64
        %v2337 = vpop.permute.xlu0 %2336
        %v2346 = vsel %vm987, %v2250, %v2291
        %v2347 = vsel %vm987, %v2251, %v2293
        %v2348 = vsel %vm987, %v2252, %v2295
        %v2349 = vsel %vm987, %v2253, %v2297
        %v2350 = vsel %vm987, %v2254, %v2299
        %v2351 = vsel %vm987, %v2255, %v2301
        %v2352 = vsel %vm987, %v2256, %v2303
        %v2353 = vsel %vm987, %v2257, %v2305
        %v2354 = vsel %vm996, %v2346, %v2323
        %v2355 = vsel %vm996, %v2347, %v2325
        %v2356 = vsel %vm996, %v2348, %v2327
        %v2357 = vsel %vm996, %v2349, %v2329
        %v2358 = vsel %vm996, %v2350, %v2331
        %v2359 = vsel %vm996, %v2351, %v2333
        %v2360 = vsel %vm996, %v2352, %v2335
        %v2361 = vsel %vm996, %v2353, %v2337
        %s2362 = scalar_lea.vmem %s2, 192
        %v2363 = vld [vmem:[%s2362] sm:$0xff]
        %v2364 = vld [vmem:[%s2362 + $0x8] sm:$0xff]
        %v2365 = vld [vmem:[%s2362 + $0x10] sm:$0xff]
        %v2366 = vld [vmem:[%s2362 + $0x18] sm:$0xff]
        %v2367 = vld [vmem:[%s2362 + $0x20] sm:$0xff]
        %v2368 = vld [vmem:[%s2362 + $0x28] sm:$0xff]
        %v2369 = vld [vmem:[%s2362 + $0x30] sm:$0xff]
        %v2370 = vld [vmem:[%s2362 + $0x38] sm:$0xff]
        %v2371 = vld [vmem:[%s2362 + $0x40] sm:$0xff]
        %v2372 = vld [vmem:[%s2362 + $0x48] sm:$0xff]
        %v2373 = vld [vmem:[%s2362 + $0x50] sm:$0xff]
        %v2374 = vld [vmem:[%s2362 + $0x58] sm:$0xff]
        %s2375 = scalar_lea.vmem [#allocation2], 2
        %v2376 = vld [vmem:[%s2375] sm:$0x1]
        %v2378 = vlaneseq
        %v2379 = vshrl.u32 %v2378, 7
        %v2380 = vsub.s32 0, %v2379
        %v2381 = vrot.slane %v2376, %v2380
        %v2384 = vsel %vm1024, %v2354, 0
        %v2387 = vsel %vm1024, %v2355, 0
        %v2390 = vsel %vm1024, %v2356, 0
        %v2393 = vsel %vm1024, %v2357, 0
        %v2396 = vsel %vm1024, %v2358, 0
        %v2399 = vsel %vm1024, %v2359, 0
        %v2402 = vsel %vm1024, %v2360, 0
        %v2405 = vsel %vm1024, %v2361, 0
        %2407 = vmatprep.subr.mxu0 0.0
        %2408 = vmatpush1.msra.mxu0 %v2363
        %2409 = vmatprep.subr.mxu0 0.0
        %2410 = vmatpush1.msra.mxu0 %v2364
        %2411 = vmatprep.subr.mxu0 0.0
        %2412 = vmatpush1.msra.mxu0 %v2365
        %2413 = vmatprep.subr.mxu0 0.0
        %2414 = vmatpush1.msra.mxu0 %v2366
        %2415 = vmatprep.subr.mxu0 0.0
        %2416 = vmatpush1.msra.mxu0 %v2367
        %2417 = vmatprep.subr.mxu0 0.0
        %2418 = vmatpush1.msra.mxu0 %v2368
        %2419 = vmatprep.subr.mxu0 0.0
        %2420 = vmatpush1.msra.mxu0 %v2369
        %2421 = vmatprep.subr.mxu0 0.0
        %2422 = vmatpush1.msra.mxu0 %v2370
        %2423 = vmatprep.subr.mxu0 0.0
        %2424 = vmatpush1.msra.mxu0 %v2371
        %2425 = vmatprep.subr.mxu0 0.0
        %2426 = vmatpush1.msra.mxu0 %v2372
        %2427 = vmatprep.subr.mxu0 0.0
        %2428 = vmatpush1.msra.mxu0 %v2373
        %2429 = vmatprep.subr.mxu0 0.0
        %2430 = vmatpush1.msra.mxu0 %v2374
        %2431 = vmatprep.subr.mxu0 0.0
        %2432 = vmatpush1.msra.mxu0 0.0
        %2433 = vmatprep.subr.mxu0 0.0
        %2434 = vmatpush1.msra.mxu0 0.0
        %2435 = vmatprep.subr.mxu0 0.0
        %2436 = vmatpush1.msra.mxu0 0.0
        %2437 = vmatprep.subr.mxu0 0.0
        %2438 = vmatpush1.msra.mxu0 0.0
        %2439 = vmatprep.subr.mxu0 0.0
        %2440 = vmatpush1.msra.mxu0 0.0
        %2441 = vmatprep.subr.mxu0 0.0
        %2442 = vmatpush1.msra.mxu0 0.0
        %2443 = vmatprep.subr.mxu0 0.0
        %2444 = vmatpush1.msra.mxu0 0.0
        %2445 = vmatprep.subr.mxu0 0.0
        %2446 = vmatpush1.msra.mxu0 0.0
        %2447 = vmatprep.subr.mxu0 0.0
        %2448 = vmatpush1.msra.mxu0 0.0
        %2449 = vmatprep.subr.mxu0 0.0
        %2450 = vmatpush1.msra.mxu0 0.0
        %2451 = vmatprep.subr.mxu0 0.0
        %2452 = vmatpush1.msra.mxu0 0.0
        %2453 = vmatprep.subr.mxu0 0.0
        %2454 = vmatpush1.msra.mxu0 0.0
        %2455 = vmatprep.subr.mxu0 0.0
        %2456 = vmatpush1.msra.mxu0 0.0
        %2457 = vmatprep.subr.mxu0 0.0
        %2458 = vmatpush1.msra.mxu0 0.0
        %2459 = vmatprep.subr.mxu0 0.0
        %2460 = vmatpush1.msra.mxu0 0.0
        %2461 = vmatprep.subr.mxu0 0.0
        %2462 = vmatpush1.msra.mxu0 0.0
        %2463 = vmatprep.subr.mxu0 0.0
        %2464 = vmatpush1.msra.mxu0 0.0
        %2465 = vmatprep.subr.mxu0 0.0
        %2466 = vmatpush1.msra.mxu0 0.0
        %2467 = vmatprep.subr.mxu0 0.0
        %2468 = vmatpush1.msra.mxu0 0.0
        %2469 = vmatprep.subr.mxu0 0.0
        %2470 = vmatpush1.msra.mxu0 0.0
        %2471 = vmatprep.mubr.f32.mxu0 0.0
        %2472 = vmatmul.mubr.f32.gmra.mrb[0].mxu0 %v2384
        %v2473 = vpop.f32.mrb[0].mxu0
        %v2474 = vadd.f32 %v2381, %v2473
        %v2475 = vpop.f32.mrb[0].mxu0
        %2476 = vmatprep.mubr.f32.mxu0 0.0
        %2477 = vmatmul.mubr.f32.gmra.mrb[0].mxu0 %v2387
        %v2478 = vpop.f32.mrb[0].mxu0
        %v2479 = vadd.f32 %v2381, %v2478
        %v2480 = vpop.f32.mrb[0].mxu0
        %2481 = vmatprep.mubr.f32.mxu0 0.0
        %2482 = vmatmul.mubr.f32.gmra.mrb[0].mxu0 %v2390
        %v2483 = vpop.f32.mrb[0].mxu0
        %v2484 = vadd.f32 %v2381, %v2483
        %v2485 = vpop.f32.mrb[0].mxu0
        %2486 = vmatprep.mubr.f32.mxu0 0.0
        %2487 = vmatmul.mubr.f32.gmra.mrb[0].mxu0 %v2393
        %v2488 = vpop.f32.mrb[0].mxu0
        %v2489 = vadd.f32 %v2381, %v2488
        %v2490 = vpop.f32.mrb[0].mxu0
        %2491 = vmatprep.mubr.f32.mxu0 0.0
        %2492 = vmatmul.mubr.f32.gmra.mrb[0].mxu0 %v2396
        %v2493 = vpop.f32.mrb[0].mxu0
        %v2494 = vadd.f32 %v2381, %v2493
        %v2495 = vpop.f32.mrb[0].mxu0
        %2496 = vmatprep.mubr.f32.mxu0 0.0
        %2497 = vmatmul.mubr.f32.gmra.mrb[0].mxu0 %v2399
        %v2498 = vpop.f32.mrb[0].mxu0
        %v2499 = vadd.f32 %v2381, %v2498
        %v2500 = vpop.f32.mrb[0].mxu0
        %2501 = vmatprep.mubr.f32.mxu0 0.0
        %2502 = vmatmul.mubr.f32.gmra.mrb[0].mxu0 %v2402
        %v2503 = vpop.f32.mrb[0].mxu0
        %v2504 = vadd.f32 %v2381, %v2503
        %v2505 = vpop.f32.mrb[0].mxu0
        %2506 = vmatprep.mubr.f32.mxu0 0.0
        %2507 = vmatmul.mubr.f32.gmra.mrb[0].mxu0 %v2405
        %v2508 = vpop.f32.mrb[0].mxu0
        %v2509 = vadd.f32 %v2381, %v2508
        %v2510 = vpop.f32.mrb[0].mxu0
        %2511 = vdwg.mxu0
        %v2513 = vsel %vm987, %v2474, 0
        %v2516 = vsel %vm987, %v2479, 0
        %v2519 = vsel %vm987, %v2484, 0
        %v2522 = vsel %vm987, %v2489, 0
        %v2525 = vsel %vm987, %v2494, 0
        %v2528 = vsel %vm987, %v2499, 0
        %v2531 = vsel %vm987, %v2504, 0
        %v2534 = vsel %vm987, %v2509, 0
        %2536 = vmatprep.subr.mxu0 0.0
        %2537 = vmatpush1.msra.mxu0 %v844
        %2538 = vmatprep.subr.mxu0 0.0
        %2539 = vmatpush1.msra.mxu0 %v845
        %2540 = vmatprep.subr.mxu0 0.0
        %2541 = vmatpush1.msra.mxu0 %v846
        %2542 = vmatprep.subr.mxu0 0.0
        %2543 = vmatpush1.msra.mxu0 %v847
        %2544 = vmatprep.subr.mxu0 0.0
        %2545 = vmatpush1.msra.mxu0 0.0
        %2546 = vmatprep.subr.mxu0 0.0
        %2547 = vmatpush1.msra.mxu0 0.0
        %2548 = vmatprep.subr.mxu0 0.0
        %2549 = vmatpush1.msra.mxu0 0.0
        %2550 = vmatprep.subr.mxu0 0.0
        %2551 = vmatpush1.msra.mxu0 0.0
        %2552 = vmatprep.subr.mxu0 0.0
        %2553 = vmatpush1.msra.mxu0 0.0
        %2554 = vmatprep.subr.mxu0 0.0
        %2555 = vmatpush1.msra.mxu0 0.0
        %2556 = vmatprep.subr.mxu0 0.0
        %2557 = vmatpush1.msra.mxu0 0.0
        %2558 = vmatprep.subr.mxu0 0.0
        %2559 = vmatpush1.msra.mxu0 0.0
        %2560 = vmatprep.subr.mxu0 0.0
        %2561 = vmatpush1.msra.mxu0 0.0
        %2562 = vmatprep.subr.mxu0 0.0
        %2563 = vmatpush1.msra.mxu0 0.0
        %2564 = vmatprep.subr.mxu0 0.0
        %2565 = vmatpush1.msra.mxu0 0.0
        %2566 = vmatprep.subr.mxu0 0.0
        %2567 = vmatpush1.msra.mxu0 0.0
        %2568 = vmatprep.subr.mxu0 0.0
        %2569 = vmatpush1.msra.mxu0 0.0
        %2570 = vmatprep.subr.mxu0 0.0
        %2571 = vmatpush1.msra.mxu0 0.0
        %2572 = vmatprep.subr.mxu0 0.0
        %2573 = vmatpush1.msra.mxu0 0.0
        %2574 = vmatprep.subr.mxu0 0.0
        %2575 = vmatpush1.msra.mxu0 0.0
        %2576 = vmatprep.subr.mxu0 0.0
        %2577 = vmatpush1.msra.mxu0 0.0
        %2578 = vmatprep.subr.mxu0 0.0
        %2579 = vmatpush1.msra.mxu0 0.0
        %2580 = vmatprep.subr.mxu0 0.0
        %2581 = vmatpush1.msra.mxu0 0.0
        %2582 = vmatprep.subr.mxu0 0.0
        %2583 = vmatpush1.msra.mxu0 0.0
        %2584 = vmatprep.subr.mxu0 0.0
        %2585 = vmatpush1.msra.mxu0 0.0
        %2586 = vmatprep.subr.mxu0 0.0
        %2587 = vmatpush1.msra.mxu0 0.0
        %2588 = vmatprep.subr.mxu0 0.0
        %2589 = vmatpush1.msra.mxu0 0.0
        %2590 = vmatprep.subr.mxu0 0.0
        %2591 = vmatpush1.msra.mxu0 0.0
        %2592 = vmatprep.subr.mxu0 0.0
        %2593 = vmatpush1.msra.mxu0 0.0
        %2594 = vmatprep.subr.mxu0 0.0
        %2595 = vmatpush1.msra.mxu0 0.0
        %2596 = vmatprep.subr.mxu0 0.0
        %2597 = vmatpush1.msra.mxu0 0.0
        %2598 = vmatprep.subr.mxu0 0.0
        %2599 = vmatpush1.msra.mxu0 0.0
        %2600 = vmatprep.mubr.f32.mxu0 0.0
        %2601 = vmatmul.mubr.f32.gmra.mrb[0].mxu0 %v2513
        %v2602 = vpop.f32.mrb[0].mxu0
        %v2603 = vadd.f32 0.0, %v2602
        %v2604 = vpop.f32.mrb[0].mxu0
        %2605 = vmatprep.mubr.f32.mxu0 0.0
        %2606 = vmatmul.mubr.f32.gmra.mrb[0].mxu0 %v2516
        %v2607 = vpop.f32.mrb[0].mxu0
        %v2608 = vadd.f32 0.0, %v2607
        %v2609 = vpop.f32.mrb[0].mxu0
        %2610 = vmatprep.mubr.f32.mxu0 0.0
        %2611 = vmatmul.mubr.f32.gmra.mrb[0].mxu0 %v2519
        %v2612 = vpop.f32.mrb[0].mxu0
        %v2613 = vadd.f32 0.0, %v2612
        %v2614 = vpop.f32.mrb[0].mxu0
        %2615 = vmatprep.mubr.f32.mxu0 0.0
        %2616 = vmatmul.mubr.f32.gmra.mrb[0].mxu0 %v2522
        %v2617 = vpop.f32.mrb[0].mxu0
        %v2618 = vadd.f32 0.0, %v2617
        %v2619 = vpop.f32.mrb[0].mxu0
        %2620 = vmatprep.mubr.f32.mxu0 0.0
        %2621 = vmatmul.mubr.f32.gmra.mrb[0].mxu0 %v2525
        %v2622 = vpop.f32.mrb[0].mxu0
        %v2623 = vadd.f32 0.0, %v2622
        %v2624 = vpop.f32.mrb[0].mxu0
        %2625 = vmatprep.mubr.f32.mxu0 0.0
        %2626 = vmatmul.mubr.f32.gmra.mrb[0].mxu0 %v2528
        %v2627 = vpop.f32.mrb[0].mxu0
        %v2628 = vadd.f32 0.0, %v2627
        %v2629 = vpop.f32.mrb[0].mxu0
        %2630 = vmatprep.mubr.f32.mxu0 0.0
        %2631 = vmatmul.mubr.f32.gmra.mrb[0].mxu0 %v2531
        %v2632 = vpop.f32.mrb[0].mxu0
        %v2633 = vadd.f32 0.0, %v2632
        %v2634 = vpop.f32.mrb[0].mxu0
        %2635 = vmatprep.mubr.f32.mxu0 0.0
        %2636 = vmatmul.mubr.f32.gmra.mrb[0].mxu0 %v2534
        %v2637 = vpop.f32.mrb[0].mxu0
        %v2638 = vadd.f32 0.0, %v2637
        %v2639 = vpop.f32.mrb[0].mxu0
        %2640 = vdwg.mxu0
        %v2641 = vsel %vm987, %v2603, 0.0
        %v2642 = vsel %vm987, %v2608, 0.0
        %v2643 = vadd.f32 %v2641, %v2642
        %v2644 = vsel %vm987, %v2613, 0.0
        %v2645 = vadd.f32 %v2643, %v2644
        %v2646 = vsel %vm987, %v2618, 0.0
        %v2647 = vadd.f32 %v2645, %v2646
        %v2648 = vsel %vm987, %v2623, 0.0
        %v2649 = vadd.f32 %v2647, %v2648
        %v2650 = vsel %vm987, %v2628, 0.0
        %v2651 = vadd.f32 %v2649, %v2650
        %v2652 = vsel %vm987, %v2633, 0.0
        %v2653 = vadd.f32 %v2651, %v2652
        %v2654 = vsel %vm987, %v2638, 0.0
        %v2655 = vadd.f32 %v2653, %v2654
        %v2656 = vrot.slane %v2655, 4
        %v2657 = vadd.f32 %v2655, %v2656
        %v2658 = vrot.slane %v2657, 2
        %v2659 = vadd.f32 %v2657, %v2658
        %v2660 = vrot.slane %v2659, 1
        %v2661 = vadd.f32 %v2659, %v2660
        %v2662 = vsub.f32 %v2474, %v2661
        %v2663 = vsub.f32 %v2479, %v2661
        %v2664 = vsub.f32 %v2484, %v2661
        %v2665 = vsub.f32 %v2489, %v2661
        %v2666 = vsub.f32 %v2494, %v2661
        %v2667 = vsub.f32 %v2499, %v2661
        %v2668 = vsub.f32 %v2504, %v2661
        %v2669 = vsub.f32 %v2509, %v2661
        %v2670 = vmul.f32 %v2662, %v2662
        %v2671 = vmul.f32 %v2663, %v2663
        %v2672 = vmul.f32 %v2664, %v2664
        %v2673 = vmul.f32 %v2665, %v2665
        %v2674 = vmul.f32 %v2666, %v2666
        %v2675 = vmul.f32 %v2667, %v2667
        %v2676 = vmul.f32 %v2668, %v2668
        %v2677 = vmul.f32 %v2669, %v2669
        %v2679 = vsel %vm987, %v2670, 0
        %v2682 = vsel %vm987, %v2671, 0
        %v2685 = vsel %vm987, %v2672, 0
        %v2688 = vsel %vm987, %v2673, 0
        %v2691 = vsel %vm987, %v2674, 0
        %v2694 = vsel %vm987, %v2675, 0
        %v2697 = vsel %vm987, %v2676, 0
        %v2700 = vsel %vm987, %v2677, 0
        %2702 = vmatprep.subr.mxu0 0.0
        %2703 = vmatpush1.msra.mxu0 %v844
        %2704 = vmatprep.subr.mxu0 0.0
        %2705 = vmatpush1.msra.mxu0 %v845
        %2706 = vmatprep.subr.mxu0 0.0
        %2707 = vmatpush1.msra.mxu0 %v846
        %2708 = vmatprep.subr.mxu0 0.0
        %2709 = vmatpush1.msra.mxu0 %v847
        %2710 = vmatprep.subr.mxu0 0.0
        %2711 = vmatpush1.msra.mxu0 0.0
        %2712 = vmatprep.subr.mxu0 0.0
        %2713 = vmatpush1.msra.mxu0 0.0
        %2714 = vmatprep.subr.mxu0 0.0
        %2715 = vmatpush1.msra.mxu0 0.0
        %2716 = vmatprep.subr.mxu0 0.0
        %2717 = vmatpush1.msra.mxu0 0.0
        %2718 = vmatprep.subr.mxu0 0.0
        %2719 = vmatpush1.msra.mxu0 0.0
        %2720 = vmatprep.subr.mxu0 0.0
        %2721 = vmatpush1.msra.mxu0 0.0
        %2722 = vmatprep.subr.mxu0 0.0
        %2723 = vmatpush1.msra.mxu0 0.0
        %2724 = vmatprep.subr.mxu0 0.0
        %2725 = vmatpush1.msra.mxu0 0.0
        %2726 = vmatprep.subr.mxu0 0.0
        %2727 = vmatpush1.msra.mxu0 0.0
        %2728 = vmatprep.subr.mxu0 0.0
        %2729 = vmatpush1.msra.mxu0 0.0
        %2730 = vmatprep.subr.mxu0 0.0
        %2731 = vmatpush1.msra.mxu0 0.0
        %2732 = vmatprep.subr.mxu0 0.0
        %2733 = vmatpush1.msra.mxu0 0.0
        %2734 = vmatprep.subr.mxu0 0.0
        %2735 = vmatpush1.msra.mxu0 0.0
        %2736 = vmatprep.subr.mxu0 0.0
        %2737 = vmatpush1.msra.mxu0 0.0
        %2738 = vmatprep.subr.mxu0 0.0
        %2739 = vmatpush1.msra.mxu0 0.0
        %2740 = vmatprep.subr.mxu0 0.0
        %2741 = vmatpush1.msra.mxu0 0.0
        %2742 = vmatprep.subr.mxu0 0.0
        %2743 = vmatpush1.msra.mxu0 0.0
        %2744 = vmatprep.subr.mxu0 0.0
        %2745 = vmatpush1.msra.mxu0 0.0
        %2746 = vmatprep.subr.mxu0 0.0
        %2747 = vmatpush1.msra.mxu0 0.0
        %2748 = vmatprep.subr.mxu0 0.0
        %2749 = vmatpush1.msra.mxu0 0.0
        %2750 = vmatprep.subr.mxu0 0.0
        %2751 = vmatpush1.msra.mxu0 0.0
        %2752 = vmatprep.subr.mxu0 0.0
        %2753 = vmatpush1.msra.mxu0 0.0
        %2754 = vmatprep.subr.mxu0 0.0
        %2755 = vmatpush1.msra.mxu0 0.0
        %2756 = vmatprep.subr.mxu0 0.0
        %2757 = vmatpush1.msra.mxu0 0.0
        %2758 = vmatprep.subr.mxu0 0.0
        %2759 = vmatpush1.msra.mxu0 0.0
        %2760 = vmatprep.subr.mxu0 0.0
        %2761 = vmatpush1.msra.mxu0 0.0
        %2762 = vmatprep.subr.mxu0 0.0
        %2763 = vmatpush1.msra.mxu0 0.0
        %2764 = vmatprep.subr.mxu0 0.0
        %2765 = vmatpush1.msra.mxu0 0.0
        %2766 = vmatprep.mubr.f32.mxu0 0.0
        %2767 = vmatmul.mubr.f32.gmra.mrb[0].mxu0 %v2679
        %v2768 = vpop.f32.mrb[0].mxu0
        %v2769 = vadd.f32 0.0, %v2768
        %v2770 = vpop.f32.mrb[0].mxu0
        %2771 = vmatprep.mubr.f32.mxu0 0.0
        %2772 = vmatmul.mubr.f32.gmra.mrb[0].mxu0 %v2682
        %v2773 = vpop.f32.mrb[0].mxu0
        %v2774 = vadd.f32 0.0, %v2773
        %v2775 = vpop.f32.mrb[0].mxu0
        %2776 = vmatprep.mubr.f32.mxu0 0.0
        %2777 = vmatmul.mubr.f32.gmra.mrb[0].mxu0 %v2685
        %v2778 = vpop.f32.mrb[0].mxu0
        %v2779 = vadd.f32 0.0, %v2778
        %v2780 = vpop.f32.mrb[0].mxu0
        %2781 = vmatprep.mubr.f32.mxu0 0.0
        %2782 = vmatmul.mubr.f32.gmra.mrb[0].mxu0 %v2688
        %v2783 = vpop.f32.mrb[0].mxu0
        %v2784 = vadd.f32 0.0, %v2783
        %v2785 = vpop.f32.mrb[0].mxu0
        %2786 = vmatprep.mubr.f32.mxu0 0.0
        %2787 = vmatmul.mubr.f32.gmra.mrb[0].mxu0 %v2691
        %v2788 = vpop.f32.mrb[0].mxu0
        %v2789 = vadd.f32 0.0, %v2788
        %v2790 = vpop.f32.mrb[0].mxu0
        %2791 = vmatprep.mubr.f32.mxu0 0.0
        %2792 = vmatmul.mubr.f32.gmra.mrb[0].mxu0 %v2694
        %v2793 = vpop.f32.mrb[0].mxu0
        %v2794 = vadd.f32 0.0, %v2793
        %v2795 = vpop.f32.mrb[0].mxu0
        %2796 = vmatprep.mubr.f32.mxu0 0.0
        %2797 = vmatmul.mubr.f32.gmra.mrb[0].mxu0 %v2697
        %v2798 = vpop.f32.mrb[0].mxu0
        %v2799 = vadd.f32 0.0, %v2798
        %v2800 = vpop.f32.mrb[0].mxu0
        %2801 = vmatprep.mubr.f32.mxu0 0.0
        %2802 = vmatmul.mubr.f32.gmra.mrb[0].mxu0 %v2700
        %v2803 = vpop.f32.mrb[0].mxu0
        %v2804 = vadd.f32 0.0, %v2803
        %v2805 = vpop.f32.mrb[0].mxu0
        %2806 = vdwg.mxu0
        %v2807 = vsel %vm987, %v2769, 0.0
        %v2808 = vsel %vm987, %v2774, 0.0
        %v2809 = vadd.f32 %v2807, %v2808
        %v2810 = vsel %vm987, %v2779, 0.0
        %v2811 = vadd.f32 %v2809, %v2810
        %v2812 = vsel %vm987, %v2784, 0.0
        %v2813 = vadd.f32 %v2811, %v2812
        %v2814 = vsel %vm987, %v2789, 0.0
        %v2815 = vadd.f32 %v2813, %v2814
        %v2816 = vsel %vm987, %v2794, 0.0
        %v2817 = vadd.f32 %v2815, %v2816
        %v2818 = vsel %vm987, %v2799, 0.0
        %v2819 = vadd.f32 %v2817, %v2818
        %v2820 = vsel %vm987, %v2804, 0.0
        %v2821 = vadd.f32 %v2819, %v2820
        %v2822 = vrot.slane %v2821, 4
        %v2823 = vadd.f32 %v2821, %v2822
        %v2824 = vrot.slane %v2823, 2
        %v2825 = vadd.f32 %v2823, %v2824
        %v2826 = vrot.slane %v2825, 1
        %v2827 = vadd.f32 %v2825, %v2826
        %v2828 = vadd.f32 %v2827, 1e-05
        %v2829 = vrsqrt.pop %v2828
        %v2830 = vmul.f32 %v2662, %v2829
        %v2831 = vmul.f32 %v2663, %v2829
        %v2832 = vmul.f32 %v2664, %v2829
        %v2833 = vmul.f32 %v2665, %v2829
        %v2834 = vmul.f32 %v2666, %v2829
        %v2835 = vmul.f32 %v2667, %v2829
        %v2836 = vmul.f32 %v2668, %v2829
        %v2837 = vmul.f32 %v2669, %v2829
        %s2838 = scalar_lea.vmem [#allocation5], 2
        %v2839 = vld [vmem:[%s2838] sm:$0x1]
        %v2841 = vlaneseq
        %v2842 = vshrl.u32 %v2841, 7
        %v2843 = vsub.s32 0, %v2842
        %v2844 = vrot.slane %v2839, %v2843
        %v2846 = vmul.f32 %v2830, %v2844
        %v2847 = vmul.f32 %v2831, %v2844
        %v2848 = vmul.f32 %v2832, %v2844
        %v2849 = vmul.f32 %v2833, %v2844
        %v2850 = vmul.f32 %v2834, %v2844
        %v2851 = vmul.f32 %v2835, %v2844
        %v2852 = vmul.f32 %v2836, %v2844
        %v2853 = vmul.f32 %v2837, %v2844
        %s2854 = scalar_lea.vmem [#allocation7], 2
        %v2855 = vld [vmem:[%s2854] sm:$0x1]
        %v2857 = vlaneseq
        %v2858 = vshrl.u32 %v2857, 7
        %v2859 = vsub.s32 0, %v2858
        %v2860 = vrot.slane %v2855, %v2859
        %v2862 = vadd.f32 %v2846, %v2860
        %v2863 = vadd.f32 %v2847, %v2860
        %v2864 = vadd.f32 %v2848, %v2860
        %v2865 = vadd.f32 %v2849, %v2860
        %v2866 = vadd.f32 %v2850, %v2860
        %v2867 = vadd.f32 %v2851, %v2860
        %v2868 = vadd.f32 %v2852, %v2860
        %v2869 = vadd.f32 %v2853, %v2860
        %v2870 = vmul.f32 %v2862, 0.2
        %v2871 = vmul.f32 %v2863, 0.2
        %v2872 = vmul.f32 %v2864, 0.2
        %v2873 = vmul.f32 %v2865, 0.2
        %v2874 = vmul.f32 %v2866, 0.2
        %v2875 = vmul.f32 %v2867, 0.2
        %v2876 = vmul.f32 %v2868, 0.2
        %v2877 = vmul.f32 %v2869, 0.2
        %v2878 = vmax.f32 %v2862, %v2870
        %v2879 = vmax.f32 %v2863, %v2871
        %v2880 = vmax.f32 %v2864, %v2872
        %v2881 = vmax.f32 %v2865, %v2873
        %v2882 = vmax.f32 %v2866, %v2874
        %v2883 = vmax.f32 %v2867, %v2875
        %v2884 = vmax.f32 %v2868, %v2876
        %v2885 = vmax.f32 %v2869, %v2877
        %v2886 = vmul.f32 %v2878, %v1529
        %v2887 = vmul.f32 %v2879, %v1534
        %v2888 = vmul.f32 %v2880, %v1539
        %v2889 = vmul.f32 %v2881, %v1544
        %v2890 = vmul.f32 %v2882, %v1549
        %v2891 = vmul.f32 %v2883, %v1554
        %v2892 = vmul.f32 %v2884, %v1559
        %v2893 = vmul.f32 %v2885, %v1564
        %v2894 = vrot.slane %v2886, 7
        %v2895 = vrot.slane %v2887, 7
        %v2896 = vrot.slane %v2888, 7
        %v2897 = vrot.slane %v2889, 7
        %v2898 = vrot.slane %v2890, 7
        %v2899 = vrot.slane %v2891, 7
        %v2900 = vrot.slane %v2892, 7
        %v2901 = vrot.slane %v2893, 7
        %v2902 = vsel %vm858, %v2900, %v2901
        %v2903 = vsel %vm858, %v2899, %v2900
        %v2904 = vsel %vm858, %v2898, %v2899
        %v2905 = vsel %vm858, %v2897, %v2898
        %v2906 = vsel %vm858, %v2896, %v2897
        %v2907 = vsel %vm858, %v2895, %v2896
        %v2908 = vsel %vm858, %v2894, %v2895
        %v2909 = vsel %vm858, %v2901, %v2894
        %v2910 = vsel %vm874, %v2909, 0.0
        %v2911 = vsel %vm875, %v2908, 0.0
        %v2912 = vsel %vm876, %v2907, 0.0
        %v2913 = vsel %vm877, %v2906, 0.0
        %v2914 = vsel %vm878, %v2905, 0.0
        %v2915 = vsel %vm879, %v2904, 0.0
        %v2916 = vsel %vm880, %v2903, 0.0
        %v2917 = vsel %vm881, %v2902, 0.0
        %v2918 = vrot.slane %v2886, 1
        %v2919 = vrot.slane %v2887, 1
        %v2920 = vrot.slane %v2888, 1
        %v2921 = vrot.slane %v2889, 1
        %v2922 = vrot.slane %v2890, 1
        %v2923 = vrot.slane %v2891, 1
        %v2924 = vrot.slane %v2892, 1
        %v2925 = vrot.slane %v2893, 1
        %v2926 = vsel %vm898, %v2924, %v2925
        %v2927 = vsel %vm898, %v2923, %v2924
        %v2928 = vsel %vm898, %v2922, %v2923
        %v2929 = vsel %vm898, %v2921, %v2922
        %v2930 = vsel %vm898, %v2920, %v2921
        %v2931 = vsel %vm898, %v2919, %v2920
        %v2932 = vsel %vm898, %v2918, %v2919
        %v2933 = vsel %vm898, %v2925, %v2918
        %v2934 = vsel %vm907, %v2932, 0.0
        %v2935 = vsel %vm908, %v2931, 0.0
        %v2936 = vsel %vm909, %v2930, 0.0
        %v2937 = vsel %vm910, %v2929, 0.0
        %v2938 = vsel %vm911, %v2928, 0.0
        %v2939 = vsel %vm912, %v2927, 0.0
        %v2940 = vsel %vm913, %v2926, 0.0
        %v2941 = vsel %vm914, %v2933, 0.0
        %2950 = vrot.lane.b32.xlu0 %v2886, 32
        %v2951 = vpop.permute.xlu0 %2950
        %2952 = vrot.lane.b32.xlu0 %v2887, 32
        %v2953 = vpop.permute.xlu0 %2952
        %2954 = vrot.lane.b32.xlu0 %v2888, 32
        %v2955 = vpop.permute.xlu0 %2954
        %2956 = vrot.lane.b32.xlu0 %v2889, 32
        %v2957 = vpop.permute.xlu0 %2956
        %2958 = vrot.lane.b32.xlu0 %v2890, 32
        %v2959 = vpop.permute.xlu0 %2958
        %2960 = vrot.lane.b32.xlu0 %v2891, 32
        %v2961 = vpop.permute.xlu0 %2960
        %2962 = vrot.lane.b32.xlu0 %v2892, 32
        %v2963 = vpop.permute.xlu0 %2962
        %2964 = vrot.lane.b32.xlu0 %v2893, 32
        %v2965 = vpop.permute.xlu0 %2964
        %2982 = vrot.lane.b32.xlu0 %v2934, 64
        %v2983 = vpop.permute.xlu0 %2982
        %2984 = vrot.lane.b32.xlu0 %v2935, 64
        %v2985 = vpop.permute.xlu0 %2984
        %2986 = vrot.lane.b32.xlu0 %v2936, 64
        %v2987 = vpop.permute.xlu0 %2986
        %2988 = vrot.lane.b32.xlu0 %v2937, 64
        %v2989 = vpop.permute.xlu0 %2988
        %2990 = vrot.lane.b32.xlu0 %v2938, 64
        %v2991 = vpop.permute.xlu0 %2990
        %2992 = vrot.lane.b32.xlu0 %v2939, 64
        %v2993 = vpop.permute.xlu0 %2992
        %2994 = vrot.lane.b32.xlu0 %v2940, 64
        %v2995 = vpop.permute.xlu0 %2994
        %2996 = vrot.lane.b32.xlu0 %v2941, 64
        %v2997 = vpop.permute.xlu0 %2996
        %v3006 = vsel %vm987, %v2910, %v2951
        %v3007 = vsel %vm987, %v2911, %v2953
        %v3008 = vsel %vm987, %v2912, %v2955
        %v3009 = vsel %vm987, %v2913, %v2957
        %v3010 = vsel %vm987, %v2914, %v2959
        %v3011 = vsel %vm987, %v2915, %v2961
        %v3012 = vsel %vm987, %v2916, %v2963
        %v3013 = vsel %vm987, %v2917, %v2965
        %v3014 = vsel %vm996, %v3006, %v2983
        %v3015 = vsel %vm996, %v3007, %v2985
        %v3016 = vsel %vm996, %v3008, %v2987
        %v3017 = vsel %vm996, %v3009, %v2989
        %v3018 = vsel %vm996, %v3010, %v2991
        %v3019 = vsel %vm996, %v3011, %v2993
        %v3020 = vsel %vm996, %v3012, %v2995
        %v3021 = vsel %vm996, %v3013, %v2997
        %s3022 = scalar_lea.vmem %s2, 288
        %v3023 = vld [vmem:[%s3022] sm:$0xff]
        %v3024 = vld [vmem:[%s3022 + $0x8] sm:$0xff]
        %v3025 = vld [vmem:[%s3022 + $0x10] sm:$0xff]
        %v3026 = vld [vmem:[%s3022 + $0x18] sm:$0xff]
        %v3027 = vld [vmem:[%s3022 + $0x20] sm:$0xff]
        %v3028 = vld [vmem:[%s3022 + $0x28] sm:$0xff]
        %v3029 = vld [vmem:[%s3022 + $0x30] sm:$0xff]
        %v3030 = vld [vmem:[%s3022 + $0x38] sm:$0xff]
        %v3031 = vld [vmem:[%s3022 + $0x40] sm:$0xff]
        %v3032 = vld [vmem:[%s3022 + $0x48] sm:$0xff]
        %v3033 = vld [vmem:[%s3022 + $0x50] sm:$0xff]
        %v3034 = vld [vmem:[%s3022 + $0x58] sm:$0xff]
        %s3035 = scalar_lea.vmem [#allocation2], 3
        %v3036 = vld [vmem:[%s3035] sm:$0x1]
        %v3038 = vlaneseq
        %v3039 = vshrl.u32 %v3038, 7
        %v3040 = vsub.s32 0, %v3039
        %v3041 = vrot.slane %v3036, %v3040
        %v3044 = vsel %vm1024, %v3014, 0
        %v3047 = vsel %vm1024, %v3015, 0
        %v3050 = vsel %vm1024, %v3016, 0
        %v3053 = vsel %vm1024, %v3017, 0
        %v3056 = vsel %vm1024, %v3018, 0
        %v3059 = vsel %vm1024, %v3019, 0
        %v3062 = vsel %vm1024, %v3020, 0
        %v3065 = vsel %vm1024, %v3021, 0
        %3067 = vmatprep.subr.mxu0 0.0
        %3068 = vmatpush1.msra.mxu0 %v3023
        %3069 = vmatprep.subr.mxu0 0.0
        %3070 = vmatpush1.msra.mxu0 %v3024
        %3071 = vmatprep.subr.mxu0 0.0
        %3072 = vmatpush1.msra.mxu0 %v3025
        %3073 = vmatprep.subr.mxu0 0.0
        %3074 = vmatpush1.msra.mxu0 %v3026
        %3075 = vmatprep.subr.mxu0 0.0
        %3076 = vmatpush1.msra.mxu0 %v3027
        %3077 = vmatprep.subr.mxu0 0.0
        %3078 = vmatpush1.msra.mxu0 %v3028
        %3079 = vmatprep.subr.mxu0 0.0
        %3080 = vmatpush1.msra.mxu0 %v3029
        %3081 = vmatprep.subr.mxu0 0.0
        %3082 = vmatpush1.msra.mxu0 %v3030
        %3083 = vmatprep.subr.mxu0 0.0
        %3084 = vmatpush1.msra.mxu0 %v3031
        %3085 = vmatprep.subr.mxu0 0.0
        %3086 = vmatpush1.msra.mxu0 %v3032
        %3087 = vmatprep.subr.mxu0 0.0
        %3088 = vmatpush1.msra.mxu0 %v3033
        %3089 = vmatprep.subr.mxu0 0.0
        %3090 = vmatpush1.msra.mxu0 %v3034
        %3091 = vmatprep.subr.mxu0 0.0
        %3092 = vmatpush1.msra.mxu0 0.0
        %3093 = vmatprep.subr.mxu0 0.0
        %3094 = vmatpush1.msra.mxu0 0.0
        %3095 = vmatprep.subr.mxu0 0.0
        %3096 = vmatpush1.msra.mxu0 0.0
        %3097 = vmatprep.subr.mxu0 0.0
        %3098 = vmatpush1.msra.mxu0 0.0
        %3099 = vmatprep.subr.mxu0 0.0
        %3100 = vmatpush1.msra.mxu0 0.0
        %3101 = vmatprep.subr.mxu0 0.0
        %3102 = vmatpush1.msra.mxu0 0.0
        %3103 = vmatprep.subr.mxu0 0.0
        %3104 = vmatpush1.msra.mxu0 0.0
        %3105 = vmatprep.subr.mxu0 0.0
        %3106 = vmatpush1.msra.mxu0 0.0
        %3107 = vmatprep.subr.mxu0 0.0
        %3108 = vmatpush1.msra.mxu0 0.0
        %3109 = vmatprep.subr.mxu0 0.0
        %3110 = vmatpush1.msra.mxu0 0.0
        %3111 = vmatprep.subr.mxu0 0.0
        %3112 = vmatpush1.msra.mxu0 0.0
        %3113 = vmatprep.subr.mxu0 0.0
        %3114 = vmatpush1.msra.mxu0 0.0
        %3115 = vmatprep.subr.mxu0 0.0
        %3116 = vmatpush1.msra.mxu0 0.0
        %3117 = vmatprep.subr.mxu0 0.0
        %3118 = vmatpush1.msra.mxu0 0.0
        %3119 = vmatprep.subr.mxu0 0.0
        %3120 = vmatpush1.msra.mxu0 0.0
        %3121 = vmatprep.subr.mxu0 0.0
        %3122 = vmatpush1.msra.mxu0 0.0
        %3123 = vmatprep.subr.mxu0 0.0
        %3124 = vmatpush1.msra.mxu0 0.0
        %3125 = vmatprep.subr.mxu0 0.0
        %3126 = vmatpush1.msra.mxu0 0.0
        %3127 = vmatprep.subr.mxu0 0.0
        %3128 = vmatpush1.msra.mxu0 0.0
        %3129 = vmatprep.subr.mxu0 0.0
        %3130 = vmatpush1.msra.mxu0 0.0
        %3131 = vmatprep.mubr.f32.mxu0 0.0
        %3132 = vmatmul.mubr.f32.gmra.mrb[0].mxu0 %v3044
        %v3133 = vpop.f32.mrb[0].mxu0
        %v3134 = vadd.f32 %v3041, %v3133
        %v3135 = vpop.f32.mrb[0].mxu0
        %3136 = vmatprep.mubr.f32.mxu0 0.0
        %3137 = vmatmul.mubr.f32.gmra.mrb[0].mxu0 %v3047
        %v3138 = vpop.f32.mrb[0].mxu0
        %v3139 = vadd.f32 %v3041, %v3138
        %v3140 = vpop.f32.mrb[0].mxu0
        %3141 = vmatprep.mubr.f32.mxu0 0.0
        %3142 = vmatmul.mubr.f32.gmra.mrb[0].mxu0 %v3050
        %v3143 = vpop.f32.mrb[0].mxu0
        %v3144 = vadd.f32 %v3041, %v3143
        %v3145 = vpop.f32.mrb[0].mxu0
        %3146 = vmatprep.mubr.f32.mxu0 0.0
        %3147 = vmatmul.mubr.f32.gmra.mrb[0].mxu0 %v3053
        %v3148 = vpop.f32.mrb[0].mxu0
        %v3149 = vadd.f32 %v3041, %v3148
        %v3150 = vpop.f32.mrb[0].mxu0
        %3151 = vmatprep.mubr.f32.mxu0 0.0
        %3152 = vmatmul.mubr.f32.gmra.mrb[0].mxu0 %v3056
        %v3153 = vpop.f32.mrb[0].mxu0
        %v3154 = vadd.f32 %v3041, %v3153
        %v3155 = vpop.f32.mrb[0].mxu0
        %3156 = vmatprep.mubr.f32.mxu0 0.0
        %3157 = vmatmul.mubr.f32.gmra.mrb[0].mxu0 %v3059
        %v3158 = vpop.f32.mrb[0].mxu0
        %v3159 = vadd.f32 %v3041, %v3158
        %v3160 = vpop.f32.mrb[0].mxu0
        %3161 = vmatprep.mubr.f32.mxu0 0.0
        %3162 = vmatmul.mubr.f32.gmra.mrb[0].mxu0 %v3062
        %v3163 = vpop.f32.mrb[0].mxu0
        %v3164 = vadd.f32 %v3041, %v3163
        %v3165 = vpop.f32.mrb[0].mxu0
        %3166 = vmatprep.mubr.f32.mxu0 0.0
        %3167 = vmatmul.mubr.f32.gmra.mrb[0].mxu0 %v3065
        %v3168 = vpop.f32.mrb[0].mxu0
        %v3169 = vadd.f32 %v3041, %v3168
        %v3170 = vpop.f32.mrb[0].mxu0
        %3171 = vdwg.mxu0
        %v3173 = vsel %vm987, %v3134, 0
        %v3176 = vsel %vm987, %v3139, 0
        %v3179 = vsel %vm987, %v3144, 0
        %v3182 = vsel %vm987, %v3149, 0
        %v3185 = vsel %vm987, %v3154, 0
        %v3188 = vsel %vm987, %v3159, 0
        %v3191 = vsel %vm987, %v3164, 0
        %v3194 = vsel %vm987, %v3169, 0
        %3196 = vmatprep.subr.mxu0 0.0
        %3197 = vmatpush1.msra.mxu0 %v844
        %3198 = vmatprep.subr.mxu0 0.0
        %3199 = vmatpush1.msra.mxu0 %v845
        %3200 = vmatprep.subr.mxu0 0.0
        %3201 = vmatpush1.msra.mxu0 %v846
        %3202 = vmatprep.subr.mxu0 0.0
        %3203 = vmatpush1.msra.mxu0 %v847
        %3204 = vmatprep.subr.mxu0 0.0
        %3205 = vmatpush1.msra.mxu0 0.0
        %3206 = vmatprep.subr.mxu0 0.0
        %3207 = vmatpush1.msra.mxu0 0.0
        %3208 = vmatprep.subr.mxu0 0.0
        %3209 = vmatpush1.msra.mxu0 0.0
        %3210 = vmatprep.subr.mxu0 0.0
        %3211 = vmatpush1.msra.mxu0 0.0
        %3212 = vmatprep.subr.mxu0 0.0
        %3213 = vmatpush1.msra.mxu0 0.0
        %3214 = vmatprep.subr.mxu0 0.0
        %3215 = vmatpush1.msra.mxu0 0.0
        %3216 = vmatprep.subr.mxu0 0.0
        %3217 = vmatpush1.msra.mxu0 0.0
        %3218 = vmatprep.subr.mxu0 0.0
        %3219 = vmatpush1.msra.mxu0 0.0
        %3220 = vmatprep.subr.mxu0 0.0
        %3221 = vmatpush1.msra.mxu0 0.0
        %3222 = vmatprep.subr.mxu0 0.0
        %3223 = vmatpush1.msra.mxu0 0.0
        %3224 = vmatprep.subr.mxu0 0.0
        %3225 = vmatpush1.msra.mxu0 0.0
        %3226 = vmatprep.subr.mxu0 0.0
        %3227 = vmatpush1.msra.mxu0 0.0
        %3228 = vmatprep.subr.mxu0 0.0
        %3229 = vmatpush1.msra.mxu0 0.0
        %3230 = vmatprep.subr.mxu0 0.0
        %3231 = vmatpush1.msra.mxu0 0.0
        %3232 = vmatprep.subr.mxu0 0.0
        %3233 = vmatpush1.msra.mxu0 0.0
        %3234 = vmatprep.subr.mxu0 0.0
        %3235 = vmatpush1.msra.mxu0 0.0
        %3236 = vmatprep.subr.mxu0 0.0
        %3237 = vmatpush1.msra.mxu0 0.0
        %3238 = vmatprep.subr.mxu0 0.0
        %3239 = vmatpush1.msra.mxu0 0.0
        %3240 = vmatprep.subr.mxu0 0.0
        %3241 = vmatpush1.msra.mxu0 0.0
        %3242 = vmatprep.subr.mxu0 0.0
        %3243 = vmatpush1.msra.mxu0 0.0
        %3244 = vmatprep.subr.mxu0 0.0
        %3245 = vmatpush1.msra.mxu0 0.0
        %3246 = vmatprep.subr.mxu0 0.0
        %3247 = vmatpush1.msra.mxu0 0.0
        %3248 = vmatprep.subr.mxu0 0.0
        %3249 = vmatpush1.msra.mxu0 0.0
        %3250 = vmatprep.subr.mxu0 0.0
        %3251 = vmatpush1.msra.mxu0 0.0
        %3252 = vmatprep.subr.mxu0 0.0
        %3253 = vmatpush1.msra.mxu0 0.0
        %3254 = vmatprep.subr.mxu0 0.0
        %3255 = vmatpush1.msra.mxu0 0.0
        %3256 = vmatprep.subr.mxu0 0.0
        %3257 = vmatpush1.msra.mxu0 0.0
        %3258 = vmatprep.subr.mxu0 0.0
        %3259 = vmatpush1.msra.mxu0 0.0
        %3260 = vmatprep.mubr.f32.mxu0 0.0
        %3261 = vmatmul.mubr.f32.gmra.mrb[0].mxu0 %v3173
        %v3262 = vpop.f32.mrb[0].mxu0
        %v3263 = vadd.f32 0.0, %v3262
        %v3264 = vpop.f32.mrb[0].mxu0
        %3265 = vmatprep.mubr.f32.mxu0 0.0
        %3266 = vmatmul.mubr.f32.gmra.mrb[0].mxu0 %v3176
        %v3267 = vpop.f32.mrb[0].mxu0
        %v3268 = vadd.f32 0.0, %v3267
        %v3269 = vpop.f32.mrb[0].mxu0
        %3270 = vmatprep.mubr.f32.mxu0 0.0
        %3271 = vmatmul.mubr.f32.gmra.mrb[0].mxu0 %v3179
        %v3272 = vpop.f32.mrb[0].mxu0
        %v3273 = vadd.f32 0.0, %v3272
        %v3274 = vpop.f32.mrb[0].mxu0
        %3275 = vmatprep.mubr.f32.mxu0 0.0
        %3276 = vmatmul.mubr.f32.gmra.mrb[0].mxu0 %v3182
        %v3277 = vpop.f32.mrb[0].mxu0
        %v3278 = vadd.f32 0.0, %v3277
        %v3279 = vpop.f32.mrb[0].mxu0
        %3280 = vmatprep.mubr.f32.mxu0 0.0
        %3281 = vmatmul.mubr.f32.gmra.mrb[0].mxu0 %v3185
        %v3282 = vpop.f32.mrb[0].mxu0
        %v3283 = vadd.f32 0.0, %v3282
        %v3284 = vpop.f32.mrb[0].mxu0
        %3285 = vmatprep.mubr.f32.mxu0 0.0
        %3286 = vmatmul.mubr.f32.gmra.mrb[0].mxu0 %v3188
        %v3287 = vpop.f32.mrb[0].mxu0
        %v3288 = vadd.f32 0.0, %v3287
        %v3289 = vpop.f32.mrb[0].mxu0
        %3290 = vmatprep.mubr.f32.mxu0 0.0
        %3291 = vmatmul.mubr.f32.gmra.mrb[0].mxu0 %v3191
        %v3292 = vpop.f32.mrb[0].mxu0
        %v3293 = vadd.f32 0.0, %v3292
        %v3294 = vpop.f32.mrb[0].mxu0
        %3295 = vmatprep.mubr.f32.mxu0 0.0
        %3296 = vmatmul.mubr.f32.gmra.mrb[0].mxu0 %v3194
        %v3297 = vpop.f32.mrb[0].mxu0
        %v3298 = vadd.f32 0.0, %v3297
        %v3299 = vpop.f32.mrb[0].mxu0
        %3300 = vdwg.mxu0
        %v3301 = vsel %vm987, %v3263, 0.0
        %v3302 = vsel %vm987, %v3268, 0.0
        %v3303 = vadd.f32 %v3301, %v3302
        %v3304 = vsel %vm987, %v3273, 0.0
        %v3305 = vadd.f32 %v3303, %v3304
        %v3306 = vsel %vm987, %v3278, 0.0
        %v3307 = vadd.f32 %v3305, %v3306
        %v3308 = vsel %vm987, %v3283, 0.0
        %v3309 = vadd.f32 %v3307, %v3308
        %v3310 = vsel %vm987, %v3288, 0.0
        %v3311 = vadd.f32 %v3309, %v3310
        %v3312 = vsel %vm987, %v3293, 0.0
        %v3313 = vadd.f32 %v3311, %v3312
        %v3314 = vsel %vm987, %v3298, 0.0
        %v3315 = vadd.f32 %v3313, %v3314
        %v3316 = vrot.slane %v3315, 4
        %v3317 = vadd.f32 %v3315, %v3316
        %v3318 = vrot.slane %v3317, 2
        %v3319 = vadd.f32 %v3317, %v3318
        %v3320 = vrot.slane %v3319, 1
        %v3321 = vadd.f32 %v3319, %v3320
        %v3322 = vsub.f32 %v3134, %v3321
        %v3323 = vsub.f32 %v3139, %v3321
        %v3324 = vsub.f32 %v3144, %v3321
        %v3325 = vsub.f32 %v3149, %v3321
        %v3326 = vsub.f32 %v3154, %v3321
        %v3327 = vsub.f32 %v3159, %v3321
        %v3328 = vsub.f32 %v3164, %v3321
        %v3329 = vsub.f32 %v3169, %v3321
        %v3330 = vmul.f32 %v3322, %v3322
        %v3331 = vmul.f32 %v3323, %v3323
        %v3332 = vmul.f32 %v3324, %v3324
        %v3333 = vmul.f32 %v3325, %v3325
        %v3334 = vmul.f32 %v3326, %v3326
        %v3335 = vmul.f32 %v3327, %v3327
        %v3336 = vmul.f32 %v3328, %v3328
        %v3337 = vmul.f32 %v3329, %v3329
        %v3339 = vsel %vm987, %v3330, 0
        %v3342 = vsel %vm987, %v3331, 0
        %v3345 = vsel %vm987, %v3332, 0
        %v3348 = vsel %vm987, %v3333, 0
        %v3351 = vsel %vm987, %v3334, 0
        %v3354 = vsel %vm987, %v3335, 0
        %v3357 = vsel %vm987, %v3336, 0
        %v3360 = vsel %vm987, %v3337, 0
        %3362 = vmatprep.subr.mxu0 0.0
        %3363 = vmatpush1.msra.mxu0 %v844
        %3364 = vmatprep.subr.mxu0 0.0
        %3365 = vmatpush1.msra.mxu0 %v845
        %3366 = vmatprep.subr.mxu0 0.0
        %3367 = vmatpush1.msra.mxu0 %v846
        %3368 = vmatprep.subr.mxu0 0.0
        %3369 = vmatpush1.msra.mxu0 %v847
        %3370 = vmatprep.subr.mxu0 0.0
        %3371 = vmatpush1.msra.mxu0 0.0
        %3372 = vmatprep.subr.mxu0 0.0
        %3373 = vmatpush1.msra.mxu0 0.0
        %3374 = vmatprep.subr.mxu0 0.0
        %3375 = vmatpush1.msra.mxu0 0.0
        %3376 = vmatprep.subr.mxu0 0.0
        %3377 = vmatpush1.msra.mxu0 0.0
        %3378 = vmatprep.subr.mxu0 0.0
        %3379 = vmatpush1.msra.mxu0 0.0
        %3380 = vmatprep.subr.mxu0 0.0
        %3381 = vmatpush1.msra.mxu0 0.0
        %3382 = vmatprep.subr.mxu0 0.0
        %3383 = vmatpush1.msra.mxu0 0.0
        %3384 = vmatprep.subr.mxu0 0.0
        %3385 = vmatpush1.msra.mxu0 0.0
        %3386 = vmatprep.subr.mxu0 0.0
        %3387 = vmatpush1.msra.mxu0 0.0
        %3388 = vmatprep.subr.mxu0 0.0
        %3389 = vmatpush1.msra.mxu0 0.0
        %3390 = vmatprep.subr.mxu0 0.0
        %3391 = vmatpush1.msra.mxu0 0.0
        %3392 = vmatprep.subr.mxu0 0.0
        %3393 = vmatpush1.msra.mxu0 0.0
        %3394 = vmatprep.subr.mxu0 0.0
        %3395 = vmatpush1.msra.mxu0 0.0
        %3396 = vmatprep.subr.mxu0 0.0
        %3397 = vmatpush1.msra.mxu0 0.0
        %3398 = vmatprep.subr.mxu0 0.0
        %3399 = vmatpush1.msra.mxu0 0.0
        %3400 = vmatprep.subr.mxu0 0.0
        %3401 = vmatpush1.msra.mxu0 0.0
        %3402 = vmatprep.subr.mxu0 0.0
        %3403 = vmatpush1.msra.mxu0 0.0
        %3404 = vmatprep.subr.mxu0 0.0
        %3405 = vmatpush1.msra.mxu0 0.0
        %3406 = vmatprep.subr.mxu0 0.0
        %3407 = vmatpush1.msra.mxu0 0.0
        %3408 = vmatprep.subr.mxu0 0.0
        %3409 = vmatpush1.msra.mxu0 0.0
        %3410 = vmatprep.subr.mxu0 0.0
        %3411 = vmatpush1.msra.mxu0 0.0
        %3412 = vmatprep.subr.mxu0 0.0
        %3413 = vmatpush1.msra.mxu0 0.0
        %3414 = vmatprep.subr.mxu0 0.0
        %3415 = vmatpush1.msra.mxu0 0.0
        %3416 = vmatprep.subr.mxu0 0.0
        %3417 = vmatpush1.msra.mxu0 0.0
        %3418 = vmatprep.subr.mxu0 0.0
        %3419 = vmatpush1.msra.mxu0 0.0
        %3420 = vmatprep.subr.mxu0 0.0
        %3421 = vmatpush1.msra.mxu0 0.0
        %3422 = vmatprep.subr.mxu0 0.0
        %3423 = vmatpush1.msra.mxu0 0.0
        %3424 = vmatprep.subr.mxu0 0.0
        %3425 = vmatpush1.msra.mxu0 0.0
        %3426 = vmatprep.mubr.f32.mxu0 0.0
        %3427 = vmatmul.mubr.f32.gmra.mrb[0].mxu0 %v3339
        %v3428 = vpop.f32.mrb[0].mxu0
        %v3429 = vadd.f32 0.0, %v3428
        %v3430 = vpop.f32.mrb[0].mxu0
        %3431 = vmatprep.mubr.f32.mxu0 0.0
        %3432 = vmatmul.mubr.f32.gmra.mrb[0].mxu0 %v3342
        %v3433 = vpop.f32.mrb[0].mxu0
        %v3434 = vadd.f32 0.0, %v3433
        %v3435 = vpop.f32.mrb[0].mxu0
        %3436 = vmatprep.mubr.f32.mxu0 0.0
        %3437 = vmatmul.mubr.f32.gmra.mrb[0].mxu0 %v3345
        %v3438 = vpop.f32.mrb[0].mxu0
        %v3439 = vadd.f32 0.0, %v3438
        %v3440 = vpop.f32.mrb[0].mxu0
        %3441 = vmatprep.mubr.f32.mxu0 0.0
        %3442 = vmatmul.mubr.f32.gmra.mrb[0].mxu0 %v3348
        %v3443 = vpop.f32.mrb[0].mxu0
        %v3444 = vadd.f32 0.0, %v3443
        %v3445 = vpop.f32.mrb[0].mxu0
        %3446 = vmatprep.mubr.f32.mxu0 0.0
        %3447 = vmatmul.mubr.f32.gmra.mrb[0].mxu0 %v3351
        %v3448 = vpop.f32.mrb[0].mxu0
        %v3449 = vadd.f32 0.0, %v3448
        %v3450 = vpop.f32.mrb[0].mxu0
        %3451 = vmatprep.mubr.f32.mxu0 0.0
        %3452 = vmatmul.mubr.f32.gmra.mrb[0].mxu0 %v3354
        %v3453 = vpop.f32.mrb[0].mxu0
        %v3454 = vadd.f32 0.0, %v3453
        %v3455 = vpop.f32.mrb[0].mxu0
        %3456 = vmatprep.mubr.f32.mxu0 0.0
        %3457 = vmatmul.mubr.f32.gmra.mrb[0].mxu0 %v3357
        %v3458 = vpop.f32.mrb[0].mxu0
        %v3459 = vadd.f32 0.0, %v3458
        %v3460 = vpop.f32.mrb[0].mxu0
        %3461 = vmatprep.mubr.f32.mxu0 0.0
        %3462 = vmatmul.mubr.f32.gmra.mrb[0].mxu0 %v3360
        %v3463 = vpop.f32.mrb[0].mxu0
        %v3464 = vadd.f32 0.0, %v3463
        %v3465 = vpop.f32.mrb[0].mxu0
        %3466 = vdwg.mxu0
        %v3467 = vsel %vm987, %v3429, 0.0
        %v3468 = vsel %vm987, %v3434, 0.0
        %v3469 = vadd.f32 %v3467, %v3468
        %v3470 = vsel %vm987, %v3439, 0.0
        %v3471 = vadd.f32 %v3469, %v3470
        %v3472 = vsel %vm987, %v3444, 0.0
        %v3473 = vadd.f32 %v3471, %v3472
        %v3474 = vsel %vm987, %v3449, 0.0
        %v3475 = vadd.f32 %v3473, %v3474
        %v3476 = vsel %vm987, %v3454, 0.0
        %v3477 = vadd.f32 %v3475, %v3476
        %v3478 = vsel %vm987, %v3459, 0.0
        %v3479 = vadd.f32 %v3477, %v3478
        %v3480 = vsel %vm987, %v3464, 0.0
        %v3481 = vadd.f32 %v3479, %v3480
        %v3482 = vrot.slane %v3481, 4
        %v3483 = vadd.f32 %v3481, %v3482
        %v3484 = vrot.slane %v3483, 2
        %v3485 = vadd.f32 %v3483, %v3484
        %v3486 = vrot.slane %v3485, 1
        %v3487 = vadd.f32 %v3485, %v3486
        %v3488 = vadd.f32 %v3487, 1e-05
        %v3489 = vrsqrt.pop %v3488
        %v3490 = vmul.f32 %v3322, %v3489
        %v3491 = vmul.f32 %v3323, %v3489
        %v3492 = vmul.f32 %v3324, %v3489
        %v3493 = vmul.f32 %v3325, %v3489
        %v3494 = vmul.f32 %v3326, %v3489
        %v3495 = vmul.f32 %v3327, %v3489
        %v3496 = vmul.f32 %v3328, %v3489
        %v3497 = vmul.f32 %v3329, %v3489
        %s3498 = scalar_lea.vmem [#allocation5], 3
        %v3499 = vld [vmem:[%s3498] sm:$0x1]
        %v3501 = vlaneseq
        %v3502 = vshrl.u32 %v3501, 7
        %v3503 = vsub.s32 0, %v3502
        %v3504 = vrot.slane %v3499, %v3503
        %v3506 = vmul.f32 %v3490, %v3504
        %v3507 = vmul.f32 %v3491, %v3504
        %v3508 = vmul.f32 %v3492, %v3504
        %v3509 = vmul.f32 %v3493, %v3504
        %v3510 = vmul.f32 %v3494, %v3504
        %v3511 = vmul.f32 %v3495, %v3504
        %v3512 = vmul.f32 %v3496, %v3504
        %v3513 = vmul.f32 %v3497, %v3504
        %s3514 = scalar_lea.vmem [#allocation7], 3
        %v3515 = vld [vmem:[%s3514] sm:$0x1]
        %v3517 = vlaneseq
        %v3518 = vshrl.u32 %v3517, 7
        %v3519 = vsub.s32 0, %v3518
        %v3520 = vrot.slane %v3515, %v3519
        %v3522 = vadd.f32 %v3506, %v3520
        %v3523 = vadd.f32 %v3507, %v3520
        %v3524 = vadd.f32 %v3508, %v3520
        %v3525 = vadd.f32 %v3509, %v3520
        %v3526 = vadd.f32 %v3510, %v3520
        %v3527 = vadd.f32 %v3511, %v3520
        %v3528 = vadd.f32 %v3512, %v3520
        %v3529 = vadd.f32 %v3513, %v3520
        %v3530 = vmul.f32 %v3522, 0.2
        %v3531 = vmul.f32 %v3523, 0.2
        %v3532 = vmul.f32 %v3524, 0.2
        %v3533 = vmul.f32 %v3525, 0.2
        %v3534 = vmul.f32 %v3526, 0.2
        %v3535 = vmul.f32 %v3527, 0.2
        %v3536 = vmul.f32 %v3528, 0.2
        %v3537 = vmul.f32 %v3529, 0.2
        %v3538 = vmax.f32 %v3522, %v3530
        %v3539 = vmax.f32 %v3523, %v3531
        %v3540 = vmax.f32 %v3524, %v3532
        %v3541 = vmax.f32 %v3525, %v3533
        %v3542 = vmax.f32 %v3526, %v3534
        %v3543 = vmax.f32 %v3527, %v3535
        %v3544 = vmax.f32 %v3528, %v3536
        %v3545 = vmax.f32 %v3529, %v3537
        %v3546 = vmul.f32 %v3538, %v1529
        %v3547 = vmul.f32 %v3539, %v1534
        %v3548 = vmul.f32 %v3540, %v1539
        %v3549 = vmul.f32 %v3541, %v1544
        %v3550 = vmul.f32 %v3542, %v1549
        %v3551 = vmul.f32 %v3543, %v1554
        %v3552 = vmul.f32 %v3544, %v1559
        %v3553 = vmul.f32 %v3545, %v1564
        %v3554 = vld [vmem:[%s7] sm:$0xff]
        %v3555 = vld [vmem:[%s7 + $0x8] sm:$0xff]
        %v3556 = vld [vmem:[%s7 + $0x10] sm:$0xff]
        %v3557 = vld [vmem:[%s7 + $0x18] sm:$0xff]
        %v3558 = vld [vmem:[%s7 + $0x20] sm:$0xff]
        %v3559 = vld [vmem:[%s7 + $0x28] sm:$0xff]
        %v3560 = vld [vmem:[%s7 + $0x30] sm:$0xff]
        %v3561 = vld [vmem:[%s7 + $0x38] sm:$0xff]
        %v3562 = vld [vmem:[%s8] sm:$0xff]
        %v3563 = vld [vmem:[%s8 + $0x8] sm:$0xff]
        %v3564 = vld [vmem:[%s8 + $0x10] sm:$0xff]
        %v3565 = vld [vmem:[%s8 + $0x18] sm:$0xff]
        %v3566 = vld [vmem:[%s8 + $0x20] sm:$0xff]
        %v3567 = vld [vmem:[%s8 + $0x28] sm:$0xff]
        %v3568 = vld [vmem:[%s8 + $0x30] sm:$0xff]
        %v3569 = vld [vmem:[%s8 + $0x38] sm:$0xff]
        %v3571 = vsel %vm996, %v3554, 0
        %v3574 = vsel %vm996, %v3555, 0
        %v3577 = vsel %vm996, %v3556, 0
        %v3580 = vsel %vm996, %v3557, 0
        %v3583 = vsel %vm996, %v3558, 0
        %v3586 = vsel %vm996, %v3559, 0
        %v3589 = vsel %vm996, %v3560, 0
        %v3592 = vsel %vm996, %v3561, 0
        %3594 = vmatprep.subr.mxu0 0.0
        %3595 = vmatpush1.msra.mxu0 %v3546
        %3596 = vmatprep.subr.mxu0 0.0
        %3597 = vmatpush1.msra.mxu0 %v3547
        %3598 = vmatprep.subr.mxu0 0.0
        %3599 = vmatpush1.msra.mxu0 %v3548
        %3600 = vmatprep.subr.mxu0 0.0
        %3601 = vmatpush1.msra.mxu0 %v3549
        %3602 = vmatprep.subr.mxu0 0.0
        %3603 = vmatpush1.msra.mxu0 %v3550
        %3604 = vmatprep.subr.mxu0 0.0
        %3605 = vmatpush1.msra.mxu0 %v3551
        %3606 = vmatprep.subr.mxu0 0.0
        %3607 = vmatpush1.msra.mxu0 %v3552
        %3608 = vmatprep.subr.mxu0 0.0
        %3609 = vmatpush1.msra.mxu0 %v3553
        %3610 = vmatprep.subr.mxu0 0.0
        %3611 = vmatpush1.msra.mxu0 0.0
        %3612 = vmatprep.subr.mxu0 0.0
        %3613 = vmatpush1.msra.mxu0 0.0
        %3614 = vmatprep.subr.mxu0 0.0
        %3615 = vmatpush1.msra.mxu0 0.0
        %3616 = vmatprep.subr.mxu0 0.0
        %3617 = vmatpush1.msra.mxu0 0.0
        %3618 = vmatprep.subr.mxu0 0.0
        %3619 = vmatpush1.msra.mxu0 0.0
        %3620 = vmatprep.subr.mxu0 0.0
        %3621 = vmatpush1.msra.mxu0 0.0
        %3622 = vmatprep.subr.mxu0 0.0
        %3623 = vmatpush1.msra.mxu0 0.0
        %3624 = vmatprep.subr.mxu0 0.0
        %3625 = vmatpush1.msra.mxu0 0.0
        %3626 = vmatprep.subr.mxu0 0.0
        %3627 = vmatpush1.msra.mxu0 0.0
        %3628 = vmatprep.subr.mxu0 0.0
        %3629 = vmatpush1.msra.mxu0 0.0
        %3630 = vmatprep.subr.mxu0 0.0
        %3631 = vmatpush1.msra.mxu0 0.0
        %3632 = vmatprep.subr.mxu0 0.0
        %3633 = vmatpush1.msra.mxu0 0.0
        %3634 = vmatprep.subr.mxu0 0.0
        %3635 = vmatpush1.msra.mxu0 0.0
        %3636 = vmatprep.subr.mxu0 0.0
        %3637 = vmatpush1.msra.mxu0 0.0
        %3638 = vmatprep.subr.mxu0 0.0
        %3639 = vmatpush1.msra.mxu0 0.0
        %3640 = vmatprep.subr.mxu0 0.0
        %3641 = vmatpush1.msra.mxu0 0.0
        %3642 = vmatprep.subr.mxu0 0.0
        %3643 = vmatpush1.msra.mxu0 0.0
        %3644 = vmatprep.subr.mxu0 0.0
        %3645 = vmatpush1.msra.mxu0 0.0
        %3646 = vmatprep.subr.mxu0 0.0
        %3647 = vmatpush1.msra.mxu0 0.0
        %3648 = vmatprep.subr.mxu0 0.0
        %3649 = vmatpush1.msra.mxu0 0.0
        %3650 = vmatprep.subr.mxu0 0.0
        %3651 = vmatpush1.msra.mxu0 0.0
        %3652 = vmatprep.subr.mxu0 0.0
        %3653 = vmatpush1.msra.mxu0 0.0
        %3654 = vmatprep.subr.mxu0 0.0
        %3655 = vmatpush1.msra.mxu0 0.0
        %3656 = vmatprep.subr.mxu0 0.0
        %3657 = vmatpush1.msra.mxu0 0.0
        %3658 = vmatprep.mubr.f32.mxu0 0.0
        %3659 = vmatmul.mubr.f32.gmra.mrb[0].mxu0 %v3571
        %v3660 = vpop.f32.mrb[0].mxu0
        %v3661 = vadd.f32 0.0, %v3660
        %v3662 = vpop.f32.mrb[0].mxu0
        %3663 = vmatprep.mubr.f32.mxu0 0.0
        %3664 = vmatmul.mubr.f32.gmra.mrb[0].mxu0 %v3574
        %v3665 = vpop.f32.mrb[0].mxu0
        %v3666 = vadd.f32 0.0, %v3665
        %v3667 = vpop.f32.mrb[0].mxu0
        %3668 = vmatprep.mubr.f32.mxu0 0.0
        %3669 = vmatmul.mubr.f32.gmra.mrb[0].mxu0 %v3577
        %v3670 = vpop.f32.mrb[0].mxu0
        %v3671 = vadd.f32 0.0, %v3670
        %v3672 = vpop.f32.mrb[0].mxu0
        %3673 = vmatprep.mubr.f32.mxu0 0.0
        %3674 = vmatmul.mubr.f32.gmra.mrb[0].mxu0 %v3580
        %v3675 = vpop.f32.mrb[0].mxu0
        %v3676 = vadd.f32 0.0, %v3675
        %v3677 = vpop.f32.mrb[0].mxu0
        %3678 = vmatprep.mubr.f32.mxu0 0.0
        %3679 = vmatmul.mubr.f32.gmra.mrb[0].mxu0 %v3583
        %v3680 = vpop.f32.mrb[0].mxu0
        %v3681 = vadd.f32 0.0, %v3680
        %v3682 = vpop.f32.mrb[0].mxu0
        %3683 = vmatprep.mubr.f32.mxu0 0.0
        %3684 = vmatmul.mubr.f32.gmra.mrb[0].mxu0 %v3586
        %v3685 = vpop.f32.mrb[0].mxu0
        %v3686 = vadd.f32 0.0, %v3685
        %v3687 = vpop.f32.mrb[0].mxu0
        %3688 = vmatprep.mubr.f32.mxu0 0.0
        %3689 = vmatmul.mubr.f32.gmra.mrb[0].mxu0 %v3589
        %v3690 = vpop.f32.mrb[0].mxu0
        %v3691 = vadd.f32 0.0, %v3690
        %v3692 = vpop.f32.mrb[0].mxu0
        %3693 = vmatprep.mubr.f32.mxu0 0.0
        %3694 = vmatmul.mubr.f32.gmra.mrb[0].mxu0 %v3592
        %v3695 = vpop.f32.mrb[0].mxu0
        %v3696 = vadd.f32 0.0, %v3695
        %v3697 = vpop.f32.mrb[0].mxu0
        %3698 = vdwg.mxu0
        %3707 = vrot.lane.b32.xlu0 %v3661, 32
        %v3708 = vpop.permute.xlu0 %3707
        %3709 = vrot.lane.b32.xlu0 %v3666, 32
        %v3710 = vpop.permute.xlu0 %3709
        %3711 = vrot.lane.b32.xlu0 %v3671, 32
        %v3712 = vpop.permute.xlu0 %3711
        %3713 = vrot.lane.b32.xlu0 %v3676, 32
        %v3714 = vpop.permute.xlu0 %3713
        %3715 = vrot.lane.b32.xlu0 %v3681, 32
        %v3716 = vpop.permute.xlu0 %3715
        %3717 = vrot.lane.b32.xlu0 %v3686, 32
        %v3718 = vpop.permute.xlu0 %3717
        %3719 = vrot.lane.b32.xlu0 %v3691, 32
        %v3720 = vpop.permute.xlu0 %3719
        %3721 = vrot.lane.b32.xlu0 %v3696, 32
        %v3722 = vpop.permute.xlu0 %3721
        %v3731 = vsel %vm987, %v3546, %v3708
        %v3732 = vsel %vm987, %v3547, %v3710
        %v3733 = vsel %vm987, %v3548, %v3712
        %v3734 = vsel %vm987, %v3549, %v3714
        %v3735 = vsel %vm987, %v3550, %v3716
        %v3736 = vsel %vm987, %v3551, %v3718
        %v3737 = vsel %vm987, %v3552, %v3720
        %v3738 = vsel %vm987, %v3553, %v3722
        %v3739 = vld [vmem:[%s9] sm:$0xff]
        %v3740 = vld [vmem:[%s9 + $0x8] sm:$0xff]
        %v3741 = vld [vmem:[%s9 + $0x10] sm:$0xff]
        %v3742 = vld [vmem:[%s9 + $0x18] sm:$0xff]
        %v3743 = vld [vmem:[%s9 + $0x20] sm:$0xff]
        %v3744 = vld [vmem:[%s9 + $0x28] sm:$0xff]
        %v3745 = vld [vmem:[%s9 + $0x30] sm:$0xff]
        %v3746 = vld [vmem:[%s9 + $0x38] sm:$0xff]
        %v3747 = vld [vmem:[%s9 + $0x40] sm:$0xff]
        %v3748 = vld [vmem:[%s9 + $0x48] sm:$0xff]
        %v3749 = vld [vmem:[%s9 + $0x50] sm:$0xff]
        %v3750 = vld [vmem:[%s9 + $0x58] sm:$0xff]
        %v3751 = vld [vmem:[%s9 + $0x60] sm:$0xff]
        %v3752 = vld [vmem:[%s9 + $0x68] sm:$0xff]
        %v3753 = vld [vmem:[%s9 + $0x70] sm:$0xff]
        %v3754 = vld [vmem:[%s9 + $0x78] sm:$0xff]
        %v3756 = vsel %vm996, %v3731, 0
        %v3759 = vsel %vm996, %v3732, 0
        %v3762 = vsel %vm996, %v3733, 0
        %v3765 = vsel %vm996, %v3734, 0
        %v3768 = vsel %vm996, %v3735, 0
        %v3771 = vsel %vm996, %v3736, 0
        %v3774 = vsel %vm996, %v3737, 0
        %v3777 = vsel %vm996, %v3738, 0
        %3779 = vmatprep.subr.mxu0 %v3740
        %3780 = vmatpush1.msra.mxu0 %v3739
        %3781 = vmatprep.subr.mxu0 %v3742
        %3782 = vmatpush1.msra.mxu0 %v3741
        %3783 = vmatprep.subr.mxu0 %v3744
        %3784 = vmatpush1.msra.mxu0 %v3743
        %3785 = vmatprep.subr.mxu0 %v3746
        %3786 = vmatpush1.msra.mxu0 %v3745
        %3787 = vmatprep.subr.mxu0 %v3748
        %3788 = vmatpush1.msra.mxu0 %v3747
        %3789 = vmatprep.subr.mxu0 %v3750
        %3790 = vmatpush1.msra.mxu0 %v3749
        %3791 = vmatprep.subr.mxu0 %v3752
        %3792 = vmatpush1.msra.mxu0 %v3751
        %3793 = vmatprep.subr.mxu0 %v3754
        %3794 = vmatpush1.msra.mxu0 %v3753
        %3795 = vmatprep.subr.mxu0 0.0
        %3796 = vmatpush1.msra.mxu0 0.0
        %3797 = vmatprep.subr.mxu0 0.0
        %3798 = vmatpush1.msra.mxu0 0.0
        %3799 = vmatprep.subr.mxu0 0.0
        %3800 = vmatpush1.msra.mxu0 0.0
        %3801 = vmatprep.subr.mxu0 0.0
        %3802 = vmatpush1.msra.mxu0 0.0
        %3803 = vmatprep.subr.mxu0 0.0
        %3804 = vmatpush1.msra.mxu0 0.0
        %3805 = vmatprep.subr.mxu0 0.0
        %3806 = vmatpush1.msra.mxu0 0.0
        %3807 = vmatprep.subr.mxu0 0.0
        %3808 = vmatpush1.msra.mxu0 0.0
        %3809 = vmatprep.subr.mxu0 0.0
        %3810 = vmatpush1.msra.mxu0 0.0
        %3811 = vmatprep.subr.mxu0 0.0
        %3812 = vmatpush1.msra.mxu0 0.0
        %3813 = vmatprep.subr.mxu0 0.0
        %3814 = vmatpush1.msra.mxu0 0.0
        %3815 = vmatprep.subr.mxu0 0.0
        %3816 = vmatpush1.msra.mxu0 0.0
        %3817 = vmatprep.subr.mxu0 0.0
        %3818 = vmatpush1.msra.mxu0 0.0
        %3819 = vmatprep.subr.mxu0 0.0
        %3820 = vmatpush1.msra.mxu0 0.0
        %3821 = vmatprep.subr.mxu0 0.0
        %3822 = vmatpush1.msra.mxu0 0.0
        %3823 = vmatprep.subr.mxu0 0.0
        %3824 = vmatpush1.msra.mxu0 0.0
        %3825 = vmatprep.subr.mxu0 0.0
        %3826 = vmatpush1.msra.mxu0 0.0
        %3827 = vmatprep.subr.mxu0 0.0
        %3828 = vmatpush1.msra.mxu0 0.0
        %3829 = vmatprep.subr.mxu0 0.0
        %3830 = vmatpush1.msra.mxu0 0.0
        %3831 = vmatprep.subr.mxu0 0.0
        %3832 = vmatpush1.msra.mxu0 0.0
        %3833 = vmatprep.subr.mxu0 0.0
        %3834 = vmatpush1.msra.mxu0 0.0
        %3835 = vmatprep.subr.mxu0 0.0
        %3836 = vmatpush1.msra.mxu0 0.0
        %3837 = vmatprep.subr.mxu0 0.0
        %3838 = vmatpush1.msra.mxu0 0.0
        %3839 = vmatprep.subr.mxu0 0.0
        %3840 = vmatpush1.msra.mxu0 0.0
        %3841 = vmatprep.subr.mxu0 0.0
        %3842 = vmatpush1.msra.mxu0 0.0
        %3843 = vmatprep.mubr.f32.mxu0 0.0
        %3844 = vmatmul.mubr.f32.gmra.mrb[0].mxu0 %v3756
        %v3845 = vpop.f32.mrb[0].mxu0
        %v3846 = vadd.f32 0.0, %v3845
        %v3847 = vpop.f32.mrb[0].mxu0
        %v3848 = vadd.f32 0.0, %v3847
        %3849 = vmatprep.mubr.f32.mxu0 0.0
        %3850 = vmatmul.mubr.f32.gmra.mrb[0].mxu0 %v3759
        %v3851 = vpop.f32.mrb[0].mxu0
        %v3852 = vadd.f32 0.0, %v3851
        %v3853 = vpop.f32.mrb[0].mxu0
        %v3854 = vadd.f32 0.0, %v3853
        %3855 = vmatprep.mubr.f32.mxu0 0.0
        %3856 = vmatmul.mubr.f32.gmra.mrb[0].mxu0 %v3762
        %v3857 = vpop.f32.mrb[0].mxu0
        %v3858 = vadd.f32 0.0, %v3857
        %v3859 = vpop.f32.mrb[0].mxu0
        %v3860 = vadd.f32 0.0, %v3859
        %3861 = vmatprep.mubr.f32.mxu0 0.0
        %3862 = vmatmul.mubr.f32.gmra.mrb[0].mxu0 %v3765
        %v3863 = vpop.f32.mrb[0].mxu0
        %v3864 = vadd.f32 0.0, %v3863
        %v3865 = vpop.f32.mrb[0].mxu0
        %v3866 = vadd.f32 0.0, %v3865
        %3867 = vmatprep.mubr.f32.mxu0 0.0
        %3868 = vmatmul.mubr.f32.gmra.mrb[0].mxu0 %v3768
        %v3869 = vpop.f32.mrb[0].mxu0
        %v3870 = vadd.f32 0.0, %v3869
        %v3871 = vpop.f32.mrb[0].mxu0
        %v3872 = vadd.f32 0.0, %v3871
        %3873 = vmatprep.mubr.f32.mxu0 0.0
        %3874 = vmatmul.mubr.f32.gmra.mrb[0].mxu0 %v3771
        %v3875 = vpop.f32.mrb[0].mxu0
        %v3876 = vadd.f32 0.0, %v3875
        %v3877 = vpop.f32.mrb[0].mxu0
        %v3878 = vadd.f32 0.0, %v3877
        %3879 = vmatprep.mubr.f32.mxu0 0.0
        %3880 = vmatmul.mubr.f32.gmra.mrb[0].mxu0 %v3774
        %v3881 = vpop.f32.mrb[0].mxu0
        %v3882 = vadd.f32 0.0, %v3881
        %v3883 = vpop.f32.mrb[0].mxu0
        %v3884 = vadd.f32 0.0, %v3883
        %3885 = vmatprep.mubr.f32.mxu0 0.0
        %3886 = vmatmul.mubr.f32.gmra.mrb[0].mxu0 %v3777
        %v3887 = vpop.f32.mrb[0].mxu0
        %v3888 = vadd.f32 0.0, %v3887
        %v3889 = vpop.f32.mrb[0].mxu0
        %v3890 = vadd.f32 0.0, %v3889
        %3891 = vdwg.mxu0
        %s3892 = scalar_lea.vmem %s10, 3
        %v3893 = vld [vmem:[%s3892] sm:$0x1]
        %v3895 = vlaneseq
        %v3896 = vshrl.u32 %v3895, 7
        %v3897 = vsub.s32 0, %v3896
        %v3898 = vrot.slane %v3893, %v3897
        %v3900 = vmul.f32 %v3846, %v3898
        %v3901 = vmul.f32 %v3852, %v3898
        %v3902 = vmul.f32 %v3858, %v3898
        %v3903 = vmul.f32 %v3864, %v3898
        %v3904 = vmul.f32 %v3870, %v3898
        %v3905 = vmul.f32 %v3876, %v3898
        %v3906 = vmul.f32 %v3882, %v3898
        %v3907 = vmul.f32 %v3888, %v3898
        %v3908 = vrot.slane %v3846, 5
        %v3909 = vrot.slane %v3852, 5
        %v3910 = vrot.slane %v3858, 5
        %v3911 = vrot.slane %v3864, 5
        %v3912 = vrot.slane %v3870, 5
        %v3913 = vrot.slane %v3876, 5
        %v3914 = vrot.slane %v3882, 5
        %v3915 = vrot.slane %v3888, 5
        %vm3916 = vcmp.lt.s32.totalorder %v857, 3
        %v3917 = vsel %vm3916, %v3914, %v3915
        %v3918 = vsel %vm3916, %v3913, %v3914
        %v3919 = vsel %vm3916, %v3912, %v3913
        %v3920 = vsel %vm3916, %v3911, %v3912
        %v3921 = vsel %vm3916, %v3910, %v3911
        %v3922 = vsel %vm3916, %v3909, %v3910
        %v3923 = vsel %vm3916, %v3908, %v3909
        %v3924 = vsel %vm3916, %v3915, %v3908
        %vm3925 = vcmp.ge.s32.totalorder %v857, 3
        %vm3926 = vcmp.ge.s32.totalorder %v867, 3
        %vm3927 = vcmp.ge.s32.totalorder %v868, 3
        %vm3928 = vcmp.ge.s32.totalorder %v869, 3
        %vm3929 = vcmp.ge.s32.totalorder %v870, 3
        %vm3930 = vcmp.ge.s32.totalorder %v871, 3
        %vm3931 = vcmp.ge.s32.totalorder %v872, 3
        %vm3932 = vcmp.ge.s32.totalorder %v873, 3
        %v3933 = vsel %vm3925, %v3924, 0.0
        %v3934 = vsel %vm3926, %v3923, 0.0
        %v3935 = vsel %vm3927, %v3922, 0.0
        %v3936 = vsel %vm3928, %v3921, 0.0
        %v3937 = vsel %vm3929, %v3920, 0.0
        %v3938 = vsel %vm3930, %v3919, 0.0
        %v3939 = vsel %vm3931, %v3918, 0.0
        %v3940 = vsel %vm3932, %v3917, 0.0
        %v3941 = vld [vmem:[%s10] sm:$0x1]
        %v3943 = vlaneseq
        %v3944 = vshrl.u32 %v3943, 7
        %v3945 = vsub.s32 0, %v3944
        %v3946 = vrot.slane %v3941, %v3945
        %v3948 = vmul.f32 %v3933, %v3946
        %v3949 = vmul.f32 %v3934, %v3946
        %v3950 = vmul.f32 %v3935, %v3946
        %v3951 = vmul.f32 %v3936, %v3946
        %v3952 = vmul.f32 %v3937, %v3946
        %v3953 = vmul.f32 %v3938, %v3946
        %v3954 = vmul.f32 %v3939, %v3946
        %v3955 = vmul.f32 %v3940, %v3946
        %v3956 = vadd.f32 %v3900, %v3948
        %v3957 = vadd.f32 %v3901, %v3949
        %v3958 = vadd.f32 %v3902, %v3950
        %v3959 = vadd.f32 %v3903, %v3951
        %v3960 = vadd.f32 %v3904, %v3952
        %v3961 = vadd.f32 %v3905, %v3953
        %v3962 = vadd.f32 %v3906, %v3954
        %v3963 = vadd.f32 %v3907, %v3955
        %v3964 = vrot.slane %v3846, 6
        %v3965 = vrot.slane %v3852, 6
        %v3966 = vrot.slane %v3858, 6
        %v3967 = vrot.slane %v3864, 6
        %v3968 = vrot.slane %v3870, 6
        %v3969 = vrot.slane %v3876, 6
        %v3970 = vrot.slane %v3882, 6
        %v3971 = vrot.slane %v3888, 6
        %vm3972 = vcmp.lt.s32.totalorder %v857, 2
        %v3973 = vsel %vm3972, %v3970, %v3971
        %v3974 = vsel %vm3972, %v3969, %v3970
        %v3975 = vsel %vm3972, %v3968, %v3969
        %v3976 = vsel %vm3972, %v3967, %v3968
        %v3977 = vsel %vm3972, %v3966, %v3967
        %v3978 = vsel %vm3972, %v3965, %v3966
        %v3979 = vsel %vm3972, %v3964, %v3965
        %v3980 = vsel %vm3972, %v3971, %v3964
        %vm3981 = vcmp.ge.s32.totalorder %v857, 2
        %vm3982 = vcmp.ge.s32.totalorder %v867, 2
        %vm3983 = vcmp.ge.s32.totalorder %v868, 2
        %vm3984 = vcmp.ge.s32.totalorder %v869, 2
        %vm3985 = vcmp.ge.s32.totalorder %v870, 2
        %vm3986 = vcmp.ge.s32.totalorder %v871, 2
        %vm3987 = vcmp.ge.s32.totalorder %v872, 2
        %vm3988 = vcmp.ge.s32.totalorder %v873, 2
        %v3989 = vsel %vm3981, %v3980, 0.0
        %v3990 = vsel %vm3982, %v3979, 0.0
        %v3991 = vsel %vm3983, %v3978, 0.0
        %v3992 = vsel %vm3984, %v3977, 0.0
        %v3993 = vsel %vm3985, %v3976, 0.0
        %v3994 = vsel %vm3986, %v3975, 0.0
        %v3995 = vsel %vm3987, %v3974, 0.0
        %v3996 = vsel %vm3988, %v3973, 0.0
        %s3997 = scalar_lea.vmem %s10, 1
        %v3998 = vld [vmem:[%s3997] sm:$0x1]
        %v4000 = vlaneseq
        %v4001 = vshrl.u32 %v4000, 7
        %v4002 = vsub.s32 0, %v4001
        %v4003 = vrot.slane %v3998, %v4002
        %v4005 = vmul.f32 %v3989, %v4003
        %v4006 = vmul.f32 %v3990, %v4003
        %v4007 = vmul.f32 %v3991, %v4003
        %v4008 = vmul.f32 %v3992, %v4003
        %v4009 = vmul.f32 %v3993, %v4003
        %v4010 = vmul.f32 %v3994, %v4003
        %v4011 = vmul.f32 %v3995, %v4003
        %v4012 = vmul.f32 %v3996, %v4003
        %v4013 = vadd.f32 %v3956, %v4005
        %v4014 = vadd.f32 %v3957, %v4006
        %v4015 = vadd.f32 %v3958, %v4007
        %v4016 = vadd.f32 %v3959, %v4008
        %v4017 = vadd.f32 %v3960, %v4009
        %v4018 = vadd.f32 %v3961, %v4010
        %v4019 = vadd.f32 %v3962, %v4011
        %v4020 = vadd.f32 %v3963, %v4012
        %v4021 = vrot.slane %v3846, 7
        %v4022 = vrot.slane %v3852, 7
        %v4023 = vrot.slane %v3858, 7
        %v4024 = vrot.slane %v3864, 7
        %v4025 = vrot.slane %v3870, 7
        %v4026 = vrot.slane %v3876, 7
        %v4027 = vrot.slane %v3882, 7
        %v4028 = vrot.slane %v3888, 7
        %v4029 = vsel %vm858, %v4027, %v4028
        %v4030 = vsel %vm858, %v4026, %v4027
        %v4031 = vsel %vm858, %v4025, %v4026
        %v4032 = vsel %vm858, %v4024, %v4025
        %v4033 = vsel %vm858, %v4023, %v4024
        %v4034 = vsel %vm858, %v4022, %v4023
        %v4035 = vsel %vm858, %v4021, %v4022
        %v4036 = vsel %vm858, %v4028, %v4021
        %v4037 = vsel %vm874, %v4036, 0.0
        %v4038 = vsel %vm875, %v4035, 0.0
        %v4039 = vsel %vm876, %v4034, 0.0
        %v4040 = vsel %vm877, %v4033, 0.0
        %v4041 = vsel %vm878, %v4032, 0.0
        %v4042 = vsel %vm879, %v4031, 0.0
        %v4043 = vsel %vm880, %v4030, 0.0
        %v4044 = vsel %vm881, %v4029, 0.0
        %s4045 = scalar_lea.vmem %s10, 2
        %v4046 = vld [vmem:[%s4045] sm:$0x1]
        %v4048 = vlaneseq
        %v4049 = vshrl.u32 %v4048, 7
        %v4050 = vsub.s32 0, %v4049
        %v4051 = vrot.slane %v4046, %v4050
        %v4053 = vmul.f32 %v4037, %v4051
        %v4054 = vmul.f32 %v4038, %v4051
        %v4055 = vmul.f32 %v4039, %v4051
        %v4056 = vmul.f32 %v4040, %v4051
        %v4057 = vmul.f32 %v4041, %v4051
        %v4058 = vmul.f32 %v4042, %v4051
        %v4059 = vmul.f32 %v4043, %v4051
        %v4060 = vmul.f32 %v4044, %v4051
        %v4061 = vadd.f32 %v4013, %v4053
        %v4062 = vadd.f32 %v4014, %v4054
        %v4063 = vadd.f32 %v4015, %v4055
        %v4064 = vadd.f32 %v4016, %v4056
        %v4065 = vadd.f32 %v4017, %v4057
        %v4066 = vadd.f32 %v4018, %v4058
        %v4067 = vadd.f32 %v4019, %v4059
        %v4068 = vadd.f32 %v4020, %v4060
        %v4069 = vld [vmem:[%s11] sm:$0x1]
        %v4071 = vlaneseq
        %v4072 = vshrl.u32 %v4071, 7
        %v4073 = vsub.s32 0, %v4072
        %v4074 = vrot.slane %v4069, %v4073
        %v4076 = vadd.f32 %v4061, %v4074
        %v4077 = vadd.f32 %v4062, %v4074
        %v4078 = vadd.f32 %v4063, %v4074
        %v4079 = vadd.f32 %v4064, %v4074
        %v4080 = vadd.f32 %v4065, %v4074
        %v4081 = vadd.f32 %v4066, %v4074
        %v4082 = vadd.f32 %v4067, %v4074
        %v4083 = vadd.f32 %v4068, %v4074
        %v4084 = vsub.f32 0.0, %v4076
        %v4085 = vsub.f32 0.0, %v4077
        %v4086 = vsub.f32 0.0, %v4078
        %v4087 = vsub.f32 0.0, %v4079
        %v4088 = vsub.f32 0.0, %v4080
        %v4089 = vsub.f32 0.0, %v4081
        %v4090 = vsub.f32 0.0, %v4082
        %v4091 = vsub.f32 0.0, %v4083
        %v4092 = vmul.f32 %v4084, 1.442695
        %v4093 = vpow.pop %v4092
        %v4094 = vmul.f32 %v4085, 1.442695
        %v4095 = vpow.pop %v4094
        %v4096 = vmul.f32 %v4086, 1.442695
        %v4097 = vpow.pop %v4096
        %v4098 = vmul.f32 %v4087, 1.442695
        %v4099 = vpow.pop %v4098
        %v4100 = vmul.f32 %v4088, 1.442695
        %v4101 = vpow.pop %v4100
        %v4102 = vmul.f32 %v4089, 1.442695
        %v4103 = vpow.pop %v4102
        %v4104 = vmul.f32 %v4090, 1.442695
        %v4105 = vpow.pop %v4104
        %v4106 = vmul.f32 %v4091, 1.442695
        %v4107 = vpow.pop %v4106
        %v4108 = vadd.f32 %v4093, 1.0
        %v4109 = vadd.f32 %v4095, 1.0
        %v4110 = vadd.f32 %v4097, 1.0
        %v4111 = vadd.f32 %v4099, 1.0
        %v4112 = vadd.f32 %v4101, 1.0
        %v4113 = vadd.f32 %v4103, 1.0
        %v4114 = vadd.f32 %v4105, 1.0
        %v4115 = vadd.f32 %v4107, 1.0
        %v4116 = vrcp.pop %v4108
        %v4117 = vrcp.pop %v4109
        %v4118 = vrcp.pop %v4110
        %v4119 = vrcp.pop %v4111
        %v4120 = vrcp.pop %v4112
        %v4121 = vrcp.pop %v4113
        %v4122 = vrcp.pop %v4114
        %v4123 = vrcp.pop %v4115
        %v4124 = vmul.f32 %v4076, %v4116
        %v4125 = vmul.f32 %v4077, %v4117
        %v4126 = vmul.f32 %v4078, %v4118
        %v4127 = vmul.f32 %v4079, %v4119
        %v4128 = vmul.f32 %v4080, %v4120
        %v4129 = vmul.f32 %v4081, %v4121
        %v4130 = vmul.f32 %v4082, %v4122
        %v4131 = vmul.f32 %v4083, %v4123
        %v4132 = vld [vmem:[%s12] sm:$0xff]
        %v4133 = vld [vmem:[%s12 + $0x8] sm:$0xff]
        %v4134 = vld [vmem:[%s12 + $0x10] sm:$0xff]
        %v4135 = vld [vmem:[%s12 + $0x18] sm:$0xff]
        %v4136 = vld [vmem:[%s12 + $0x20] sm:$0xff]
        %v4137 = vld [vmem:[%s12 + $0x28] sm:$0xff]
        %v4138 = vld [vmem:[%s12 + $0x30] sm:$0xff]
        %v4139 = vld [vmem:[%s12 + $0x38] sm:$0xff]
        %v4140 = vld [vmem:[%s12 + $0x40] sm:$0xff]
        %v4141 = vld [vmem:[%s12 + $0x48] sm:$0xff]
        %v4142 = vld [vmem:[%s12 + $0x50] sm:$0xff]
        %v4143 = vld [vmem:[%s12 + $0x58] sm:$0xff]
        %v4144 = vld [vmem:[%s12 + $0x60] sm:$0xff]
        %v4145 = vld [vmem:[%s12 + $0x68] sm:$0xff]
        %v4146 = vld [vmem:[%s12 + $0x70] sm:$0xff]
        %v4147 = vld [vmem:[%s12 + $0x78] sm:$0xff]
        %v4148 = vld [vmem:[%s12 + $0x80] sm:$0xff]
        %v4149 = vld [vmem:[%s12 + $0x88] sm:$0xff]
        %v4150 = vld [vmem:[%s12 + $0x90] sm:$0xff]
        %v4151 = vld [vmem:[%s12 + $0x98] sm:$0xff]
        %v4152 = vld [vmem:[%s12 + $0xa0] sm:$0xff]
        %v4153 = vld [vmem:[%s12 + $0xa8] sm:$0xff]
        %v4154 = vld [vmem:[%s12 + $0xb0] sm:$0xff]
        %v4155 = vld [vmem:[%s12 + $0xb8] sm:$0xff]
        %v4156 = vld [vmem:[%s12 + $0xc0] sm:$0xff]
        %v4157 = vld [vmem:[%s12 + $0xc8] sm:$0xff]
        %v4158 = vld [vmem:[%s12 + $0xd0] sm:$0xff]
        %v4159 = vld [vmem:[%s12 + $0xd8] sm:$0xff]
        %v4160 = vld [vmem:[%s12 + $0xe0] sm:$0xff]
        %v4161 = vld [vmem:[%s12 + $0xe8] sm:$0xff]
        %v4162 = vld [vmem:[%s12 + $0xf0] sm:$0xff]
        %v4163 = vld [vmem:[%s12 + $0xf8] sm:$0xff]
        %4164 = vmatprep.subr.mxu0 %v4133
        %4165 = vmatpush1.msra.mxu0 %v4132
        %4166 = vmatprep.subr.mxu0 %v4135
        %4167 = vmatpush1.msra.mxu0 %v4134
        %4168 = vmatprep.subr.mxu0 %v4137
        %4169 = vmatpush1.msra.mxu0 %v4136
        %4170 = vmatprep.subr.mxu0 %v4139
        %4171 = vmatpush1.msra.mxu0 %v4138
        %4172 = vmatprep.subr.mxu0 %v4141
        %4173 = vmatpush1.msra.mxu0 %v4140
        %4174 = vmatprep.subr.mxu0 %v4143
        %4175 = vmatpush1.msra.mxu0 %v4142
        %4176 = vmatprep.subr.mxu0 %v4145
        %4177 = vmatpush1.msra.mxu0 %v4144
        %4178 = vmatprep.subr.mxu0 %v4147
        %4179 = vmatpush1.msra.mxu0 %v4146
        %4180 = vmatprep.subr.mxu0 %v4149
        %4181 = vmatpush1.msra.mxu0 %v4148
        %4182 = vmatprep.subr.mxu0 %v4151
        %4183 = vmatpush1.msra.mxu0 %v4150
        %4184 = vmatprep.subr.mxu0 %v4153
        %4185 = vmatpush1.msra.mxu0 %v4152
        %4186 = vmatprep.subr.mxu0 %v4155
        %4187 = vmatpush1.msra.mxu0 %v4154
        %4188 = vmatprep.subr.mxu0 %v4157
        %4189 = vmatpush1.msra.mxu0 %v4156
        %4190 = vmatprep.subr.mxu0 %v4159
        %4191 = vmatpush1.msra.mxu0 %v4158
        %4192 = vmatprep.subr.mxu0 %v4161
        %4193 = vmatpush1.msra.mxu0 %v4160
        %4194 = vmatprep.subr.mxu0 %v4163
        %4195 = vmatpush1.msra.mxu0 %v4162
        %4196 = vmatprep.subr.mxu0 0.0
        %4197 = vmatpush1.msra.mxu0 0.0
        %4198 = vmatprep.subr.mxu0 0.0
        %4199 = vmatpush1.msra.mxu0 0.0
        %4200 = vmatprep.subr.mxu0 0.0
        %4201 = vmatpush1.msra.mxu0 0.0
        %4202 = vmatprep.subr.mxu0 0.0
        %4203 = vmatpush1.msra.mxu0 0.0
        %4204 = vmatprep.subr.mxu0 0.0
        %4205 = vmatpush1.msra.mxu0 0.0
        %4206 = vmatprep.subr.mxu0 0.0
        %4207 = vmatpush1.msra.mxu0 0.0
        %4208 = vmatprep.subr.mxu0 0.0
        %4209 = vmatpush1.msra.mxu0 0.0
        %4210 = vmatprep.subr.mxu0 0.0
        %4211 = vmatpush1.msra.mxu0 0.0
        %4212 = vmatprep.subr.mxu0 0.0
        %4213 = vmatpush1.msra.mxu0 0.0
        %4214 = vmatprep.subr.mxu0 0.0
        %4215 = vmatpush1.msra.mxu0 0.0
        %4216 = vmatprep.subr.mxu0 0.0
        %4217 = vmatpush1.msra.mxu0 0.0
        %4218 = vmatprep.subr.mxu0 0.0
        %4219 = vmatpush1.msra.mxu0 0.0
        %4220 = vmatprep.subr.mxu0 0.0
        %4221 = vmatpush1.msra.mxu0 0.0
        %4222 = vmatprep.subr.mxu0 0.0
        %4223 = vmatpush1.msra.mxu0 0.0
        %4224 = vmatprep.subr.mxu0 0.0
        %4225 = vmatpush1.msra.mxu0 0.0
        %4226 = vmatprep.subr.mxu0 0.0
        %4227 = vmatpush1.msra.mxu0 0.0
        %4228 = vmatprep.mubr.f32.mxu0 0.0
        %4229 = vmatmul.mubr.f32.gmra.mrb[0].mxu0 %v4124
        %v4230 = vpop.f32.mrb[0].mxu0
        %v4231 = vadd.f32 0.0, %v4230
        %v4232 = vpop.f32.mrb[0].mxu0
        %v4233 = vadd.f32 0.0, %v4232
        %4234 = vmatprep.mubr.f32.mxu0 0.0
        %4235 = vmatmul.mubr.f32.gmra.mrb[0].mxu0 %v4125
        %v4236 = vpop.f32.mrb[0].mxu0
        %v4237 = vadd.f32 0.0, %v4236
        %v4238 = vpop.f32.mrb[0].mxu0
        %v4239 = vadd.f32 0.0, %v4238
        %4240 = vmatprep.mubr.f32.mxu0 0.0
        %4241 = vmatmul.mubr.f32.gmra.mrb[0].mxu0 %v4126
        %v4242 = vpop.f32.mrb[0].mxu0
        %v4243 = vadd.f32 0.0, %v4242
        %v4244 = vpop.f32.mrb[0].mxu0
        %v4245 = vadd.f32 0.0, %v4244
        %4246 = vmatprep.mubr.f32.mxu0 0.0
        %4247 = vmatmul.mubr.f32.gmra.mrb[0].mxu0 %v4127
        %v4248 = vpop.f32.mrb[0].mxu0
        %v4249 = vadd.f32 0.0, %v4248
        %v4250 = vpop.f32.mrb[0].mxu0
        %v4251 = vadd.f32 0.0, %v4250
        %4252 = vmatprep.mubr.f32.mxu0 0.0
        %4253 = vmatmul.mubr.f32.gmra.mrb[0].mxu0 %v4128
        %v4254 = vpop.f32.mrb[0].mxu0
        %v4255 = vadd.f32 0.0, %v4254
        %v4256 = vpop.f32.mrb[0].mxu0
        %v4257 = vadd.f32 0.0, %v4256
        %4258 = vmatprep.mubr.f32.mxu0 0.0
        %4259 = vmatmul.mubr.f32.gmra.mrb[0].mxu0 %v4129
        %v4260 = vpop.f32.mrb[0].mxu0
        %v4261 = vadd.f32 0.0, %v4260
        %v4262 = vpop.f32.mrb[0].mxu0
        %v4263 = vadd.f32 0.0, %v4262
        %4264 = vmatprep.mubr.f32.mxu0 0.0
        %4265 = vmatmul.mubr.f32.gmra.mrb[0].mxu0 %v4130
        %v4266 = vpop.f32.mrb[0].mxu0
        %v4267 = vadd.f32 0.0, %v4266
        %v4268 = vpop.f32.mrb[0].mxu0
        %v4269 = vadd.f32 0.0, %v4268
        %4270 = vmatprep.mubr.f32.mxu0 0.0
        %4271 = vmatmul.mubr.f32.gmra.mrb[0].mxu0 %v4131
        %v4272 = vpop.f32.mrb[0].mxu0
        %v4273 = vadd.f32 0.0, %v4272
        %v4274 = vpop.f32.mrb[0].mxu0
        %v4275 = vadd.f32 0.0, %v4274
        %4276 = vdwg.mxu0
        %v4277 = vld [vmem:[%s13] sm:$0x1]
        %v4279 = vlaneseq
        %v4280 = vshrl.u32 %v4279, 7
        %v4281 = vsub.s32 0, %v4280
        %v4282 = vrot.slane %v4277, %v4281
        %v4284 = vadd.f32 %v4231, %v4282
        %v4285 = vadd.f32 %v4237, %v4282
        %v4286 = vadd.f32 %v4243, %v4282
        %v4287 = vadd.f32 %v4249, %v4282
        %v4288 = vadd.f32 %v4255, %v4282
        %v4289 = vadd.f32 %v4261, %v4282
        %v4290 = vadd.f32 %v4267, %v4282
        %v4291 = vadd.f32 %v4273, %v4282
        %v4292 = vmax.f32 %v4284, 0.0
        %v4293 = vmax.f32 %v4285, 0.0
        %v4294 = vmax.f32 %v4286, 0.0
        %v4295 = vmax.f32 %v4287, 0.0
        %v4296 = vmax.f32 %v4288, 0.0
        %v4297 = vmax.f32 %v4289, 0.0
        %v4298 = vmax.f32 %v4290, 0.0
        %v4299 = vmax.f32 %v4291, 0.0
        %v4300 = vand.u32 2147483647, %v4284
        %v4301 = vand.u32 2147483647, %v4285
        %v4302 = vand.u32 2147483647, %v4286
        %v4303 = vand.u32 2147483647, %v4287
        %v4304 = vand.u32 2147483647, %v4288
        %v4305 = vand.u32 2147483647, %v4289
        %v4306 = vand.u32 2147483647, %v4290
        %v4307 = vand.u32 2147483647, %v4291
        %v4308 = vsub.f32 0.0, %v4300
        %v4309 = vsub.f32 0.0, %v4301
        %v4310 = vsub.f32 0.0, %v4302
        %v4311 = vsub.f32 0.0, %v4303
        %v4312 = vsub.f32 0.0, %v4304
        %v4313 = vsub.f32 0.0, %v4305
        %v4314 = vsub.f32 0.0, %v4306
        %v4315 = vsub.f32 0.0, %v4307
        %v4316 = vmul.f32 %v4308, 1.442695
        %v4317 = vpow.pop %v4316
        %v4318 = vmul.f32 %v4309, 1.442695
        %v4319 = vpow.pop %v4318
        %v4320 = vmul.f32 %v4310, 1.442695
        %v4321 = vpow.pop %v4320
        %v4322 = vmul.f32 %v4311, 1.442695
        %v4323 = vpow.pop %v4322
        %v4324 = vmul.f32 %v4312, 1.442695
        %v4325 = vpow.pop %v4324
        %v4326 = vmul.f32 %v4313, 1.442695
        %v4327 = vpow.pop %v4326
        %v4328 = vmul.f32 %v4314, 1.442695
        %v4329 = vpow.pop %v4328
        %v4330 = vmul.f32 %v4315, 1.442695
        %v4331 = vpow.pop %v4330
        %v4332 = vadd.f32 %v4317, 1.0
        %v4333 = vlog2.pop %v4332
        %v4334 = vmul.f32 %v4333, 0.6931472
        %v4335 = vmul.f32 -0.5, %v4317
        %v4336 = vadd.f32 %v4335, 1.0
        %v4337 = vmul.f32 %v4336, %v4317
        %v4338 = vand.u32 2147483647, %v4317
        %vm4339 = vcmp.lt.f32.partialorder %v4338, 0.0004427343
        %v4340 = vsel %vm4339, %v4337, %v4334
        %v4341 = vadd.f32 %v4319, 1.0
        %v4342 = vlog2.pop %v4341
        %v4343 = vmul.f32 %v4342, 0.6931472
        %v4344 = vmul.f32 -0.5, %v4319
        %v4345 = vadd.f32 %v4344, 1.0
        %v4346 = vmul.f32 %v4345, %v4319
        %v4347 = vand.u32 2147483647, %v4319
        %vm4348 = vcmp.lt.f32.partialorder %v4347, 0.0004427343
        %v4349 = vsel %vm4348, %v4346, %v4343
        %v4350 = vadd.f32 %v4321, 1.0
        %v4351 = vlog2.pop %v4350
        %v4352 = vmul.f32 %v4351, 0.6931472
        %v4353 = vmul.f32 -0.5, %v4321
        %v4354 = vadd.f32 %v4353, 1.0
        %v4355 = vmul.f32 %v4354, %v4321
        %v4356 = vand.u32 2147483647, %v4321
        %vm4357 = vcmp.lt.f32.partialorder %v4356, 0.0004427343
        %v4358 = vsel %vm4357, %v4355, %v4352
        %v4359 = vadd.f32 %v4323, 1.0
        %v4360 = vlog2.pop %v4359
        %v4361 = vmul.f32 %v4360, 0.6931472
        %v4362 = vmul.f32 -0.5, %v4323
        %v4363 = vadd.f32 %v4362, 1.0
        %v4364 = vmul.f32 %v4363, %v4323
        %v4365 = vand.u32 2147483647, %v4323
        %vm4366 = vcmp.lt.f32.partialorder %v4365, 0.0004427343
        %v4367 = vsel %vm4366, %v4364, %v4361
        %v4368 = vadd.f32 %v4325, 1.0
        %v4369 = vlog2.pop %v4368
        %v4370 = vmul.f32 %v4369, 0.6931472
        %v4371 = vmul.f32 -0.5, %v4325
        %v4372 = vadd.f32 %v4371, 1.0
        %v4373 = vmul.f32 %v4372, %v4325
        %v4374 = vand.u32 2147483647, %v4325
        %vm4375 = vcmp.lt.f32.partialorder %v4374, 0.0004427343
        %v4376 = vsel %vm4375, %v4373, %v4370
        %v4377 = vadd.f32 %v4327, 1.0
        %v4378 = vlog2.pop %v4377
        %v4379 = vmul.f32 %v4378, 0.6931472
        %v4380 = vmul.f32 -0.5, %v4327
        %v4381 = vadd.f32 %v4380, 1.0
        %v4382 = vmul.f32 %v4381, %v4327
        %v4383 = vand.u32 2147483647, %v4327
        %vm4384 = vcmp.lt.f32.partialorder %v4383, 0.0004427343
        %v4385 = vsel %vm4384, %v4382, %v4379
        %v4386 = vadd.f32 %v4329, 1.0
        %v4387 = vlog2.pop %v4386
        %v4388 = vmul.f32 %v4387, 0.6931472
        %v4389 = vmul.f32 -0.5, %v4329
        %v4390 = vadd.f32 %v4389, 1.0
        %v4391 = vmul.f32 %v4390, %v4329
        %v4392 = vand.u32 2147483647, %v4329
        %vm4393 = vcmp.lt.f32.partialorder %v4392, 0.0004427343
        %v4394 = vsel %vm4393, %v4391, %v4388
        %v4395 = vadd.f32 %v4331, 1.0
        %v4396 = vlog2.pop %v4395
        %v4397 = vmul.f32 %v4396, 0.6931472
        %v4398 = vmul.f32 -0.5, %v4331
        %v4399 = vadd.f32 %v4398, 1.0
        %v4400 = vmul.f32 %v4399, %v4331
        %v4401 = vand.u32 2147483647, %v4331
        %vm4402 = vcmp.lt.f32.partialorder %v4401, 0.0004427343
        %v4403 = vsel %vm4402, %v4400, %v4397
        %v4404 = vadd.f32 %v4292, %v4340
        %v4405 = vadd.f32 %v4293, %v4349
        %v4406 = vadd.f32 %v4294, %v4358
        %v4407 = vadd.f32 %v4295, %v4367
        %v4408 = vadd.f32 %v4296, %v4376
        %v4409 = vadd.f32 %v4297, %v4385
        %v4410 = vadd.f32 %v4298, %v4394
        %v4411 = vadd.f32 %v4299, %v4403
        %v4413 = vsel %vm996, %v3562, 0
        %v4416 = vsel %vm996, %v3563, 0
        %v4419 = vsel %vm996, %v3564, 0
        %v4422 = vsel %vm996, %v3565, 0
        %v4425 = vsel %vm996, %v3566, 0
        %v4428 = vsel %vm996, %v3567, 0
        %v4431 = vsel %vm996, %v3568, 0
        %v4434 = vsel %vm996, %v3569, 0
        %4436 = vmatprep.subr.mxu0 0.0
        %4437 = vmatpush1.msra.mxu0 %v4404
        %4438 = vmatprep.subr.mxu0 0.0
        %4439 = vmatpush1.msra.mxu0 %v4405
        %4440 = vmatprep.subr.mxu0 0.0
        %4441 = vmatpush1.msra.mxu0 %v4406
        %4442 = vmatprep.subr.mxu0 0.0
        %4443 = vmatpush1.msra.mxu0 %v4407
        %4444 = vmatprep.subr.mxu0 0.0
        %4445 = vmatpush1.msra.mxu0 %v4408
        %4446 = vmatprep.subr.mxu0 0.0
        %4447 = vmatpush1.msra.mxu0 %v4409
        %4448 = vmatprep.subr.mxu0 0.0
        %4449 = vmatpush1.msra.mxu0 %v4410
        %4450 = vmatprep.subr.mxu0 0.0
        %4451 = vmatpush1.msra.mxu0 %v4411
        %4452 = vmatprep.subr.mxu0 0.0
        %4453 = vmatpush1.msra.mxu0 0.0
        %4454 = vmatprep.subr.mxu0 0.0
        %4455 = vmatpush1.msra.mxu0 0.0
        %4456 = vmatprep.subr.mxu0 0.0
        %4457 = vmatpush1.msra.mxu0 0.0
        %4458 = vmatprep.subr.mxu0 0.0
        %4459 = vmatpush1.msra.mxu0 0.0
        %4460 = vmatprep.subr.mxu0 0.0
        %4461 = vmatpush1.msra.mxu0 0.0
        %4462 = vmatprep.subr.mxu0 0.0
        %4463 = vmatpush1.msra.mxu0 0.0
        %4464 = vmatprep.subr.mxu0 0.0
        %4465 = vmatpush1.msra.mxu0 0.0
        %4466 = vmatprep.subr.mxu0 0.0
        %4467 = vmatpush1.msra.mxu0 0.0
        %4468 = vmatprep.subr.mxu0 0.0
        %4469 = vmatpush1.msra.mxu0 0.0
        %4470 = vmatprep.subr.mxu0 0.0
        %4471 = vmatpush1.msra.mxu0 0.0
        %4472 = vmatprep.subr.mxu0 0.0
        %4473 = vmatpush1.msra.mxu0 0.0
        %4474 = vmatprep.subr.mxu0 0.0
        %4475 = vmatpush1.msra.mxu0 0.0
        %4476 = vmatprep.subr.mxu0 0.0
        %4477 = vmatpush1.msra.mxu0 0.0
        %4478 = vmatprep.subr.mxu0 0.0
        %4479 = vmatpush1.msra.mxu0 0.0
        %4480 = vmatprep.subr.mxu0 0.0
        %4481 = vmatpush1.msra.mxu0 0.0
        %4482 = vmatprep.subr.mxu0 0.0
        %4483 = vmatpush1.msra.mxu0 0.0
        %4484 = vmatprep.subr.mxu0 0.0
        %4485 = vmatpush1.msra.mxu0 0.0
        %4486 = vmatprep.subr.mxu0 0.0
        %4487 = vmatpush1.msra.mxu0 0.0
        %4488 = vmatprep.subr.mxu0 0.0
        %4489 = vmatpush1.msra.mxu0 0.0
        %4490 = vmatprep.subr.mxu0 0.0
        %4491 = vmatpush1.msra.mxu0 0.0
        %4492 = vmatprep.subr.mxu0 0.0
        %4493 = vmatpush1.msra.mxu0 0.0
        %4494 = vmatprep.subr.mxu0 0.0
        %4495 = vmatpush1.msra.mxu0 0.0
        %4496 = vmatprep.subr.mxu0 0.0
        %4497 = vmatpush1.msra.mxu0 0.0
        %4498 = vmatprep.subr.mxu0 0.0
        %4499 = vmatpush1.msra.mxu0 0.0
        %4500 = vmatprep.mubr.f32.mxu0 0.0
        %4501 = vmatmul.mubr.f32.gmra.mrb[0].mxu0 %v4413
        %v4502 = vpop.f32.mrb[0].mxu0
        %v4503 = vadd.f32 0.0, %v4502
        %v4504 = vpop.f32.mrb[0].mxu0
        %4505 = vmatprep.mubr.f32.mxu0 0.0
        %4506 = vmatmul.mubr.f32.gmra.mrb[0].mxu0 %v4416
        %v4507 = vpop.f32.mrb[0].mxu0
        %v4508 = vadd.f32 0.0, %v4507
        %v4509 = vpop.f32.mrb[0].mxu0
        %4510 = vmatprep.mubr.f32.mxu0 0.0
        %4511 = vmatmul.mubr.f32.gmra.mrb[0].mxu0 %v4419
        %v4512 = vpop.f32.mrb[0].mxu0
        %v4513 = vadd.f32 0.0, %v4512
        %v4514 = vpop.f32.mrb[0].mxu0
        %4515 = vmatprep.mubr.f32.mxu0 0.0
        %4516 = vmatmul.mubr.f32.gmra.mrb[0].mxu0 %v4422
        %v4517 = vpop.f32.mrb[0].mxu0
        %v4518 = vadd.f32 0.0, %v4517
        %v4519 = vpop.f32.mrb[0].mxu0
        %4520 = vmatprep.mubr.f32.mxu0 0.0
        %4521 = vmatmul.mubr.f32.gmra.mrb[0].mxu0 %v4425
        %v4522 = vpop.f32.mrb[0].mxu0
        %v4523 = vadd.f32 0.0, %v4522
        %v4524 = vpop.f32.mrb[0].mxu0
        %4525 = vmatprep.mubr.f32.mxu0 0.0
        %4526 = vmatmul.mubr.f32.gmra.mrb[0].mxu0 %v4428
        %v4527 = vpop.f32.mrb[0].mxu0
        %v4528 = vadd.f32 0.0, %v4527
        %v4529 = vpop.f32.mrb[0].mxu0
        %4530 = vmatprep.mubr.f32.mxu0 0.0
        %4531 = vmatmul.mubr.f32.gmra.mrb[0].mxu0 %v4431
        %v4532 = vpop.f32.mrb[0].mxu0
        %v4533 = vadd.f32 0.0, %v4532
        %v4534 = vpop.f32.mrb[0].mxu0
        %4535 = vmatprep.mubr.f32.mxu0 0.0
        %4536 = vmatmul.mubr.f32.gmra.mrb[0].mxu0 %v4434
        %v4537 = vpop.f32.mrb[0].mxu0
        %v4538 = vadd.f32 0.0, %v4537
        %v4539 = vpop.f32.mrb[0].mxu0
        %4540 = vdwg.mxu0
        %v4541 = vmul.f32 %v4404, %v4124
        %v4542 = vmul.f32 %v4405, %v4125
        %v4543 = vmul.f32 %v4406, %v4126
        %v4544 = vmul.f32 %v4407, %v4127
        %v4545 = vmul.f32 %v4408, %v4128
        %v4546 = vmul.f32 %v4409, %v4129
        %v4547 = vmul.f32 %v4410, %v4130
        %v4548 = vmul.f32 %v4411, %v4131
        %4549 = vmatprep.subr.mxu0 0.0
        %4550 = vmatpush1.msra.mxu0 %v4541
        %4551 = vmatprep.subr.mxu0 0.0
        %4552 = vmatpush1.msra.mxu0 %v4542
        %4553 = vmatprep.subr.mxu0 0.0
        %4554 = vmatpush1.msra.mxu0 %v4543
        %4555 = vmatprep.subr.mxu0 0.0
        %4556 = vmatpush1.msra.mxu0 %v4544
        %4557 = vmatprep.subr.mxu0 0.0
        %4558 = vmatpush1.msra.mxu0 %v4545
        %4559 = vmatprep.subr.mxu0 0.0
        %4560 = vmatpush1.msra.mxu0 %v4546
        %4561 = vmatprep.subr.mxu0 0.0
        %4562 = vmatpush1.msra.mxu0 %v4547
        %4563 = vmatprep.subr.mxu0 0.0
        %4564 = vmatpush1.msra.mxu0 %v4548
        %4565 = vmatprep.subr.mxu0 0.0
        %4566 = vmatpush1.msra.mxu0 0.0
        %4567 = vmatprep.subr.mxu0 0.0
        %4568 = vmatpush1.msra.mxu0 0.0
        %4569 = vmatprep.subr.mxu0 0.0
        %4570 = vmatpush1.msra.mxu0 0.0
        %4571 = vmatprep.subr.mxu0 0.0
        %4572 = vmatpush1.msra.mxu0 0.0
        %4573 = vmatprep.subr.mxu0 0.0
        %4574 = vmatpush1.msra.mxu0 0.0
        %4575 = vmatprep.subr.mxu0 0.0
        %4576 = vmatpush1.msra.mxu0 0.0
        %4577 = vmatprep.subr.mxu0 0.0
        %4578 = vmatpush1.msra.mxu0 0.0
        %4579 = vmatprep.subr.mxu0 0.0
        %4580 = vmatpush1.msra.mxu0 0.0
        %4581 = vmatprep.subr.mxu0 0.0
        %4582 = vmatpush1.msra.mxu0 0.0
        %4583 = vmatprep.subr.mxu0 0.0
        %4584 = vmatpush1.msra.mxu0 0.0
        %4585 = vmatprep.subr.mxu0 0.0
        %4586 = vmatpush1.msra.mxu0 0.0
        %4587 = vmatprep.subr.mxu0 0.0
        %4588 = vmatpush1.msra.mxu0 0.0
        %4589 = vmatprep.subr.mxu0 0.0
        %4590 = vmatpush1.msra.mxu0 0.0
        %4591 = vmatprep.subr.mxu0 0.0
        %4592 = vmatpush1.msra.mxu0 0.0
        %4593 = vmatprep.subr.mxu0 0.0
        %4594 = vmatpush1.msra.mxu0 0.0
        %4595 = vmatprep.subr.mxu0 0.0
        %4596 = vmatpush1.msra.mxu0 0.0
        %4597 = vmatprep.subr.mxu0 0.0
        %4598 = vmatpush1.msra.mxu0 0.0
        %4599 = vmatprep.subr.mxu0 0.0
        %4600 = vmatpush1.msra.mxu0 0.0
        %4601 = vmatprep.subr.mxu0 0.0
        %4602 = vmatpush1.msra.mxu0 0.0
        %4603 = vmatprep.subr.mxu0 0.0
        %4604 = vmatpush1.msra.mxu0 0.0
        %4605 = vmatprep.subr.mxu0 0.0
        %4606 = vmatpush1.msra.mxu0 0.0
        %4607 = vmatprep.subr.mxu0 0.0
        %4608 = vmatpush1.msra.mxu0 0.0
        %4609 = vmatprep.subr.mxu0 0.0
        %4610 = vmatpush1.msra.mxu0 0.0
        %4611 = vmatprep.subr.mxu0 0.0
        %4612 = vmatpush1.msra.mxu0 0.0
        %4613 = vmatprep.mubr.f32.mxu0 0.0
        %4614 = vmatmul.mubr.f32.gmra.mrb[0].mxu0 %v4413
        %v4615 = vpop.f32.mrb[0].mxu0
        %v4616 = vadd.f32 0.0, %v4615
        %v4617 = vpop.f32.mrb[0].mxu0
        %4618 = vmatprep.mubr.f32.mxu0 0.0
        %4619 = vmatmul.mubr.f32.gmra.mrb[0].mxu0 %v4416
        %v4620 = vpop.f32.mrb[0].mxu0
        %v4621 = vadd.f32 0.0, %v4620
        %v4622 = vpop.f32.mrb[0].mxu0
        %4623 = vmatprep.mubr.f32.mxu0 0.0
        %4624 = vmatmul.mubr.f32.gmra.mrb[0].mxu0 %v4419
        %v4625 = vpop.f32.mrb[0].mxu0
        %v4626 = vadd.f32 0.0, %v4625
        %v4627 = vpop.f32.mrb[0].mxu0
        %4628 = vmatprep.mubr.f32.mxu0 0.0
        %4629 = vmatmul.mubr.f32.gmra.mrb[0].mxu0 %v4422
        %v4630 = vpop.f32.mrb[0].mxu0
        %v4631 = vadd.f32 0.0, %v4630
        %v4632 = vpop.f32.mrb[0].mxu0
        %4633 = vmatprep.mubr.f32.mxu0 0.0
        %4634 = vmatmul.mubr.f32.gmra.mrb[0].mxu0 %v4425
        %v4635 = vpop.f32.mrb[0].mxu0
        %v4636 = vadd.f32 0.0, %v4635
        %v4637 = vpop.f32.mrb[0].mxu0
        %4638 = vmatprep.mubr.f32.mxu0 0.0
        %4639 = vmatmul.mubr.f32.gmra.mrb[0].mxu0 %v4428
        %v4640 = vpop.f32.mrb[0].mxu0
        %v4641 = vadd.f32 0.0, %v4640
        %v4642 = vpop.f32.mrb[0].mxu0
        %4643 = vmatprep.mubr.f32.mxu0 0.0
        %4644 = vmatmul.mubr.f32.gmra.mrb[0].mxu0 %v4431
        %v4645 = vpop.f32.mrb[0].mxu0
        %v4646 = vadd.f32 0.0, %v4645
        %v4647 = vpop.f32.mrb[0].mxu0
        %4648 = vmatprep.mubr.f32.mxu0 0.0
        %4649 = vmatmul.mubr.f32.gmra.mrb[0].mxu0 %v4434
        %v4650 = vpop.f32.mrb[0].mxu0
        %v4651 = vadd.f32 0.0, %v4650
        %v4652 = vpop.f32.mrb[0].mxu0
        %4653 = vdwg.mxu0
        %4654 = vmatprep.subr.mxu0 0.0
        %4655 = vmatpush1.msra.mxu0 %v4233
        %4656 = vmatprep.subr.mxu0 0.0
        %4657 = vmatpush1.msra.mxu0 %v4239
        %4658 = vmatprep.subr.mxu0 0.0
        %4659 = vmatpush1.msra.mxu0 %v4245
        %4660 = vmatprep.subr.mxu0 0.0
        %4661 = vmatpush1.msra.mxu0 %v4251
        %4662 = vmatprep.subr.mxu0 0.0
        %4663 = vmatpush1.msra.mxu0 %v4257
        %4664 = vmatprep.subr.mxu0 0.0
        %4665 = vmatpush1.msra.mxu0 %v4263
        %4666 = vmatprep.subr.mxu0 0.0
        %4667 = vmatpush1.msra.mxu0 %v4269
        %4668 = vmatprep.subr.mxu0 0.0
        %4669 = vmatpush1.msra.mxu0 %v4275
        %4670 = vmatprep.subr.mxu0 0.0
        %4671 = vmatpush1.msra.mxu0 0.0
        %4672 = vmatprep.subr.mxu0 0.0
        %4673 = vmatpush1.msra.mxu0 0.0
        %4674 = vmatprep.subr.mxu0 0.0
        %4675 = vmatpush1.msra.mxu0 0.0
        %4676 = vmatprep.subr.mxu0 0.0
        %4677 = vmatpush1.msra.mxu0 0.0
        %4678 = vmatprep.subr.mxu0 0.0
        %4679 = vmatpush1.msra.mxu0 0.0
        %4680 = vmatprep.subr.mxu0 0.0
        %4681 = vmatpush1.msra.mxu0 0.0
        %4682 = vmatprep.subr.mxu0 0.0
        %4683 = vmatpush1.msra.mxu0 0.0
        %4684 = vmatprep.subr.mxu0 0.0
        %4685 = vmatpush1.msra.mxu0 0.0
        %4686 = vmatprep.subr.mxu0 0.0
        %4687 = vmatpush1.msra.mxu0 0.0
        %4688 = vmatprep.subr.mxu0 0.0
        %4689 = vmatpush1.msra.mxu0 0.0
        %4690 = vmatprep.subr.mxu0 0.0
        %4691 = vmatpush1.msra.mxu0 0.0
        %4692 = vmatprep.subr.mxu0 0.0
        %4693 = vmatpush1.msra.mxu0 0.0
        %4694 = vmatprep.subr.mxu0 0.0
        %4695 = vmatpush1.msra.mxu0 0.0
        %4696 = vmatprep.subr.mxu0 0.0
        %4697 = vmatpush1.msra.mxu0 0.0
        %4698 = vmatprep.subr.mxu0 0.0
        %4699 = vmatpush1.msra.mxu0 0.0
        %4700 = vmatprep.subr.mxu0 0.0
        %4701 = vmatpush1.msra.mxu0 0.0
        %4702 = vmatprep.subr.mxu0 0.0
        %4703 = vmatpush1.msra.mxu0 0.0
        %4704 = vmatprep.subr.mxu0 0.0
        %4705 = vmatpush1.msra.mxu0 0.0
        %4706 = vmatprep.subr.mxu0 0.0
        %4707 = vmatpush1.msra.mxu0 0.0
        %4708 = vmatprep.subr.mxu0 0.0
        %4709 = vmatpush1.msra.mxu0 0.0
        %4710 = vmatprep.subr.mxu0 0.0
        %4711 = vmatpush1.msra.mxu0 0.0
        %4712 = vmatprep.subr.mxu0 0.0
        %4713 = vmatpush1.msra.mxu0 0.0
        %4714 = vmatprep.subr.mxu0 0.0
        %4715 = vmatpush1.msra.mxu0 0.0
        %4716 = vmatprep.subr.mxu0 0.0
        %4717 = vmatpush1.msra.mxu0 0.0
        %4718 = vmatprep.mubr.f32.mxu0 0.0
        %4719 = vmatmul.mubr.f32.gmra.mrb[0].mxu0 %v4413
        %v4720 = vpop.f32.mrb[0].mxu0
        %v4721 = vadd.f32 0.0, %v4720
        %v4722 = vpop.f32.mrb[0].mxu0
        %4723 = vmatprep.mubr.f32.mxu0 0.0
        %4724 = vmatmul.mubr.f32.gmra.mrb[0].mxu0 %v4416
        %v4725 = vpop.f32.mrb[0].mxu0
        %v4726 = vadd.f32 0.0, %v4725
        %v4727 = vpop.f32.mrb[0].mxu0
        %4728 = vmatprep.mubr.f32.mxu0 0.0
        %4729 = vmatmul.mubr.f32.gmra.mrb[0].mxu0 %v4419
        %v4730 = vpop.f32.mrb[0].mxu0
        %v4731 = vadd.f32 0.0, %v4730
        %v4732 = vpop.f32.mrb[0].mxu0
        %4733 = vmatprep.mubr.f32.mxu0 0.0
        %4734 = vmatmul.mubr.f32.gmra.mrb[0].mxu0 %v4422
        %v4735 = vpop.f32.mrb[0].mxu0
        %v4736 = vadd.f32 0.0, %v4735
        %v4737 = vpop.f32.mrb[0].mxu0
        %4738 = vmatprep.mubr.f32.mxu0 0.0
        %4739 = vmatmul.mubr.f32.gmra.mrb[0].mxu0 %v4425
        %v4740 = vpop.f32.mrb[0].mxu0
        %v4741 = vadd.f32 0.0, %v4740
        %v4742 = vpop.f32.mrb[0].mxu0
        %4743 = vmatprep.mubr.f32.mxu0 0.0
        %4744 = vmatmul.mubr.f32.gmra.mrb[0].mxu0 %v4428
        %v4745 = vpop.f32.mrb[0].mxu0
        %v4746 = vadd.f32 0.0, %v4745
        %v4747 = vpop.f32.mrb[0].mxu0
        %4748 = vmatprep.mubr.f32.mxu0 0.0
        %4749 = vmatmul.mubr.f32.gmra.mrb[0].mxu0 %v4431
        %v4750 = vpop.f32.mrb[0].mxu0
        %v4751 = vadd.f32 0.0, %v4750
        %v4752 = vpop.f32.mrb[0].mxu0
        %4753 = vmatprep.mubr.f32.mxu0 0.0
        %4754 = vmatmul.mubr.f32.gmra.mrb[0].mxu0 %v4434
        %v4755 = vpop.f32.mrb[0].mxu0
        %v4756 = vadd.f32 0.0, %v4755
        %v4757 = vpop.f32.mrb[0].mxu0
        %4758 = vdwg.mxu0
        %v4759 = vld [vmem:[%s15] sm:$0xff]
        %v4760 = vld [vmem:[%s15 + $0x8] sm:$0xff]
        %v4761 = vld [vmem:[%s15 + $0x10] sm:$0xff]
        %v4762 = vld [vmem:[%s15 + $0x18] sm:$0xff]
        %v4763 = vld [vmem:[%s15 + $0x20] sm:$0xff]
        %v4764 = vld [vmem:[%s15 + $0x28] sm:$0xff]
        %v4765 = vld [vmem:[%s15 + $0x30] sm:$0xff]
        %v4766 = vld [vmem:[%s15 + $0x38] sm:$0xff]
        %v4767 = vld [vmem:[%s15 + $0x40] sm:$0xff]
        %v4768 = vld [vmem:[%s15 + $0x48] sm:$0xff]
        %v4769 = vld [vmem:[%s15 + $0x50] sm:$0xff]
        %v4770 = vld [vmem:[%s15 + $0x58] sm:$0xff]
        %v4771 = vld [vmem:[%s15 + $0x60] sm:$0xff]
        %v4772 = vld [vmem:[%s15 + $0x68] sm:$0xff]
        %v4773 = vld [vmem:[%s15 + $0x70] sm:$0xff]
        %v4774 = vld [vmem:[%s15 + $0x78] sm:$0xff]
        %v4775 = vld [vmem:[%s15 + $0x80] sm:$0xff]
        %v4776 = vld [vmem:[%s15 + $0x88] sm:$0xff]
        %v4777 = vld [vmem:[%s15 + $0x90] sm:$0xff]
        %v4778 = vld [vmem:[%s15 + $0x98] sm:$0xff]
        %v4779 = vld [vmem:[%s15 + $0xa0] sm:$0xff]
        %v4780 = vld [vmem:[%s15 + $0xa8] sm:$0xff]
        %v4781 = vld [vmem:[%s15 + $0xb0] sm:$0xff]
        %v4782 = vld [vmem:[%s15 + $0xb8] sm:$0xff]
        %v4783 = vld [vmem:[%s15 + $0xc0] sm:$0xff]
        %v4784 = vld [vmem:[%s15 + $0xc8] sm:$0xff]
        %v4785 = vld [vmem:[%s15 + $0xd0] sm:$0xff]
        %v4786 = vld [vmem:[%s15 + $0xd8] sm:$0xff]
        %v4787 = vld [vmem:[%s15 + $0xe0] sm:$0xff]
        %v4788 = vld [vmem:[%s15 + $0xe8] sm:$0xff]
        %v4789 = vld [vmem:[%s15 + $0xf0] sm:$0xff]
        %v4790 = vld [vmem:[%s15 + $0xf8] sm:$0xff]
        %v4791 = vld [vmem:[%s15 + $0x100] sm:$0xff]
        %v4792 = vld [vmem:[%s15 + $0x108] sm:$0xff]
        %v4793 = vld [vmem:[%s15 + $0x110] sm:$0xff]
        %v4794 = vld [vmem:[%s15 + $0x118] sm:$0xff]
        %v4795 = vld [vmem:[%s15 + $0x120] sm:$0xff]
        %v4796 = vld [vmem:[%s15 + $0x128] sm:$0xff]
        %v4797 = vld [vmem:[%s15 + $0x130] sm:$0xff]
        %v4798 = vld [vmem:[%s15 + $0x138] sm:$0xff]
        %v4799 = vld [vmem:[%s15 + $0x140] sm:$0xff]
        %v4800 = vld [vmem:[%s15 + $0x148] sm:$0xff]
        %v4801 = vld [vmem:[%s15 + $0x150] sm:$0xff]
        %v4802 = vld [vmem:[%s15 + $0x158] sm:$0xff]
        %v4803 = vld [vmem:[%s15 + $0x160] sm:$0xff]
        %v4804 = vld [vmem:[%s15 + $0x168] sm:$0xff]
        %v4805 = vld [vmem:[%s15 + $0x170] sm:$0xff]
        %v4806 = vld [vmem:[%s15 + $0x178] sm:$0xff]
        %v4807 = vld [vmem:[%s15 + $0x180] sm:$0xff]
        %v4808 = vld [vmem:[%s15 + $0x188] sm:$0xff]
        %v4809 = vld [vmem:[%s15 + $0x190] sm:$0xff]
        %v4810 = vld [vmem:[%s15 + $0x198] sm:$0xff]
        %v4811 = vld [vmem:[%s15 + $0x1a0] sm:$0xff]
        %v4812 = vld [vmem:[%s15 + $0x1a8] sm:$0xff]
        %v4813 = vld [vmem:[%s15 + $0x1b0] sm:$0xff]
        %v4814 = vld [vmem:[%s15 + $0x1b8] sm:$0xff]
        %v4815 = vld [vmem:[%s15 + $0x1c0] sm:$0xff]
        %v4816 = vld [vmem:[%s15 + $0x1c8] sm:$0xff]
        %v4817 = vld [vmem:[%s15 + $0x1d0] sm:$0xff]
        %v4818 = vld [vmem:[%s15 + $0x1d8] sm:$0xff]
        %v4819 = vld [vmem:[%s15 + $0x1e0] sm:$0xff]
        %v4820 = vld [vmem:[%s15 + $0x1e8] sm:$0xff]
        %v4821 = vld [vmem:[%s15 + $0x1f0] sm:$0xff]
        %v4822 = vld [vmem:[%s15 + $0x1f8] sm:$0xff]
        %v4824 = vsel %vm987, %v4721, 0
        %v4827 = vsel %vm987, %v4726, 0
        %v4830 = vsel %vm987, %v4731, 0
        %v4833 = vsel %vm987, %v4736, 0
        %v4836 = vsel %vm987, %v4741, 0
        %v4839 = vsel %vm987, %v4746, 0
        %v4842 = vsel %vm987, %v4751, 0
        %v4845 = vsel %vm987, %v4756, 0
        %4847 = vmatprep.subr.mxu0 %v4760
        %4848 = vmatpush1.msra.mxu0 %v4759
        %4849 = vmatprep.subr.mxu0 %v4776
        %4850 = vmatpush1.msra.mxu0 %v4775
        %4851 = vmatprep.subr.mxu0 %v4792
        %4852 = vmatpush1.msra.mxu0 %v4791
        %4853 = vmatprep.subr.mxu0 %v4808
        %4854 = vmatpush1.msra.mxu0 %v4807
        %4855 = vmatprep.subr.mxu0 0.0
        %4856 = vmatpush1.msra.mxu0 0.0
        %4857 = vmatprep.subr.mxu0 0.0
        %4858 = vmatpush1.msra.mxu0 0.0
        %4859 = vmatprep.subr.mxu0 0.0
        %4860 = vmatpush1.msra.mxu0 0.0
        %4861 = vmatprep.subr.mxu0 0.0
        %4862 = vmatpush1.msra.mxu0 0.0
        %4863 = vmatprep.subr.mxu0 0.0
        %4864 = vmatpush1.msra.mxu0 0.0
        %4865 = vmatprep.subr.mxu0 0.0
        %4866 = vmatpush1.msra.mxu0 0.0
        %4867 = vmatprep.subr.mxu0 0.0
        %4868 = vmatpush1.msra.mxu0 0.0
        %4869 = vmatprep.subr.mxu0 0.0
        %4870 = vmatpush1.msra.mxu0 0.0
        %4871 = vmatprep.subr.mxu0 0.0
        %4872 = vmatpush1.msra.mxu0 0.0
        %4873 = vmatprep.subr.mxu0 0.0
        %4874 = vmatpush1.msra.mxu0 0.0
        %4875 = vmatprep.subr.mxu0 0.0
        %4876 = vmatpush1.msra.mxu0 0.0
        %4877 = vmatprep.subr.mxu0 0.0
        %4878 = vmatpush1.msra.mxu0 0.0
        %4879 = vmatprep.subr.mxu0 0.0
        %4880 = vmatpush1.msra.mxu0 0.0
        %4881 = vmatprep.subr.mxu0 0.0
        %4882 = vmatpush1.msra.mxu0 0.0
        %4883 = vmatprep.subr.mxu0 0.0
        %4884 = vmatpush1.msra.mxu0 0.0
        %4885 = vmatprep.subr.mxu0 0.0
        %4886 = vmatpush1.msra.mxu0 0.0
        %4887 = vmatprep.subr.mxu0 0.0
        %4888 = vmatpush1.msra.mxu0 0.0
        %4889 = vmatprep.subr.mxu0 0.0
        %4890 = vmatpush1.msra.mxu0 0.0
        %4891 = vmatprep.subr.mxu0 0.0
        %4892 = vmatpush1.msra.mxu0 0.0
        %4893 = vmatprep.subr.mxu0 0.0
        %4894 = vmatpush1.msra.mxu0 0.0
        %4895 = vmatprep.subr.mxu0 0.0
        %4896 = vmatpush1.msra.mxu0 0.0
        %4897 = vmatprep.subr.mxu0 0.0
        %4898 = vmatpush1.msra.mxu0 0.0
        %4899 = vmatprep.subr.mxu0 0.0
        %4900 = vmatpush1.msra.mxu0 0.0
        %4901 = vmatprep.subr.mxu0 0.0
        %4902 = vmatpush1.msra.mxu0 0.0
        %4903 = vmatprep.subr.mxu0 0.0
        %4904 = vmatpush1.msra.mxu0 0.0
        %4905 = vmatprep.subr.mxu0 0.0
        %4906 = vmatpush1.msra.mxu0 0.0
        %4907 = vmatprep.subr.mxu0 0.0
        %4908 = vmatpush1.msra.mxu0 0.0
        %4909 = vmatprep.subr.mxu0 0.0
        %4910 = vmatpush1.msra.mxu0 0.0
        %4911 = vmatprep.mubr.f32.mxu0 0.0
        %4912 = vmatmul.mubr.f32.gmra.mrb[0].mxu0 %v4824
        %v4913 = vpop.f32.mrb[0].mxu0
        %v4914 = vadd.f32 0.0, %v4913
        %v4915 = vpop.f32.mrb[0].mxu0
        %v4916 = vadd.f32 0.0, %v4915
        %4917 = vmatprep.mubr.f32.mxu0 0.0
        %4918 = vmatmul.mubr.f32.gmra.mrb[0].mxu0 %v4827
        %v4919 = vpop.f32.mrb[0].mxu0
        %v4920 = vadd.f32 0.0, %v4919
        %v4921 = vpop.f32.mrb[0].mxu0
        %v4922 = vadd.f32 0.0, %v4921
        %4923 = vmatprep.mubr.f32.mxu0 0.0
        %4924 = vmatmul.mubr.f32.gmra.mrb[0].mxu0 %v4830
        %v4925 = vpop.f32.mrb[0].mxu0
        %v4926 = vadd.f32 0.0, %v4925
        %v4927 = vpop.f32.mrb[0].mxu0
        %v4928 = vadd.f32 0.0, %v4927
        %4929 = vmatprep.mubr.f32.mxu0 0.0
        %4930 = vmatmul.mubr.f32.gmra.mrb[0].mxu0 %v4833
        %v4931 = vpop.f32.mrb[0].mxu0
        %v4932 = vadd.f32 0.0, %v4931
        %v4933 = vpop.f32.mrb[0].mxu0
        %v4934 = vadd.f32 0.0, %v4933
        %4935 = vmatprep.mubr.f32.mxu0 0.0
        %4936 = vmatmul.mubr.f32.gmra.mrb[0].mxu0 %v4836
        %v4937 = vpop.f32.mrb[0].mxu0
        %v4938 = vadd.f32 0.0, %v4937
        %v4939 = vpop.f32.mrb[0].mxu0
        %v4940 = vadd.f32 0.0, %v4939
        %4941 = vmatprep.mubr.f32.mxu0 0.0
        %4942 = vmatmul.mubr.f32.gmra.mrb[0].mxu0 %v4839
        %v4943 = vpop.f32.mrb[0].mxu0
        %v4944 = vadd.f32 0.0, %v4943
        %v4945 = vpop.f32.mrb[0].mxu0
        %v4946 = vadd.f32 0.0, %v4945
        %4947 = vmatprep.mubr.f32.mxu0 0.0
        %4948 = vmatmul.mubr.f32.gmra.mrb[0].mxu0 %v4842
        %v4949 = vpop.f32.mrb[0].mxu0
        %v4950 = vadd.f32 0.0, %v4949
        %v4951 = vpop.f32.mrb[0].mxu0
        %v4952 = vadd.f32 0.0, %v4951
        %4953 = vmatprep.mubr.f32.mxu0 0.0
        %4954 = vmatmul.mubr.f32.gmra.mrb[0].mxu0 %v4845
        %v4955 = vpop.f32.mrb[0].mxu0
        %v4956 = vadd.f32 0.0, %v4955
        %v4957 = vpop.f32.mrb[0].mxu0
        %v4958 = vadd.f32 0.0, %v4957
        %4959 = vdwg.mxu0
        %4960 = vmatprep.subr.mxu0 %v4762
        %4961 = vmatpush1.msra.mxu0 %v4761
        %4962 = vmatprep.subr.mxu0 %v4778
        %4963 = vmatpush1.msra.mxu0 %v4777
        %4964 = vmatprep.subr.mxu0 %v4794
        %4965 = vmatpush1.msra.mxu0 %v4793
        %4966 = vmatprep.subr.mxu0 %v4810
        %4967 = vmatpush1.msra.mxu0 %v4809
        %4968 = vmatprep.subr.mxu0 0.0
        %4969 = vmatpush1.msra.mxu0 0.0
        %4970 = vmatprep.subr.mxu0 0.0
        %4971 = vmatpush1.msra.mxu0 0.0
        %4972 = vmatprep.subr.mxu0 0.0
        %4973 = vmatpush1.msra.mxu0 0.0
        %4974 = vmatprep.subr.mxu0 0.0
        %4975 = vmatpush1.msra.mxu0 0.0
        %4976 = vmatprep.subr.mxu0 0.0
        %4977 = vmatpush1.msra.mxu0 0.0
        %4978 = vmatprep.subr.mxu0 0.0
        %4979 = vmatpush1.msra.mxu0 0.0
        %4980 = vmatprep.subr.mxu0 0.0
        %4981 = vmatpush1.msra.mxu0 0.0
        %4982 = vmatprep.subr.mxu0 0.0
        %4983 = vmatpush1.msra.mxu0 0.0
        %4984 = vmatprep.subr.mxu0 0.0
        %4985 = vmatpush1.msra.mxu0 0.0
        %4986 = vmatprep.subr.mxu0 0.0
        %4987 = vmatpush1.msra.mxu0 0.0
        %4988 = vmatprep.subr.mxu0 0.0
        %4989 = vmatpush1.msra.mxu0 0.0
        %4990 = vmatprep.subr.mxu0 0.0
        %4991 = vmatpush1.msra.mxu0 0.0
        %4992 = vmatprep.subr.mxu0 0.0
        %4993 = vmatpush1.msra.mxu0 0.0
        %4994 = vmatprep.subr.mxu0 0.0
        %4995 = vmatpush1.msra.mxu0 0.0
        %4996 = vmatprep.subr.mxu0 0.0
        %4997 = vmatpush1.msra.mxu0 0.0
        %4998 = vmatprep.subr.mxu0 0.0
        %4999 = vmatpush1.msra.mxu0 0.0
        %5000 = vmatprep.subr.mxu0 0.0
        %5001 = vmatpush1.msra.mxu0 0.0
        %5002 = vmatprep.subr.mxu0 0.0
        %5003 = vmatpush1.msra.mxu0 0.0
        %5004 = vmatprep.subr.mxu0 0.0
        %5005 = vmatpush1.msra.mxu0 0.0
        %5006 = vmatprep.subr.mxu0 0.0
        %5007 = vmatpush1.msra.mxu0 0.0
        %5008 = vmatprep.subr.mxu0 0.0
        %5009 = vmatpush1.msra.mxu0 0.0
        %5010 = vmatprep.subr.mxu0 0.0
        %5011 = vmatpush1.msra.mxu0 0.0
        %5012 = vmatprep.subr.mxu0 0.0
        %5013 = vmatpush1.msra.mxu0 0.0
        %5014 = vmatprep.subr.mxu0 0.0
        %5015 = vmatpush1.msra.mxu0 0.0
        %5016 = vmatprep.subr.mxu0 0.0
        %5017 = vmatpush1.msra.mxu0 0.0
        %5018 = vmatprep.subr.mxu0 0.0
        %5019 = vmatpush1.msra.mxu0 0.0
        %5020 = vmatprep.subr.mxu0 0.0
        %5021 = vmatpush1.msra.mxu0 0.0
        %5022 = vmatprep.subr.mxu0 0.0
        %5023 = vmatpush1.msra.mxu0 0.0
        %5024 = vmatprep.mubr.f32.mxu0 0.0
        %5025 = vmatmul.mubr.f32.gmra.mrb[0].mxu0 %v4824
        %v5026 = vpop.f32.mrb[0].mxu0
        %v5027 = vadd.f32 0.0, %v5026
        %v5028 = vpop.f32.mrb[0].mxu0
        %v5029 = vadd.f32 0.0, %v5028
        %5030 = vmatprep.mubr.f32.mxu0 0.0
        %5031 = vmatmul.mubr.f32.gmra.mrb[0].mxu0 %v4827
        %v5032 = vpop.f32.mrb[0].mxu0
        %v5033 = vadd.f32 0.0, %v5032
        %v5034 = vpop.f32.mrb[0].mxu0
        %v5035 = vadd.f32 0.0, %v5034
        %5036 = vmatprep.mubr.f32.mxu0 0.0
        %5037 = vmatmul.mubr.f32.gmra.mrb[0].mxu0 %v4830
        %v5038 = vpop.f32.mrb[0].mxu0
        %v5039 = vadd.f32 0.0, %v5038
        %v5040 = vpop.f32.mrb[0].mxu0
        %v5041 = vadd.f32 0.0, %v5040
        %5042 = vmatprep.mubr.f32.mxu0 0.0
        %5043 = vmatmul.mubr.f32.gmra.mrb[0].mxu0 %v4833
        %v5044 = vpop.f32.mrb[0].mxu0
        %v5045 = vadd.f32 0.0, %v5044
        %v5046 = vpop.f32.mrb[0].mxu0
        %v5047 = vadd.f32 0.0, %v5046
        %5048 = vmatprep.mubr.f32.mxu0 0.0
        %5049 = vmatmul.mubr.f32.gmra.mrb[0].mxu0 %v4836
        %v5050 = vpop.f32.mrb[0].mxu0
        %v5051 = vadd.f32 0.0, %v5050
        %v5052 = vpop.f32.mrb[0].mxu0
        %v5053 = vadd.f32 0.0, %v5052
        %5054 = vmatprep.mubr.f32.mxu0 0.0
        %5055 = vmatmul.mubr.f32.gmra.mrb[0].mxu0 %v4839
        %v5056 = vpop.f32.mrb[0].mxu0
        %v5057 = vadd.f32 0.0, %v5056
        %v5058 = vpop.f32.mrb[0].mxu0
        %v5059 = vadd.f32 0.0, %v5058
        %5060 = vmatprep.mubr.f32.mxu0 0.0
        %5061 = vmatmul.mubr.f32.gmra.mrb[0].mxu0 %v4842
        %v5062 = vpop.f32.mrb[0].mxu0
        %v5063 = vadd.f32 0.0, %v5062
        %v5064 = vpop.f32.mrb[0].mxu0
        %v5065 = vadd.f32 0.0, %v5064
        %5066 = vmatprep.mubr.f32.mxu0 0.0
        %5067 = vmatmul.mubr.f32.gmra.mrb[0].mxu0 %v4845
        %v5068 = vpop.f32.mrb[0].mxu0
        %v5069 = vadd.f32 0.0, %v5068
        %v5070 = vpop.f32.mrb[0].mxu0
        %v5071 = vadd.f32 0.0, %v5070
        %5072 = vdwg.mxu0
        %5073 = vmatprep.subr.mxu0 %v4764
        %5074 = vmatpush1.msra.mxu0 %v4763
        %5075 = vmatprep.subr.mxu0 %v4780
        %5076 = vmatpush1.msra.mxu0 %v4779
        %5077 = vmatprep.subr.mxu0 %v4796
        %5078 = vmatpush1.msra.mxu0 %v4795
        %5079 = vmatprep.subr.mxu0 %v4812
        %5080 = vmatpush1.msra.mxu0 %v4811
        %5081 = vmatprep.subr.mxu0 0.0
        %5082 = vmatpush1.msra.mxu0 0.0
        %5083 = vmatprep.subr.mxu0 0.0
        %5084 = vmatpush1.msra.mxu0 0.0
        %5085 = vmatprep.subr.mxu0 0.0
        %5086 = vmatpush1.msra.mxu0 0.0
        %5087 = vmatprep.subr.mxu0 0.0
        %5088 = vmatpush1.msra.mxu0 0.0
        %5089 = vmatprep.subr.mxu0 0.0
        %5090 = vmatpush1.msra.mxu0 0.0
        %5091 = vmatprep.subr.mxu0 0.0
        %5092 = vmatpush1.msra.mxu0 0.0
        %5093 = vmatprep.subr.mxu0 0.0
        %5094 = vmatpush1.msra.mxu0 0.0
        %5095 = vmatprep.subr.mxu0 0.0
        %5096 = vmatpush1.msra.mxu0 0.0
        %5097 = vmatprep.subr.mxu0 0.0
        %5098 = vmatpush1.msra.mxu0 0.0
        %5099 = vmatprep.subr.mxu0 0.0
        %5100 = vmatpush1.msra.mxu0 0.0
        %5101 = vmatprep.subr.mxu0 0.0
        %5102 = vmatpush1.msra.mxu0 0.0
        %5103 = vmatprep.subr.mxu0 0.0
        %5104 = vmatpush1.msra.mxu0 0.0
        %5105 = vmatprep.subr.mxu0 0.0
        %5106 = vmatpush1.msra.mxu0 0.0
        %5107 = vmatprep.subr.mxu0 0.0
        %5108 = vmatpush1.msra.mxu0 0.0
        %5109 = vmatprep.subr.mxu0 0.0
        %5110 = vmatpush1.msra.mxu0 0.0
        %5111 = vmatprep.subr.mxu0 0.0
        %5112 = vmatpush1.msra.mxu0 0.0
        %5113 = vmatprep.subr.mxu0 0.0
        %5114 = vmatpush1.msra.mxu0 0.0
        %5115 = vmatprep.subr.mxu0 0.0
        %5116 = vmatpush1.msra.mxu0 0.0
        %5117 = vmatprep.subr.mxu0 0.0
        %5118 = vmatpush1.msra.mxu0 0.0
        %5119 = vmatprep.subr.mxu0 0.0
        %5120 = vmatpush1.msra.mxu0 0.0
        %5121 = vmatprep.subr.mxu0 0.0
        %5122 = vmatpush1.msra.mxu0 0.0
        %5123 = vmatprep.subr.mxu0 0.0
        %5124 = vmatpush1.msra.mxu0 0.0
        %5125 = vmatprep.subr.mxu0 0.0
        %5126 = vmatpush1.msra.mxu0 0.0
        %5127 = vmatprep.subr.mxu0 0.0
        %5128 = vmatpush1.msra.mxu0 0.0
        %5129 = vmatprep.subr.mxu0 0.0
        %5130 = vmatpush1.msra.mxu0 0.0
        %5131 = vmatprep.subr.mxu0 0.0
        %5132 = vmatpush1.msra.mxu0 0.0
        %5133 = vmatprep.subr.mxu0 0.0
        %5134 = vmatpush1.msra.mxu0 0.0
        %5135 = vmatprep.subr.mxu0 0.0
        %5136 = vmatpush1.msra.mxu0 0.0
        %5137 = vmatprep.mubr.f32.mxu0 0.0
        %5138 = vmatmul.mubr.f32.gmra.mrb[0].mxu0 %v4824
        %v5139 = vpop.f32.mrb[0].mxu0
        %v5140 = vadd.f32 0.0, %v5139
        %v5141 = vpop.f32.mrb[0].mxu0
        %v5142 = vadd.f32 0.0, %v5141
        %5143 = vmatprep.mubr.f32.mxu0 0.0
        %5144 = vmatmul.mubr.f32.gmra.mrb[0].mxu0 %v4827
        %v5145 = vpop.f32.mrb[0].mxu0
        %v5146 = vadd.f32 0.0, %v5145
        %v5147 = vpop.f32.mrb[0].mxu0
        %v5148 = vadd.f32 0.0, %v5147
        %5149 = vmatprep.mubr.f32.mxu0 0.0
        %5150 = vmatmul.mubr.f32.gmra.mrb[0].mxu0 %v4830
        %v5151 = vpop.f32.mrb[0].mxu0
        %v5152 = vadd.f32 0.0, %v5151
        %v5153 = vpop.f32.mrb[0].mxu0
        %v5154 = vadd.f32 0.0, %v5153
        %5155 = vmatprep.mubr.f32.mxu0 0.0
        %5156 = vmatmul.mubr.f32.gmra.mrb[0].mxu0 %v4833
        %v5157 = vpop.f32.mrb[0].mxu0
        %v5158 = vadd.f32 0.0, %v5157
        %v5159 = vpop.f32.mrb[0].mxu0
        %v5160 = vadd.f32 0.0, %v5159
        %5161 = vmatprep.mubr.f32.mxu0 0.0
        %5162 = vmatmul.mubr.f32.gmra.mrb[0].mxu0 %v4836
        %v5163 = vpop.f32.mrb[0].mxu0
        %v5164 = vadd.f32 0.0, %v5163
        %v5165 = vpop.f32.mrb[0].mxu0
        %v5166 = vadd.f32 0.0, %v5165
        %5167 = vmatprep.mubr.f32.mxu0 0.0
        %5168 = vmatmul.mubr.f32.gmra.mrb[0].mxu0 %v4839
        %v5169 = vpop.f32.mrb[0].mxu0
        %v5170 = vadd.f32 0.0, %v5169
        %v5171 = vpop.f32.mrb[0].mxu0
        %v5172 = vadd.f32 0.0, %v5171
        %5173 = vmatprep.mubr.f32.mxu0 0.0
        %5174 = vmatmul.mubr.f32.gmra.mrb[0].mxu0 %v4842
        %v5175 = vpop.f32.mrb[0].mxu0
        %v5176 = vadd.f32 0.0, %v5175
        %v5177 = vpop.f32.mrb[0].mxu0
        %v5178 = vadd.f32 0.0, %v5177
        %5179 = vmatprep.mubr.f32.mxu0 0.0
        %5180 = vmatmul.mubr.f32.gmra.mrb[0].mxu0 %v4845
        %v5181 = vpop.f32.mrb[0].mxu0
        %v5182 = vadd.f32 0.0, %v5181
        %v5183 = vpop.f32.mrb[0].mxu0
        %v5184 = vadd.f32 0.0, %v5183
        %5185 = vdwg.mxu0
        %5186 = vmatprep.subr.mxu0 %v4766
        %5187 = vmatpush1.msra.mxu0 %v4765
        %5188 = vmatprep.subr.mxu0 %v4782
        %5189 = vmatpush1.msra.mxu0 %v4781
        %5190 = vmatprep.subr.mxu0 %v4798
        %5191 = vmatpush1.msra.mxu0 %v4797
        %5192 = vmatprep.subr.mxu0 %v4814
        %5193 = vmatpush1.msra.mxu0 %v4813
        %5194 = vmatprep.subr.mxu0 0.0
        %5195 = vmatpush1.msra.mxu0 0.0
        %5196 = vmatprep.subr.mxu0 0.0
        %5197 = vmatpush1.msra.mxu0 0.0
        %5198 = vmatprep.subr.mxu0 0.0
        %5199 = vmatpush1.msra.mxu0 0.0
        %5200 = vmatprep.subr.mxu0 0.0
        %5201 = vmatpush1.msra.mxu0 0.0
        %5202 = vmatprep.subr.mxu0 0.0
        %5203 = vmatpush1.msra.mxu0 0.0
        %5204 = vmatprep.subr.mxu0 0.0
        %5205 = vmatpush1.msra.mxu0 0.0
        %5206 = vmatprep.subr.mxu0 0.0
        %5207 = vmatpush1.msra.mxu0 0.0
        %5208 = vmatprep.subr.mxu0 0.0
        %5209 = vmatpush1.msra.mxu0 0.0
        %5210 = vmatprep.subr.mxu0 0.0
        %5211 = vmatpush1.msra.mxu0 0.0
        %5212 = vmatprep.subr.mxu0 0.0
        %5213 = vmatpush1.msra.mxu0 0.0
        %5214 = vmatprep.subr.mxu0 0.0
        %5215 = vmatpush1.msra.mxu0 0.0
        %5216 = vmatprep.subr.mxu0 0.0
        %5217 = vmatpush1.msra.mxu0 0.0
        %5218 = vmatprep.subr.mxu0 0.0
        %5219 = vmatpush1.msra.mxu0 0.0
        %5220 = vmatprep.subr.mxu0 0.0
        %5221 = vmatpush1.msra.mxu0 0.0
        %5222 = vmatprep.subr.mxu0 0.0
        %5223 = vmatpush1.msra.mxu0 0.0
        %5224 = vmatprep.subr.mxu0 0.0
        %5225 = vmatpush1.msra.mxu0 0.0
        %5226 = vmatprep.subr.mxu0 0.0
        %5227 = vmatpush1.msra.mxu0 0.0
        %5228 = vmatprep.subr.mxu0 0.0
        %5229 = vmatpush1.msra.mxu0 0.0
        %5230 = vmatprep.subr.mxu0 0.0
        %5231 = vmatpush1.msra.mxu0 0.0
        %5232 = vmatprep.subr.mxu0 0.0
        %5233 = vmatpush1.msra.mxu0 0.0
        %5234 = vmatprep.subr.mxu0 0.0
        %5235 = vmatpush1.msra.mxu0 0.0
        %5236 = vmatprep.subr.mxu0 0.0
        %5237 = vmatpush1.msra.mxu0 0.0
        %5238 = vmatprep.subr.mxu0 0.0
        %5239 = vmatpush1.msra.mxu0 0.0
        %5240 = vmatprep.subr.mxu0 0.0
        %5241 = vmatpush1.msra.mxu0 0.0
        %5242 = vmatprep.subr.mxu0 0.0
        %5243 = vmatpush1.msra.mxu0 0.0
        %5244 = vmatprep.subr.mxu0 0.0
        %5245 = vmatpush1.msra.mxu0 0.0
        %5246 = vmatprep.subr.mxu0 0.0
        %5247 = vmatpush1.msra.mxu0 0.0
        %5248 = vmatprep.subr.mxu0 0.0
        %5249 = vmatpush1.msra.mxu0 0.0
        %5250 = vmatprep.mubr.f32.mxu0 0.0
        %5251 = vmatmul.mubr.f32.gmra.mrb[0].mxu0 %v4824
        %v5252 = vpop.f32.mrb[0].mxu0
        %v5253 = vadd.f32 0.0, %v5252
        %v5254 = vpop.f32.mrb[0].mxu0
        %v5255 = vadd.f32 0.0, %v5254
        %5256 = vmatprep.mubr.f32.mxu0 0.0
        %5257 = vmatmul.mubr.f32.gmra.mrb[0].mxu0 %v4827
        %v5258 = vpop.f32.mrb[0].mxu0
        %v5259 = vadd.f32 0.0, %v5258
        %v5260 = vpop.f32.mrb[0].mxu0
        %v5261 = vadd.f32 0.0, %v5260
        %5262 = vmatprep.mubr.f32.mxu0 0.0
        %5263 = vmatmul.mubr.f32.gmra.mrb[0].mxu0 %v4830
        %v5264 = vpop.f32.mrb[0].mxu0
        %v5265 = vadd.f32 0.0, %v5264
        %v5266 = vpop.f32.mrb[0].mxu0
        %v5267 = vadd.f32 0.0, %v5266
        %5268 = vmatprep.mubr.f32.mxu0 0.0
        %5269 = vmatmul.mubr.f32.gmra.mrb[0].mxu0 %v4833
        %v5270 = vpop.f32.mrb[0].mxu0
        %v5271 = vadd.f32 0.0, %v5270
        %v5272 = vpop.f32.mrb[0].mxu0
        %v5273 = vadd.f32 0.0, %v5272
        %5274 = vmatprep.mubr.f32.mxu0 0.0
        %5275 = vmatmul.mubr.f32.gmra.mrb[0].mxu0 %v4836
        %v5276 = vpop.f32.mrb[0].mxu0
        %v5277 = vadd.f32 0.0, %v5276
        %v5278 = vpop.f32.mrb[0].mxu0
        %v5279 = vadd.f32 0.0, %v5278
        %5280 = vmatprep.mubr.f32.mxu0 0.0
        %5281 = vmatmul.mubr.f32.gmra.mrb[0].mxu0 %v4839
        %v5282 = vpop.f32.mrb[0].mxu0
        %v5283 = vadd.f32 0.0, %v5282
        %v5284 = vpop.f32.mrb[0].mxu0
        %v5285 = vadd.f32 0.0, %v5284
        %5286 = vmatprep.mubr.f32.mxu0 0.0
        %5287 = vmatmul.mubr.f32.gmra.mrb[0].mxu0 %v4842
        %v5288 = vpop.f32.mrb[0].mxu0
        %v5289 = vadd.f32 0.0, %v5288
        %v5290 = vpop.f32.mrb[0].mxu0
        %v5291 = vadd.f32 0.0, %v5290
        %5292 = vmatprep.mubr.f32.mxu0 0.0
        %5293 = vmatmul.mubr.f32.gmra.mrb[0].mxu0 %v4845
        %v5294 = vpop.f32.mrb[0].mxu0
        %v5295 = vadd.f32 0.0, %v5294
        %v5296 = vpop.f32.mrb[0].mxu0
        %v5297 = vadd.f32 0.0, %v5296
        %5298 = vdwg.mxu0
        %5299 = vmatprep.subr.mxu0 %v4768
        %5300 = vmatpush1.msra.mxu0 %v4767
        %5301 = vmatprep.subr.mxu0 %v4784
        %5302 = vmatpush1.msra.mxu0 %v4783
        %5303 = vmatprep.subr.mxu0 %v4800
        %5304 = vmatpush1.msra.mxu0 %v4799
        %5305 = vmatprep.subr.mxu0 %v4816
        %5306 = vmatpush1.msra.mxu0 %v4815
        %5307 = vmatprep.subr.mxu0 0.0
        %5308 = vmatpush1.msra.mxu0 0.0
        %5309 = vmatprep.subr.mxu0 0.0
        %5310 = vmatpush1.msra.mxu0 0.0
        %5311 = vmatprep.subr.mxu0 0.0
        %5312 = vmatpush1.msra.mxu0 0.0
        %5313 = vmatprep.subr.mxu0 0.0
        %5314 = vmatpush1.msra.mxu0 0.0
        %5315 = vmatprep.subr.mxu0 0.0
        %5316 = vmatpush1.msra.mxu0 0.0
        %5317 = vmatprep.subr.mxu0 0.0
        %5318 = vmatpush1.msra.mxu0 0.0
        %5319 = vmatprep.subr.mxu0 0.0
        %5320 = vmatpush1.msra.mxu0 0.0
        %5321 = vmatprep.subr.mxu0 0.0
        %5322 = vmatpush1.msra.mxu0 0.0
        %5323 = vmatprep.subr.mxu0 0.0
        %5324 = vmatpush1.msra.mxu0 0.0
        %5325 = vmatprep.subr.mxu0 0.0
        %5326 = vmatpush1.msra.mxu0 0.0
        %5327 = vmatprep.subr.mxu0 0.0
        %5328 = vmatpush1.msra.mxu0 0.0
        %5329 = vmatprep.subr.mxu0 0.0
        %5330 = vmatpush1.msra.mxu0 0.0
        %5331 = vmatprep.subr.mxu0 0.0
        %5332 = vmatpush1.msra.mxu0 0.0
        %5333 = vmatprep.subr.mxu0 0.0
        %5334 = vmatpush1.msra.mxu0 0.0
        %5335 = vmatprep.subr.mxu0 0.0
        %5336 = vmatpush1.msra.mxu0 0.0
        %5337 = vmatprep.subr.mxu0 0.0
        %5338 = vmatpush1.msra.mxu0 0.0
        %5339 = vmatprep.subr.mxu0 0.0
        %5340 = vmatpush1.msra.mxu0 0.0
        %5341 = vmatprep.subr.mxu0 0.0
        %5342 = vmatpush1.msra.mxu0 0.0
        %5343 = vmatprep.subr.mxu0 0.0
        %5344 = vmatpush1.msra.mxu0 0.0
        %5345 = vmatprep.subr.mxu0 0.0
        %5346 = vmatpush1.msra.mxu0 0.0
        %5347 = vmatprep.subr.mxu0 0.0
        %5348 = vmatpush1.msra.mxu0 0.0
        %5349 = vmatprep.subr.mxu0 0.0
        %5350 = vmatpush1.msra.mxu0 0.0
        %5351 = vmatprep.subr.mxu0 0.0
        %5352 = vmatpush1.msra.mxu0 0.0
        %5353 = vmatprep.subr.mxu0 0.0
        %5354 = vmatpush1.msra.mxu0 0.0
        %5355 = vmatprep.subr.mxu0 0.0
        %5356 = vmatpush1.msra.mxu0 0.0
        %5357 = vmatprep.subr.mxu0 0.0
        %5358 = vmatpush1.msra.mxu0 0.0
        %5359 = vmatprep.subr.mxu0 0.0
        %5360 = vmatpush1.msra.mxu0 0.0
        %5361 = vmatprep.subr.mxu0 0.0
        %5362 = vmatpush1.msra.mxu0 0.0
        %5363 = vmatprep.mubr.f32.mxu0 0.0
        %5364 = vmatmul.mubr.f32.gmra.mrb[0].mxu0 %v4824
        %v5365 = vpop.f32.mrb[0].mxu0
        %v5366 = vadd.f32 0.0, %v5365
        %v5367 = vpop.f32.mrb[0].mxu0
        %v5368 = vadd.f32 0.0, %v5367
        %5369 = vmatprep.mubr.f32.mxu0 0.0
        %5370 = vmatmul.mubr.f32.gmra.mrb[0].mxu0 %v4827
        %v5371 = vpop.f32.mrb[0].mxu0
        %v5372 = vadd.f32 0.0, %v5371
        %v5373 = vpop.f32.mrb[0].mxu0
        %v5374 = vadd.f32 0.0, %v5373
        %5375 = vmatprep.mubr.f32.mxu0 0.0
        %5376 = vmatmul.mubr.f32.gmra.mrb[0].mxu0 %v4830
        %v5377 = vpop.f32.mrb[0].mxu0
        %v5378 = vadd.f32 0.0, %v5377
        %v5379 = vpop.f32.mrb[0].mxu0
        %v5380 = vadd.f32 0.0, %v5379
        %5381 = vmatprep.mubr.f32.mxu0 0.0
        %5382 = vmatmul.mubr.f32.gmra.mrb[0].mxu0 %v4833
        %v5383 = vpop.f32.mrb[0].mxu0
        %v5384 = vadd.f32 0.0, %v5383
        %v5385 = vpop.f32.mrb[0].mxu0
        %v5386 = vadd.f32 0.0, %v5385
        %5387 = vmatprep.mubr.f32.mxu0 0.0
        %5388 = vmatmul.mubr.f32.gmra.mrb[0].mxu0 %v4836
        %v5389 = vpop.f32.mrb[0].mxu0
        %v5390 = vadd.f32 0.0, %v5389
        %v5391 = vpop.f32.mrb[0].mxu0
        %v5392 = vadd.f32 0.0, %v5391
        %5393 = vmatprep.mubr.f32.mxu0 0.0
        %5394 = vmatmul.mubr.f32.gmra.mrb[0].mxu0 %v4839
        %v5395 = vpop.f32.mrb[0].mxu0
        %v5396 = vadd.f32 0.0, %v5395
        %v5397 = vpop.f32.mrb[0].mxu0
        %v5398 = vadd.f32 0.0, %v5397
        %5399 = vmatprep.mubr.f32.mxu0 0.0
        %5400 = vmatmul.mubr.f32.gmra.mrb[0].mxu0 %v4842
        %v5401 = vpop.f32.mrb[0].mxu0
        %v5402 = vadd.f32 0.0, %v5401
        %v5403 = vpop.f32.mrb[0].mxu0
        %v5404 = vadd.f32 0.0, %v5403
        %5405 = vmatprep.mubr.f32.mxu0 0.0
        %5406 = vmatmul.mubr.f32.gmra.mrb[0].mxu0 %v4845
        %v5407 = vpop.f32.mrb[0].mxu0
        %v5408 = vadd.f32 0.0, %v5407
        %v5409 = vpop.f32.mrb[0].mxu0
        %v5410 = vadd.f32 0.0, %v5409
        %5411 = vdwg.mxu0
        %5412 = vmatprep.subr.mxu0 %v4770
        %5413 = vmatpush1.msra.mxu0 %v4769
        %5414 = vmatprep.subr.mxu0 %v4786
        %5415 = vmatpush1.msra.mxu0 %v4785
        %5416 = vmatprep.subr.mxu0 %v4802
        %5417 = vmatpush1.msra.mxu0 %v4801
        %5418 = vmatprep.subr.mxu0 %v4818
        %5419 = vmatpush1.msra.mxu0 %v4817
        %5420 = vmatprep.subr.mxu0 0.0
        %5421 = vmatpush1.msra.mxu0 0.0
        %5422 = vmatprep.subr.mxu0 0.0
        %5423 = vmatpush1.msra.mxu0 0.0
        %5424 = vmatprep.subr.mxu0 0.0
        %5425 = vmatpush1.msra.mxu0 0.0
        %5426 = vmatprep.subr.mxu0 0.0
        %5427 = vmatpush1.msra.mxu0 0.0
        %5428 = vmatprep.subr.mxu0 0.0
        %5429 = vmatpush1.msra.mxu0 0.0
        %5430 = vmatprep.subr.mxu0 0.0
        %5431 = vmatpush1.msra.mxu0 0.0
        %5432 = vmatprep.subr.mxu0 0.0
        %5433 = vmatpush1.msra.mxu0 0.0
        %5434 = vmatprep.subr.mxu0 0.0
        %5435 = vmatpush1.msra.mxu0 0.0
        %5436 = vmatprep.subr.mxu0 0.0
        %5437 = vmatpush1.msra.mxu0 0.0
        %5438 = vmatprep.subr.mxu0 0.0
        %5439 = vmatpush1.msra.mxu0 0.0
        %5440 = vmatprep.subr.mxu0 0.0
        %5441 = vmatpush1.msra.mxu0 0.0
        %5442 = vmatprep.subr.mxu0 0.0
        %5443 = vmatpush1.msra.mxu0 0.0
        %5444 = vmatprep.subr.mxu0 0.0
        %5445 = vmatpush1.msra.mxu0 0.0
        %5446 = vmatprep.subr.mxu0 0.0
        %5447 = vmatpush1.msra.mxu0 0.0
        %5448 = vmatprep.subr.mxu0 0.0
        %5449 = vmatpush1.msra.mxu0 0.0
        %5450 = vmatprep.subr.mxu0 0.0
        %5451 = vmatpush1.msra.mxu0 0.0
        %5452 = vmatprep.subr.mxu0 0.0
        %5453 = vmatpush1.msra.mxu0 0.0
        %5454 = vmatprep.subr.mxu0 0.0
        %5455 = vmatpush1.msra.mxu0 0.0
        %5456 = vmatprep.subr.mxu0 0.0
        %5457 = vmatpush1.msra.mxu0 0.0
        %5458 = vmatprep.subr.mxu0 0.0
        %5459 = vmatpush1.msra.mxu0 0.0
        %5460 = vmatprep.subr.mxu0 0.0
        %5461 = vmatpush1.msra.mxu0 0.0
        %5462 = vmatprep.subr.mxu0 0.0
        %5463 = vmatpush1.msra.mxu0 0.0
        %5464 = vmatprep.subr.mxu0 0.0
        %5465 = vmatpush1.msra.mxu0 0.0
        %5466 = vmatprep.subr.mxu0 0.0
        %5467 = vmatpush1.msra.mxu0 0.0
        %5468 = vmatprep.subr.mxu0 0.0
        %5469 = vmatpush1.msra.mxu0 0.0
        %5470 = vmatprep.subr.mxu0 0.0
        %5471 = vmatpush1.msra.mxu0 0.0
        %5472 = vmatprep.subr.mxu0 0.0
        %5473 = vmatpush1.msra.mxu0 0.0
        %5474 = vmatprep.subr.mxu0 0.0
        %5475 = vmatpush1.msra.mxu0 0.0
        %5476 = vmatprep.mubr.f32.mxu0 0.0
        %5477 = vmatmul.mubr.f32.gmra.mrb[0].mxu0 %v4824
        %v5478 = vpop.f32.mrb[0].mxu0
        %v5479 = vadd.f32 0.0, %v5478
        %v5480 = vpop.f32.mrb[0].mxu0
        %v5481 = vadd.f32 0.0, %v5480
        %5482 = vmatprep.mubr.f32.mxu0 0.0
        %5483 = vmatmul.mubr.f32.gmra.mrb[0].mxu0 %v4827
        %v5484 = vpop.f32.mrb[0].mxu0
        %v5485 = vadd.f32 0.0, %v5484
        %v5486 = vpop.f32.mrb[0].mxu0
        %v5487 = vadd.f32 0.0, %v5486
        %5488 = vmatprep.mubr.f32.mxu0 0.0
        %5489 = vmatmul.mubr.f32.gmra.mrb[0].mxu0 %v4830
        %v5490 = vpop.f32.mrb[0].mxu0
        %v5491 = vadd.f32 0.0, %v5490
        %v5492 = vpop.f32.mrb[0].mxu0
        %v5493 = vadd.f32 0.0, %v5492
        %5494 = vmatprep.mubr.f32.mxu0 0.0
        %5495 = vmatmul.mubr.f32.gmra.mrb[0].mxu0 %v4833
        %v5496 = vpop.f32.mrb[0].mxu0
        %v5497 = vadd.f32 0.0, %v5496
        %v5498 = vpop.f32.mrb[0].mxu0
        %v5499 = vadd.f32 0.0, %v5498
        %5500 = vmatprep.mubr.f32.mxu0 0.0
        %5501 = vmatmul.mubr.f32.gmra.mrb[0].mxu0 %v4836
        %v5502 = vpop.f32.mrb[0].mxu0
        %v5503 = vadd.f32 0.0, %v5502
        %v5504 = vpop.f32.mrb[0].mxu0
        %v5505 = vadd.f32 0.0, %v5504
        %5506 = vmatprep.mubr.f32.mxu0 0.0
        %5507 = vmatmul.mubr.f32.gmra.mrb[0].mxu0 %v4839
        %v5508 = vpop.f32.mrb[0].mxu0
        %v5509 = vadd.f32 0.0, %v5508
        %v5510 = vpop.f32.mrb[0].mxu0
        %v5511 = vadd.f32 0.0, %v5510
        %5512 = vmatprep.mubr.f32.mxu0 0.0
        %5513 = vmatmul.mubr.f32.gmra.mrb[0].mxu0 %v4842
        %v5514 = vpop.f32.mrb[0].mxu0
        %v5515 = vadd.f32 0.0, %v5514
        %v5516 = vpop.f32.mrb[0].mxu0
        %v5517 = vadd.f32 0.0, %v5516
        %5518 = vmatprep.mubr.f32.mxu0 0.0
        %5519 = vmatmul.mubr.f32.gmra.mrb[0].mxu0 %v4845
        %v5520 = vpop.f32.mrb[0].mxu0
        %v5521 = vadd.f32 0.0, %v5520
        %v5522 = vpop.f32.mrb[0].mxu0
        %v5523 = vadd.f32 0.0, %v5522
        %5524 = vdwg.mxu0
        %5525 = vmatprep.subr.mxu0 %v4772
        %5526 = vmatpush1.msra.mxu0 %v4771
        %5527 = vmatprep.subr.mxu0 %v4788
        %5528 = vmatpush1.msra.mxu0 %v4787
        %5529 = vmatprep.subr.mxu0 %v4804
        %5530 = vmatpush1.msra.mxu0 %v4803
        %5531 = vmatprep.subr.mxu0 %v4820
        %5532 = vmatpush1.msra.mxu0 %v4819
        %5533 = vmatprep.subr.mxu0 0.0
        %5534 = vmatpush1.msra.mxu0 0.0
        %5535 = vmatprep.subr.mxu0 0.0
        %5536 = vmatpush1.msra.mxu0 0.0
        %5537 = vmatprep.subr.mxu0 0.0
        %5538 = vmatpush1.msra.mxu0 0.0
        %5539 = vmatprep.subr.mxu0 0.0
        %5540 = vmatpush1.msra.mxu0 0.0
        %5541 = vmatprep.subr.mxu0 0.0
        %5542 = vmatpush1.msra.mxu0 0.0
        %5543 = vmatprep.subr.mxu0 0.0
        %5544 = vmatpush1.msra.mxu0 0.0
        %5545 = vmatprep.subr.mxu0 0.0
        %5546 = vmatpush1.msra.mxu0 0.0
        %5547 = vmatprep.subr.mxu0 0.0
        %5548 = vmatpush1.msra.mxu0 0.0
        %5549 = vmatprep.subr.mxu0 0.0
        %5550 = vmatpush1.msra.mxu0 0.0
        %5551 = vmatprep.subr.mxu0 0.0
        %5552 = vmatpush1.msra.mxu0 0.0
        %5553 = vmatprep.subr.mxu0 0.0
        %5554 = vmatpush1.msra.mxu0 0.0
        %5555 = vmatprep.subr.mxu0 0.0
        %5556 = vmatpush1.msra.mxu0 0.0
        %5557 = vmatprep.subr.mxu0 0.0
        %5558 = vmatpush1.msra.mxu0 0.0
        %5559 = vmatprep.subr.mxu0 0.0
        %5560 = vmatpush1.msra.mxu0 0.0
        %5561 = vmatprep.subr.mxu0 0.0
        %5562 = vmatpush1.msra.mxu0 0.0
        %5563 = vmatprep.subr.mxu0 0.0
        %5564 = vmatpush1.msra.mxu0 0.0
        %5565 = vmatprep.subr.mxu0 0.0
        %5566 = vmatpush1.msra.mxu0 0.0
        %5567 = vmatprep.subr.mxu0 0.0
        %5568 = vmatpush1.msra.mxu0 0.0
        %5569 = vmatprep.subr.mxu0 0.0
        %5570 = vmatpush1.msra.mxu0 0.0
        %5571 = vmatprep.subr.mxu0 0.0
        %5572 = vmatpush1.msra.mxu0 0.0
        %5573 = vmatprep.subr.mxu0 0.0
        %5574 = vmatpush1.msra.mxu0 0.0
        %5575 = vmatprep.subr.mxu0 0.0
        %5576 = vmatpush1.msra.mxu0 0.0
        %5577 = vmatprep.subr.mxu0 0.0
        %5578 = vmatpush1.msra.mxu0 0.0
        %5579 = vmatprep.subr.mxu0 0.0
        %5580 = vmatpush1.msra.mxu0 0.0
        %5581 = vmatprep.subr.mxu0 0.0
        %5582 = vmatpush1.msra.mxu0 0.0
        %5583 = vmatprep.subr.mxu0 0.0
        %5584 = vmatpush1.msra.mxu0 0.0
        %5585 = vmatprep.subr.mxu0 0.0
        %5586 = vmatpush1.msra.mxu0 0.0
        %5587 = vmatprep.subr.mxu0 0.0
        %5588 = vmatpush1.msra.mxu0 0.0
        %5589 = vmatprep.mubr.f32.mxu0 0.0
        %5590 = vmatmul.mubr.f32.gmra.mrb[0].mxu0 %v4824
        %v5591 = vpop.f32.mrb[0].mxu0
        %v5592 = vadd.f32 0.0, %v5591
        %v5593 = vpop.f32.mrb[0].mxu0
        %v5594 = vadd.f32 0.0, %v5593
        %5595 = vmatprep.mubr.f32.mxu0 0.0
        %5596 = vmatmul.mubr.f32.gmra.mrb[0].mxu0 %v4827
        %v5597 = vpop.f32.mrb[0].mxu0
        %v5598 = vadd.f32 0.0, %v5597
        %v5599 = vpop.f32.mrb[0].mxu0
        %v5600 = vadd.f32 0.0, %v5599
        %5601 = vmatprep.mubr.f32.mxu0 0.0
        %5602 = vmatmul.mubr.f32.gmra.mrb[0].mxu0 %v4830
        %v5603 = vpop.f32.mrb[0].mxu0
        %v5604 = vadd.f32 0.0, %v5603
        %v5605 = vpop.f32.mrb[0].mxu0
        %v5606 = vadd.f32 0.0, %v5605
        %5607 = vmatprep.mubr.f32.mxu0 0.0
        %5608 = vmatmul.mubr.f32.gmra.mrb[0].mxu0 %v4833
        %v5609 = vpop.f32.mrb[0].mxu0
        %v5610 = vadd.f32 0.0, %v5609
        %v5611 = vpop.f32.mrb[0].mxu0
        %v5612 = vadd.f32 0.0, %v5611
        %5613 = vmatprep.mubr.f32.mxu0 0.0
        %5614 = vmatmul.mubr.f32.gmra.mrb[0].mxu0 %v4836
        %v5615 = vpop.f32.mrb[0].mxu0
        %v5616 = vadd.f32 0.0, %v5615
        %v5617 = vpop.f32.mrb[0].mxu0
        %v5618 = vadd.f32 0.0, %v5617
        %5619 = vmatprep.mubr.f32.mxu0 0.0
        %5620 = vmatmul.mubr.f32.gmra.mrb[0].mxu0 %v4839
        %v5621 = vpop.f32.mrb[0].mxu0
        %v5622 = vadd.f32 0.0, %v5621
        %v5623 = vpop.f32.mrb[0].mxu0
        %v5624 = vadd.f32 0.0, %v5623
        %5625 = vmatprep.mubr.f32.mxu0 0.0
        %5626 = vmatmul.mubr.f32.gmra.mrb[0].mxu0 %v4842
        %v5627 = vpop.f32.mrb[0].mxu0
        %v5628 = vadd.f32 0.0, %v5627
        %v5629 = vpop.f32.mrb[0].mxu0
        %v5630 = vadd.f32 0.0, %v5629
        %5631 = vmatprep.mubr.f32.mxu0 0.0
        %5632 = vmatmul.mubr.f32.gmra.mrb[0].mxu0 %v4845
        %v5633 = vpop.f32.mrb[0].mxu0
        %v5634 = vadd.f32 0.0, %v5633
        %v5635 = vpop.f32.mrb[0].mxu0
        %v5636 = vadd.f32 0.0, %v5635
        %5637 = vdwg.mxu0
        %5638 = vmatprep.subr.mxu0 %v4774
        %5639 = vmatpush1.msra.mxu0 %v4773
        %5640 = vmatprep.subr.mxu0 %v4790
        %5641 = vmatpush1.msra.mxu0 %v4789
        %5642 = vmatprep.subr.mxu0 %v4806
        %5643 = vmatpush1.msra.mxu0 %v4805
        %5644 = vmatprep.subr.mxu0 %v4822
        %5645 = vmatpush1.msra.mxu0 %v4821
        %5646 = vmatprep.subr.mxu0 0.0
        %5647 = vmatpush1.msra.mxu0 0.0
        %5648 = vmatprep.subr.mxu0 0.0
        %5649 = vmatpush1.msra.mxu0 0.0
        %5650 = vmatprep.subr.mxu0 0.0
        %5651 = vmatpush1.msra.mxu0 0.0
        %5652 = vmatprep.subr.mxu0 0.0
        %5653 = vmatpush1.msra.mxu0 0.0
        %5654 = vmatprep.subr.mxu0 0.0
        %5655 = vmatpush1.msra.mxu0 0.0
        %5656 = vmatprep.subr.mxu0 0.0
        %5657 = vmatpush1.msra.mxu0 0.0
        %5658 = vmatprep.subr.mxu0 0.0
        %5659 = vmatpush1.msra.mxu0 0.0
        %5660 = vmatprep.subr.mxu0 0.0
        %5661 = vmatpush1.msra.mxu0 0.0
        %5662 = vmatprep.subr.mxu0 0.0
        %5663 = vmatpush1.msra.mxu0 0.0
        %5664 = vmatprep.subr.mxu0 0.0
        %5665 = vmatpush1.msra.mxu0 0.0
        %5666 = vmatprep.subr.mxu0 0.0
        %5667 = vmatpush1.msra.mxu0 0.0
        %5668 = vmatprep.subr.mxu0 0.0
        %5669 = vmatpush1.msra.mxu0 0.0
        %5670 = vmatprep.subr.mxu0 0.0
        %5671 = vmatpush1.msra.mxu0 0.0
        %5672 = vmatprep.subr.mxu0 0.0
        %5673 = vmatpush1.msra.mxu0 0.0
        %5674 = vmatprep.subr.mxu0 0.0
        %5675 = vmatpush1.msra.mxu0 0.0
        %5676 = vmatprep.subr.mxu0 0.0
        %5677 = vmatpush1.msra.mxu0 0.0
        %5678 = vmatprep.subr.mxu0 0.0
        %5679 = vmatpush1.msra.mxu0 0.0
        %5680 = vmatprep.subr.mxu0 0.0
        %5681 = vmatpush1.msra.mxu0 0.0
        %5682 = vmatprep.subr.mxu0 0.0
        %5683 = vmatpush1.msra.mxu0 0.0
        %5684 = vmatprep.subr.mxu0 0.0
        %5685 = vmatpush1.msra.mxu0 0.0
        %5686 = vmatprep.subr.mxu0 0.0
        %5687 = vmatpush1.msra.mxu0 0.0
        %5688 = vmatprep.subr.mxu0 0.0
        %5689 = vmatpush1.msra.mxu0 0.0
        %5690 = vmatprep.subr.mxu0 0.0
        %5691 = vmatpush1.msra.mxu0 0.0
        %5692 = vmatprep.subr.mxu0 0.0
        %5693 = vmatpush1.msra.mxu0 0.0
        %5694 = vmatprep.subr.mxu0 0.0
        %5695 = vmatpush1.msra.mxu0 0.0
        %5696 = vmatprep.subr.mxu0 0.0
        %5697 = vmatpush1.msra.mxu0 0.0
        %5698 = vmatprep.subr.mxu0 0.0
        %5699 = vmatpush1.msra.mxu0 0.0
        %5700 = vmatprep.subr.mxu0 0.0
        %5701 = vmatpush1.msra.mxu0 0.0
        %5702 = vmatprep.mubr.f32.mxu0 0.0
        %5703 = vmatmul.mubr.f32.gmra.mrb[0].mxu0 %v4824
        %v5704 = vpop.f32.mrb[0].mxu0
        %v5705 = vadd.f32 0.0, %v5704
        %v5706 = vpop.f32.mrb[0].mxu0
        %v5707 = vadd.f32 0.0, %v5706
        %5708 = vmatprep.mubr.f32.mxu0 0.0
        %5709 = vmatmul.mubr.f32.gmra.mrb[0].mxu0 %v4827
        %v5710 = vpop.f32.mrb[0].mxu0
        %v5711 = vadd.f32 0.0, %v5710
        %v5712 = vpop.f32.mrb[0].mxu0
        %v5713 = vadd.f32 0.0, %v5712
        %5714 = vmatprep.mubr.f32.mxu0 0.0
        %5715 = vmatmul.mubr.f32.gmra.mrb[0].mxu0 %v4830
        %v5716 = vpop.f32.mrb[0].mxu0
        %v5717 = vadd.f32 0.0, %v5716
        %v5718 = vpop.f32.mrb[0].mxu0
        %v5719 = vadd.f32 0.0, %v5718
        %5720 = vmatprep.mubr.f32.mxu0 0.0
        %5721 = vmatmul.mubr.f32.gmra.mrb[0].mxu0 %v4833
        %v5722 = vpop.f32.mrb[0].mxu0
        %v5723 = vadd.f32 0.0, %v5722
        %v5724 = vpop.f32.mrb[0].mxu0
        %v5725 = vadd.f32 0.0, %v5724
        %5726 = vmatprep.mubr.f32.mxu0 0.0
        %5727 = vmatmul.mubr.f32.gmra.mrb[0].mxu0 %v4836
        %v5728 = vpop.f32.mrb[0].mxu0
        %v5729 = vadd.f32 0.0, %v5728
        %v5730 = vpop.f32.mrb[0].mxu0
        %v5731 = vadd.f32 0.0, %v5730
        %5732 = vmatprep.mubr.f32.mxu0 0.0
        %5733 = vmatmul.mubr.f32.gmra.mrb[0].mxu0 %v4839
        %v5734 = vpop.f32.mrb[0].mxu0
        %v5735 = vadd.f32 0.0, %v5734
        %v5736 = vpop.f32.mrb[0].mxu0
        %v5737 = vadd.f32 0.0, %v5736
        %5738 = vmatprep.mubr.f32.mxu0 0.0
        %5739 = vmatmul.mubr.f32.gmra.mrb[0].mxu0 %v4842
        %v5740 = vpop.f32.mrb[0].mxu0
        %v5741 = vadd.f32 0.0, %v5740
        %v5742 = vpop.f32.mrb[0].mxu0
        %v5743 = vadd.f32 0.0, %v5742
        %5744 = vmatprep.mubr.f32.mxu0 0.0
        %5745 = vmatmul.mubr.f32.gmra.mrb[0].mxu0 %v4845
        %v5746 = vpop.f32.mrb[0].mxu0
        %v5747 = vadd.f32 0.0, %v5746
        %v5748 = vpop.f32.mrb[0].mxu0
        %v5749 = vadd.f32 0.0, %v5748
        %5750 = vdwg.mxu0
        %5759 = vrot.lane.b32.xlu0 %v4233, 96
        %v5760 = vpop.permute.xlu0 %5759
        %5761 = vrot.lane.b32.xlu0 %v4239, 96
        %v5762 = vpop.permute.xlu0 %5761
        %5763 = vrot.lane.b32.xlu0 %v4245, 96
        %v5764 = vpop.permute.xlu0 %5763
        %5765 = vrot.lane.b32.xlu0 %v4251, 96
        %v5766 = vpop.permute.xlu0 %5765
        %5767 = vrot.lane.b32.xlu0 %v4257, 96
        %v5768 = vpop.permute.xlu0 %5767
        %5769 = vrot.lane.b32.xlu0 %v4263, 96
        %v5770 = vpop.permute.xlu0 %5769
        %5771 = vrot.lane.b32.xlu0 %v4269, 96
        %v5772 = vpop.permute.xlu0 %5771
        %5773 = vrot.lane.b32.xlu0 %v4275, 96
        %v5774 = vpop.permute.xlu0 %5773
        %5783 = vmatprep.subr.mxu0 0.0
        %5784 = vmatpush1.msra.mxu0 %v5760
        %5785 = vmatprep.subr.mxu0 0.0
        %5786 = vmatpush1.msra.mxu0 %v5762
        %5787 = vmatprep.subr.mxu0 0.0
        %5788 = vmatpush1.msra.mxu0 %v5764
        %5789 = vmatprep.subr.mxu0 0.0
        %5790 = vmatpush1.msra.mxu0 %v5766
        %5791 = vmatprep.subr.mxu0 0.0
        %5792 = vmatpush1.msra.mxu0 %v5768
        %5793 = vmatprep.subr.mxu0 0.0
        %5794 = vmatpush1.msra.mxu0 %v5770
        %5795 = vmatprep.subr.mxu0 0.0
        %5796 = vmatpush1.msra.mxu0 %v5772
        %5797 = vmatprep.subr.mxu0 0.0
        %5798 = vmatpush1.msra.mxu0 %v5774
        %5799 = vmatprep.subr.mxu0 0.0
        %5800 = vmatpush1.msra.mxu0 0.0
        %5801 = vmatprep.subr.mxu0 0.0
        %5802 = vmatpush1.msra.mxu0 0.0
        %5803 = vmatprep.subr.mxu0 0.0
        %5804 = vmatpush1.msra.mxu0 0.0
        %5805 = vmatprep.subr.mxu0 0.0
        %5806 = vmatpush1.msra.mxu0 0.0
        %5807 = vmatprep.subr.mxu0 0.0
        %5808 = vmatpush1.msra.mxu0 0.0
        %5809 = vmatprep.subr.mxu0 0.0
        %5810 = vmatpush1.msra.mxu0 0.0
        %5811 = vmatprep.subr.mxu0 0.0
        %5812 = vmatpush1.msra.mxu0 0.0
        %5813 = vmatprep.subr.mxu0 0.0
        %5814 = vmatpush1.msra.mxu0 0.0
        %5815 = vmatprep.subr.mxu0 0.0
        %5816 = vmatpush1.msra.mxu0 0.0
        %5817 = vmatprep.subr.mxu0 0.0
        %5818 = vmatpush1.msra.mxu0 0.0
        %5819 = vmatprep.subr.mxu0 0.0
        %5820 = vmatpush1.msra.mxu0 0.0
        %5821 = vmatprep.subr.mxu0 0.0
        %5822 = vmatpush1.msra.mxu0 0.0
        %5823 = vmatprep.subr.mxu0 0.0
        %5824 = vmatpush1.msra.mxu0 0.0
        %5825 = vmatprep.subr.mxu0 0.0
        %5826 = vmatpush1.msra.mxu0 0.0
        %5827 = vmatprep.subr.mxu0 0.0
        %5828 = vmatpush1.msra.mxu0 0.0
        %5829 = vmatprep.subr.mxu0 0.0
        %5830 = vmatpush1.msra.mxu0 0.0
        %5831 = vmatprep.subr.mxu0 0.0
        %5832 = vmatpush1.msra.mxu0 0.0
        %5833 = vmatprep.subr.mxu0 0.0
        %5834 = vmatpush1.msra.mxu0 0.0
        %5835 = vmatprep.subr.mxu0 0.0
        %5836 = vmatpush1.msra.mxu0 0.0
        %5837 = vmatprep.subr.mxu0 0.0
        %5838 = vmatpush1.msra.mxu0 0.0
        %5839 = vmatprep.subr.mxu0 0.0
        %5840 = vmatpush1.msra.mxu0 0.0
        %5841 = vmatprep.subr.mxu0 0.0
        %5842 = vmatpush1.msra.mxu0 0.0
        %5843 = vmatprep.subr.mxu0 0.0
        %5844 = vmatpush1.msra.mxu0 0.0
        %5845 = vmatprep.subr.mxu0 0.0
        %5846 = vmatpush1.msra.mxu0 0.0
        %5847 = vmatprep.mubr.f32.mxu0 0.0
        %5848 = vmatmul.mubr.f32.gmra.mrb[0].mxu0 %v4413
        %v5849 = vpop.f32.mrb[0].mxu0
        %v5850 = vadd.f32 0.0, %v5849
        %v5851 = vpop.f32.mrb[0].mxu0
        %5852 = vmatprep.mubr.f32.mxu0 0.0
        %5853 = vmatmul.mubr.f32.gmra.mrb[0].mxu0 %v4416
        %v5854 = vpop.f32.mrb[0].mxu0
        %v5855 = vadd.f32 0.0, %v5854
        %v5856 = vpop.f32.mrb[0].mxu0
        %5857 = vmatprep.mubr.f32.mxu0 0.0
        %5858 = vmatmul.mubr.f32.gmra.mrb[0].mxu0 %v4419
        %v5859 = vpop.f32.mrb[0].mxu0
        %v5860 = vadd.f32 0.0, %v5859
        %v5861 = vpop.f32.mrb[0].mxu0
        %5862 = vmatprep.mubr.f32.mxu0 0.0
        %5863 = vmatmul.mubr.f32.gmra.mrb[0].mxu0 %v4422
        %v5864 = vpop.f32.mrb[0].mxu0
        %v5865 = vadd.f32 0.0, %v5864
        %v5866 = vpop.f32.mrb[0].mxu0
        %5867 = vmatprep.mubr.f32.mxu0 0.0
        %5868 = vmatmul.mubr.f32.gmra.mrb[0].mxu0 %v4425
        %v5869 = vpop.f32.mrb[0].mxu0
        %v5870 = vadd.f32 0.0, %v5869
        %v5871 = vpop.f32.mrb[0].mxu0
        %5872 = vmatprep.mubr.f32.mxu0 0.0
        %5873 = vmatmul.mubr.f32.gmra.mrb[0].mxu0 %v4428
        %v5874 = vpop.f32.mrb[0].mxu0
        %v5875 = vadd.f32 0.0, %v5874
        %v5876 = vpop.f32.mrb[0].mxu0
        %5877 = vmatprep.mubr.f32.mxu0 0.0
        %5878 = vmatmul.mubr.f32.gmra.mrb[0].mxu0 %v4431
        %v5879 = vpop.f32.mrb[0].mxu0
        %v5880 = vadd.f32 0.0, %v5879
        %v5881 = vpop.f32.mrb[0].mxu0
        %5882 = vmatprep.mubr.f32.mxu0 0.0
        %5883 = vmatmul.mubr.f32.gmra.mrb[0].mxu0 %v4434
        %v5884 = vpop.f32.mrb[0].mxu0
        %v5885 = vadd.f32 0.0, %v5884
        %v5886 = vpop.f32.mrb[0].mxu0
        %5887 = vdwg.mxu0
        %v5889 = vsel %vm987, %v5850, 0
        %v5892 = vsel %vm987, %v5855, 0
        %v5895 = vsel %vm987, %v5860, 0
        %v5898 = vsel %vm987, %v5865, 0
        %v5901 = vsel %vm987, %v5870, 0
        %v5904 = vsel %vm987, %v5875, 0
        %v5907 = vsel %vm987, %v5880, 0
        %v5910 = vsel %vm987, %v5885, 0
        %5912 = vmatprep.subr.mxu0 %v4760
        %5913 = vmatpush1.msra.mxu0 %v4759
        %5914 = vmatprep.subr.mxu0 %v4776
        %5915 = vmatpush1.msra.mxu0 %v4775
        %5916 = vmatprep.subr.mxu0 %v4792
        %5917 = vmatpush1.msra.mxu0 %v4791
        %5918 = vmatprep.subr.mxu0 %v4808
        %5919 = vmatpush1.msra.mxu0 %v4807
        %5920 = vmatprep.subr.mxu0 0.0
        %5921 = vmatpush1.msra.mxu0 0.0
        %5922 = vmatprep.subr.mxu0 0.0
        %5923 = vmatpush1.msra.mxu0 0.0
        %5924 = vmatprep.subr.mxu0 0.0
        %5925 = vmatpush1.msra.mxu0 0.0
        %5926 = vmatprep.subr.mxu0 0.0
        %5927 = vmatpush1.msra.mxu0 0.0
        %5928 = vmatprep.subr.mxu0 0.0
        %5929 = vmatpush1.msra.mxu0 0.0
        %5930 = vmatprep.subr.mxu0 0.0
        %5931 = vmatpush1.msra.mxu0 0.0
        %5932 = vmatprep.subr.mxu0 0.0
        %5933 = vmatpush1.msra.mxu0 0.0
        %5934 = vmatprep.subr.mxu0 0.0
        %5935 = vmatpush1.msra.mxu0 0.0
        %5936 = vmatprep.subr.mxu0 0.0
        %5937 = vmatpush1.msra.mxu0 0.0
        %5938 = vmatprep.subr.mxu0 0.0
        %5939 = vmatpush1.msra.mxu0 0.0
        %5940 = vmatprep.subr.mxu0 0.0
        %5941 = vmatpush1.msra.mxu0 0.0
        %5942 = vmatprep.subr.mxu0 0.0
        %5943 = vmatpush1.msra.mxu0 0.0
        %5944 = vmatprep.subr.mxu0 0.0
        %5945 = vmatpush1.msra.mxu0 0.0
        %5946 = vmatprep.subr.mxu0 0.0
        %5947 = vmatpush1.msra.mxu0 0.0
        %5948 = vmatprep.subr.mxu0 0.0
        %5949 = vmatpush1.msra.mxu0 0.0
        %5950 = vmatprep.subr.mxu0 0.0
        %5951 = vmatpush1.msra.mxu0 0.0
        %5952 = vmatprep.subr.mxu0 0.0
        %5953 = vmatpush1.msra.mxu0 0.0
        %5954 = vmatprep.subr.mxu0 0.0
        %5955 = vmatpush1.msra.mxu0 0.0
        %5956 = vmatprep.subr.mxu0 0.0
        %5957 = vmatpush1.msra.mxu0 0.0
        %5958 = vmatprep.subr.mxu0 0.0
        %5959 = vmatpush1.msra.mxu0 0.0
        %5960 = vmatprep.subr.mxu0 0.0
        %5961 = vmatpush1.msra.mxu0 0.0
        %5962 = vmatprep.subr.mxu0 0.0
        %5963 = vmatpush1.msra.mxu0 0.0
        %5964 = vmatprep.subr.mxu0 0.0
        %5965 = vmatpush1.msra.mxu0 0.0
        %5966 = vmatprep.subr.mxu0 0.0
        %5967 = vmatpush1.msra.mxu0 0.0
        %5968 = vmatprep.subr.mxu0 0.0
        %5969 = vmatpush1.msra.mxu0 0.0
        %5970 = vmatprep.subr.mxu0 0.0
        %5971 = vmatpush1.msra.mxu0 0.0
        %5972 = vmatprep.subr.mxu0 0.0
        %5973 = vmatpush1.msra.mxu0 0.0
        %5974 = vmatprep.subr.mxu0 0.0
        %5975 = vmatpush1.msra.mxu0 0.0
        %5976 = vmatprep.mubr.f32.mxu0 0.0
        %5977 = vmatmul.mubr.f32.gmra.mrb[0].mxu0 %v5889
        %v5978 = vpop.f32.mrb[0].mxu0
        %v5979 = vadd.f32 0.0, %v5978
        %v5980 = vpop.f32.mrb[0].mxu0
        %v5981 = vadd.f32 0.0, %v5980
        %5982 = vmatprep.mubr.f32.mxu0 0.0
        %5983 = vmatmul.mubr.f32.gmra.mrb[0].mxu0 %v5892
        %v5984 = vpop.f32.mrb[0].mxu0
        %v5985 = vadd.f32 0.0, %v5984
        %v5986 = vpop.f32.mrb[0].mxu0
        %v5987 = vadd.f32 0.0, %v5986
        %5988 = vmatprep.mubr.f32.mxu0 0.0
        %5989 = vmatmul.mubr.f32.gmra.mrb[0].mxu0 %v5895
        %v5990 = vpop.f32.mrb[0].mxu0
        %v5991 = vadd.f32 0.0, %v5990
        %v5992 = vpop.f32.mrb[0].mxu0
        %v5993 = vadd.f32 0.0, %v5992
        %5994 = vmatprep.mubr.f32.mxu0 0.0
        %5995 = vmatmul.mubr.f32.gmra.mrb[0].mxu0 %v5898
        %v5996 = vpop.f32.mrb[0].mxu0
        %v5997 = vadd.f32 0.0, %v5996
        %v5998 = vpop.f32.mrb[0].mxu0
        %v5999 = vadd.f32 0.0, %v5998
        %6000 = vmatprep.mubr.f32.mxu0 0.0
        %6001 = vmatmul.mubr.f32.gmra.mrb[0].mxu0 %v5901
        %v6002 = vpop.f32.mrb[0].mxu0
        %v6003 = vadd.f32 0.0, %v6002
        %v6004 = vpop.f32.mrb[0].mxu0
        %v6005 = vadd.f32 0.0, %v6004
        %6006 = vmatprep.mubr.f32.mxu0 0.0
        %6007 = vmatmul.mubr.f32.gmra.mrb[0].mxu0 %v5904
        %v6008 = vpop.f32.mrb[0].mxu0
        %v6009 = vadd.f32 0.0, %v6008
        %v6010 = vpop.f32.mrb[0].mxu0
        %v6011 = vadd.f32 0.0, %v6010
        %6012 = vmatprep.mubr.f32.mxu0 0.0
        %6013 = vmatmul.mubr.f32.gmra.mrb[0].mxu0 %v5907
        %v6014 = vpop.f32.mrb[0].mxu0
        %v6015 = vadd.f32 0.0, %v6014
        %v6016 = vpop.f32.mrb[0].mxu0
        %v6017 = vadd.f32 0.0, %v6016
        %6018 = vmatprep.mubr.f32.mxu0 0.0
        %6019 = vmatmul.mubr.f32.gmra.mrb[0].mxu0 %v5910
        %v6020 = vpop.f32.mrb[0].mxu0
        %v6021 = vadd.f32 0.0, %v6020
        %v6022 = vpop.f32.mrb[0].mxu0
        %v6023 = vadd.f32 0.0, %v6022
        %6024 = vdwg.mxu0
        %6025 = vmatprep.subr.mxu0 %v4762
        %6026 = vmatpush1.msra.mxu0 %v4761
        %6027 = vmatprep.subr.mxu0 %v4778
        %6028 = vmatpush1.msra.mxu0 %v4777
        %6029 = vmatprep.subr.mxu0 %v4794
        %6030 = vmatpush1.msra.mxu0 %v4793
        %6031 = vmatprep.subr.mxu0 %v4810
        %6032 = vmatpush1.msra.mxu0 %v4809
        %6033 = vmatprep.subr.mxu0 0.0
        %6034 = vmatpush1.msra.mxu0 0.0
        %6035 = vmatprep.subr.mxu0 0.0
        %6036 = vmatpush1.msra.mxu0 0.0
        %6037 = vmatprep.subr.mxu0 0.0
        %6038 = vmatpush1.msra.mxu0 0.0
        %6039 = vmatprep.subr.mxu0 0.0
        %6040 = vmatpush1.msra.mxu0 0.0
        %6041 = vmatprep.subr.mxu0 0.0
        %6042 = vmatpush1.msra.mxu0 0.0
        %6043 = vmatprep.subr.mxu0 0.0
        %6044 = vmatpush1.msra.mxu0 0.0
        %6045 = vmatprep.subr.mxu0 0.0
        %6046 = vmatpush1.msra.mxu0 0.0
        %6047 = vmatprep.subr.mxu0 0.0
        %6048 = vmatpush1.msra.mxu0 0.0
        %6049 = vmatprep.subr.mxu0 0.0
        %6050 = vmatpush1.msra.mxu0 0.0
        %6051 = vmatprep.subr.mxu0 0.0
        %6052 = vmatpush1.msra.mxu0 0.0
        %6053 = vmatprep.subr.mxu0 0.0
        %6054 = vmatpush1.msra.mxu0 0.0
        %6055 = vmatprep.subr.mxu0 0.0
        %6056 = vmatpush1.msra.mxu0 0.0
        %6057 = vmatprep.subr.mxu0 0.0
        %6058 = vmatpush1.msra.mxu0 0.0
        %6059 = vmatprep.subr.mxu0 0.0
        %6060 = vmatpush1.msra.mxu0 0.0
        %6061 = vmatprep.subr.mxu0 0.0
        %6062 = vmatpush1.msra.mxu0 0.0
        %6063 = vmatprep.subr.mxu0 0.0
        %6064 = vmatpush1.msra.mxu0 0.0
        %6065 = vmatprep.subr.mxu0 0.0
        %6066 = vmatpush1.msra.mxu0 0.0
        %6067 = vmatprep.subr.mxu0 0.0
        %6068 = vmatpush1.msra.mxu0 0.0
        %6069 = vmatprep.subr.mxu0 0.0
        %6070 = vmatpush1.msra.mxu0 0.0
        %6071 = vmatprep.subr.mxu0 0.0
        %6072 = vmatpush1.msra.mxu0 0.0
        %6073 = vmatprep.subr.mxu0 0.0
        %6074 = vmatpush1.msra.mxu0 0.0
        %6075 = vmatprep.subr.mxu0 0.0
        %6076 = vmatpush1.msra.mxu0 0.0
        %6077 = vmatprep.subr.mxu0 0.0
        %6078 = vmatpush1.msra.mxu0 0.0
        %6079 = vmatprep.subr.mxu0 0.0
        %6080 = vmatpush1.msra.mxu0 0.0
        %6081 = vmatprep.subr.mxu0 0.0
        %6082 = vmatpush1.msra.mxu0 0.0
        %6083 = vmatprep.subr.mxu0 0.0
        %6084 = vmatpush1.msra.mxu0 0.0
        %6085 = vmatprep.subr.mxu0 0.0
        %6086 = vmatpush1.msra.mxu0 0.0
        %6087 = vmatprep.subr.mxu0 0.0
        %6088 = vmatpush1.msra.mxu0 0.0
        %6089 = vmatprep.mubr.f32.mxu0 0.0
        %6090 = vmatmul.mubr.f32.gmra.mrb[0].mxu0 %v5889
        %v6091 = vpop.f32.mrb[0].mxu0
        %v6092 = vadd.f32 0.0, %v6091
        %v6093 = vpop.f32.mrb[0].mxu0
        %v6094 = vadd.f32 0.0, %v6093
        %6095 = vmatprep.mubr.f32.mxu0 0.0
        %6096 = vmatmul.mubr.f32.gmra.mrb[0].mxu0 %v5892
        %v6097 = vpop.f32.mrb[0].mxu0
        %v6098 = vadd.f32 0.0, %v6097
        %v6099 = vpop.f32.mrb[0].mxu0
        %v6100 = vadd.f32 0.0, %v6099
        %6101 = vmatprep.mubr.f32.mxu0 0.0
        %6102 = vmatmul.mubr.f32.gmra.mrb[0].mxu0 %v5895
        %v6103 = vpop.f32.mrb[0].mxu0
        %v6104 = vadd.f32 0.0, %v6103
        %v6105 = vpop.f32.mrb[0].mxu0
        %v6106 = vadd.f32 0.0, %v6105
        %6107 = vmatprep.mubr.f32.mxu0 0.0
        %6108 = vmatmul.mubr.f32.gmra.mrb[0].mxu0 %v5898
        %v6109 = vpop.f32.mrb[0].mxu0
        %v6110 = vadd.f32 0.0, %v6109
        %v6111 = vpop.f32.mrb[0].mxu0
        %v6112 = vadd.f32 0.0, %v6111
        %6113 = vmatprep.mubr.f32.mxu0 0.0
        %6114 = vmatmul.mubr.f32.gmra.mrb[0].mxu0 %v5901
        %v6115 = vpop.f32.mrb[0].mxu0
        %v6116 = vadd.f32 0.0, %v6115
        %v6117 = vpop.f32.mrb[0].mxu0
        %v6118 = vadd.f32 0.0, %v6117
        %6119 = vmatprep.mubr.f32.mxu0 0.0
        %6120 = vmatmul.mubr.f32.gmra.mrb[0].mxu0 %v5904
        %v6121 = vpop.f32.mrb[0].mxu0
        %v6122 = vadd.f32 0.0, %v6121
        %v6123 = vpop.f32.mrb[0].mxu0
        %v6124 = vadd.f32 0.0, %v6123
        %6125 = vmatprep.mubr.f32.mxu0 0.0
        %6126 = vmatmul.mubr.f32.gmra.mrb[0].mxu0 %v5907
        %v6127 = vpop.f32.mrb[0].mxu0
        %v6128 = vadd.f32 0.0, %v6127
        %v6129 = vpop.f32.mrb[0].mxu0
        %v6130 = vadd.f32 0.0, %v6129
        %6131 = vmatprep.mubr.f32.mxu0 0.0
        %6132 = vmatmul.mubr.f32.gmra.mrb[0].mxu0 %v5910
        %v6133 = vpop.f32.mrb[0].mxu0
        %v6134 = vadd.f32 0.0, %v6133
        %v6135 = vpop.f32.mrb[0].mxu0
        %v6136 = vadd.f32 0.0, %v6135
        %6137 = vdwg.mxu0
        %6138 = vmatprep.subr.mxu0 %v4764
        %6139 = vmatpush1.msra.mxu0 %v4763
        %6140 = vmatprep.subr.mxu0 %v4780
        %6141 = vmatpush1.msra.mxu0 %v4779
        %6142 = vmatprep.subr.mxu0 %v4796
        %6143 = vmatpush1.msra.mxu0 %v4795
        %6144 = vmatprep.subr.mxu0 %v4812
        %6145 = vmatpush1.msra.mxu0 %v4811
        %6146 = vmatprep.subr.mxu0 0.0
        %6147 = vmatpush1.msra.mxu0 0.0
        %6148 = vmatprep.subr.mxu0 0.0
        %6149 = vmatpush1.msra.mxu0 0.0
        %6150 = vmatprep.subr.mxu0 0.0
        %6151 = vmatpush1.msra.mxu0 0.0
        %6152 = vmatprep.subr.mxu0 0.0
        %6153 = vmatpush1.msra.mxu0 0.0
        %6154 = vmatprep.subr.mxu0 0.0
        %6155 = vmatpush1.msra.mxu0 0.0
        %6156 = vmatprep.subr.mxu0 0.0
        %6157 = vmatpush1.msra.mxu0 0.0
        %6158 = vmatprep.subr.mxu0 0.0
        %6159 = vmatpush1.msra.mxu0 0.0
        %6160 = vmatprep.subr.mxu0 0.0
        %6161 = vmatpush1.msra.mxu0 0.0
        %6162 = vmatprep.subr.mxu0 0.0
        %6163 = vmatpush1.msra.mxu0 0.0
        %6164 = vmatprep.subr.mxu0 0.0
        %6165 = vmatpush1.msra.mxu0 0.0
        %6166 = vmatprep.subr.mxu0 0.0
        %6167 = vmatpush1.msra.mxu0 0.0
        %6168 = vmatprep.subr.mxu0 0.0
        %6169 = vmatpush1.msra.mxu0 0.0
        %6170 = vmatprep.subr.mxu0 0.0
        %6171 = vmatpush1.msra.mxu0 0.0
        %6172 = vmatprep.subr.mxu0 0.0
        %6173 = vmatpush1.msra.mxu0 0.0
        %6174 = vmatprep.subr.mxu0 0.0
        %6175 = vmatpush1.msra.mxu0 0.0
        %6176 = vmatprep.subr.mxu0 0.0
        %6177 = vmatpush1.msra.mxu0 0.0
        %6178 = vmatprep.subr.mxu0 0.0
        %6179 = vmatpush1.msra.mxu0 0.0
        %6180 = vmatprep.subr.mxu0 0.0
        %6181 = vmatpush1.msra.mxu0 0.0
        %6182 = vmatprep.subr.mxu0 0.0
        %6183 = vmatpush1.msra.mxu0 0.0
        %6184 = vmatprep.subr.mxu0 0.0
        %6185 = vmatpush1.msra.mxu0 0.0
        %6186 = vmatprep.subr.mxu0 0.0
        %6187 = vmatpush1.msra.mxu0 0.0
        %6188 = vmatprep.subr.mxu0 0.0
        %6189 = vmatpush1.msra.mxu0 0.0
        %6190 = vmatprep.subr.mxu0 0.0
        %6191 = vmatpush1.msra.mxu0 0.0
        %6192 = vmatprep.subr.mxu0 0.0
        %6193 = vmatpush1.msra.mxu0 0.0
        %6194 = vmatprep.subr.mxu0 0.0
        %6195 = vmatpush1.msra.mxu0 0.0
        %6196 = vmatprep.subr.mxu0 0.0
        %6197 = vmatpush1.msra.mxu0 0.0
        %6198 = vmatprep.subr.mxu0 0.0
        %6199 = vmatpush1.msra.mxu0 0.0
        %6200 = vmatprep.subr.mxu0 0.0
        %6201 = vmatpush1.msra.mxu0 0.0
        %6202 = vmatprep.mubr.f32.mxu0 0.0
        %6203 = vmatmul.mubr.f32.gmra.mrb[0].mxu0 %v5889
        %v6204 = vpop.f32.mrb[0].mxu0
        %v6205 = vadd.f32 0.0, %v6204
        %v6206 = vpop.f32.mrb[0].mxu0
        %v6207 = vadd.f32 0.0, %v6206
        %6208 = vmatprep.mubr.f32.mxu0 0.0
        %6209 = vmatmul.mubr.f32.gmra.mrb[0].mxu0 %v5892
        %v6210 = vpop.f32.mrb[0].mxu0
        %v6211 = vadd.f32 0.0, %v6210
        %v6212 = vpop.f32.mrb[0].mxu0
        %v6213 = vadd.f32 0.0, %v6212
        %6214 = vmatprep.mubr.f32.mxu0 0.0
        %6215 = vmatmul.mubr.f32.gmra.mrb[0].mxu0 %v5895
        %v6216 = vpop.f32.mrb[0].mxu0
        %v6217 = vadd.f32 0.0, %v6216
        %v6218 = vpop.f32.mrb[0].mxu0
        %v6219 = vadd.f32 0.0, %v6218
        %6220 = vmatprep.mubr.f32.mxu0 0.0
        %6221 = vmatmul.mubr.f32.gmra.mrb[0].mxu0 %v5898
        %v6222 = vpop.f32.mrb[0].mxu0
        %v6223 = vadd.f32 0.0, %v6222
        %v6224 = vpop.f32.mrb[0].mxu0
        %v6225 = vadd.f32 0.0, %v6224
        %6226 = vmatprep.mubr.f32.mxu0 0.0
        %6227 = vmatmul.mubr.f32.gmra.mrb[0].mxu0 %v5901
        %v6228 = vpop.f32.mrb[0].mxu0
        %v6229 = vadd.f32 0.0, %v6228
        %v6230 = vpop.f32.mrb[0].mxu0
        %v6231 = vadd.f32 0.0, %v6230
        %6232 = vmatprep.mubr.f32.mxu0 0.0
        %6233 = vmatmul.mubr.f32.gmra.mrb[0].mxu0 %v5904
        %v6234 = vpop.f32.mrb[0].mxu0
        %v6235 = vadd.f32 0.0, %v6234
        %v6236 = vpop.f32.mrb[0].mxu0
        %v6237 = vadd.f32 0.0, %v6236
        %6238 = vmatprep.mubr.f32.mxu0 0.0
        %6239 = vmatmul.mubr.f32.gmra.mrb[0].mxu0 %v5907
        %v6240 = vpop.f32.mrb[0].mxu0
        %v6241 = vadd.f32 0.0, %v6240
        %v6242 = vpop.f32.mrb[0].mxu0
        %v6243 = vadd.f32 0.0, %v6242
        %6244 = vmatprep.mubr.f32.mxu0 0.0
        %6245 = vmatmul.mubr.f32.gmra.mrb[0].mxu0 %v5910
        %v6246 = vpop.f32.mrb[0].mxu0
        %v6247 = vadd.f32 0.0, %v6246
        %v6248 = vpop.f32.mrb[0].mxu0
        %v6249 = vadd.f32 0.0, %v6248
        %6250 = vdwg.mxu0
        %6251 = vmatprep.subr.mxu0 %v4766
        %6252 = vmatpush1.msra.mxu0 %v4765
        %6253 = vmatprep.subr.mxu0 %v4782
        %6254 = vmatpush1.msra.mxu0 %v4781
        %6255 = vmatprep.subr.mxu0 %v4798
        %6256 = vmatpush1.msra.mxu0 %v4797
        %6257 = vmatprep.subr.mxu0 %v4814
        %6258 = vmatpush1.msra.mxu0 %v4813
        %6259 = vmatprep.subr.mxu0 0.0
        %6260 = vmatpush1.msra.mxu0 0.0
        %6261 = vmatprep.subr.mxu0 0.0
        %6262 = vmatpush1.msra.mxu0 0.0
        %6263 = vmatprep.subr.mxu0 0.0
        %6264 = vmatpush1.msra.mxu0 0.0
        %6265 = vmatprep.subr.mxu0 0.0
        %6266 = vmatpush1.msra.mxu0 0.0
        %6267 = vmatprep.subr.mxu0 0.0
        %6268 = vmatpush1.msra.mxu0 0.0
        %6269 = vmatprep.subr.mxu0 0.0
        %6270 = vmatpush1.msra.mxu0 0.0
        %6271 = vmatprep.subr.mxu0 0.0
        %6272 = vmatpush1.msra.mxu0 0.0
        %6273 = vmatprep.subr.mxu0 0.0
        %6274 = vmatpush1.msra.mxu0 0.0
        %6275 = vmatprep.subr.mxu0 0.0
        %6276 = vmatpush1.msra.mxu0 0.0
        %6277 = vmatprep.subr.mxu0 0.0
        %6278 = vmatpush1.msra.mxu0 0.0
        %6279 = vmatprep.subr.mxu0 0.0
        %6280 = vmatpush1.msra.mxu0 0.0
        %6281 = vmatprep.subr.mxu0 0.0
        %6282 = vmatpush1.msra.mxu0 0.0
        %6283 = vmatprep.subr.mxu0 0.0
        %6284 = vmatpush1.msra.mxu0 0.0
        %6285 = vmatprep.subr.mxu0 0.0
        %6286 = vmatpush1.msra.mxu0 0.0
        %6287 = vmatprep.subr.mxu0 0.0
        %6288 = vmatpush1.msra.mxu0 0.0
        %6289 = vmatprep.subr.mxu0 0.0
        %6290 = vmatpush1.msra.mxu0 0.0
        %6291 = vmatprep.subr.mxu0 0.0
        %6292 = vmatpush1.msra.mxu0 0.0
        %6293 = vmatprep.subr.mxu0 0.0
        %6294 = vmatpush1.msra.mxu0 0.0
        %6295 = vmatprep.subr.mxu0 0.0
        %6296 = vmatpush1.msra.mxu0 0.0
        %6297 = vmatprep.subr.mxu0 0.0
        %6298 = vmatpush1.msra.mxu0 0.0
        %6299 = vmatprep.subr.mxu0 0.0
        %6300 = vmatpush1.msra.mxu0 0.0
        %6301 = vmatprep.subr.mxu0 0.0
        %6302 = vmatpush1.msra.mxu0 0.0
        %6303 = vmatprep.subr.mxu0 0.0
        %6304 = vmatpush1.msra.mxu0 0.0
        %6305 = vmatprep.subr.mxu0 0.0
        %6306 = vmatpush1.msra.mxu0 0.0
        %6307 = vmatprep.subr.mxu0 0.0
        %6308 = vmatpush1.msra.mxu0 0.0
        %6309 = vmatprep.subr.mxu0 0.0
        %6310 = vmatpush1.msra.mxu0 0.0
        %6311 = vmatprep.subr.mxu0 0.0
        %6312 = vmatpush1.msra.mxu0 0.0
        %6313 = vmatprep.subr.mxu0 0.0
        %6314 = vmatpush1.msra.mxu0 0.0
        %6315 = vmatprep.mubr.f32.mxu0 0.0
        %6316 = vmatmul.mubr.f32.gmra.mrb[0].mxu0 %v5889
        %v6317 = vpop.f32.mrb[0].mxu0
        %v6318 = vadd.f32 0.0, %v6317
        %v6319 = vpop.f32.mrb[0].mxu0
        %v6320 = vadd.f32 0.0, %v6319
        %6321 = vmatprep.mubr.f32.mxu0 0.0
        %6322 = vmatmul.mubr.f32.gmra.mrb[0].mxu0 %v5892
        %v6323 = vpop.f32.mrb[0].mxu0
        %v6324 = vadd.f32 0.0, %v6323
        %v6325 = vpop.f32.mrb[0].mxu0
        %v6326 = vadd.f32 0.0, %v6325
        %6327 = vmatprep.mubr.f32.mxu0 0.0
        %6328 = vmatmul.mubr.f32.gmra.mrb[0].mxu0 %v5895
        %v6329 = vpop.f32.mrb[0].mxu0
        %v6330 = vadd.f32 0.0, %v6329
        %v6331 = vpop.f32.mrb[0].mxu0
        %v6332 = vadd.f32 0.0, %v6331
        %6333 = vmatprep.mubr.f32.mxu0 0.0
        %6334 = vmatmul.mubr.f32.gmra.mrb[0].mxu0 %v5898
        %v6335 = vpop.f32.mrb[0].mxu0
        %v6336 = vadd.f32 0.0, %v6335
        %v6337 = vpop.f32.mrb[0].mxu0
        %v6338 = vadd.f32 0.0, %v6337
        %6339 = vmatprep.mubr.f32.mxu0 0.0
        %6340 = vmatmul.mubr.f32.gmra.mrb[0].mxu0 %v5901
        %v6341 = vpop.f32.mrb[0].mxu0
        %v6342 = vadd.f32 0.0, %v6341
        %v6343 = vpop.f32.mrb[0].mxu0
        %v6344 = vadd.f32 0.0, %v6343
        %6345 = vmatprep.mubr.f32.mxu0 0.0
        %6346 = vmatmul.mubr.f32.gmra.mrb[0].mxu0 %v5904
        %v6347 = vpop.f32.mrb[0].mxu0
        %v6348 = vadd.f32 0.0, %v6347
        %v6349 = vpop.f32.mrb[0].mxu0
        %v6350 = vadd.f32 0.0, %v6349
        %6351 = vmatprep.mubr.f32.mxu0 0.0
        %6352 = vmatmul.mubr.f32.gmra.mrb[0].mxu0 %v5907
        %v6353 = vpop.f32.mrb[0].mxu0
        %v6354 = vadd.f32 0.0, %v6353
        %v6355 = vpop.f32.mrb[0].mxu0
        %v6356 = vadd.f32 0.0, %v6355
        %6357 = vmatprep.mubr.f32.mxu0 0.0
        %6358 = vmatmul.mubr.f32.gmra.mrb[0].mxu0 %v5910
        %v6359 = vpop.f32.mrb[0].mxu0
        %v6360 = vadd.f32 0.0, %v6359
        %v6361 = vpop.f32.mrb[0].mxu0
        %v6362 = vadd.f32 0.0, %v6361
        %6363 = vdwg.mxu0
        %6364 = vmatprep.subr.mxu0 %v4768
        %6365 = vmatpush1.msra.mxu0 %v4767
        %6366 = vmatprep.subr.mxu0 %v4784
        %6367 = vmatpush1.msra.mxu0 %v4783
        %6368 = vmatprep.subr.mxu0 %v4800
        %6369 = vmatpush1.msra.mxu0 %v4799
        %6370 = vmatprep.subr.mxu0 %v4816
        %6371 = vmatpush1.msra.mxu0 %v4815
        %6372 = vmatprep.subr.mxu0 0.0
        %6373 = vmatpush1.msra.mxu0 0.0
        %6374 = vmatprep.subr.mxu0 0.0
        %6375 = vmatpush1.msra.mxu0 0.0
        %6376 = vmatprep.subr.mxu0 0.0
        %6377 = vmatpush1.msra.mxu0 0.0
        %6378 = vmatprep.subr.mxu0 0.0
        %6379 = vmatpush1.msra.mxu0 0.0
        %6380 = vmatprep.subr.mxu0 0.0
        %6381 = vmatpush1.msra.mxu0 0.0
        %6382 = vmatprep.subr.mxu0 0.0
        %6383 = vmatpush1.msra.mxu0 0.0
        %6384 = vmatprep.subr.mxu0 0.0
        %6385 = vmatpush1.msra.mxu0 0.0
        %6386 = vmatprep.subr.mxu0 0.0
        %6387 = vmatpush1.msra.mxu0 0.0
        %6388 = vmatprep.subr.mxu0 0.0
        %6389 = vmatpush1.msra.mxu0 0.0
        %6390 = vmatprep.subr.mxu0 0.0
        %6391 = vmatpush1.msra.mxu0 0.0
        %6392 = vmatprep.subr.mxu0 0.0
        %6393 = vmatpush1.msra.mxu0 0.0
        %6394 = vmatprep.subr.mxu0 0.0
        %6395 = vmatpush1.msra.mxu0 0.0
        %6396 = vmatprep.subr.mxu0 0.0
        %6397 = vmatpush1.msra.mxu0 0.0
        %6398 = vmatprep.subr.mxu0 0.0
        %6399 = vmatpush1.msra.mxu0 0.0
        %6400 = vmatprep.subr.mxu0 0.0
        %6401 = vmatpush1.msra.mxu0 0.0
        %6402 = vmatprep.subr.mxu0 0.0
        %6403 = vmatpush1.msra.mxu0 0.0
        %6404 = vmatprep.subr.mxu0 0.0
        %6405 = vmatpush1.msra.mxu0 0.0
        %6406 = vmatprep.subr.mxu0 0.0
        %6407 = vmatpush1.msra.mxu0 0.0
        %6408 = vmatprep.subr.mxu0 0.0
        %6409 = vmatpush1.msra.mxu0 0.0
        %6410 = vmatprep.subr.mxu0 0.0
        %6411 = vmatpush1.msra.mxu0 0.0
        %6412 = vmatprep.subr.mxu0 0.0
        %6413 = vmatpush1.msra.mxu0 0.0
        %6414 = vmatprep.subr.mxu0 0.0
        %6415 = vmatpush1.msra.mxu0 0.0
        %6416 = vmatprep.subr.mxu0 0.0
        %6417 = vmatpush1.msra.mxu0 0.0
        %6418 = vmatprep.subr.mxu0 0.0
        %6419 = vmatpush1.msra.mxu0 0.0
        %6420 = vmatprep.subr.mxu0 0.0
        %6421 = vmatpush1.msra.mxu0 0.0
        %6422 = vmatprep.subr.mxu0 0.0
        %6423 = vmatpush1.msra.mxu0 0.0
        %6424 = vmatprep.subr.mxu0 0.0
        %6425 = vmatpush1.msra.mxu0 0.0
        %6426 = vmatprep.subr.mxu0 0.0
        %6427 = vmatpush1.msra.mxu0 0.0
        %6428 = vmatprep.mubr.f32.mxu0 0.0
        %6429 = vmatmul.mubr.f32.gmra.mrb[0].mxu0 %v5889
        %v6430 = vpop.f32.mrb[0].mxu0
        %v6431 = vadd.f32 0.0, %v6430
        %v6432 = vpop.f32.mrb[0].mxu0
        %v6433 = vadd.f32 0.0, %v6432
        %6434 = vmatprep.mubr.f32.mxu0 0.0
        %6435 = vmatmul.mubr.f32.gmra.mrb[0].mxu0 %v5892
        %v6436 = vpop.f32.mrb[0].mxu0
        %v6437 = vadd.f32 0.0, %v6436
        %v6438 = vpop.f32.mrb[0].mxu0
        %v6439 = vadd.f32 0.0, %v6438
        %6440 = vmatprep.mubr.f32.mxu0 0.0
        %6441 = vmatmul.mubr.f32.gmra.mrb[0].mxu0 %v5895
        %v6442 = vpop.f32.mrb[0].mxu0
        %v6443 = vadd.f32 0.0, %v6442
        %v6444 = vpop.f32.mrb[0].mxu0
        %v6445 = vadd.f32 0.0, %v6444
        %6446 = vmatprep.mubr.f32.mxu0 0.0
        %6447 = vmatmul.mubr.f32.gmra.mrb[0].mxu0 %v5898
        %v6448 = vpop.f32.mrb[0].mxu0
        %v6449 = vadd.f32 0.0, %v6448
        %v6450 = vpop.f32.mrb[0].mxu0
        %v6451 = vadd.f32 0.0, %v6450
        %6452 = vmatprep.mubr.f32.mxu0 0.0
        %6453 = vmatmul.mubr.f32.gmra.mrb[0].mxu0 %v5901
        %v6454 = vpop.f32.mrb[0].mxu0
        %v6455 = vadd.f32 0.0, %v6454
        %v6456 = vpop.f32.mrb[0].mxu0
        %v6457 = vadd.f32 0.0, %v6456
        %6458 = vmatprep.mubr.f32.mxu0 0.0
        %6459 = vmatmul.mubr.f32.gmra.mrb[0].mxu0 %v5904
        %v6460 = vpop.f32.mrb[0].mxu0
        %v6461 = vadd.f32 0.0, %v6460
        %v6462 = vpop.f32.mrb[0].mxu0
        %v6463 = vadd.f32 0.0, %v6462
        %6464 = vmatprep.mubr.f32.mxu0 0.0
        %6465 = vmatmul.mubr.f32.gmra.mrb[0].mxu0 %v5907
        %v6466 = vpop.f32.mrb[0].mxu0
        %v6467 = vadd.f32 0.0, %v6466
        %v6468 = vpop.f32.mrb[0].mxu0
        %v6469 = vadd.f32 0.0, %v6468
        %6470 = vmatprep.mubr.f32.mxu0 0.0
        %6471 = vmatmul.mubr.f32.gmra.mrb[0].mxu0 %v5910
        %v6472 = vpop.f32.mrb[0].mxu0
        %v6473 = vadd.f32 0.0, %v6472
        %v6474 = vpop.f32.mrb[0].mxu0
        %v6475 = vadd.f32 0.0, %v6474
        %6476 = vdwg.mxu0
        %6477 = vmatprep.subr.mxu0 %v4770
        %6478 = vmatpush1.msra.mxu0 %v4769
        %6479 = vmatprep.subr.mxu0 %v4786
        %6480 = vmatpush1.msra.mxu0 %v4785
        %6481 = vmatprep.subr.mxu0 %v4802
        %6482 = vmatpush1.msra.mxu0 %v4801
        %6483 = vmatprep.subr.mxu0 %v4818
        %6484 = vmatpush1.msra.mxu0 %v4817
        %6485 = vmatprep.subr.mxu0 0.0
        %6486 = vmatpush1.msra.mxu0 0.0
        %6487 = vmatprep.subr.mxu0 0.0
        %6488 = vmatpush1.msra.mxu0 0.0
        %6489 = vmatprep.subr.mxu0 0.0
        %6490 = vmatpush1.msra.mxu0 0.0
        %6491 = vmatprep.subr.mxu0 0.0
        %6492 = vmatpush1.msra.mxu0 0.0
        %6493 = vmatprep.subr.mxu0 0.0
        %6494 = vmatpush1.msra.mxu0 0.0
        %6495 = vmatprep.subr.mxu0 0.0
        %6496 = vmatpush1.msra.mxu0 0.0
        %6497 = vmatprep.subr.mxu0 0.0
        %6498 = vmatpush1.msra.mxu0 0.0
        %6499 = vmatprep.subr.mxu0 0.0
        %6500 = vmatpush1.msra.mxu0 0.0
        %6501 = vmatprep.subr.mxu0 0.0
        %6502 = vmatpush1.msra.mxu0 0.0
        %6503 = vmatprep.subr.mxu0 0.0
        %6504 = vmatpush1.msra.mxu0 0.0
        %6505 = vmatprep.subr.mxu0 0.0
        %6506 = vmatpush1.msra.mxu0 0.0
        %6507 = vmatprep.subr.mxu0 0.0
        %6508 = vmatpush1.msra.mxu0 0.0
        %6509 = vmatprep.subr.mxu0 0.0
        %6510 = vmatpush1.msra.mxu0 0.0
        %6511 = vmatprep.subr.mxu0 0.0
        %6512 = vmatpush1.msra.mxu0 0.0
        %6513 = vmatprep.subr.mxu0 0.0
        %6514 = vmatpush1.msra.mxu0 0.0
        %6515 = vmatprep.subr.mxu0 0.0
        %6516 = vmatpush1.msra.mxu0 0.0
        %6517 = vmatprep.subr.mxu0 0.0
        %6518 = vmatpush1.msra.mxu0 0.0
        %6519 = vmatprep.subr.mxu0 0.0
        %6520 = vmatpush1.msra.mxu0 0.0
        %6521 = vmatprep.subr.mxu0 0.0
        %6522 = vmatpush1.msra.mxu0 0.0
        %6523 = vmatprep.subr.mxu0 0.0
        %6524 = vmatpush1.msra.mxu0 0.0
        %6525 = vmatprep.subr.mxu0 0.0
        %6526 = vmatpush1.msra.mxu0 0.0
        %6527 = vmatprep.subr.mxu0 0.0
        %6528 = vmatpush1.msra.mxu0 0.0
        %6529 = vmatprep.subr.mxu0 0.0
        %6530 = vmatpush1.msra.mxu0 0.0
        %6531 = vmatprep.subr.mxu0 0.0
        %6532 = vmatpush1.msra.mxu0 0.0
        %6533 = vmatprep.subr.mxu0 0.0
        %6534 = vmatpush1.msra.mxu0 0.0
        %6535 = vmatprep.subr.mxu0 0.0
        %6536 = vmatpush1.msra.mxu0 0.0
        %6537 = vmatprep.subr.mxu0 0.0
        %6538 = vmatpush1.msra.mxu0 0.0
        %6539 = vmatprep.subr.mxu0 0.0
        %6540 = vmatpush1.msra.mxu0 0.0
        %6541 = vmatprep.mubr.f32.mxu0 0.0
        %6542 = vmatmul.mubr.f32.gmra.mrb[0].mxu0 %v5889
        %v6543 = vpop.f32.mrb[0].mxu0
        %v6544 = vadd.f32 0.0, %v6543
        %v6545 = vpop.f32.mrb[0].mxu0
        %v6546 = vadd.f32 0.0, %v6545
        %6547 = vmatprep.mubr.f32.mxu0 0.0
        %6548 = vmatmul.mubr.f32.gmra.mrb[0].mxu0 %v5892
        %v6549 = vpop.f32.mrb[0].mxu0
        %v6550 = vadd.f32 0.0, %v6549
        %v6551 = vpop.f32.mrb[0].mxu0
        %v6552 = vadd.f32 0.0, %v6551
        %6553 = vmatprep.mubr.f32.mxu0 0.0
        %6554 = vmatmul.mubr.f32.gmra.mrb[0].mxu0 %v5895
        %v6555 = vpop.f32.mrb[0].mxu0
        %v6556 = vadd.f32 0.0, %v6555
        %v6557 = vpop.f32.mrb[0].mxu0
        %v6558 = vadd.f32 0.0, %v6557
        %6559 = vmatprep.mubr.f32.mxu0 0.0
        %6560 = vmatmul.mubr.f32.gmra.mrb[0].mxu0 %v5898
        %v6561 = vpop.f32.mrb[0].mxu0
        %v6562 = vadd.f32 0.0, %v6561
        %v6563 = vpop.f32.mrb[0].mxu0
        %v6564 = vadd.f32 0.0, %v6563
        %6565 = vmatprep.mubr.f32.mxu0 0.0
        %6566 = vmatmul.mubr.f32.gmra.mrb[0].mxu0 %v5901
        %v6567 = vpop.f32.mrb[0].mxu0
        %v6568 = vadd.f32 0.0, %v6567
        %v6569 = vpop.f32.mrb[0].mxu0
        %v6570 = vadd.f32 0.0, %v6569
        %6571 = vmatprep.mubr.f32.mxu0 0.0
        %6572 = vmatmul.mubr.f32.gmra.mrb[0].mxu0 %v5904
        %v6573 = vpop.f32.mrb[0].mxu0
        %v6574 = vadd.f32 0.0, %v6573
        %v6575 = vpop.f32.mrb[0].mxu0
        %v6576 = vadd.f32 0.0, %v6575
        %6577 = vmatprep.mubr.f32.mxu0 0.0
        %6578 = vmatmul.mubr.f32.gmra.mrb[0].mxu0 %v5907
        %v6579 = vpop.f32.mrb[0].mxu0
        %v6580 = vadd.f32 0.0, %v6579
        %v6581 = vpop.f32.mrb[0].mxu0
        %v6582 = vadd.f32 0.0, %v6581
        %6583 = vmatprep.mubr.f32.mxu0 0.0
        %6584 = vmatmul.mubr.f32.gmra.mrb[0].mxu0 %v5910
        %v6585 = vpop.f32.mrb[0].mxu0
        %v6586 = vadd.f32 0.0, %v6585
        %v6587 = vpop.f32.mrb[0].mxu0
        %v6588 = vadd.f32 0.0, %v6587
        %6589 = vdwg.mxu0
        %6590 = vmatprep.subr.mxu0 %v4772
        %6591 = vmatpush1.msra.mxu0 %v4771
        %6592 = vmatprep.subr.mxu0 %v4788
        %6593 = vmatpush1.msra.mxu0 %v4787
        %6594 = vmatprep.subr.mxu0 %v4804
        %6595 = vmatpush1.msra.mxu0 %v4803
        %6596 = vmatprep.subr.mxu0 %v4820
        %6597 = vmatpush1.msra.mxu0 %v4819
        %6598 = vmatprep.subr.mxu0 0.0
        %6599 = vmatpush1.msra.mxu0 0.0
        %6600 = vmatprep.subr.mxu0 0.0
        %6601 = vmatpush1.msra.mxu0 0.0
        %6602 = vmatprep.subr.mxu0 0.0
        %6603 = vmatpush1.msra.mxu0 0.0
        %6604 = vmatprep.subr.mxu0 0.0
        %6605 = vmatpush1.msra.mxu0 0.0
        %6606 = vmatprep.subr.mxu0 0.0
        %6607 = vmatpush1.msra.mxu0 0.0
        %6608 = vmatprep.subr.mxu0 0.0
        %6609 = vmatpush1.msra.mxu0 0.0
        %6610 = vmatprep.subr.mxu0 0.0
        %6611 = vmatpush1.msra.mxu0 0.0
        %6612 = vmatprep.subr.mxu0 0.0
        %6613 = vmatpush1.msra.mxu0 0.0
        %6614 = vmatprep.subr.mxu0 0.0
        %6615 = vmatpush1.msra.mxu0 0.0
        %6616 = vmatprep.subr.mxu0 0.0
        %6617 = vmatpush1.msra.mxu0 0.0
        %6618 = vmatprep.subr.mxu0 0.0
        %6619 = vmatpush1.msra.mxu0 0.0
        %6620 = vmatprep.subr.mxu0 0.0
        %6621 = vmatpush1.msra.mxu0 0.0
        %6622 = vmatprep.subr.mxu0 0.0
        %6623 = vmatpush1.msra.mxu0 0.0
        %6624 = vmatprep.subr.mxu0 0.0
        %6625 = vmatpush1.msra.mxu0 0.0
        %6626 = vmatprep.subr.mxu0 0.0
        %6627 = vmatpush1.msra.mxu0 0.0
        %6628 = vmatprep.subr.mxu0 0.0
        %6629 = vmatpush1.msra.mxu0 0.0
        %6630 = vmatprep.subr.mxu0 0.0
        %6631 = vmatpush1.msra.mxu0 0.0
        %6632 = vmatprep.subr.mxu0 0.0
        %6633 = vmatpush1.msra.mxu0 0.0
        %6634 = vmatprep.subr.mxu0 0.0
        %6635 = vmatpush1.msra.mxu0 0.0
        %6636 = vmatprep.subr.mxu0 0.0
        %6637 = vmatpush1.msra.mxu0 0.0
        %6638 = vmatprep.subr.mxu0 0.0
        %6639 = vmatpush1.msra.mxu0 0.0
        %6640 = vmatprep.subr.mxu0 0.0
        %6641 = vmatpush1.msra.mxu0 0.0
        %6642 = vmatprep.subr.mxu0 0.0
        %6643 = vmatpush1.msra.mxu0 0.0
        %6644 = vmatprep.subr.mxu0 0.0
        %6645 = vmatpush1.msra.mxu0 0.0
        %6646 = vmatprep.subr.mxu0 0.0
        %6647 = vmatpush1.msra.mxu0 0.0
        %6648 = vmatprep.subr.mxu0 0.0
        %6649 = vmatpush1.msra.mxu0 0.0
        %6650 = vmatprep.subr.mxu0 0.0
        %6651 = vmatpush1.msra.mxu0 0.0
        %6652 = vmatprep.subr.mxu0 0.0
        %6653 = vmatpush1.msra.mxu0 0.0
        %6654 = vmatprep.mubr.f32.mxu0 0.0
        %6655 = vmatmul.mubr.f32.gmra.mrb[0].mxu0 %v5889
        %v6656 = vpop.f32.mrb[0].mxu0
        %v6657 = vadd.f32 0.0, %v6656
        %v6658 = vpop.f32.mrb[0].mxu0
        %v6659 = vadd.f32 0.0, %v6658
        %6660 = vmatprep.mubr.f32.mxu0 0.0
        %6661 = vmatmul.mubr.f32.gmra.mrb[0].mxu0 %v5892
        %v6662 = vpop.f32.mrb[0].mxu0
        %v6663 = vadd.f32 0.0, %v6662
        %v6664 = vpop.f32.mrb[0].mxu0
        %v6665 = vadd.f32 0.0, %v6664
        %6666 = vmatprep.mubr.f32.mxu0 0.0
        %6667 = vmatmul.mubr.f32.gmra.mrb[0].mxu0 %v5895
        %v6668 = vpop.f32.mrb[0].mxu0
        %v6669 = vadd.f32 0.0, %v6668
        %v6670 = vpop.f32.mrb[0].mxu0
        %v6671 = vadd.f32 0.0, %v6670
        %6672 = vmatprep.mubr.f32.mxu0 0.0
        %6673 = vmatmul.mubr.f32.gmra.mrb[0].mxu0 %v5898
        %v6674 = vpop.f32.mrb[0].mxu0
        %v6675 = vadd.f32 0.0, %v6674
        %v6676 = vpop.f32.mrb[0].mxu0
        %v6677 = vadd.f32 0.0, %v6676
        %6678 = vmatprep.mubr.f32.mxu0 0.0
        %6679 = vmatmul.mubr.f32.gmra.mrb[0].mxu0 %v5901
        %v6680 = vpop.f32.mrb[0].mxu0
        %v6681 = vadd.f32 0.0, %v6680
        %v6682 = vpop.f32.mrb[0].mxu0
        %v6683 = vadd.f32 0.0, %v6682
        %6684 = vmatprep.mubr.f32.mxu0 0.0
        %6685 = vmatmul.mubr.f32.gmra.mrb[0].mxu0 %v5904
        %v6686 = vpop.f32.mrb[0].mxu0
        %v6687 = vadd.f32 0.0, %v6686
        %v6688 = vpop.f32.mrb[0].mxu0
        %v6689 = vadd.f32 0.0, %v6688
        %6690 = vmatprep.mubr.f32.mxu0 0.0
        %6691 = vmatmul.mubr.f32.gmra.mrb[0].mxu0 %v5907
        %v6692 = vpop.f32.mrb[0].mxu0
        %v6693 = vadd.f32 0.0, %v6692
        %v6694 = vpop.f32.mrb[0].mxu0
        %v6695 = vadd.f32 0.0, %v6694
        %6696 = vmatprep.mubr.f32.mxu0 0.0
        %6697 = vmatmul.mubr.f32.gmra.mrb[0].mxu0 %v5910
        %v6698 = vpop.f32.mrb[0].mxu0
        %v6699 = vadd.f32 0.0, %v6698
        %v6700 = vpop.f32.mrb[0].mxu0
        %v6701 = vadd.f32 0.0, %v6700
        %6702 = vdwg.mxu0
        %6703 = vmatprep.subr.mxu0 %v4774
        %6704 = vmatpush1.msra.mxu0 %v4773
        %6705 = vmatprep.subr.mxu0 %v4790
        %6706 = vmatpush1.msra.mxu0 %v4789
        %6707 = vmatprep.subr.mxu0 %v4806
        %6708 = vmatpush1.msra.mxu0 %v4805
        %6709 = vmatprep.subr.mxu0 %v4822
        %6710 = vmatpush1.msra.mxu0 %v4821
        %6711 = vmatprep.subr.mxu0 0.0
        %6712 = vmatpush1.msra.mxu0 0.0
        %6713 = vmatprep.subr.mxu0 0.0
        %6714 = vmatpush1.msra.mxu0 0.0
        %6715 = vmatprep.subr.mxu0 0.0
        %6716 = vmatpush1.msra.mxu0 0.0
        %6717 = vmatprep.subr.mxu0 0.0
        %6718 = vmatpush1.msra.mxu0 0.0
        %6719 = vmatprep.subr.mxu0 0.0
        %6720 = vmatpush1.msra.mxu0 0.0
        %6721 = vmatprep.subr.mxu0 0.0
        %6722 = vmatpush1.msra.mxu0 0.0
        %6723 = vmatprep.subr.mxu0 0.0
        %6724 = vmatpush1.msra.mxu0 0.0
        %6725 = vmatprep.subr.mxu0 0.0
        %6726 = vmatpush1.msra.mxu0 0.0
        %6727 = vmatprep.subr.mxu0 0.0
        %6728 = vmatpush1.msra.mxu0 0.0
        %6729 = vmatprep.subr.mxu0 0.0
        %6730 = vmatpush1.msra.mxu0 0.0
        %6731 = vmatprep.subr.mxu0 0.0
        %6732 = vmatpush1.msra.mxu0 0.0
        %6733 = vmatprep.subr.mxu0 0.0
        %6734 = vmatpush1.msra.mxu0 0.0
        %6735 = vmatprep.subr.mxu0 0.0
        %6736 = vmatpush1.msra.mxu0 0.0
        %6737 = vmatprep.subr.mxu0 0.0
        %6738 = vmatpush1.msra.mxu0 0.0
        %6739 = vmatprep.subr.mxu0 0.0
        %6740 = vmatpush1.msra.mxu0 0.0
        %6741 = vmatprep.subr.mxu0 0.0
        %6742 = vmatpush1.msra.mxu0 0.0
        %6743 = vmatprep.subr.mxu0 0.0
        %6744 = vmatpush1.msra.mxu0 0.0
        %6745 = vmatprep.subr.mxu0 0.0
        %6746 = vmatpush1.msra.mxu0 0.0
        %6747 = vmatprep.subr.mxu0 0.0
        %6748 = vmatpush1.msra.mxu0 0.0
        %6749 = vmatprep.subr.mxu0 0.0
        %6750 = vmatpush1.msra.mxu0 0.0
        %6751 = vmatprep.subr.mxu0 0.0
        %6752 = vmatpush1.msra.mxu0 0.0
        %6753 = vmatprep.subr.mxu0 0.0
        %6754 = vmatpush1.msra.mxu0 0.0
        %6755 = vmatprep.subr.mxu0 0.0
        %6756 = vmatpush1.msra.mxu0 0.0
        %6757 = vmatprep.subr.mxu0 0.0
        %6758 = vmatpush1.msra.mxu0 0.0
        %6759 = vmatprep.subr.mxu0 0.0
        %6760 = vmatpush1.msra.mxu0 0.0
        %6761 = vmatprep.subr.mxu0 0.0
        %6762 = vmatpush1.msra.mxu0 0.0
        %6763 = vmatprep.subr.mxu0 0.0
        %6764 = vmatpush1.msra.mxu0 0.0
        %6765 = vmatprep.subr.mxu0 0.0
        %6766 = vmatpush1.msra.mxu0 0.0
        %6767 = vmatprep.mubr.f32.mxu0 0.0
        %6768 = vmatmul.mubr.f32.gmra.mrb[0].mxu0 %v5889
        %v6769 = vpop.f32.mrb[0].mxu0
        %v6770 = vadd.f32 0.0, %v6769
        %v6771 = vpop.f32.mrb[0].mxu0
        %v6772 = vadd.f32 0.0, %v6771
        %6773 = vmatprep.mubr.f32.mxu0 0.0
        %6774 = vmatmul.mubr.f32.gmra.mrb[0].mxu0 %v5892
        %v6775 = vpop.f32.mrb[0].mxu0
        %v6776 = vadd.f32 0.0, %v6775
        %v6777 = vpop.f32.mrb[0].mxu0
        %v6778 = vadd.f32 0.0, %v6777
        %6779 = vmatprep.mubr.f32.mxu0 0.0
        %6780 = vmatmul.mubr.f32.gmra.mrb[0].mxu0 %v5895
        %v6781 = vpop.f32.mrb[0].mxu0
        %v6782 = vadd.f32 0.0, %v6781
        %v6783 = vpop.f32.mrb[0].mxu0
        %v6784 = vadd.f32 0.0, %v6783
        %6785 = vmatprep.mubr.f32.mxu0 0.0
        %6786 = vmatmul.mubr.f32.gmra.mrb[0].mxu0 %v5898
        %v6787 = vpop.f32.mrb[0].mxu0
        %v6788 = vadd.f32 0.0, %v6787
        %v6789 = vpop.f32.mrb[0].mxu0
        %v6790 = vadd.f32 0.0, %v6789
        %6791 = vmatprep.mubr.f32.mxu0 0.0
        %6792 = vmatmul.mubr.f32.gmra.mrb[0].mxu0 %v5901
        %v6793 = vpop.f32.mrb[0].mxu0
        %v6794 = vadd.f32 0.0, %v6793
        %v6795 = vpop.f32.mrb[0].mxu0
        %v6796 = vadd.f32 0.0, %v6795
        %6797 = vmatprep.mubr.f32.mxu0 0.0
        %6798 = vmatmul.mubr.f32.gmra.mrb[0].mxu0 %v5904
        %v6799 = vpop.f32.mrb[0].mxu0
        %v6800 = vadd.f32 0.0, %v6799
        %v6801 = vpop.f32.mrb[0].mxu0
        %v6802 = vadd.f32 0.0, %v6801
        %6803 = vmatprep.mubr.f32.mxu0 0.0
        %6804 = vmatmul.mubr.f32.gmra.mrb[0].mxu0 %v5907
        %v6805 = vpop.f32.mrb[0].mxu0
        %v6806 = vadd.f32 0.0, %v6805
        %v6807 = vpop.f32.mrb[0].mxu0
        %v6808 = vadd.f32 0.0, %v6807
        %6809 = vmatprep.mubr.f32.mxu0 0.0
        %6810 = vmatmul.mubr.f32.gmra.mrb[0].mxu0 %v5910
        %v6811 = vpop.f32.mrb[0].mxu0
        %v6812 = vadd.f32 0.0, %v6811
        %v6813 = vpop.f32.mrb[0].mxu0
        %v6814 = vadd.f32 0.0, %v6813
        %6815 = vdwg.mxu0
        %v6816 = vld [vmem:[%s14] sm:$0xff]
        %v6817 = vld [vmem:[%s14 + $0x8] sm:$0xff]
        %v6820 = vlaneseq
        %v6821 = vshrl.u32 %v6820, 7
        %v6822 = vsub.s32 0, %v6821
        %v6823 = vrot.slane %v6816, %v6822
        %v6824 = vlaneseq
        %v6825 = vshrl.u32 %v6824, 7
        %v6826 = vsub.s32 1, %v6825
        %v6827 = vrot.slane %v6816, %v6826
        %v6828 = vlaneseq
        %v6829 = vshrl.u32 %v6828, 7
        %v6830 = vsub.s32 2, %v6829
        %v6831 = vrot.slane %v6816, %v6830
        %v6832 = vlaneseq
        %v6833 = vshrl.u32 %v6832, 7
        %v6834 = vsub.s32 3, %v6833
        %v6835 = vrot.slane %v6816, %v6834
        %v6836 = vlaneseq
        %v6837 = vshrl.u32 %v6836, 7
        %v6838 = vsub.s32 4, %v6837
        %v6839 = vrot.slane %v6816, %v6838
        %v6840 = vlaneseq
        %v6841 = vshrl.u32 %v6840, 7
        %v6842 = vsub.s32 5, %v6841
        %v6843 = vrot.slane %v6816, %v6842
        %v6844 = vlaneseq
        %v6845 = vshrl.u32 %v6844, 7
        %v6846 = vsub.s32 6, %v6845
        %v6847 = vrot.slane %v6816, %v6846
        %v6848 = vlaneseq
        %v6849 = vshrl.u32 %v6848, 7
        %v6850 = vsub.s32 7, %v6849
        %v6851 = vrot.slane %v6816, %v6850
        %v6852 = vlaneseq
        %v6853 = vshrl.u32 %v6852, 7
        %v6854 = vsub.s32 0, %v6853
        %v6855 = vrot.slane %v6817, %v6854
        %v6856 = vlaneseq
        %v6857 = vshrl.u32 %v6856, 7
        %v6858 = vsub.s32 1, %v6857
        %v6859 = vrot.slane %v6817, %v6858
        %v6860 = vlaneseq
        %v6861 = vshrl.u32 %v6860, 7
        %v6862 = vsub.s32 2, %v6861
        %v6863 = vrot.slane %v6817, %v6862
        %v6864 = vlaneseq
        %v6865 = vshrl.u32 %v6864, 7
        %v6866 = vsub.s32 3, %v6865
        %v6867 = vrot.slane %v6817, %v6866
        %v6868 = vlaneseq
        %v6869 = vshrl.u32 %v6868, 7
        %v6870 = vsub.s32 4, %v6869
        %v6871 = vrot.slane %v6817, %v6870
        %v6872 = vlaneseq
        %v6873 = vshrl.u32 %v6872, 7
        %v6874 = vsub.s32 5, %v6873
        %v6875 = vrot.slane %v6817, %v6874
        %v6876 = vlaneseq
        %v6877 = vshrl.u32 %v6876, 7
        %v6878 = vsub.s32 6, %v6877
        %v6879 = vrot.slane %v6817, %v6878
        %v6880 = vlaneseq
        %v6881 = vshrl.u32 %v6880, 7
        %v6882 = vsub.s32 7, %v6881
        %v6883 = vrot.slane %v6817, %v6882
        %v6900 = vmul.f32 %v4503, %v6823
        %v6901 = vmul.f32 %v4503, %v6827
        %v6902 = vmul.f32 %v4503, %v6831
        %v6903 = vmul.f32 %v4503, %v6835
        %v6904 = vmul.f32 %v4503, %v6839
        %v6905 = vmul.f32 %v4503, %v6843
        %v6906 = vmul.f32 %v4503, %v6847
        %v6907 = vmul.f32 %v4503, %v6851
        %v6908 = vmul.f32 %v4503, %v6855
        %v6909 = vmul.f32 %v4503, %v6859
        %v6910 = vmul.f32 %v4503, %v6863
        %v6911 = vmul.f32 %v4503, %v6867
        %v6912 = vmul.f32 %v4503, %v6871
        %v6913 = vmul.f32 %v4503, %v6875
        %v6914 = vmul.f32 %v4503, %v6879
        %v6915 = vmul.f32 %v4503, %v6883
        %v6916 = vmul.f32 %v4508, %v6823
        %v6917 = vmul.f32 %v4508, %v6827
        %v6918 = vmul.f32 %v4508, %v6831
        %v6919 = vmul.f32 %v4508, %v6835
        %v6920 = vmul.f32 %v4508, %v6839
        %v6921 = vmul.f32 %v4508, %v6843
        %v6922 = vmul.f32 %v4508, %v6847
        %v6923 = vmul.f32 %v4508, %v6851
        %v6924 = vmul.f32 %v4508, %v6855
        %v6925 = vmul.f32 %v4508, %v6859
        %v6926 = vmul.f32 %v4508, %v6863
        %v6927 = vmul.f32 %v4508, %v6867
        %v6928 = vmul.f32 %v4508, %v6871
        %v6929 = vmul.f32 %v4508, %v6875
        %v6930 = vmul.f32 %v4508, %v6879
        %v6931 = vmul.f32 %v4508, %v6883
        %v6932 = vmul.f32 %v4513, %v6823
        %v6933 = vmul.f32 %v4513, %v6827
        %v6934 = vmul.f32 %v4513, %v6831
        %v6935 = vmul.f32 %v4513, %v6835
        %v6936 = vmul.f32 %v4513, %v6839
        %v6937 = vmul.f32 %v4513, %v6843
        %v6938 = vmul.f32 %v4513, %v6847
        %v6939 = vmul.f32 %v4513, %v6851
        %v6940 = vmul.f32 %v4513, %v6855
        %v6941 = vmul.f32 %v4513, %v6859
        %v6942 = vmul.f32 %v4513, %v6863
        %v6943 = vmul.f32 %v4513, %v6867
        %v6944 = vmul.f32 %v4513, %v6871
        %v6945 = vmul.f32 %v4513, %v6875
        %v6946 = vmul.f32 %v4513, %v6879
        %v6947 = vmul.f32 %v4513, %v6883
        %v6948 = vmul.f32 %v4518, %v6823
        %v6949 = vmul.f32 %v4518, %v6827
        %v6950 = vmul.f32 %v4518, %v6831
        %v6951 = vmul.f32 %v4518, %v6835
        %v6952 = vmul.f32 %v4518, %v6839
        %v6953 = vmul.f32 %v4518, %v6843
        %v6954 = vmul.f32 %v4518, %v6847
        %v6955 = vmul.f32 %v4518, %v6851
        %v6956 = vmul.f32 %v4518, %v6855
        %v6957 = vmul.f32 %v4518, %v6859
        %v6958 = vmul.f32 %v4518, %v6863
        %v6959 = vmul.f32 %v4518, %v6867
        %v6960 = vmul.f32 %v4518, %v6871
        %v6961 = vmul.f32 %v4518, %v6875
        %v6962 = vmul.f32 %v4518, %v6879
        %v6963 = vmul.f32 %v4518, %v6883
        %v6964 = vmul.f32 %v4523, %v6823
        %v6965 = vmul.f32 %v4523, %v6827
        %v6966 = vmul.f32 %v4523, %v6831
        %v6967 = vmul.f32 %v4523, %v6835
        %v6968 = vmul.f32 %v4523, %v6839
        %v6969 = vmul.f32 %v4523, %v6843
        %v6970 = vmul.f32 %v4523, %v6847
        %v6971 = vmul.f32 %v4523, %v6851
        %v6972 = vmul.f32 %v4523, %v6855
        %v6973 = vmul.f32 %v4523, %v6859
        %v6974 = vmul.f32 %v4523, %v6863
        %v6975 = vmul.f32 %v4523, %v6867
        %v6976 = vmul.f32 %v4523, %v6871
        %v6977 = vmul.f32 %v4523, %v6875
        %v6978 = vmul.f32 %v4523, %v6879
        %v6979 = vmul.f32 %v4523, %v6883
        %v6980 = vmul.f32 %v4528, %v6823
        %v6981 = vmul.f32 %v4528, %v6827
        %v6982 = vmul.f32 %v4528, %v6831
        %v6983 = vmul.f32 %v4528, %v6835
        %v6984 = vmul.f32 %v4528, %v6839
        %v6985 = vmul.f32 %v4528, %v6843
        %v6986 = vmul.f32 %v4528, %v6847
        %v6987 = vmul.f32 %v4528, %v6851
        %v6988 = vmul.f32 %v4528, %v6855
        %v6989 = vmul.f32 %v4528, %v6859
        %v6990 = vmul.f32 %v4528, %v6863
        %v6991 = vmul.f32 %v4528, %v6867
        %v6992 = vmul.f32 %v4528, %v6871
        %v6993 = vmul.f32 %v4528, %v6875
        %v6994 = vmul.f32 %v4528, %v6879
        %v6995 = vmul.f32 %v4528, %v6883
        %v6996 = vmul.f32 %v4533, %v6823
        %v6997 = vmul.f32 %v4533, %v6827
        %v6998 = vmul.f32 %v4533, %v6831
        %v6999 = vmul.f32 %v4533, %v6835
        %v7000 = vmul.f32 %v4533, %v6839
        %v7001 = vmul.f32 %v4533, %v6843
        %v7002 = vmul.f32 %v4533, %v6847
        %v7003 = vmul.f32 %v4533, %v6851
        %v7004 = vmul.f32 %v4533, %v6855
        %v7005 = vmul.f32 %v4533, %v6859
        %v7006 = vmul.f32 %v4533, %v6863
        %v7007 = vmul.f32 %v4533, %v6867
        %v7008 = vmul.f32 %v4533, %v6871
        %v7009 = vmul.f32 %v4533, %v6875
        %v7010 = vmul.f32 %v4533, %v6879
        %v7011 = vmul.f32 %v4533, %v6883
        %v7012 = vmul.f32 %v4538, %v6823
        %v7013 = vmul.f32 %v4538, %v6827
        %v7014 = vmul.f32 %v4538, %v6831
        %v7015 = vmul.f32 %v4538, %v6835
        %v7016 = vmul.f32 %v4538, %v6839
        %v7017 = vmul.f32 %v4538, %v6843
        %v7018 = vmul.f32 %v4538, %v6847
        %v7019 = vmul.f32 %v4538, %v6851
        %v7020 = vmul.f32 %v4538, %v6855
        %v7021 = vmul.f32 %v4538, %v6859
        %v7022 = vmul.f32 %v4538, %v6863
        %v7023 = vmul.f32 %v4538, %v6867
        %v7024 = vmul.f32 %v4538, %v6871
        %v7025 = vmul.f32 %v4538, %v6875
        %v7026 = vmul.f32 %v4538, %v6879
        %v7027 = vmul.f32 %v4538, %v6883
        %v7028 = vmul.f32 %v6900, 1.442695
        %v7029 = vpow.pop %v7028
        %v7030 = vmul.f32 %v6901, 1.442695
        %v7031 = vpow.pop %v7030
        %v7032 = vmul.f32 %v6902, 1.442695
        %v7033 = vpow.pop %v7032
        %v7034 = vmul.f32 %v6903, 1.442695
        %v7035 = vpow.pop %v7034
        %v7036 = vmul.f32 %v6904, 1.442695
        %v7037 = vpow.pop %v7036
        %v7038 = vmul.f32 %v6905, 1.442695
        %v7039 = vpow.pop %v7038
        %v7040 = vmul.f32 %v6906, 1.442695
        %v7041 = vpow.pop %v7040
        %v7042 = vmul.f32 %v6907, 1.442695
        %v7043 = vpow.pop %v7042
        %v7044 = vmul.f32 %v6908, 1.442695
        %v7045 = vpow.pop %v7044
        %v7046 = vmul.f32 %v6909, 1.442695
        %v7047 = vpow.pop %v7046
        %v7048 = vmul.f32 %v6910, 1.442695
        %v7049 = vpow.pop %v7048
        %v7050 = vmul.f32 %v6911, 1.442695
        %v7051 = vpow.pop %v7050
        %v7052 = vmul.f32 %v6912, 1.442695
        %v7053 = vpow.pop %v7052
        %v7054 = vmul.f32 %v6913, 1.442695
        %v7055 = vpow.pop %v7054
        %v7056 = vmul.f32 %v6914, 1.442695
        %v7057 = vpow.pop %v7056
        %v7058 = vmul.f32 %v6915, 1.442695
        %v7059 = vpow.pop %v7058
        %v7060 = vmul.f32 %v6916, 1.442695
        %v7061 = vpow.pop %v7060
        %v7062 = vmul.f32 %v6917, 1.442695
        %v7063 = vpow.pop %v7062
        %v7064 = vmul.f32 %v6918, 1.442695
        %v7065 = vpow.pop %v7064
        %v7066 = vmul.f32 %v6919, 1.442695
        %v7067 = vpow.pop %v7066
        %v7068 = vmul.f32 %v6920, 1.442695
        %v7069 = vpow.pop %v7068
        %v7070 = vmul.f32 %v6921, 1.442695
        %v7071 = vpow.pop %v7070
        %v7072 = vmul.f32 %v6922, 1.442695
        %v7073 = vpow.pop %v7072
        %v7074 = vmul.f32 %v6923, 1.442695
        %v7075 = vpow.pop %v7074
        %v7076 = vmul.f32 %v6924, 1.442695
        %v7077 = vpow.pop %v7076
        %v7078 = vmul.f32 %v6925, 1.442695
        %v7079 = vpow.pop %v7078
        %v7080 = vmul.f32 %v6926, 1.442695
        %v7081 = vpow.pop %v7080
        %v7082 = vmul.f32 %v6927, 1.442695
        %v7083 = vpow.pop %v7082
        %v7084 = vmul.f32 %v6928, 1.442695
        %v7085 = vpow.pop %v7084
        %v7086 = vmul.f32 %v6929, 1.442695
        %v7087 = vpow.pop %v7086
        %v7088 = vmul.f32 %v6930, 1.442695
        %v7089 = vpow.pop %v7088
        %v7090 = vmul.f32 %v6931, 1.442695
        %v7091 = vpow.pop %v7090
        %v7092 = vmul.f32 %v6932, 1.442695
        %v7093 = vpow.pop %v7092
        %v7094 = vmul.f32 %v6933, 1.442695
        %v7095 = vpow.pop %v7094
        %v7096 = vmul.f32 %v6934, 1.442695
        %v7097 = vpow.pop %v7096
        %v7098 = vmul.f32 %v6935, 1.442695
        %v7099 = vpow.pop %v7098
        %v7100 = vmul.f32 %v6936, 1.442695
        %v7101 = vpow.pop %v7100
        %v7102 = vmul.f32 %v6937, 1.442695
        %v7103 = vpow.pop %v7102
        %v7104 = vmul.f32 %v6938, 1.442695
        %v7105 = vpow.pop %v7104
        %v7106 = vmul.f32 %v6939, 1.442695
        %v7107 = vpow.pop %v7106
        %v7108 = vmul.f32 %v6940, 1.442695
        %v7109 = vpow.pop %v7108
        %v7110 = vmul.f32 %v6941, 1.442695
        %v7111 = vpow.pop %v7110
        %v7112 = vmul.f32 %v6942, 1.442695
        %v7113 = vpow.pop %v7112
        %v7114 = vmul.f32 %v6943, 1.442695
        %v7115 = vpow.pop %v7114
        %v7116 = vmul.f32 %v6944, 1.442695
        %v7117 = vpow.pop %v7116
        %v7118 = vmul.f32 %v6945, 1.442695
        %v7119 = vpow.pop %v7118
        %v7120 = vmul.f32 %v6946, 1.442695
        %v7121 = vpow.pop %v7120
        %v7122 = vmul.f32 %v6947, 1.442695
        %v7123 = vpow.pop %v7122
        %v7124 = vmul.f32 %v6948, 1.442695
        %v7125 = vpow.pop %v7124
        %v7126 = vmul.f32 %v6949, 1.442695
        %v7127 = vpow.pop %v7126
        %v7128 = vmul.f32 %v6950, 1.442695
        %v7129 = vpow.pop %v7128
        %v7130 = vmul.f32 %v6951, 1.442695
        %v7131 = vpow.pop %v7130
        %v7132 = vmul.f32 %v6952, 1.442695
        %v7133 = vpow.pop %v7132
        %v7134 = vmul.f32 %v6953, 1.442695
        %v7135 = vpow.pop %v7134
        %v7136 = vmul.f32 %v6954, 1.442695
        %v7137 = vpow.pop %v7136
        %v7138 = vmul.f32 %v6955, 1.442695
        %v7139 = vpow.pop %v7138
        %v7140 = vmul.f32 %v6956, 1.442695
        %v7141 = vpow.pop %v7140
        %v7142 = vmul.f32 %v6957, 1.442695
        %v7143 = vpow.pop %v7142
        %v7144 = vmul.f32 %v6958, 1.442695
        %v7145 = vpow.pop %v7144
        %v7146 = vmul.f32 %v6959, 1.442695
        %v7147 = vpow.pop %v7146
        %v7148 = vmul.f32 %v6960, 1.442695
        %v7149 = vpow.pop %v7148
        %v7150 = vmul.f32 %v6961, 1.442695
        %v7151 = vpow.pop %v7150
        %v7152 = vmul.f32 %v6962, 1.442695
        %v7153 = vpow.pop %v7152
        %v7154 = vmul.f32 %v6963, 1.442695
        %v7155 = vpow.pop %v7154
        %v7156 = vmul.f32 %v6964, 1.442695
        %v7157 = vpow.pop %v7156
        %v7158 = vmul.f32 %v6965, 1.442695
        %v7159 = vpow.pop %v7158
        %v7160 = vmul.f32 %v6966, 1.442695
        %v7161 = vpow.pop %v7160
        %v7162 = vmul.f32 %v6967, 1.442695
        %v7163 = vpow.pop %v7162
        %v7164 = vmul.f32 %v6968, 1.442695
        %v7165 = vpow.pop %v7164
        %v7166 = vmul.f32 %v6969, 1.442695
        %v7167 = vpow.pop %v7166
        %v7168 = vmul.f32 %v6970, 1.442695
        %v7169 = vpow.pop %v7168
        %v7170 = vmul.f32 %v6971, 1.442695
        %v7171 = vpow.pop %v7170
        %v7172 = vmul.f32 %v6972, 1.442695
        %v7173 = vpow.pop %v7172
        %v7174 = vmul.f32 %v6973, 1.442695
        %v7175 = vpow.pop %v7174
        %v7176 = vmul.f32 %v6974, 1.442695
        %v7177 = vpow.pop %v7176
        %v7178 = vmul.f32 %v6975, 1.442695
        %v7179 = vpow.pop %v7178
        %v7180 = vmul.f32 %v6976, 1.442695
        %v7181 = vpow.pop %v7180
        %v7182 = vmul.f32 %v6977, 1.442695
        %v7183 = vpow.pop %v7182
        %v7184 = vmul.f32 %v6978, 1.442695
        %v7185 = vpow.pop %v7184
        %v7186 = vmul.f32 %v6979, 1.442695
        %v7187 = vpow.pop %v7186
        %v7188 = vmul.f32 %v6980, 1.442695
        %v7189 = vpow.pop %v7188
        %v7190 = vmul.f32 %v6981, 1.442695
        %v7191 = vpow.pop %v7190
        %v7192 = vmul.f32 %v6982, 1.442695
        %v7193 = vpow.pop %v7192
        %v7194 = vmul.f32 %v6983, 1.442695
        %v7195 = vpow.pop %v7194
        %v7196 = vmul.f32 %v6984, 1.442695
        %v7197 = vpow.pop %v7196
        %v7198 = vmul.f32 %v6985, 1.442695
        %v7199 = vpow.pop %v7198
        %v7200 = vmul.f32 %v6986, 1.442695
        %v7201 = vpow.pop %v7200
        %v7202 = vmul.f32 %v6987, 1.442695
        %v7203 = vpow.pop %v7202
        %v7204 = vmul.f32 %v6988, 1.442695
        %v7205 = vpow.pop %v7204
        %v7206 = vmul.f32 %v6989, 1.442695
        %v7207 = vpow.pop %v7206
        %v7208 = vmul.f32 %v6990, 1.442695
        %v7209 = vpow.pop %v7208
        %v7210 = vmul.f32 %v6991, 1.442695
        %v7211 = vpow.pop %v7210
        %v7212 = vmul.f32 %v6992, 1.442695
        %v7213 = vpow.pop %v7212
        %v7214 = vmul.f32 %v6993, 1.442695
        %v7215 = vpow.pop %v7214
        %v7216 = vmul.f32 %v6994, 1.442695
        %v7217 = vpow.pop %v7216
        %v7218 = vmul.f32 %v6995, 1.442695
        %v7219 = vpow.pop %v7218
        %v7220 = vmul.f32 %v6996, 1.442695
        %v7221 = vpow.pop %v7220
        %v7222 = vmul.f32 %v6997, 1.442695
        %v7223 = vpow.pop %v7222
        %v7224 = vmul.f32 %v6998, 1.442695
        %v7225 = vpow.pop %v7224
        %v7226 = vmul.f32 %v6999, 1.442695
        %v7227 = vpow.pop %v7226
        %v7228 = vmul.f32 %v7000, 1.442695
        %v7229 = vpow.pop %v7228
        %v7230 = vmul.f32 %v7001, 1.442695
        %v7231 = vpow.pop %v7230
        %v7232 = vmul.f32 %v7002, 1.442695
        %v7233 = vpow.pop %v7232
        %v7234 = vmul.f32 %v7003, 1.442695
        %v7235 = vpow.pop %v7234
        %v7236 = vmul.f32 %v7004, 1.442695
        %v7237 = vpow.pop %v7236
        %v7238 = vmul.f32 %v7005, 1.442695
        %v7239 = vpow.pop %v7238
        %v7240 = vmul.f32 %v7006, 1.442695
        %v7241 = vpow.pop %v7240
        %v7242 = vmul.f32 %v7007, 1.442695
        %v7243 = vpow.pop %v7242
        %v7244 = vmul.f32 %v7008, 1.442695
        %v7245 = vpow.pop %v7244
        %v7246 = vmul.f32 %v7009, 1.442695
        %v7247 = vpow.pop %v7246
        %v7248 = vmul.f32 %v7010, 1.442695
        %v7249 = vpow.pop %v7248
        %v7250 = vmul.f32 %v7011, 1.442695
        %v7251 = vpow.pop %v7250
        %v7252 = vmul.f32 %v7012, 1.442695
        %v7253 = vpow.pop %v7252
        %v7254 = vmul.f32 %v7013, 1.442695
        %v7255 = vpow.pop %v7254
        %v7256 = vmul.f32 %v7014, 1.442695
        %v7257 = vpow.pop %v7256
        %v7258 = vmul.f32 %v7015, 1.442695
        %v7259 = vpow.pop %v7258
        %v7260 = vmul.f32 %v7016, 1.442695
        %v7261 = vpow.pop %v7260
        %v7262 = vmul.f32 %v7017, 1.442695
        %v7263 = vpow.pop %v7262
        %v7264 = vmul.f32 %v7018, 1.442695
        %v7265 = vpow.pop %v7264
        %v7266 = vmul.f32 %v7019, 1.442695
        %v7267 = vpow.pop %v7266
        %v7268 = vmul.f32 %v7020, 1.442695
        %v7269 = vpow.pop %v7268
        %v7270 = vmul.f32 %v7021, 1.442695
        %v7271 = vpow.pop %v7270
        %v7272 = vmul.f32 %v7022, 1.442695
        %v7273 = vpow.pop %v7272
        %v7274 = vmul.f32 %v7023, 1.442695
        %v7275 = vpow.pop %v7274
        %v7276 = vmul.f32 %v7024, 1.442695
        %v7277 = vpow.pop %v7276
        %v7278 = vmul.f32 %v7025, 1.442695
        %v7279 = vpow.pop %v7278
        %v7280 = vmul.f32 %v7026, 1.442695
        %v7281 = vpow.pop %v7280
        %v7282 = vmul.f32 %v7027, 1.442695
        %v7283 = vpow.pop %v7282
        %v7284 = vmul.f32 %v4616, %v4914
        %v7285 = vmul.f32 %v4616, %v4916
        %v7286 = vmul.f32 %v4616, %v5027
        %v7287 = vmul.f32 %v4616, %v5029
        %v7288 = vmul.f32 %v4616, %v5140
        %v7289 = vmul.f32 %v4616, %v5142
        %v7290 = vmul.f32 %v4616, %v5253
        %v7291 = vmul.f32 %v4616, %v5255
        %v7292 = vmul.f32 %v4616, %v5366
        %v7293 = vmul.f32 %v4616, %v5368
        %v7294 = vmul.f32 %v4616, %v5479
        %v7295 = vmul.f32 %v4616, %v5481
        %v7296 = vmul.f32 %v4616, %v5592
        %v7297 = vmul.f32 %v4616, %v5594
        %v7298 = vmul.f32 %v4616, %v5705
        %v7299 = vmul.f32 %v4616, %v5707
        %v7300 = vmul.f32 %v4621, %v4920
        %v7301 = vmul.f32 %v4621, %v4922
        %v7302 = vmul.f32 %v4621, %v5033
        %v7303 = vmul.f32 %v4621, %v5035
        %v7304 = vmul.f32 %v4621, %v5146
        %v7305 = vmul.f32 %v4621, %v5148
        %v7306 = vmul.f32 %v4621, %v5259
        %v7307 = vmul.f32 %v4621, %v5261
        %v7308 = vmul.f32 %v4621, %v5372
        %v7309 = vmul.f32 %v4621, %v5374
        %v7310 = vmul.f32 %v4621, %v5485
        %v7311 = vmul.f32 %v4621, %v5487
        %v7312 = vmul.f32 %v4621, %v5598
        %v7313 = vmul.f32 %v4621, %v5600
        %v7314 = vmul.f32 %v4621, %v5711
        %v7315 = vmul.f32 %v4621, %v5713
        %v7316 = vmul.f32 %v4626, %v4926
        %v7317 = vmul.f32 %v4626, %v4928
        %v7318 = vmul.f32 %v4626, %v5039
        %v7319 = vmul.f32 %v4626, %v5041
        %v7320 = vmul.f32 %v4626, %v5152
        %v7321 = vmul.f32 %v4626, %v5154
        %v7322 = vmul.f32 %v4626, %v5265
        %v7323 = vmul.f32 %v4626, %v5267
        %v7324 = vmul.f32 %v4626, %v5378
        %v7325 = vmul.f32 %v4626, %v5380
        %v7326 = vmul.f32 %v4626, %v5491
        %v7327 = vmul.f32 %v4626, %v5493
        %v7328 = vmul.f32 %v4626, %v5604
        %v7329 = vmul.f32 %v4626, %v5606
        %v7330 = vmul.f32 %v4626, %v5717
        %v7331 = vmul.f32 %v4626, %v5719
        %v7332 = vmul.f32 %v4631, %v4932
        %v7333 = vmul.f32 %v4631, %v4934
        %v7334 = vmul.f32 %v4631, %v5045
        %v7335 = vmul.f32 %v4631, %v5047
        %v7336 = vmul.f32 %v4631, %v5158
        %v7337 = vmul.f32 %v4631, %v5160
        %v7338 = vmul.f32 %v4631, %v5271
        %v7339 = vmul.f32 %v4631, %v5273
        %v7340 = vmul.f32 %v4631, %v5384
        %v7341 = vmul.f32 %v4631, %v5386
        %v7342 = vmul.f32 %v4631, %v5497
        %v7343 = vmul.f32 %v4631, %v5499
        %v7344 = vmul.f32 %v4631, %v5610
        %v7345 = vmul.f32 %v4631, %v5612
        %v7346 = vmul.f32 %v4631, %v5723
        %v7347 = vmul.f32 %v4631, %v5725
        %v7348 = vmul.f32 %v4636, %v4938
        %v7349 = vmul.f32 %v4636, %v4940
        %v7350 = vmul.f32 %v4636, %v5051
        %v7351 = vmul.f32 %v4636, %v5053
        %v7352 = vmul.f32 %v4636, %v5164
        %v7353 = vmul.f32 %v4636, %v5166
        %v7354 = vmul.f32 %v4636, %v5277
        %v7355 = vmul.f32 %v4636, %v5279
        %v7356 = vmul.f32 %v4636, %v5390
        %v7357 = vmul.f32 %v4636, %v5392
        %v7358 = vmul.f32 %v4636, %v5503
        %v7359 = vmul.f32 %v4636, %v5505
        %v7360 = vmul.f32 %v4636, %v5616
        %v7361 = vmul.f32 %v4636, %v5618
        %v7362 = vmul.f32 %v4636, %v5729
        %v7363 = vmul.f32 %v4636, %v5731
        %v7364 = vmul.f32 %v4641, %v4944
        %v7365 = vmul.f32 %v4641, %v4946
        %v7366 = vmul.f32 %v4641, %v5057
        %v7367 = vmul.f32 %v4641, %v5059
        %v7368 = vmul.f32 %v4641, %v5170
        %v7369 = vmul.f32 %v4641, %v5172
        %v7370 = vmul.f32 %v4641, %v5283
        %v7371 = vmul.f32 %v4641, %v5285
        %v7372 = vmul.f32 %v4641, %v5396
        %v7373 = vmul.f32 %v4641, %v5398
        %v7374 = vmul.f32 %v4641, %v5509
        %v7375 = vmul.f32 %v4641, %v5511
        %v7376 = vmul.f32 %v4641, %v5622
        %v7377 = vmul.f32 %v4641, %v5624
        %v7378 = vmul.f32 %v4641, %v5735
        %v7379 = vmul.f32 %v4641, %v5737
        %v7380 = vmul.f32 %v4646, %v4950
        %v7381 = vmul.f32 %v4646, %v4952
        %v7382 = vmul.f32 %v4646, %v5063
        %v7383 = vmul.f32 %v4646, %v5065
        %v7384 = vmul.f32 %v4646, %v5176
        %v7385 = vmul.f32 %v4646, %v5178
        %v7386 = vmul.f32 %v4646, %v5289
        %v7387 = vmul.f32 %v4646, %v5291
        %v7388 = vmul.f32 %v4646, %v5402
        %v7389 = vmul.f32 %v4646, %v5404
        %v7390 = vmul.f32 %v4646, %v5515
        %v7391 = vmul.f32 %v4646, %v5517
        %v7392 = vmul.f32 %v4646, %v5628
        %v7393 = vmul.f32 %v4646, %v5630
        %v7394 = vmul.f32 %v4646, %v5741
        %v7395 = vmul.f32 %v4646, %v5743
        %v7396 = vmul.f32 %v4651, %v4956
        %v7397 = vmul.f32 %v4651, %v4958
        %v7398 = vmul.f32 %v4651, %v5069
        %v7399 = vmul.f32 %v4651, %v5071
        %v7400 = vmul.f32 %v4651, %v5182
        %v7401 = vmul.f32 %v4651, %v5184
        %v7402 = vmul.f32 %v4651, %v5295
        %v7403 = vmul.f32 %v4651, %v5297
        %v7404 = vmul.f32 %v4651, %v5408
        %v7405 = vmul.f32 %v4651, %v5410
        %v7406 = vmul.f32 %v4651, %v5521
        %v7407 = vmul.f32 %v4651, %v5523
        %v7408 = vmul.f32 %v4651, %v5634
        %v7409 = vmul.f32 %v4651, %v5636
        %v7410 = vmul.f32 %v4651, %v5747
        %v7411 = vmul.f32 %v4651, %v5749
        %v7412 = vmul.f32 %v7284, %v7061
        %v7413 = vmul.f32 %v7285, %v7063
        %v7414 = vmul.f32 %v7286, %v7065
        %v7415 = vmul.f32 %v7287, %v7067
        %v7416 = vmul.f32 %v7288, %v7069
        %v7417 = vmul.f32 %v7289, %v7071
        %v7418 = vmul.f32 %v7290, %v7073
        %v7419 = vmul.f32 %v7291, %v7075
        %v7420 = vmul.f32 %v7292, %v7077
        %v7421 = vmul.f32 %v7293, %v7079
        %v7422 = vmul.f32 %v7294, %v7081
        %v7423 = vmul.f32 %v7295, %v7083
        %v7424 = vmul.f32 %v7296, %v7085
        %v7425 = vmul.f32 %v7297, %v7087
        %v7426 = vmul.f32 %v7298, %v7089
        %v7427 = vmul.f32 %v7299, %v7091
        %v7428 = vadd.f32 %v7412, %v7300
        %v7429 = vadd.f32 %v7413, %v7301
        %v7430 = vadd.f32 %v7414, %v7302
        %v7431 = vadd.f32 %v7415, %v7303
        %v7432 = vadd.f32 %v7416, %v7304
        %v7433 = vadd.f32 %v7417, %v7305
        %v7434 = vadd.f32 %v7418, %v7306
        %v7435 = vadd.f32 %v7419, %v7307
        %v7436 = vadd.f32 %v7420, %v7308
        %v7437 = vadd.f32 %v7421, %v7309
        %v7438 = vadd.f32 %v7422, %v7310
        %v7439 = vadd.f32 %v7423, %v7311
        %v7440 = vadd.f32 %v7424, %v7312
        %v7441 = vadd.f32 %v7425, %v7313
        %v7442 = vadd.f32 %v7426, %v7314
        %v7443 = vadd.f32 %v7427, %v7315
        %v7444 = vmul.f32 %v7029, %v7061
        %v7445 = vmul.f32 %v7031, %v7063
        %v7446 = vmul.f32 %v7033, %v7065
        %v7447 = vmul.f32 %v7035, %v7067
        %v7448 = vmul.f32 %v7037, %v7069
        %v7449 = vmul.f32 %v7039, %v7071
        %v7450 = vmul.f32 %v7041, %v7073
        %v7451 = vmul.f32 %v7043, %v7075
        %v7452 = vmul.f32 %v7045, %v7077
        %v7453 = vmul.f32 %v7047, %v7079
        %v7454 = vmul.f32 %v7049, %v7081
        %v7455 = vmul.f32 %v7051, %v7083
        %v7456 = vmul.f32 %v7053, %v7085
        %v7457 = vmul.f32 %v7055, %v7087
        %v7458 = vmul.f32 %v7057, %v7089
        %v7459 = vmul.f32 %v7059, %v7091
        %v7460 = vmul.f32 %v7428, %v7093
        %v7461 = vmul.f32 %v7429, %v7095
        %v7462 = vmul.f32 %v7430, %v7097
        %v7463 = vmul.f32 %v7431, %v7099
        %v7464 = vmul.f32 %v7432, %v7101
        %v7465 = vmul.f32 %v7433, %v7103
        %v7466 = vmul.f32 %v7434, %v7105
        %v7467 = vmul.f32 %v7435, %v7107
        %v7468 = vmul.f32 %v7436, %v7109
        %v7469 = vmul.f32 %v7437, %v7111
        %v7470 = vmul.f32 %v7438, %v7113
        %v7471 = vmul.f32 %v7439, %v7115
        %v7472 = vmul.f32 %v7440, %v7117
        %v7473 = vmul.f32 %v7441, %v7119
        %v7474 = vmul.f32 %v7442, %v7121
        %v7475 = vmul.f32 %v7443, %v7123
        %v7476 = vadd.f32 %v7460, %v7316
        %v7477 = vadd.f32 %v7461, %v7317
        %v7478 = vadd.f32 %v7462, %v7318
        %v7479 = vadd.f32 %v7463, %v7319
        %v7480 = vadd.f32 %v7464, %v7320
        %v7481 = vadd.f32 %v7465, %v7321
        %v7482 = vadd.f32 %v7466, %v7322
        %v7483 = vadd.f32 %v7467, %v7323
        %v7484 = vadd.f32 %v7468, %v7324
        %v7485 = vadd.f32 %v7469, %v7325
        %v7486 = vadd.f32 %v7470, %v7326
        %v7487 = vadd.f32 %v7471, %v7327
        %v7488 = vadd.f32 %v7472, %v7328
        %v7489 = vadd.f32 %v7473, %v7329
        %v7490 = vadd.f32 %v7474, %v7330
        %v7491 = vadd.f32 %v7475, %v7331
        %v7492 = vmul.f32 %v7444, %v7093
        %v7493 = vmul.f32 %v7445, %v7095
        %v7494 = vmul.f32 %v7446, %v7097
        %v7495 = vmul.f32 %v7447, %v7099
        %v7496 = vmul.f32 %v7448, %v7101
        %v7497 = vmul.f32 %v7449, %v7103
        %v7498 = vmul.f32 %v7450, %v7105
        %v7499 = vmul.f32 %v7451, %v7107
        %v7500 = vmul.f32 %v7452, %v7109
        %v7501 = vmul.f32 %v7453, %v7111
        %v7502 = vmul.f32 %v7454, %v7113
        %v7503 = vmul.f32 %v7455, %v7115
        %v7504 = vmul.f32 %v7456, %v7117
        %v7505 = vmul.f32 %v7457, %v7119
        %v7506 = vmul.f32 %v7458, %v7121
        %v7507 = vmul.f32 %v7459, %v7123
        %v7508 = vmul.f32 %v7476, %v7125
        %v7509 = vmul.f32 %v7477, %v7127
        %v7510 = vmul.f32 %v7478, %v7129
        %v7511 = vmul.f32 %v7479, %v7131
        %v7512 = vmul.f32 %v7480, %v7133
        %v7513 = vmul.f32 %v7481, %v7135
        %v7514 = vmul.f32 %v7482, %v7137
        %v7515 = vmul.f32 %v7483, %v7139
        %v7516 = vmul.f32 %v7484, %v7141
        %v7517 = vmul.f32 %v7485, %v7143
        %v7518 = vmul.f32 %v7486, %v7145
        %v7519 = vmul.f32 %v7487, %v7147
        %v7520 = vmul.f32 %v7488, %v7149
        %v7521 = vmul.f32 %v7489, %v7151
        %v7522 = vmul.f32 %v7490, %v7153
        %v7523 = vmul.f32 %v7491, %v7155
        %v7524 = vadd.f32 %v7508, %v7332
        %v7525 = vadd.f32 %v7509, %v7333
        %v7526 = vadd.f32 %v7510, %v7334
        %v7527 = vadd.f32 %v7511, %v7335
        %v7528 = vadd.f32 %v7512, %v7336
        %v7529 = vadd.f32 %v7513, %v7337
        %v7530 = vadd.f32 %v7514, %v7338
        %v7531 = vadd.f32 %v7515, %v7339
        %v7532 = vadd.f32 %v7516, %v7340
        %v7533 = vadd.f32 %v7517, %v7341
        %v7534 = vadd.f32 %v7518, %v7342
        %v7535 = vadd.f32 %v7519, %v7343
        %v7536 = vadd.f32 %v7520, %v7344
        %v7537 = vadd.f32 %v7521, %v7345
        %v7538 = vadd.f32 %v7522, %v7346
        %v7539 = vadd.f32 %v7523, %v7347
        %v7540 = vmul.f32 %v7492, %v7125
        %v7541 = vmul.f32 %v7493, %v7127
        %v7542 = vmul.f32 %v7494, %v7129
        %v7543 = vmul.f32 %v7495, %v7131
        %v7544 = vmul.f32 %v7496, %v7133
        %v7545 = vmul.f32 %v7497, %v7135
        %v7546 = vmul.f32 %v7498, %v7137
        %v7547 = vmul.f32 %v7499, %v7139
        %v7548 = vmul.f32 %v7500, %v7141
        %v7549 = vmul.f32 %v7501, %v7143
        %v7550 = vmul.f32 %v7502, %v7145
        %v7551 = vmul.f32 %v7503, %v7147
        %v7552 = vmul.f32 %v7504, %v7149
        %v7553 = vmul.f32 %v7505, %v7151
        %v7554 = vmul.f32 %v7506, %v7153
        %v7555 = vmul.f32 %v7507, %v7155
        %v7556 = vmul.f32 %v7524, %v7157
        %v7557 = vmul.f32 %v7525, %v7159
        %v7558 = vmul.f32 %v7526, %v7161
        %v7559 = vmul.f32 %v7527, %v7163
        %v7560 = vmul.f32 %v7528, %v7165
        %v7561 = vmul.f32 %v7529, %v7167
        %v7562 = vmul.f32 %v7530, %v7169
        %v7563 = vmul.f32 %v7531, %v7171
        %v7564 = vmul.f32 %v7532, %v7173
        %v7565 = vmul.f32 %v7533, %v7175
        %v7566 = vmul.f32 %v7534, %v7177
        %v7567 = vmul.f32 %v7535, %v7179
        %v7568 = vmul.f32 %v7536, %v7181
        %v7569 = vmul.f32 %v7537, %v7183
        %v7570 = vmul.f32 %v7538, %v7185
        %v7571 = vmul.f32 %v7539, %v7187
        %v7572 = vadd.f32 %v7556, %v7348
        %v7573 = vadd.f32 %v7557, %v7349
        %v7574 = vadd.f32 %v7558, %v7350
        %v7575 = vadd.f32 %v7559, %v7351
        %v7576 = vadd.f32 %v7560, %v7352
        %v7577 = vadd.f32 %v7561, %v7353
        %v7578 = vadd.f32 %v7562, %v7354
        %v7579 = vadd.f32 %v7563, %v7355
        %v7580 = vadd.f32 %v7564, %v7356
        %v7581 = vadd.f32 %v7565, %v7357
        %v7582 = vadd.f32 %v7566, %v7358
        %v7583 = vadd.f32 %v7567, %v7359
        %v7584 = vadd.f32 %v7568, %v7360
        %v7585 = vadd.f32 %v7569, %v7361
        %v7586 = vadd.f32 %v7570, %v7362
        %v7587 = vadd.f32 %v7571, %v7363
        %v7588 = vmul.f32 %v7540, %v7157
        %v7589 = vmul.f32 %v7541, %v7159
        %v7590 = vmul.f32 %v7542, %v7161
        %v7591 = vmul.f32 %v7543, %v7163
        %v7592 = vmul.f32 %v7544, %v7165
        %v7593 = vmul.f32 %v7545, %v7167
        %v7594 = vmul.f32 %v7546, %v7169
        %v7595 = vmul.f32 %v7547, %v7171
        %v7596 = vmul.f32 %v7548, %v7173
        %v7597 = vmul.f32 %v7549, %v7175
        %v7598 = vmul.f32 %v7550, %v7177
        %v7599 = vmul.f32 %v7551, %v7179
        %v7600 = vmul.f32 %v7552, %v7181
        %v7601 = vmul.f32 %v7553, %v7183
        %v7602 = vmul.f32 %v7554, %v7185
        %v7603 = vmul.f32 %v7555, %v7187
        %v7604 = vmul.f32 %v7572, %v7189
        %v7605 = vmul.f32 %v7573, %v7191
        %v7606 = vmul.f32 %v7574, %v7193
        %v7607 = vmul.f32 %v7575, %v7195
        %v7608 = vmul.f32 %v7576, %v7197
        %v7609 = vmul.f32 %v7577, %v7199
        %v7610 = vmul.f32 %v7578, %v7201
        %v7611 = vmul.f32 %v7579, %v7203
        %v7612 = vmul.f32 %v7580, %v7205
        %v7613 = vmul.f32 %v7581, %v7207
        %v7614 = vmul.f32 %v7582, %v7209
        %v7615 = vmul.f32 %v7583, %v7211
        %v7616 = vmul.f32 %v7584, %v7213
        %v7617 = vmul.f32 %v7585, %v7215
        %v7618 = vmul.f32 %v7586, %v7217
        %v7619 = vmul.f32 %v7587, %v7219
        %v7620 = vadd.f32 %v7604, %v7364
        %v7621 = vadd.f32 %v7605, %v7365
        %v7622 = vadd.f32 %v7606, %v7366
        %v7623 = vadd.f32 %v7607, %v7367
        %v7624 = vadd.f32 %v7608, %v7368
        %v7625 = vadd.f32 %v7609, %v7369
        %v7626 = vadd.f32 %v7610, %v7370
        %v7627 = vadd.f32 %v7611, %v7371
        %v7628 = vadd.f32 %v7612, %v7372
        %v7629 = vadd.f32 %v7613, %v7373
        %v7630 = vadd.f32 %v7614, %v7374
        %v7631 = vadd.f32 %v7615, %v7375
        %v7632 = vadd.f32 %v7616, %v7376
        %v7633 = vadd.f32 %v7617, %v7377
        %v7634 = vadd.f32 %v7618, %v7378
        %v7635 = vadd.f32 %v7619, %v7379
        %v7636 = vmul.f32 %v7588, %v7189
        %v7637 = vmul.f32 %v7589, %v7191
        %v7638 = vmul.f32 %v7590, %v7193
        %v7639 = vmul.f32 %v7591, %v7195
        %v7640 = vmul.f32 %v7592, %v7197
        %v7641 = vmul.f32 %v7593, %v7199
        %v7642 = vmul.f32 %v7594, %v7201
        %v7643 = vmul.f32 %v7595, %v7203
        %v7644 = vmul.f32 %v7596, %v7205
        %v7645 = vmul.f32 %v7597, %v7207
        %v7646 = vmul.f32 %v7598, %v7209
        %v7647 = vmul.f32 %v7599, %v7211
        %v7648 = vmul.f32 %v7600, %v7213
        %v7649 = vmul.f32 %v7601, %v7215
        %v7650 = vmul.f32 %v7602, %v7217
        %v7651 = vmul.f32 %v7603, %v7219
        %v7652 = vmul.f32 %v7620, %v7221
        %v7653 = vmul.f32 %v7621, %v7223
        %v7654 = vmul.f32 %v7622, %v7225
        %v7655 = vmul.f32 %v7623, %v7227
        %v7656 = vmul.f32 %v7624, %v7229
        %v7657 = vmul.f32 %v7625, %v7231
        %v7658 = vmul.f32 %v7626, %v7233
        %v7659 = vmul.f32 %v7627, %v7235
        %v7660 = vmul.f32 %v7628, %v7237
        %v7661 = vmul.f32 %v7629, %v7239
        %v7662 = vmul.f32 %v7630, %v7241
        %v7663 = vmul.f32 %v7631, %v7243
        %v7664 = vmul.f32 %v7632, %v7245
        %v7665 = vmul.f32 %v7633, %v7247
        %v7666 = vmul.f32 %v7634, %v7249
        %v7667 = vmul.f32 %v7635, %v7251
        %v7668 = vadd.f32 %v7652, %v7380
        %v7669 = vadd.f32 %v7653, %v7381
        %v7670 = vadd.f32 %v7654, %v7382
        %v7671 = vadd.f32 %v7655, %v7383
        %v7672 = vadd.f32 %v7656, %v7384
        %v7673 = vadd.f32 %v7657, %v7385
        %v7674 = vadd.f32 %v7658, %v7386
        %v7675 = vadd.f32 %v7659, %v7387
        %v7676 = vadd.f32 %v7660, %v7388
        %v7677 = vadd.f32 %v7661, %v7389
        %v7678 = vadd.f32 %v7662, %v7390
        %v7679 = vadd.f32 %v7663, %v7391
        %v7680 = vadd.f32 %v7664, %v7392
        %v7681 = vadd.f32 %v7665, %v7393
        %v7682 = vadd.f32 %v7666, %v7394
        %v7683 = vadd.f32 %v7667, %v7395
        %v7684 = vmul.f32 %v7636, %v7221
        %v7685 = vmul.f32 %v7637, %v7223
        %v7686 = vmul.f32 %v7638, %v7225
        %v7687 = vmul.f32 %v7639, %v7227
        %v7688 = vmul.f32 %v7640, %v7229
        %v7689 = vmul.f32 %v7641, %v7231
        %v7690 = vmul.f32 %v7642, %v7233
        %v7691 = vmul.f32 %v7643, %v7235
        %v7692 = vmul.f32 %v7644, %v7237
        %v7693 = vmul.f32 %v7645, %v7239
        %v7694 = vmul.f32 %v7646, %v7241
        %v7695 = vmul.f32 %v7647, %v7243
        %v7696 = vmul.f32 %v7648, %v7245
        %v7697 = vmul.f32 %v7649, %v7247
        %v7698 = vmul.f32 %v7650, %v7249
        %v7699 = vmul.f32 %v7651, %v7251
        %v7700 = vmul.f32 %v7668, %v7253
        %v7701 = vmul.f32 %v7669, %v7255
        %v7702 = vmul.f32 %v7670, %v7257
        %v7703 = vmul.f32 %v7671, %v7259
        %v7704 = vmul.f32 %v7672, %v7261
        %v7705 = vmul.f32 %v7673, %v7263
        %v7706 = vmul.f32 %v7674, %v7265
        %v7707 = vmul.f32 %v7675, %v7267
        %v7708 = vmul.f32 %v7676, %v7269
        %v7709 = vmul.f32 %v7677, %v7271
        %v7710 = vmul.f32 %v7678, %v7273
        %v7711 = vmul.f32 %v7679, %v7275
        %v7712 = vmul.f32 %v7680, %v7277
        %v7713 = vmul.f32 %v7681, %v7279
        %v7714 = vmul.f32 %v7682, %v7281
        %v7715 = vmul.f32 %v7683, %v7283
        %v7716 = vadd.f32 %v7700, %v7396
        %v7717 = vadd.f32 %v7701, %v7397
        %v7718 = vadd.f32 %v7702, %v7398
        %v7719 = vadd.f32 %v7703, %v7399
        %v7720 = vadd.f32 %v7704, %v7400
        %v7721 = vadd.f32 %v7705, %v7401
        %v7722 = vadd.f32 %v7706, %v7402
        %v7723 = vadd.f32 %v7707, %v7403
        %v7724 = vadd.f32 %v7708, %v7404
        %v7725 = vadd.f32 %v7709, %v7405
        %v7726 = vadd.f32 %v7710, %v7406
        %v7727 = vadd.f32 %v7711, %v7407
        %v7728 = vadd.f32 %v7712, %v7408
        %v7729 = vadd.f32 %v7713, %v7409
        %v7730 = vadd.f32 %v7714, %v7410
        %v7731 = vadd.f32 %v7715, %v7411
        %v7732 = vmul.f32 %v7684, %v7253
        %v7733 = vmul.f32 %v7685, %v7255
        %v7734 = vmul.f32 %v7686, %v7257
        %v7735 = vmul.f32 %v7687, %v7259
        %v7736 = vmul.f32 %v7688, %v7261
        %v7737 = vmul.f32 %v7689, %v7263
        %v7738 = vmul.f32 %v7690, %v7265
        %v7739 = vmul.f32 %v7691, %v7267
        %v7740 = vmul.f32 %v7692, %v7269
        %v7741 = vmul.f32 %v7693, %v7271
        %v7742 = vmul.f32 %v7694, %v7273
        %v7743 = vmul.f32 %v7695, %v7275
        %v7744 = vmul.f32 %v7696, %v7277
        %v7745 = vmul.f32 %v7697, %v7279
        %v7746 = vmul.f32 %v7698, %v7281
        %v7747 = vmul.f32 %v7699, %v7283
        %v7748 = vmul.f32 %v7732, 0.0
        %v7749 = vmul.f32 %v7733, 0.0
        %v7750 = vmul.f32 %v7734, 0.0
        %v7751 = vmul.f32 %v7735, 0.0
        %v7752 = vmul.f32 %v7736, 0.0
        %v7753 = vmul.f32 %v7737, 0.0
        %v7754 = vmul.f32 %v7738, 0.0
        %v7755 = vmul.f32 %v7739, 0.0
        %v7756 = vmul.f32 %v7740, 0.0
        %v7757 = vmul.f32 %v7741, 0.0
        %v7758 = vmul.f32 %v7742, 0.0
        %v7759 = vmul.f32 %v7743, 0.0
        %v7760 = vmul.f32 %v7744, 0.0
        %v7761 = vmul.f32 %v7745, 0.0
        %v7762 = vmul.f32 %v7746, 0.0
        %v7763 = vmul.f32 %v7747, 0.0
        %v7764 = vadd.f32 %v7748, %v7716
        %v7765 = vadd.f32 %v7749, %v7717
        %v7766 = vadd.f32 %v7750, %v7718
        %v7767 = vadd.f32 %v7751, %v7719
        %v7768 = vadd.f32 %v7752, %v7720
        %v7769 = vadd.f32 %v7753, %v7721
        %v7770 = vadd.f32 %v7754, %v7722
        %v7771 = vadd.f32 %v7755, %v7723
        %v7772 = vadd.f32 %v7756, %v7724
        %v7773 = vadd.f32 %v7757, %v7725
        %v7774 = vadd.f32 %v7758, %v7726
        %v7775 = vadd.f32 %v7759, %v7727
        %v7776 = vadd.f32 %v7760, %v7728
        %v7777 = vadd.f32 %v7761, %v7729
        %v7778 = vadd.f32 %v7762, %v7730
        %v7779 = vadd.f32 %v7763, %v7731
        %v7796 = vrot.slane %v7764, 7
        %v7797 = vrot.slane %v7765, 7
        %v7798 = vrot.slane %v7766, 7
        %v7799 = vrot.slane %v7767, 7
        %v7800 = vrot.slane %v7768, 7
        %v7801 = vrot.slane %v7769, 7
        %v7802 = vrot.slane %v7770, 7
        %v7803 = vrot.slane %v7771, 7
        %v7804 = vrot.slane %v7772, 7
        %v7805 = vrot.slane %v7773, 7
        %v7806 = vrot.slane %v7774, 7
        %v7807 = vrot.slane %v7775, 7
        %v7808 = vrot.slane %v7776, 7
        %v7809 = vrot.slane %v7777, 7
        %v7810 = vrot.slane %v7778, 7
        %v7811 = vrot.slane %v7779, 7
        %v7828 = vmul.f32 %v7732, %v7796
        %v7829 = vmul.f32 %v7733, %v7797
        %v7830 = vmul.f32 %v7734, %v7798
        %v7831 = vmul.f32 %v7735, %v7799
        %v7832 = vmul.f32 %v7736, %v7800
        %v7833 = vmul.f32 %v7737, %v7801
        %v7834 = vmul.f32 %v7738, %v7802
        %v7835 = vmul.f32 %v7739, %v7803
        %v7836 = vmul.f32 %v7740, %v7804
        %v7837 = vmul.f32 %v7741, %v7805
        %v7838 = vmul.f32 %v7742, %v7806
        %v7839 = vmul.f32 %v7743, %v7807
        %v7840 = vmul.f32 %v7744, %v7808
        %v7841 = vmul.f32 %v7745, %v7809
        %v7842 = vmul.f32 %v7746, %v7810
        %v7843 = vmul.f32 %v7747, %v7811
        %v7844 = vadd.f32 %v7828, %v7716
        %v7845 = vadd.f32 %v7829, %v7717
        %v7846 = vadd.f32 %v7830, %v7718
        %v7847 = vadd.f32 %v7831, %v7719
        %v7848 = vadd.f32 %v7832, %v7720
        %v7849 = vadd.f32 %v7833, %v7721
        %v7850 = vadd.f32 %v7834, %v7722
        %v7851 = vadd.f32 %v7835, %v7723
        %v7852 = vadd.f32 %v7836, %v7724
        %v7853 = vadd.f32 %v7837, %v7725
        %v7854 = vadd.f32 %v7838, %v7726
        %v7855 = vadd.f32 %v7839, %v7727
        %v7856 = vadd.f32 %v7840, %v7728
        %v7857 = vadd.f32 %v7841, %v7729
        %v7858 = vadd.f32 %v7842, %v7730
        %v7859 = vadd.f32 %v7843, %v7731
        %v7876 = vrot.slane %v7844, 7
        %v7877 = vrot.slane %v7845, 7
        %v7878 = vrot.slane %v7846, 7
        %v7879 = vrot.slane %v7847, 7
        %v7880 = vrot.slane %v7848, 7
        %v7881 = vrot.slane %v7849, 7
        %v7882 = vrot.slane %v7850, 7
        %v7883 = vrot.slane %v7851, 7
        %v7884 = vrot.slane %v7852, 7
        %v7885 = vrot.slane %v7853, 7
        %v7886 = vrot.slane %v7854, 7
        %v7887 = vrot.slane %v7855, 7
        %v7888 = vrot.slane %v7856, 7
        %v7889 = vrot.slane %v7857, 7
        %v7890 = vrot.slane %v7858, 7
        %v7891 = vrot.slane %v7859, 7
        %v7908 = vmul.f32 %v7732, %v7876
        %v7909 = vmul.f32 %v7733, %v7877
        %v7910 = vmul.f32 %v7734, %v7878
        %v7911 = vmul.f32 %v7735, %v7879
        %v7912 = vmul.f32 %v7736, %v7880
        %v7913 = vmul.f32 %v7737, %v7881
        %v7914 = vmul.f32 %v7738, %v7882
        %v7915 = vmul.f32 %v7739, %v7883
        %v7916 = vmul.f32 %v7740, %v7884
        %v7917 = vmul.f32 %v7741, %v7885
        %v7918 = vmul.f32 %v7742, %v7886
        %v7919 = vmul.f32 %v7743, %v7887
        %v7920 = vmul.f32 %v7744, %v7888
        %v7921 = vmul.f32 %v7745, %v7889
        %v7922 = vmul.f32 %v7746, %v7890
        %v7923 = vmul.f32 %v7747, %v7891
        %v7924 = vadd.f32 %v7908, %v7716
        %v7925 = vadd.f32 %v7909, %v7717
        %v7926 = vadd.f32 %v7910, %v7718
        %v7927 = vadd.f32 %v7911, %v7719
        %v7928 = vadd.f32 %v7912, %v7720
        %v7929 = vadd.f32 %v7913, %v7721
        %v7930 = vadd.f32 %v7914, %v7722
        %v7931 = vadd.f32 %v7915, %v7723
        %v7932 = vadd.f32 %v7916, %v7724
        %v7933 = vadd.f32 %v7917, %v7725
        %v7934 = vadd.f32 %v7918, %v7726
        %v7935 = vadd.f32 %v7919, %v7727
        %v7936 = vadd.f32 %v7920, %v7728
        %v7937 = vadd.f32 %v7921, %v7729
        %v7938 = vadd.f32 %v7922, %v7730
        %v7939 = vadd.f32 %v7923, %v7731
        %v7956 = vrot.slane %v7924, 7
        %v7957 = vrot.slane %v7925, 7
        %v7958 = vrot.slane %v7926, 7
        %v7959 = vrot.slane %v7927, 7
        %v7960 = vrot.slane %v7928, 7
        %v7961 = vrot.slane %v7929, 7
        %v7962 = vrot.slane %v7930, 7
        %v7963 = vrot.slane %v7931, 7
        %v7964 = vrot.slane %v7932, 7
        %v7965 = vrot.slane %v7933, 7
        %v7966 = vrot.slane %v7934, 7
        %v7967 = vrot.slane %v7935, 7
        %v7968 = vrot.slane %v7936, 7
        %v7969 = vrot.slane %v7937, 7
        %v7970 = vrot.slane %v7938, 7
        %v7971 = vrot.slane %v7939, 7
        %v7988 = vmul.f32 %v7732, %v7956
        %v7989 = vmul.f32 %v7733, %v7957
        %v7990 = vmul.f32 %v7734, %v7958
        %v7991 = vmul.f32 %v7735, %v7959
        %v7992 = vmul.f32 %v7736, %v7960
        %v7993 = vmul.f32 %v7737, %v7961
        %v7994 = vmul.f32 %v7738, %v7962
        %v7995 = vmul.f32 %v7739, %v7963
        %v7996 = vmul.f32 %v7740, %v7964
        %v7997 = vmul.f32 %v7741, %v7965
        %v7998 = vmul.f32 %v7742, %v7966
        %v7999 = vmul.f32 %v7743, %v7967
        %v8000 = vmul.f32 %v7744, %v7968
        %v8001 = vmul.f32 %v7745, %v7969
        %v8002 = vmul.f32 %v7746, %v7970
        %v8003 = vmul.f32 %v7747, %v7971
        %v8004 = vadd.f32 %v7988, %v7716
        %v8005 = vadd.f32 %v7989, %v7717
        %v8006 = vadd.f32 %v7990, %v7718
        %v8007 = vadd.f32 %v7991, %v7719
        %v8008 = vadd.f32 %v7992, %v7720
        %v8009 = vadd.f32 %v7993, %v7721
        %v8010 = vadd.f32 %v7994, %v7722
        %v8011 = vadd.f32 %v7995, %v7723
        %v8012 = vadd.f32 %v7996, %v7724
        %v8013 = vadd.f32 %v7997, %v7725
        %v8014 = vadd.f32 %v7998, %v7726
        %v8015 = vadd.f32 %v7999, %v7727
        %v8016 = vadd.f32 %v8000, %v7728
        %v8017 = vadd.f32 %v8001, %v7729
        %v8018 = vadd.f32 %v8002, %v7730
        %v8019 = vadd.f32 %v8003, %v7731
        %v8036 = vrot.slane %v8004, 7
        %v8037 = vrot.slane %v8005, 7
        %v8038 = vrot.slane %v8006, 7
        %v8039 = vrot.slane %v8007, 7
        %v8040 = vrot.slane %v8008, 7
        %v8041 = vrot.slane %v8009, 7
        %v8042 = vrot.slane %v8010, 7
        %v8043 = vrot.slane %v8011, 7
        %v8044 = vrot.slane %v8012, 7
        %v8045 = vrot.slane %v8013, 7
        %v8046 = vrot.slane %v8014, 7
        %v8047 = vrot.slane %v8015, 7
        %v8048 = vrot.slane %v8016, 7
        %v8049 = vrot.slane %v8017, 7
        %v8050 = vrot.slane %v8018, 7
        %v8051 = vrot.slane %v8019, 7
        %v8068 = vmul.f32 %v7732, %v8036
        %v8069 = vmul.f32 %v7733, %v8037
        %v8070 = vmul.f32 %v7734, %v8038
        %v8071 = vmul.f32 %v7735, %v8039
        %v8072 = vmul.f32 %v7736, %v8040
        %v8073 = vmul.f32 %v7737, %v8041
        %v8074 = vmul.f32 %v7738, %v8042
        %v8075 = vmul.f32 %v7739, %v8043
        %v8076 = vmul.f32 %v7740, %v8044
        %v8077 = vmul.f32 %v7741, %v8045
        %v8078 = vmul.f32 %v7742, %v8046
        %v8079 = vmul.f32 %v7743, %v8047
        %v8080 = vmul.f32 %v7744, %v8048
        %v8081 = vmul.f32 %v7745, %v8049
        %v8082 = vmul.f32 %v7746, %v8050
        %v8083 = vmul.f32 %v7747, %v8051
        %v8084 = vadd.f32 %v8068, %v7716
        %v8085 = vadd.f32 %v8069, %v7717
        %v8086 = vadd.f32 %v8070, %v7718
        %v8087 = vadd.f32 %v8071, %v7719
        %v8088 = vadd.f32 %v8072, %v7720
        %v8089 = vadd.f32 %v8073, %v7721
        %v8090 = vadd.f32 %v8074, %v7722
        %v8091 = vadd.f32 %v8075, %v7723
        %v8092 = vadd.f32 %v8076, %v7724
        %v8093 = vadd.f32 %v8077, %v7725
        %v8094 = vadd.f32 %v8078, %v7726
        %v8095 = vadd.f32 %v8079, %v7727
        %v8096 = vadd.f32 %v8080, %v7728
        %v8097 = vadd.f32 %v8081, %v7729
        %v8098 = vadd.f32 %v8082, %v7730
        %v8099 = vadd.f32 %v8083, %v7731
        %v8116 = vrot.slane %v8084, 7
        %v8117 = vrot.slane %v8085, 7
        %v8118 = vrot.slane %v8086, 7
        %v8119 = vrot.slane %v8087, 7
        %v8120 = vrot.slane %v8088, 7
        %v8121 = vrot.slane %v8089, 7
        %v8122 = vrot.slane %v8090, 7
        %v8123 = vrot.slane %v8091, 7
        %v8124 = vrot.slane %v8092, 7
        %v8125 = vrot.slane %v8093, 7
        %v8126 = vrot.slane %v8094, 7
        %v8127 = vrot.slane %v8095, 7
        %v8128 = vrot.slane %v8096, 7
        %v8129 = vrot.slane %v8097, 7
        %v8130 = vrot.slane %v8098, 7
        %v8131 = vrot.slane %v8099, 7
        %v8148 = vmul.f32 %v7732, %v8116
        %v8149 = vmul.f32 %v7733, %v8117
        %v8150 = vmul.f32 %v7734, %v8118
        %v8151 = vmul.f32 %v7735, %v8119
        %v8152 = vmul.f32 %v7736, %v8120
        %v8153 = vmul.f32 %v7737, %v8121
        %v8154 = vmul.f32 %v7738, %v8122
        %v8155 = vmul.f32 %v7739, %v8123
        %v8156 = vmul.f32 %v7740, %v8124
        %v8157 = vmul.f32 %v7741, %v8125
        %v8158 = vmul.f32 %v7742, %v8126
        %v8159 = vmul.f32 %v7743, %v8127
        %v8160 = vmul.f32 %v7744, %v8128
        %v8161 = vmul.f32 %v7745, %v8129
        %v8162 = vmul.f32 %v7746, %v8130
        %v8163 = vmul.f32 %v7747, %v8131
        %v8164 = vadd.f32 %v8148, %v7716
        %v8165 = vadd.f32 %v8149, %v7717
        %v8166 = vadd.f32 %v8150, %v7718
        %v8167 = vadd.f32 %v8151, %v7719
        %v8168 = vadd.f32 %v8152, %v7720
        %v8169 = vadd.f32 %v8153, %v7721
        %v8170 = vadd.f32 %v8154, %v7722
        %v8171 = vadd.f32 %v8155, %v7723
        %v8172 = vadd.f32 %v8156, %v7724
        %v8173 = vadd.f32 %v8157, %v7725
        %v8174 = vadd.f32 %v8158, %v7726
        %v8175 = vadd.f32 %v8159, %v7727
        %v8176 = vadd.f32 %v8160, %v7728
        %v8177 = vadd.f32 %v8161, %v7729
        %v8178 = vadd.f32 %v8162, %v7730
        %v8179 = vadd.f32 %v8163, %v7731
        %v8196 = vrot.slane %v8164, 7
        %v8197 = vrot.slane %v8165, 7
        %v8198 = vrot.slane %v8166, 7
        %v8199 = vrot.slane %v8167, 7
        %v8200 = vrot.slane %v8168, 7
        %v8201 = vrot.slane %v8169, 7
        %v8202 = vrot.slane %v8170, 7
        %v8203 = vrot.slane %v8171, 7
        %v8204 = vrot.slane %v8172, 7
        %v8205 = vrot.slane %v8173, 7
        %v8206 = vrot.slane %v8174, 7
        %v8207 = vrot.slane %v8175, 7
        %v8208 = vrot.slane %v8176, 7
        %v8209 = vrot.slane %v8177, 7
        %v8210 = vrot.slane %v8178, 7
        %v8211 = vrot.slane %v8179, 7
        %v8228 = vmul.f32 %v7732, %v8196
        %v8229 = vmul.f32 %v7733, %v8197
        %v8230 = vmul.f32 %v7734, %v8198
        %v8231 = vmul.f32 %v7735, %v8199
        %v8232 = vmul.f32 %v7736, %v8200
        %v8233 = vmul.f32 %v7737, %v8201
        %v8234 = vmul.f32 %v7738, %v8202
        %v8235 = vmul.f32 %v7739, %v8203
        %v8236 = vmul.f32 %v7740, %v8204
        %v8237 = vmul.f32 %v7741, %v8205
        %v8238 = vmul.f32 %v7742, %v8206
        %v8239 = vmul.f32 %v7743, %v8207
        %v8240 = vmul.f32 %v7744, %v8208
        %v8241 = vmul.f32 %v7745, %v8209
        %v8242 = vmul.f32 %v7746, %v8210
        %v8243 = vmul.f32 %v7747, %v8211
        %v8244 = vadd.f32 %v8228, %v7716
        %v8245 = vadd.f32 %v8229, %v7717
        %v8246 = vadd.f32 %v8230, %v7718
        %v8247 = vadd.f32 %v8231, %v7719
        %v8248 = vadd.f32 %v8232, %v7720
        %v8249 = vadd.f32 %v8233, %v7721
        %v8250 = vadd.f32 %v8234, %v7722
        %v8251 = vadd.f32 %v8235, %v7723
        %v8252 = vadd.f32 %v8236, %v7724
        %v8253 = vadd.f32 %v8237, %v7725
        %v8254 = vadd.f32 %v8238, %v7726
        %v8255 = vadd.f32 %v8239, %v7727
        %v8256 = vadd.f32 %v8240, %v7728
        %v8257 = vadd.f32 %v8241, %v7729
        %v8258 = vadd.f32 %v8242, %v7730
        %v8259 = vadd.f32 %v8243, %v7731
        %v8276 = vrot.slane %v8244, 7
        %v8277 = vrot.slane %v8245, 7
        %v8278 = vrot.slane %v8246, 7
        %v8279 = vrot.slane %v8247, 7
        %v8280 = vrot.slane %v8248, 7
        %v8281 = vrot.slane %v8249, 7
        %v8282 = vrot.slane %v8250, 7
        %v8283 = vrot.slane %v8251, 7
        %v8284 = vrot.slane %v8252, 7
        %v8285 = vrot.slane %v8253, 7
        %v8286 = vrot.slane %v8254, 7
        %v8287 = vrot.slane %v8255, 7
        %v8288 = vrot.slane %v8256, 7
        %v8289 = vrot.slane %v8257, 7
        %v8290 = vrot.slane %v8258, 7
        %v8291 = vrot.slane %v8259, 7
        %vm8308 = vcmask 1040384
        %v8309 = vsel %vm8308, 0.0, %v7796
        %v8310 = vsel %vm8308, 0.0, %v7797
        %v8311 = vsel %vm8308, 0.0, %v7798
        %v8312 = vsel %vm8308, 0.0, %v7799
        %v8313 = vsel %vm8308, 0.0, %v7800
        %v8314 = vsel %vm8308, 0.0, %v7801
        %v8315 = vsel %vm8308, 0.0, %v7802
        %v8316 = vsel %vm8308, 0.0, %v7803
        %v8317 = vsel %vm8308, 0.0, %v7804
        %v8318 = vsel %vm8308, 0.0, %v7805
        %v8319 = vsel %vm8308, 0.0, %v7806
        %v8320 = vsel %vm8308, 0.0, %v7807
        %v8321 = vsel %vm8308, 0.0, %v7808
        %v8322 = vsel %vm8308, 0.0, %v7809
        %v8323 = vsel %vm8308, 0.0, %v7810
        %v8324 = vsel %vm8308, 0.0, %v7811
        %vm8325 = vcmask 1041408
        %v8326 = vsel %vm8325, %v8309, %v7876
        %v8327 = vsel %vm8325, %v8310, %v7877
        %v8328 = vsel %vm8325, %v8311, %v7878
        %v8329 = vsel %vm8325, %v8312, %v7879
        %v8330 = vsel %vm8325, %v8313, %v7880
        %v8331 = vsel %vm8325, %v8314, %v7881
        %v8332 = vsel %vm8325, %v8315, %v7882
        %v8333 = vsel %vm8325, %v8316, %v7883
        %v8334 = vsel %vm8325, %v8317, %v7884
        %v8335 = vsel %vm8325, %v8318, %v7885
        %v8336 = vsel %vm8325, %v8319, %v7886
        %v8337 = vsel %vm8325, %v8320, %v7887
        %v8338 = vsel %vm8325, %v8321, %v7888
        %v8339 = vsel %vm8325, %v8322, %v7889
        %v8340 = vsel %vm8325, %v8323, %v7890
        %v8341 = vsel %vm8325, %v8324, %v7891
        %vm8342 = vcmask 1042432
        %v8343 = vsel %vm8342, %v8326, %v7956
        %v8344 = vsel %vm8342, %v8327, %v7957
        %v8345 = vsel %vm8342, %v8328, %v7958
        %v8346 = vsel %vm8342, %v8329, %v7959
        %v8347 = vsel %vm8342, %v8330, %v7960
        %v8348 = vsel %vm8342, %v8331, %v7961
        %v8349 = vsel %vm8342, %v8332, %v7962
        %v8350 = vsel %vm8342, %v8333, %v7963
        %v8351 = vsel %vm8342, %v8334, %v7964
        %v8352 = vsel %vm8342, %v8335, %v7965
        %v8353 = vsel %vm8342, %v8336, %v7966
        %v8354 = vsel %vm8342, %v8337, %v7967
        %v8355 = vsel %vm8342, %v8338, %v7968
        %v8356 = vsel %vm8342, %v8339, %v7969
        %v8357 = vsel %vm8342, %v8340, %v7970
        %v8358 = vsel %vm8342, %v8341, %v7971
        %vm8359 = vcmask 1043456
        %v8360 = vsel %vm8359, %v8343, %v8036
        %v8361 = vsel %vm8359, %v8344, %v8037
        %v8362 = vsel %vm8359, %v8345, %v8038
        %v8363 = vsel %vm8359, %v8346, %v8039
        %v8364 = vsel %vm8359, %v8347, %v8040
        %v8365 = vsel %vm8359, %v8348, %v8041
        %v8366 = vsel %vm8359, %v8349, %v8042
        %v8367 = vsel %vm8359, %v8350, %v8043
        %v8368 = vsel %vm8359, %v8351, %v8044
        %v8369 = vsel %vm8359, %v8352, %v8045
        %v8370 = vsel %vm8359, %v8353, %v8046
        %v8371 = vsel %vm8359, %v8354, %v8047
        %v8372 = vsel %vm8359, %v8355, %v8048
        %v8373 = vsel %vm8359, %v8356, %v8049
        %v8374 = vsel %vm8359, %v8357, %v8050
        %v8375 = vsel %vm8359, %v8358, %v8051
        %vm8376 = vcmask 1044480
        %v8377 = vsel %vm8376, %v8360, %v8116
        %v8378 = vsel %vm8376, %v8361, %v8117
        %v8379 = vsel %vm8376, %v8362, %v8118
        %v8380 = vsel %vm8376, %v8363, %v8119
        %v8381 = vsel %vm8376, %v8364, %v8120
        %v8382 = vsel %vm8376, %v8365, %v8121
        %v8383 = vsel %vm8376, %v8366, %v8122
        %v8384 = vsel %vm8376, %v8367, %v8123
        %v8385 = vsel %vm8376, %v8368, %v8124
        %v8386 = vsel %vm8376, %v8369, %v8125
        %v8387 = vsel %vm8376, %v8370, %v8126
        %v8388 = vsel %vm8376, %v8371, %v8127
        %v8389 = vsel %vm8376, %v8372, %v8128
        %v8390 = vsel %vm8376, %v8373, %v8129
        %v8391 = vsel %vm8376, %v8374, %v8130
        %v8392 = vsel %vm8376, %v8375, %v8131
        %vm8393 = vcmask 1045504
        %v8394 = vsel %vm8393, %v8377, %v8196
        %v8395 = vsel %vm8393, %v8378, %v8197
        %v8396 = vsel %vm8393, %v8379, %v8198
        %v8397 = vsel %vm8393, %v8380, %v8199
        %v8398 = vsel %vm8393, %v8381, %v8200
        %v8399 = vsel %vm8393, %v8382, %v8201
        %v8400 = vsel %vm8393, %v8383, %v8202
        %v8401 = vsel %vm8393, %v8384, %v8203
        %v8402 = vsel %vm8393, %v8385, %v8204
        %v8403 = vsel %vm8393, %v8386, %v8205
        %v8404 = vsel %vm8393, %v8387, %v8206
        %v8405 = vsel %vm8393, %v8388, %v8207
        %v8406 = vsel %vm8393, %v8389, %v8208
        %v8407 = vsel %vm8393, %v8390, %v8209
        %v8408 = vsel %vm8393, %v8391, %v8210
        %v8409 = vsel %vm8393, %v8392, %v8211
        %vm8410 = vcmask 1046528
        %v8411 = vsel %vm8410, %v8394, %v8276
        %v8412 = vsel %vm8410, %v8395, %v8277
        %v8413 = vsel %vm8410, %v8396, %v8278
        %v8414 = vsel %vm8410, %v8397, %v8279
        %v8415 = vsel %vm8410, %v8398, %v8280
        %v8416 = vsel %vm8410, %v8399, %v8281
        %v8417 = vsel %vm8410, %v8400, %v8282
        %v8418 = vsel %vm8410, %v8401, %v8283
        %v8419 = vsel %vm8410, %v8402, %v8284
        %v8420 = vsel %vm8410, %v8403, %v8285
        %v8421 = vsel %vm8410, %v8404, %v8286
        %v8422 = vsel %vm8410, %v8405, %v8287
        %v8423 = vsel %vm8410, %v8406, %v8288
        %v8424 = vsel %vm8410, %v8407, %v8289
        %v8425 = vsel %vm8410, %v8408, %v8290
        %v8426 = vsel %vm8410, %v8409, %v8291
        %v8427 = vmul.f32 %v7029, %v8411
        %v8428 = vmul.f32 %v7031, %v8412
        %v8429 = vmul.f32 %v7033, %v8413
        %v8430 = vmul.f32 %v7035, %v8414
        %v8431 = vmul.f32 %v7037, %v8415
        %v8432 = vmul.f32 %v7039, %v8416
        %v8433 = vmul.f32 %v7041, %v8417
        %v8434 = vmul.f32 %v7043, %v8418
        %v8435 = vmul.f32 %v7045, %v8419
        %v8436 = vmul.f32 %v7047, %v8420
        %v8437 = vmul.f32 %v7049, %v8421
        %v8438 = vmul.f32 %v7051, %v8422
        %v8439 = vmul.f32 %v7053, %v8423
        %v8440 = vmul.f32 %v7055, %v8424
        %v8441 = vmul.f32 %v7057, %v8425
        %v8442 = vmul.f32 %v7059, %v8426
        %v8443 = vadd.f32 %v8427, %v7284
        %v8444 = vadd.f32 %v8428, %v7285
        %v8445 = vadd.f32 %v8429, %v7286
        %v8446 = vadd.f32 %v8430, %v7287
        %v8447 = vadd.f32 %v8431, %v7288
        %v8448 = vadd.f32 %v8432, %v7289
        %v8449 = vadd.f32 %v8433, %v7290
        %v8450 = vadd.f32 %v8434, %v7291
        %v8451 = vadd.f32 %v8435, %v7292
        %v8452 = vadd.f32 %v8436, %v7293
        %v8453 = vadd.f32 %v8437, %v7294
        %v8454 = vadd.f32 %v8438, %v7295
        %v8455 = vadd.f32 %v8439, %v7296
        %v8456 = vadd.f32 %v8440, %v7297
        %v8457 = vadd.f32 %v8441, %v7298
        %v8458 = vadd.f32 %v8442, %v7299
        %v8459 = vmul.f32 %v8443, %v5979
        %v8460 = vmul.f32 %v8444, %v5981
        %v8461 = vmul.f32 %v8445, %v6092
        %v8462 = vmul.f32 %v8446, %v6094
        %v8463 = vmul.f32 %v8447, %v6205
        %v8464 = vmul.f32 %v8448, %v6207
        %v8465 = vmul.f32 %v8449, %v6318
        %v8466 = vmul.f32 %v8450, %v6320
        %v8467 = vmul.f32 %v8451, %v6431
        %v8468 = vmul.f32 %v8452, %v6433
        %v8469 = vmul.f32 %v8453, %v6544
        %v8470 = vmul.f32 %v8454, %v6546
        %v8471 = vmul.f32 %v8455, %v6657
        %v8472 = vmul.f32 %v8456, %v6659
        %v8473 = vmul.f32 %v8457, %v6770
        %v8474 = vmul.f32 %v8458, %v6772
        %v8475 = vadd.f32 %v8459, %v8467
        %v8476 = vadd.f32 %v8460, %v8468
        %v8477 = vadd.f32 %v8461, %v8469
        %v8478 = vadd.f32 %v8462, %v8470
        %v8479 = vadd.f32 %v8463, %v8471
        %v8480 = vadd.f32 %v8464, %v8472
        %v8481 = vadd.f32 %v8465, %v8473
        %v8482 = vadd.f32 %v8466, %v8474
        %v8483 = vadd.f32 %v8475, %v8479
        %v8484 = vadd.f32 %v8476, %v8480
        %v8485 = vadd.f32 %v8477, %v8481
        %v8486 = vadd.f32 %v8478, %v8482
        %v8487 = vadd.f32 %v8483, %v8485
        %v8488 = vadd.f32 %v8484, %v8486
        %v8489 = vadd.f32 %v8487, %v8488
        %v8490 = vmul.f32 %v7061, %v8443
        %v8491 = vmul.f32 %v7063, %v8444
        %v8492 = vmul.f32 %v7065, %v8445
        %v8493 = vmul.f32 %v7067, %v8446
        %v8494 = vmul.f32 %v7069, %v8447
        %v8495 = vmul.f32 %v7071, %v8448
        %v8496 = vmul.f32 %v7073, %v8449
        %v8497 = vmul.f32 %v7075, %v8450
        %v8498 = vmul.f32 %v7077, %v8451
        %v8499 = vmul.f32 %v7079, %v8452
        %v8500 = vmul.f32 %v7081, %v8453
        %v8501 = vmul.f32 %v7083, %v8454
        %v8502 = vmul.f32 %v7085, %v8455
        %v8503 = vmul.f32 %v7087, %v8456
        %v8504 = vmul.f32 %v7089, %v8457
        %v8505 = vmul.f32 %v7091, %v8458
        %v8506 = vadd.f32 %v8490, %v7300
        %v8507 = vadd.f32 %v8491, %v7301
        %v8508 = vadd.f32 %v8492, %v7302
        %v8509 = vadd.f32 %v8493, %v7303
        %v8510 = vadd.f32 %v8494, %v7304
        %v8511 = vadd.f32 %v8495, %v7305
        %v8512 = vadd.f32 %v8496, %v7306
        %v8513 = vadd.f32 %v8497, %v7307
        %v8514 = vadd.f32 %v8498, %v7308
        %v8515 = vadd.f32 %v8499, %v7309
        %v8516 = vadd.f32 %v8500, %v7310
        %v8517 = vadd.f32 %v8501, %v7311
        %v8518 = vadd.f32 %v8502, %v7312
        %v8519 = vadd.f32 %v8503, %v7313
        %v8520 = vadd.f32 %v8504, %v7314
        %v8521 = vadd.f32 %v8505, %v7315
        %v8522 = vmul.f32 %v8506, %v5985
        %v8523 = vmul.f32 %v8507, %v5987
        %v8524 = vmul.f32 %v8508, %v6098
        %v8525 = vmul.f32 %v8509, %v6100
        %v8526 = vmul.f32 %v8510, %v6211
        %v8527 = vmul.f32 %v8511, %v6213
        %v8528 = vmul.f32 %v8512, %v6324
        %v8529 = vmul.f32 %v8513, %v6326
        %v8530 = vmul.f32 %v8514, %v6437
        %v8531 = vmul.f32 %v8515, %v6439
        %v8532 = vmul.f32 %v8516, %v6550
        %v8533 = vmul.f32 %v8517, %v6552
        %v8534 = vmul.f32 %v8518, %v6663
        %v8535 = vmul.f32 %v8519, %v6665
        %v8536 = vmul.f32 %v8520, %v6776
        %v8537 = vmul.f32 %v8521, %v6778
        %v8538 = vadd.f32 %v8522, %v8530
        %v8539 = vadd.f32 %v8523, %v8531
        %v8540 = vadd.f32 %v8524, %v8532
        %v8541 = vadd.f32 %v8525, %v8533
        %v8542 = vadd.f32 %v8526, %v8534
        %v8543 = vadd.f32 %v8527, %v8535
        %v8544 = vadd.f32 %v8528, %v8536
        %v8545 = vadd.f32 %v8529, %v8537
        %v8546 = vadd.f32 %v8538, %v8542
        %v8547 = vadd.f32 %v8539, %v8543
        %v8548 = vadd.f32 %v8540, %v8544
        %v8549 = vadd.f32 %v8541, %v8545
        %v8550 = vadd.f32 %v8546, %v8548
        %v8551 = vadd.f32 %v8547, %v8549
        %v8552 = vadd.f32 %v8550, %v8551
        %v8553 = vmul.f32 %v7093, %v8506
        %v8554 = vmul.f32 %v7095, %v8507
        %v8555 = vmul.f32 %v7097, %v8508
        %v8556 = vmul.f32 %v7099, %v8509
        %v8557 = vmul.f32 %v7101, %v8510
        %v8558 = vmul.f32 %v7103, %v8511
        %v8559 = vmul.f32 %v7105, %v8512
        %v8560 = vmul.f32 %v7107, %v8513
        %v8561 = vmul.f32 %v7109, %v8514
        %v8562 = vmul.f32 %v7111, %v8515
        %v8563 = vmul.f32 %v7113, %v8516
        %v8564 = vmul.f32 %v7115, %v8517
        %v8565 = vmul.f32 %v7117, %v8518
        %v8566 = vmul.f32 %v7119, %v8519
        %v8567 = vmul.f32 %v7121, %v8520
        %v8568 = vmul.f32 %v7123, %v8521
        %v8569 = vadd.f32 %v8553, %v7316
        %v8570 = vadd.f32 %v8554, %v7317
        %v8571 = vadd.f32 %v8555, %v7318
        %v8572 = vadd.f32 %v8556, %v7319
        %v8573 = vadd.f32 %v8557, %v7320
        %v8574 = vadd.f32 %v8558, %v7321
        %v8575 = vadd.f32 %v8559, %v7322
        %v8576 = vadd.f32 %v8560, %v7323
        %v8577 = vadd.f32 %v8561, %v7324
        %v8578 = vadd.f32 %v8562, %v7325
        %v8579 = vadd.f32 %v8563, %v7326
        %v8580 = vadd.f32 %v8564, %v7327
        %v8581 = vadd.f32 %v8565, %v7328
        %v8582 = vadd.f32 %v8566, %v7329
        %v8583 = vadd.f32 %v8567, %v7330
        %v8584 = vadd.f32 %v8568, %v7331
        %v8585 = vmul.f32 %v8569, %v5991
        %v8586 = vmul.f32 %v8570, %v5993
        %v8587 = vmul.f32 %v8571, %v6104
        %v8588 = vmul.f32 %v8572, %v6106
        %v8589 = vmul.f32 %v8573, %v6217
        %v8590 = vmul.f32 %v8574, %v6219
        %v8591 = vmul.f32 %v8575, %v6330
        %v8592 = vmul.f32 %v8576, %v6332
        %v8593 = vmul.f32 %v8577, %v6443
        %v8594 = vmul.f32 %v8578, %v6445
        %v8595 = vmul.f32 %v8579, %v6556
        %v8596 = vmul.f32 %v8580, %v6558
        %v8597 = vmul.f32 %v8581, %v6669
        %v8598 = vmul.f32 %v8582, %v6671
        %v8599 = vmul.f32 %v8583, %v6782
        %v8600 = vmul.f32 %v8584, %v6784
        %v8601 = vadd.f32 %v8585, %v8593
        %v8602 = vadd.f32 %v8586, %v8594
        %v8603 = vadd.f32 %v8587, %v8595
        %v8604 = vadd.f32 %v8588, %v8596
        %v8605 = vadd.f32 %v8589, %v8597
        %v8606 = vadd.f32 %v8590, %v8598
        %v8607 = vadd.f32 %v8591, %v8599
        %v8608 = vadd.f32 %v8592, %v8600
        %v8609 = vadd.f32 %v8601, %v8605
        %v8610 = vadd.f32 %v8602, %v8606
        %v8611 = vadd.f32 %v8603, %v8607
        %v8612 = vadd.f32 %v8604, %v8608
        %v8613 = vadd.f32 %v8609, %v8611
        %v8614 = vadd.f32 %v8610, %v8612
        %v8615 = vadd.f32 %v8613, %v8614
        %v8616 = vmul.f32 %v7125, %v8569
        %v8617 = vmul.f32 %v7127, %v8570
        %v8618 = vmul.f32 %v7129, %v8571
        %v8619 = vmul.f32 %v7131, %v8572
        %v8620 = vmul.f32 %v7133, %v8573
        %v8621 = vmul.f32 %v7135, %v8574
        %v8622 = vmul.f32 %v7137, %v8575
        %v8623 = vmul.f32 %v7139, %v8576
        %v8624 = vmul.f32 %v7141, %v8577
        %v8625 = vmul.f32 %v7143, %v8578
        %v8626 = vmul.f32 %v7145, %v8579
        %v8627 = vmul.f32 %v7147, %v8580
        %v8628 = vmul.f32 %v7149, %v8581
        %v8629 = vmul.f32 %v7151, %v8582
        %v8630 = vmul.f32 %v7153, %v8583
        %v8631 = vmul.f32 %v7155, %v8584
        %v8632 = vadd.f32 %v8616, %v7332
        %v8633 = vadd.f32 %v8617, %v7333
        %v8634 = vadd.f32 %v8618, %v7334
        %v8635 = vadd.f32 %v8619, %v7335
        %v8636 = vadd.f32 %v8620, %v7336
        %v8637 = vadd.f32 %v8621, %v7337
        %v8638 = vadd.f32 %v8622, %v7338
        %v8639 = vadd.f32 %v8623, %v7339
        %v8640 = vadd.f32 %v8624, %v7340
        %v8641 = vadd.f32 %v8625, %v7341
        %v8642 = vadd.f32 %v8626, %v7342
        %v8643 = vadd.f32 %v8627, %v7343
        %v8644 = vadd.f32 %v8628, %v7344
        %v8645 = vadd.f32 %v8629, %v7345
        %v8646 = vadd.f32 %v8630, %v7346
        %v8647 = vadd.f32 %v8631, %v7347
        %v8648 = vmul.f32 %v8632, %v5997
        %v8649 = vmul.f32 %v8633, %v5999
        %v8650 = vmul.f32 %v8634, %v6110
        %v8651 = vmul.f32 %v8635, %v6112
        %v8652 = vmul.f32 %v8636, %v6223
        %v8653 = vmul.f32 %v8637, %v6225
        %v8654 = vmul.f32 %v8638, %v6336
        %v8655 = vmul.f32 %v8639, %v6338
        %v8656 = vmul.f32 %v8640, %v6449
        %v8657 = vmul.f32 %v8641, %v6451
        %v8658 = vmul.f32 %v8642, %v6562
        %v8659 = vmul.f32 %v8643, %v6564
        %v8660 = vmul.f32 %v8644, %v6675
        %v8661 = vmul.f32 %v8645, %v6677
        %v8662 = vmul.f32 %v8646, %v6788
        %v8663 = vmul.f32 %v8647, %v6790
        %v8664 = vadd.f32 %v8648, %v8656
        %v8665 = vadd.f32 %v8649, %v8657
        %v8666 = vadd.f32 %v8650, %v8658
        %v8667 = vadd.f32 %v8651, %v8659
        %v8668 = vadd.f32 %v8652, %v8660
        %v8669 = vadd.f32 %v8653, %v8661
        %v8670 = vadd.f32 %v8654, %v8662
        %v8671 = vadd.f32 %v8655, %v8663
        %v8672 = vadd.f32 %v8664, %v8668
        %v8673 = vadd.f32 %v8665, %v8669
        %v8674 = vadd.f32 %v8666, %v8670
        %v8675 = vadd.f32 %v8667, %v8671
        %v8676 = vadd.f32 %v8672, %v8674
        %v8677 = vadd.f32 %v8673, %v8675
        %v8678 = vadd.f32 %v8676, %v8677
        %v8679 = vmul.f32 %v7157, %v8632
        %v8680 = vmul.f32 %v7159, %v8633
        %v8681 = vmul.f32 %v7161, %v8634
        %v8682 = vmul.f32 %v7163, %v8635
        %v8683 = vmul.f32 %v7165, %v8636
        %v8684 = vmul.f32 %v7167, %v8637
        %v8685 = vmul.f32 %v7169, %v8638
        %v8686 = vmul.f32 %v7171, %v8639
        %v8687 = vmul.f32 %v7173, %v8640
        %v8688 = vmul.f32 %v7175, %v8641
        %v8689 = vmul.f32 %v7177, %v8642
        %v8690 = vmul.f32 %v7179, %v8643
        %v8691 = vmul.f32 %v7181, %v8644
        %v8692 = vmul.f32 %v7183, %v8645
        %v8693 = vmul.f32 %v7185, %v8646
        %v8694 = vmul.f32 %v7187, %v8647
        %v8695 = vadd.f32 %v8679, %v7348
        %v8696 = vadd.f32 %v8680, %v7349
        %v8697 = vadd.f32 %v8681, %v7350
        %v8698 = vadd.f32 %v8682, %v7351
        %v8699 = vadd.f32 %v8683, %v7352
        %v8700 = vadd.f32 %v8684, %v7353
        %v8701 = vadd.f32 %v8685, %v7354
        %v8702 = vadd.f32 %v8686, %v7355
        %v8703 = vadd.f32 %v8687, %v7356
        %v8704 = vadd.f32 %v8688, %v7357
        %v8705 = vadd.f32 %v8689, %v7358
        %v8706 = vadd.f32 %v8690, %v7359
        %v8707 = vadd.f32 %v8691, %v7360
        %v8708 = vadd.f32 %v8692, %v7361
        %v8709 = vadd.f32 %v8693, %v7362
        %v8710 = vadd.f32 %v8694, %v7363
        %v8711 = vmul.f32 %v8695, %v6003
        %v8712 = vmul.f32 %v8696, %v6005
        %v8713 = vmul.f32 %v8697, %v6116
        %v8714 = vmul.f32 %v8698, %v6118
        %v8715 = vmul.f32 %v8699, %v6229
        %v8716 = vmul.f32 %v8700, %v6231
        %v8717 = vmul.f32 %v8701, %v6342
        %v8718 = vmul.f32 %v8702, %v6344
        %v8719 = vmul.f32 %v8703, %v6455
        %v8720 = vmul.f32 %v8704, %v6457
        %v8721 = vmul.f32 %v8705, %v6568
        %v8722 = vmul.f32 %v8706, %v6570
        %v8723 = vmul.f32 %v8707, %v6681
        %v8724 = vmul.f32 %v8708, %v6683
        %v8725 = vmul.f32 %v8709, %v6794
        %v8726 = vmul.f32 %v8710, %v6796
        %v8727 = vadd.f32 %v8711, %v8719
        %v8728 = vadd.f32 %v8712, %v8720
        %v8729 = vadd.f32 %v8713, %v8721
        %v8730 = vadd.f32 %v8714, %v8722
        %v8731 = vadd.f32 %v8715, %v8723
        %v8732 = vadd.f32 %v8716, %v8724
        %v8733 = vadd.f32 %v8717, %v8725
        %v8734 = vadd.f32 %v8718, %v8726
        %v8735 = vadd.f32 %v8727, %v8731
        %v8736 = vadd.f32 %v8728, %v8732
        %v8737 = vadd.f32 %v8729, %v8733
        %v8738 = vadd.f32 %v8730, %v8734
        %v8739 = vadd.f32 %v8735, %v8737
        %v8740 = vadd.f32 %v8736, %v8738
        %v8741 = vadd.f32 %v8739, %v8740
        %v8742 = vmul.f32 %v7189, %v8695
        %v8743 = vmul.f32 %v7191, %v8696
        %v8744 = vmul.f32 %v7193, %v8697
        %v8745 = vmul.f32 %v7195, %v8698
        %v8746 = vmul.f32 %v7197, %v8699
        %v8747 = vmul.f32 %v7199, %v8700
        %v8748 = vmul.f32 %v7201, %v8701
        %v8749 = vmul.f32 %v7203, %v8702
        %v8750 = vmul.f32 %v7205, %v8703
        %v8751 = vmul.f32 %v7207, %v8704
        %v8752 = vmul.f32 %v7209, %v8705
        %v8753 = vmul.f32 %v7211, %v8706
        %v8754 = vmul.f32 %v7213, %v8707
        %v8755 = vmul.f32 %v7215, %v8708
        %v8756 = vmul.f32 %v7217, %v8709
        %v8757 = vmul.f32 %v7219, %v8710
        %v8758 = vadd.f32 %v8742, %v7364
        %v8759 = vadd.f32 %v8743, %v7365
        %v8760 = vadd.f32 %v8744, %v7366
        %v8761 = vadd.f32 %v8745, %v7367
        %v8762 = vadd.f32 %v8746, %v7368
        %v8763 = vadd.f32 %v8747, %v7369
        %v8764 = vadd.f32 %v8748, %v7370
        %v8765 = vadd.f32 %v8749, %v7371
        %v8766 = vadd.f32 %v8750, %v7372
        %v8767 = vadd.f32 %v8751, %v7373
        %v8768 = vadd.f32 %v8752, %v7374
        %v8769 = vadd.f32 %v8753, %v7375
        %v8770 = vadd.f32 %v8754, %v7376
        %v8771 = vadd.f32 %v8755, %v7377
        %v8772 = vadd.f32 %v8756, %v7378
        %v8773 = vadd.f32 %v8757, %v7379
        %v8774 = vmul.f32 %v8758, %v6009
        %v8775 = vmul.f32 %v8759, %v6011
        %v8776 = vmul.f32 %v8760, %v6122
        %v8777 = vmul.f32 %v8761, %v6124
        %v8778 = vmul.f32 %v8762, %v6235
        %v8779 = vmul.f32 %v8763, %v6237
        %v8780 = vmul.f32 %v8764, %v6348
        %v8781 = vmul.f32 %v8765, %v6350
        %v8782 = vmul.f32 %v8766, %v6461
        %v8783 = vmul.f32 %v8767, %v6463
        %v8784 = vmul.f32 %v8768, %v6574
        %v8785 = vmul.f32 %v8769, %v6576
        %v8786 = vmul.f32 %v8770, %v6687
        %v8787 = vmul.f32 %v8771, %v6689
        %v8788 = vmul.f32 %v8772, %v6800
        %v8789 = vmul.f32 %v8773, %v6802
        %v8790 = vadd.f32 %v8774, %v8782
        %v8791 = vadd.f32 %v8775, %v8783
        %v8792 = vadd.f32 %v8776, %v8784
        %v8793 = vadd.f32 %v8777, %v8785
        %v8794 = vadd.f32 %v8778, %v8786
        %v8795 = vadd.f32 %v8779, %v8787
        %v8796 = vadd.f32 %v8780, %v8788
        %v8797 = vadd.f32 %v8781, %v8789
        %v8798 = vadd.f32 %v8790, %v8794
        %v8799 = vadd.f32 %v8791, %v8795
        %v8800 = vadd.f32 %v8792, %v8796
        %v8801 = vadd.f32 %v8793, %v8797
        %v8802 = vadd.f32 %v8798, %v8800
        %v8803 = vadd.f32 %v8799, %v8801
        %v8804 = vadd.f32 %v8802, %v8803
        %v8805 = vmul.f32 %v7221, %v8758
        %v8806 = vmul.f32 %v7223, %v8759
        %v8807 = vmul.f32 %v7225, %v8760
        %v8808 = vmul.f32 %v7227, %v8761
        %v8809 = vmul.f32 %v7229, %v8762
        %v8810 = vmul.f32 %v7231, %v8763
        %v8811 = vmul.f32 %v7233, %v8764
        %v8812 = vmul.f32 %v7235, %v8765
        %v8813 = vmul.f32 %v7237, %v8766
        %v8814 = vmul.f32 %v7239, %v8767
        %v8815 = vmul.f32 %v7241, %v8768
        %v8816 = vmul.f32 %v7243, %v8769
        %v8817 = vmul.f32 %v7245, %v8770
        %v8818 = vmul.f32 %v7247, %v8771
        %v8819 = vmul.f32 %v7249, %v8772
        %v8820 = vmul.f32 %v7251, %v8773
        %v8821 = vadd.f32 %v8805, %v7380
        %v8822 = vadd.f32 %v8806, %v7381
        %v8823 = vadd.f32 %v8807, %v7382
        %v8824 = vadd.f32 %v8808, %v7383
        %v8825 = vadd.f32 %v8809, %v7384
        %v8826 = vadd.f32 %v8810, %v7385
        %v8827 = vadd.f32 %v8811, %v7386
        %v8828 = vadd.f32 %v8812, %v7387
        %v8829 = vadd.f32 %v8813, %v7388
        %v8830 = vadd.f32 %v8814, %v7389
        %v8831 = vadd.f32 %v8815, %v7390
        %v8832 = vadd.f32 %v8816, %v7391
        %v8833 = vadd.f32 %v8817, %v7392
        %v8834 = vadd.f32 %v8818, %v7393
        %v8835 = vadd.f32 %v8819, %v7394
        %v8836 = vadd.f32 %v8820, %v7395
        %v8837 = vmul.f32 %v8821, %v6015
        %v8838 = vmul.f32 %v8822, %v6017
        %v8839 = vmul.f32 %v8823, %v6128
        %v8840 = vmul.f32 %v8824, %v6130
        %v8841 = vmul.f32 %v8825, %v6241
        %v8842 = vmul.f32 %v8826, %v6243
        %v8843 = vmul.f32 %v8827, %v6354
        %v8844 = vmul.f32 %v8828, %v6356
        %v8845 = vmul.f32 %v8829, %v6467
        %v8846 = vmul.f32 %v8830, %v6469
        %v8847 = vmul.f32 %v8831, %v6580
        %v8848 = vmul.f32 %v8832, %v6582
        %v8849 = vmul.f32 %v8833, %v6693
        %v8850 = vmul.f32 %v8834, %v6695
        %v8851 = vmul.f32 %v8835, %v6806
        %v8852 = vmul.f32 %v8836, %v6808
        %v8853 = vadd.f32 %v8837, %v8845
        %v8854 = vadd.f32 %v8838, %v8846
        %v8855 = vadd.f32 %v8839, %v8847
        %v8856 = vadd.f32 %v8840, %v8848
        %v8857 = vadd.f32 %v8841, %v8849
        %v8858 = vadd.f32 %v8842, %v8850
        %v8859 = vadd.f32 %v8843, %v8851
        %v8860 = vadd.f32 %v8844, %v8852
        %v8861 = vadd.f32 %v8853, %v8857
        %v8862 = vadd.f32 %v8854, %v8858
        %v8863 = vadd.f32 %v8855, %v8859
        %v8864 = vadd.f32 %v8856, %v8860
        %v8865 = vadd.f32 %v8861, %v8863
        %v8866 = vadd.f32 %v8862, %v8864
        %v8867 = vadd.f32 %v8865, %v8866
        %v8868 = vmul.f32 %v7253, %v8821
        %v8869 = vmul.f32 %v7255, %v8822
        %v8870 = vmul.f32 %v7257, %v8823
        %v8871 = vmul.f32 %v7259, %v8824
        %v8872 = vmul.f32 %v7261, %v8825
        %v8873 = vmul.f32 %v7263, %v8826
        %v8874 = vmul.f32 %v7265, %v8827
        %v8875 = vmul.f32 %v7267, %v8828
        %v8876 = vmul.f32 %v7269, %v8829
        %v8877 = vmul.f32 %v7271, %v8830
        %v8878 = vmul.f32 %v7273, %v8831
        %v8879 = vmul.f32 %v7275, %v8832
        %v8880 = vmul.f32 %v7277, %v8833
        %v8881 = vmul.f32 %v7279, %v8834
        %v8882 = vmul.f32 %v7281, %v8835
        %v8883 = vmul.f32 %v7283, %v8836
        %v8884 = vadd.f32 %v8868, %v7396
        %v8885 = vadd.f32 %v8869, %v7397
        %v8886 = vadd.f32 %v8870, %v7398
        %v8887 = vadd.f32 %v8871, %v7399
        %v8888 = vadd.f32 %v8872, %v7400
        %v8889 = vadd.f32 %v8873, %v7401
        %v8890 = vadd.f32 %v8874, %v7402
        %v8891 = vadd.f32 %v8875, %v7403
        %v8892 = vadd.f32 %v8876, %v7404
        %v8893 = vadd.f32 %v8877, %v7405
        %v8894 = vadd.f32 %v8878, %v7406
        %v8895 = vadd.f32 %v8879, %v7407
        %v8896 = vadd.f32 %v8880, %v7408
        %v8897 = vadd.f32 %v8881, %v7409
        %v8898 = vadd.f32 %v8882, %v7410
        %v8899 = vadd.f32 %v8883, %v7411
        %v8900 = vmul.f32 %v8884, %v6021
        %v8901 = vmul.f32 %v8885, %v6023
        %v8902 = vmul.f32 %v8886, %v6134
        %v8903 = vmul.f32 %v8887, %v6136
        %v8904 = vmul.f32 %v8888, %v6247
        %v8905 = vmul.f32 %v8889, %v6249
        %v8906 = vmul.f32 %v8890, %v6360
        %v8907 = vmul.f32 %v8891, %v6362
        %v8908 = vmul.f32 %v8892, %v6473
        %v8909 = vmul.f32 %v8893, %v6475
        %v8910 = vmul.f32 %v8894, %v6586
        %v8911 = vmul.f32 %v8895, %v6588
        %v8912 = vmul.f32 %v8896, %v6699
        %v8913 = vmul.f32 %v8897, %v6701
        %v8914 = vmul.f32 %v8898, %v6812
        %v8915 = vmul.f32 %v8899, %v6814
        %v8916 = vadd.f32 %v8900, %v8908
        %v8917 = vadd.f32 %v8901, %v8909
        %v8918 = vadd.f32 %v8902, %v8910
        %v8919 = vadd.f32 %v8903, %v8911
        %v8920 = vadd.f32 %v8904, %v8912
        %v8921 = vadd.f32 %v8905, %v8913
        %v8922 = vadd.f32 %v8906, %v8914
        %v8923 = vadd.f32 %v8907, %v8915
        %v8924 = vadd.f32 %v8916, %v8920
        %v8925 = vadd.f32 %v8917, %v8921
        %v8926 = vadd.f32 %v8918, %v8922
        %v8927 = vadd.f32 %v8919, %v8923
        %v8928 = vadd.f32 %v8924, %v8926
        %v8929 = vadd.f32 %v8925, %v8927
        %v8930 = vadd.f32 %v8928, %v8929
        %v8931 = vld [vmem:[%s16] sm:$0x1]
        %v8933 = vlaneseq
        %v8934 = vshrl.u32 %v8933, 7
        %v8935 = vsub.s32 0, %v8934
        %v8936 = vrot.slane %v8931, %v8935
        %v8938 = vmul.f32 %v4124, %v8936
        %v8939 = vmul.f32 %v4125, %v8936
        %v8940 = vmul.f32 %v4126, %v8936
        %v8941 = vmul.f32 %v4127, %v8936
        %v8942 = vmul.f32 %v4128, %v8936
        %v8943 = vmul.f32 %v4129, %v8936
        %v8944 = vmul.f32 %v4130, %v8936
        %v8945 = vmul.f32 %v4131, %v8936
        %8946 = vmatprep.subr.mxu0 0.0
        %8947 = vmatpush1.msra.mxu0 %v8489
        %8948 = vmatprep.subr.mxu0 0.0
        %8949 = vmatpush1.msra.mxu0 %v8552
        %8950 = vmatprep.subr.mxu0 0.0
        %8951 = vmatpush1.msra.mxu0 %v8615
        %8952 = vmatprep.subr.mxu0 0.0
        %8953 = vmatpush1.msra.mxu0 %v8678
        %8954 = vmatprep.subr.mxu0 0.0
        %8955 = vmatpush1.msra.mxu0 %v8741
        %8956 = vmatprep.subr.mxu0 0.0
        %8957 = vmatpush1.msra.mxu0 %v8804
        %8958 = vmatprep.subr.mxu0 0.0
        %8959 = vmatpush1.msra.mxu0 %v8867
        %8960 = vmatprep.subr.mxu0 0.0
        %8961 = vmatpush1.msra.mxu0 %v8930
        %8962 = vmatprep.subr.mxu0 0.0
        %8963 = vmatpush1.msra.mxu0 0.0
        %8964 = vmatprep.subr.mxu0 0.0
        %8965 = vmatpush1.msra.mxu0 0.0
        %8966 = vmatprep.subr.mxu0 0.0
        %8967 = vmatpush1.msra.mxu0 0.0
        %8968 = vmatprep.subr.mxu0 0.0
        %8969 = vmatpush1.msra.mxu0 0.0
        %8970 = vmatprep.subr.mxu0 0.0
        %8971 = vmatpush1.msra.mxu0 0.0
        %8972 = vmatprep.subr.mxu0 0.0
        %8973 = vmatpush1.msra.mxu0 0.0
        %8974 = vmatprep.subr.mxu0 0.0
        %8975 = vmatpush1.msra.mxu0 0.0
        %8976 = vmatprep.subr.mxu0 0.0
        %8977 = vmatpush1.msra.mxu0 0.0
        %8978 = vmatprep.subr.mxu0 0.0
        %8979 = vmatpush1.msra.mxu0 0.0
        %8980 = vmatprep.subr.mxu0 0.0
        %8981 = vmatpush1.msra.mxu0 0.0
        %8982 = vmatprep.subr.mxu0 0.0
        %8983 = vmatpush1.msra.mxu0 0.0
        %8984 = vmatprep.subr.mxu0 0.0
        %8985 = vmatpush1.msra.mxu0 0.0
        %8986 = vmatprep.subr.mxu0 0.0
        %8987 = vmatpush1.msra.mxu0 0.0
        %8988 = vmatprep.subr.mxu0 0.0
        %8989 = vmatpush1.msra.mxu0 0.0
        %8990 = vmatprep.subr.mxu0 0.0
        %8991 = vmatpush1.msra.mxu0 0.0
        %8992 = vmatprep.subr.mxu0 0.0
        %8993 = vmatpush1.msra.mxu0 0.0
        %8994 = vmatprep.subr.mxu0 0.0
        %8995 = vmatpush1.msra.mxu0 0.0
        %8996 = vmatprep.subr.mxu0 0.0
        %8997 = vmatpush1.msra.mxu0 0.0
        %8998 = vmatprep.subr.mxu0 0.0
        %8999 = vmatpush1.msra.mxu0 0.0
        %9000 = vmatprep.subr.mxu0 0.0
        %9001 = vmatpush1.msra.mxu0 0.0
        %9002 = vmatprep.subr.mxu0 0.0
        %9003 = vmatpush1.msra.mxu0 0.0
        %9004 = vmatprep.subr.mxu0 0.0
        %9005 = vmatpush1.msra.mxu0 0.0
        %9006 = vmatprep.subr.mxu0 0.0
        %9007 = vmatpush1.msra.mxu0 0.0
        %9008 = vmatprep.subr.mxu0 0.0
        %9009 = vmatpush1.msra.mxu0 0.0
        %9010 = vmatprep.mubr.f32.mxu0 0.0
        %9011 = vmatmul.mubr.f32.gmra.mrb[0].mxu0 %v4413
        %v9012 = vpop.f32.mrb[0].mxu0
        %v9013 = vadd.f32 %v8938, %v9012
        %v9014 = vpop.f32.mrb[0].mxu0
        %9015 = vmatprep.mubr.f32.mxu0 0.0
        %9016 = vmatmul.mubr.f32.gmra.mrb[0].mxu0 %v4416
        %v9017 = vpop.f32.mrb[0].mxu0
        %v9018 = vadd.f32 %v8939, %v9017
        %v9019 = vpop.f32.mrb[0].mxu0
        %9020 = vmatprep.mubr.f32.mxu0 0.0
        %9021 = vmatmul.mubr.f32.gmra.mrb[0].mxu0 %v4419
        %v9022 = vpop.f32.mrb[0].mxu0
        %v9023 = vadd.f32 %v8940, %v9022
        %v9024 = vpop.f32.mrb[0].mxu0
        %9025 = vmatprep.mubr.f32.mxu0 0.0
        %9026 = vmatmul.mubr.f32.gmra.mrb[0].mxu0 %v4422
        %v9027 = vpop.f32.mrb[0].mxu0
        %v9028 = vadd.f32 %v8941, %v9027
        %v9029 = vpop.f32.mrb[0].mxu0
        %9030 = vmatprep.mubr.f32.mxu0 0.0
        %9031 = vmatmul.mubr.f32.gmra.mrb[0].mxu0 %v4425
        %v9032 = vpop.f32.mrb[0].mxu0
        %v9033 = vadd.f32 %v8942, %v9032
        %v9034 = vpop.f32.mrb[0].mxu0
        %9035 = vmatprep.mubr.f32.mxu0 0.0
        %9036 = vmatmul.mubr.f32.gmra.mrb[0].mxu0 %v4428
        %v9037 = vpop.f32.mrb[0].mxu0
        %v9038 = vadd.f32 %v8943, %v9037
        %v9039 = vpop.f32.mrb[0].mxu0
        %9040 = vmatprep.mubr.f32.mxu0 0.0
        %9041 = vmatmul.mubr.f32.gmra.mrb[0].mxu0 %v4431
        %v9042 = vpop.f32.mrb[0].mxu0
        %v9043 = vadd.f32 %v8944, %v9042
        %v9044 = vpop.f32.mrb[0].mxu0
        %9045 = vmatprep.mubr.f32.mxu0 0.0
        %9046 = vmatmul.mubr.f32.gmra.mrb[0].mxu0 %v4434
        %v9047 = vpop.f32.mrb[0].mxu0
        %v9048 = vadd.f32 %v8945, %v9047
        %v9049 = vpop.f32.mrb[0].mxu0
        %9050 = vdwg.mxu0
        %v9051 = vsub.f32 0.0, %v3848
        %v9052 = vsub.f32 0.0, %v3854
        %v9053 = vsub.f32 0.0, %v3860
        %v9054 = vsub.f32 0.0, %v3866
        %v9055 = vsub.f32 0.0, %v3872
        %v9056 = vsub.f32 0.0, %v3878
        %v9057 = vsub.f32 0.0, %v3884
        %v9058 = vsub.f32 0.0, %v3890
        %v9059 = vmul.f32 %v9051, 1.442695
        %v9060 = vpow.pop %v9059
        %v9061 = vmul.f32 %v9052, 1.442695
        %v9062 = vpow.pop %v9061
        %v9063 = vmul.f32 %v9053, 1.442695
        %v9064 = vpow.pop %v9063
        %v9065 = vmul.f32 %v9054, 1.442695
        %v9066 = vpow.pop %v9065
        %v9067 = vmul.f32 %v9055, 1.442695
        %v9068 = vpow.pop %v9067
        %v9069 = vmul.f32 %v9056, 1.442695
        %v9070 = vpow.pop %v9069
        %v9071 = vmul.f32 %v9057, 1.442695
        %v9072 = vpow.pop %v9071
        %v9073 = vmul.f32 %v9058, 1.442695
        %v9074 = vpow.pop %v9073
        %v9075 = vadd.f32 %v9060, 1.0
        %v9076 = vadd.f32 %v9062, 1.0
        %v9077 = vadd.f32 %v9064, 1.0
        %v9078 = vadd.f32 %v9066, 1.0
        %v9079 = vadd.f32 %v9068, 1.0
        %v9080 = vadd.f32 %v9070, 1.0
        %v9081 = vadd.f32 %v9072, 1.0
        %v9082 = vadd.f32 %v9074, 1.0
        %v9083 = vrcp.pop %v9075
        %v9084 = vrcp.pop %v9076
        %v9085 = vrcp.pop %v9077
        %v9086 = vrcp.pop %v9078
        %v9087 = vrcp.pop %v9079
        %v9088 = vrcp.pop %v9080
        %v9089 = vrcp.pop %v9081
        %v9090 = vrcp.pop %v9082
        %v9091 = vmul.f32 %v3848, %v9083
        %v9092 = vmul.f32 %v3854, %v9084
        %v9093 = vmul.f32 %v3860, %v9085
        %v9094 = vmul.f32 %v3866, %v9086
        %v9095 = vmul.f32 %v3872, %v9087
        %v9096 = vmul.f32 %v3878, %v9088
        %v9097 = vmul.f32 %v3884, %v9089
        %v9098 = vmul.f32 %v3890, %v9090
        %v9099 = vmul.f32 %v9013, %v9091
        %v9100 = vmul.f32 %v9018, %v9092
        %v9101 = vmul.f32 %v9023, %v9093
        %v9102 = vmul.f32 %v9028, %v9094
        %v9103 = vmul.f32 %v9033, %v9095
        %v9104 = vmul.f32 %v9038, %v9096
        %v9105 = vmul.f32 %v9043, %v9097
        %v9106 = vmul.f32 %v9048, %v9098
        %v9107 = vld [vmem:[%s17] sm:$0xff]
        %v9108 = vld [vmem:[%s17 + $0x8] sm:$0xff]
        %v9109 = vld [vmem:[%s17 + $0x10] sm:$0xff]
        %v9110 = vld [vmem:[%s17 + $0x18] sm:$0xff]
        %v9111 = vld [vmem:[%s17 + $0x20] sm:$0xff]
        %v9112 = vld [vmem:[%s17 + $0x28] sm:$0xff]
        %v9113 = vld [vmem:[%s17 + $0x30] sm:$0xff]
        %v9114 = vld [vmem:[%s17 + $0x38] sm:$0xff]
        %v9115 = vld [vmem:[%s17 + $0x40] sm:$0xff]
        %v9116 = vld [vmem:[%s17 + $0x48] sm:$0xff]
        %v9117 = vld [vmem:[%s17 + $0x50] sm:$0xff]
        %v9118 = vld [vmem:[%s17 + $0x58] sm:$0xff]
        %v9119 = vld [vmem:[%s17 + $0x60] sm:$0xff]
        %v9120 = vld [vmem:[%s17 + $0x68] sm:$0xff]
        %v9121 = vld [vmem:[%s17 + $0x70] sm:$0xff]
        %v9122 = vld [vmem:[%s17 + $0x78] sm:$0xff]
        %9123 = vmatprep.subr.mxu0 0.0
        %9124 = vmatpush1.msra.mxu0 %v9107
        %9125 = vmatprep.subr.mxu0 0.0
        %9126 = vmatpush1.msra.mxu0 %v9108
        %9127 = vmatprep.subr.mxu0 0.0
        %9128 = vmatpush1.msra.mxu0 %v9109
        %9129 = vmatprep.subr.mxu0 0.0
        %9130 = vmatpush1.msra.mxu0 %v9110
        %9131 = vmatprep.subr.mxu0 0.0
        %9132 = vmatpush1.msra.mxu0 %v9111
        %9133 = vmatprep.subr.mxu0 0.0
        %9134 = vmatpush1.msra.mxu0 %v9112
        %9135 = vmatprep.subr.mxu0 0.0
        %9136 = vmatpush1.msra.mxu0 %v9113
        %9137 = vmatprep.subr.mxu0 0.0
        %9138 = vmatpush1.msra.mxu0 %v9114
        %9139 = vmatprep.subr.mxu0 0.0
        %9140 = vmatpush1.msra.mxu0 %v9115
        %9141 = vmatprep.subr.mxu0 0.0
        %9142 = vmatpush1.msra.mxu0 %v9116
        %9143 = vmatprep.subr.mxu0 0.0
        %9144 = vmatpush1.msra.mxu0 %v9117
        %9145 = vmatprep.subr.mxu0 0.0
        %9146 = vmatpush1.msra.mxu0 %v9118
        %9147 = vmatprep.subr.mxu0 0.0
        %9148 = vmatpush1.msra.mxu0 %v9119
        %9149 = vmatprep.subr.mxu0 0.0
        %9150 = vmatpush1.msra.mxu0 %v9120
        %9151 = vmatprep.subr.mxu0 0.0
        %9152 = vmatpush1.msra.mxu0 %v9121
        %9153 = vmatprep.subr.mxu0 0.0
        %9154 = vmatpush1.msra.mxu0 %v9122
        %9155 = vmatprep.subr.mxu0 0.0
        %9156 = vmatpush1.msra.mxu0 0.0
        %9157 = vmatprep.subr.mxu0 0.0
        %9158 = vmatpush1.msra.mxu0 0.0
        %9159 = vmatprep.subr.mxu0 0.0
        %9160 = vmatpush1.msra.mxu0 0.0
        %9161 = vmatprep.subr.mxu0 0.0
        %9162 = vmatpush1.msra.mxu0 0.0
        %9163 = vmatprep.subr.mxu0 0.0
        %9164 = vmatpush1.msra.mxu0 0.0
        %9165 = vmatprep.subr.mxu0 0.0
        %9166 = vmatpush1.msra.mxu0 0.0
        %9167 = vmatprep.subr.mxu0 0.0
        %9168 = vmatpush1.msra.mxu0 0.0
        %9169 = vmatprep.subr.mxu0 0.0
        %9170 = vmatpush1.msra.mxu0 0.0
        %9171 = vmatprep.subr.mxu0 0.0
        %9172 = vmatpush1.msra.mxu0 0.0
        %9173 = vmatprep.subr.mxu0 0.0
        %9174 = vmatpush1.msra.mxu0 0.0
        %9175 = vmatprep.subr.mxu0 0.0
        %9176 = vmatpush1.msra.mxu0 0.0
        %9177 = vmatprep.subr.mxu0 0.0
        %9178 = vmatpush1.msra.mxu0 0.0
        %9179 = vmatprep.subr.mxu0 0.0
        %9180 = vmatpush1.msra.mxu0 0.0
        %9181 = vmatprep.subr.mxu0 0.0
        %9182 = vmatpush1.msra.mxu0 0.0
        %9183 = vmatprep.subr.mxu0 0.0
        %9184 = vmatpush1.msra.mxu0 0.0
        %9185 = vmatprep.subr.mxu0 0.0
        %9186 = vmatpush1.msra.mxu0 0.0
        %9187 = vmatprep.mubr.f32.mxu0 0.0
        %9188 = vmatmul.mubr.f32.gmra.mrb[0].mxu0 %v9099
        %v9189 = vpop.f32.mrb[0].mxu0
        %v9190 = vadd.f32 0.0, %v9189
        %v9191 = vpop.f32.mrb[0].mxu0
        %9192 = vmatprep.mubr.f32.mxu0 0.0
        %9193 = vmatmul.mubr.f32.gmra.mrb[0].mxu0 %v9100
        %v9194 = vpop.f32.mrb[0].mxu0
        %v9195 = vadd.f32 0.0, %v9194
        %v9196 = vpop.f32.mrb[0].mxu0
        %9197 = vmatprep.mubr.f32.mxu0 0.0
        %9198 = vmatmul.mubr.f32.gmra.mrb[0].mxu0 %v9101
        %v9199 = vpop.f32.mrb[0].mxu0
        %v9200 = vadd.f32 0.0, %v9199
        %v9201 = vpop.f32.mrb[0].mxu0
        %9202 = vmatprep.mubr.f32.mxu0 0.0
        %9203 = vmatmul.mubr.f32.gmra.mrb[0].mxu0 %v9102
        %v9204 = vpop.f32.mrb[0].mxu0
        %v9205 = vadd.f32 0.0, %v9204
        %v9206 = vpop.f32.mrb[0].mxu0
        %9207 = vmatprep.mubr.f32.mxu0 0.0
        %9208 = vmatmul.mubr.f32.gmra.mrb[0].mxu0 %v9103
        %v9209 = vpop.f32.mrb[0].mxu0
        %v9210 = vadd.f32 0.0, %v9209
        %v9211 = vpop.f32.mrb[0].mxu0
        %9212 = vmatprep.mubr.f32.mxu0 0.0
        %9213 = vmatmul.mubr.f32.gmra.mrb[0].mxu0 %v9104
        %v9214 = vpop.f32.mrb[0].mxu0
        %v9215 = vadd.f32 0.0, %v9214
        %v9216 = vpop.f32.mrb[0].mxu0
        %9217 = vmatprep.mubr.f32.mxu0 0.0
        %9218 = vmatmul.mubr.f32.gmra.mrb[0].mxu0 %v9105
        %v9219 = vpop.f32.mrb[0].mxu0
        %v9220 = vadd.f32 0.0, %v9219
        %v9221 = vpop.f32.mrb[0].mxu0
        %9222 = vmatprep.mubr.f32.mxu0 0.0
        %9223 = vmatmul.mubr.f32.gmra.mrb[0].mxu0 %v9106
        %v9224 = vpop.f32.mrb[0].mxu0
        %v9225 = vadd.f32 0.0, %v9224
        %v9226 = vpop.f32.mrb[0].mxu0
        %9227 = vdwg.mxu0
        %9236 = vrot.lane.b32.xlu0 %v9190, 96
        %v9237 = vpop.permute.xlu0 %9236
        %9238 = vrot.lane.b32.xlu0 %v9195, 96
        %v9239 = vpop.permute.xlu0 %9238
        %9240 = vrot.lane.b32.xlu0 %v9200, 96
        %v9241 = vpop.permute.xlu0 %9240
        %9242 = vrot.lane.b32.xlu0 %v9205, 96
        %v9243 = vpop.permute.xlu0 %9242
        %9244 = vrot.lane.b32.xlu0 %v9210, 96
        %v9245 = vpop.permute.xlu0 %9244
        %9246 = vrot.lane.b32.xlu0 %v9215, 96
        %v9247 = vpop.permute.xlu0 %9246
        %9248 = vrot.lane.b32.xlu0 %v9220, 96
        %v9249 = vpop.permute.xlu0 %9248
        %9250 = vrot.lane.b32.xlu0 %v9225, 96
        %v9251 = vpop.permute.xlu0 %9250
        %9260 = vmatprep.subr.mxu0 0.0
        %9261 = vmatpush1.msra.mxu0 %v9237
        %9262 = vmatprep.subr.mxu0 0.0
        %9263 = vmatpush1.msra.mxu0 %v9239
        %9264 = vmatprep.subr.mxu0 0.0
        %9265 = vmatpush1.msra.mxu0 %v9241
        %9266 = vmatprep.subr.mxu0 0.0
        %9267 = vmatpush1.msra.mxu0 %v9243
        %9268 = vmatprep.subr.mxu0 0.0
        %9269 = vmatpush1.msra.mxu0 %v9245
        %9270 = vmatprep.subr.mxu0 0.0
        %9271 = vmatpush1.msra.mxu0 %v9247
        %9272 = vmatprep.subr.mxu0 0.0
        %9273 = vmatpush1.msra.mxu0 %v9249
        %9274 = vmatprep.subr.mxu0 0.0
        %9275 = vmatpush1.msra.mxu0 %v9251
        %9276 = vmatprep.subr.mxu0 0.0
        %9277 = vmatpush1.msra.mxu0 0.0
        %9278 = vmatprep.subr.mxu0 0.0
        %9279 = vmatpush1.msra.mxu0 0.0
        %9280 = vmatprep.subr.mxu0 0.0
        %9281 = vmatpush1.msra.mxu0 0.0
        %9282 = vmatprep.subr.mxu0 0.0
        %9283 = vmatpush1.msra.mxu0 0.0
        %9284 = vmatprep.subr.mxu0 0.0
        %9285 = vmatpush1.msra.mxu0 0.0
        %9286 = vmatprep.subr.mxu0 0.0
        %9287 = vmatpush1.msra.mxu0 0.0
        %9288 = vmatprep.subr.mxu0 0.0
        %9289 = vmatpush1.msra.mxu0 0.0
        %9290 = vmatprep.subr.mxu0 0.0
        %9291 = vmatpush1.msra.mxu0 0.0
        %9292 = vmatprep.subr.mxu0 0.0
        %9293 = vmatpush1.msra.mxu0 0.0
        %9294 = vmatprep.subr.mxu0 0.0
        %9295 = vmatpush1.msra.mxu0 0.0
        %9296 = vmatprep.subr.mxu0 0.0
        %9297 = vmatpush1.msra.mxu0 0.0
        %9298 = vmatprep.subr.mxu0 0.0
        %9299 = vmatpush1.msra.mxu0 0.0
        %9300 = vmatprep.subr.mxu0 0.0
        %9301 = vmatpush1.msra.mxu0 0.0
        %9302 = vmatprep.subr.mxu0 0.0
        %9303 = vmatpush1.msra.mxu0 0.0
        %9304 = vmatprep.subr.mxu0 0.0
        %9305 = vmatpush1.msra.mxu0 0.0
        %9306 = vmatprep.subr.mxu0 0.0
        %9307 = vmatpush1.msra.mxu0 0.0
        %9308 = vmatprep.subr.mxu0 0.0
        %9309 = vmatpush1.msra.mxu0 0.0
        %9310 = vmatprep.subr.mxu0 0.0
        %9311 = vmatpush1.msra.mxu0 0.0
        %9312 = vmatprep.subr.mxu0 0.0
        %9313 = vmatpush1.msra.mxu0 0.0
        %9314 = vmatprep.subr.mxu0 0.0
        %9315 = vmatpush1.msra.mxu0 0.0
        %9316 = vmatprep.subr.mxu0 0.0
        %9317 = vmatpush1.msra.mxu0 0.0
        %9318 = vmatprep.subr.mxu0 0.0
        %9319 = vmatpush1.msra.mxu0 0.0
        %9320 = vmatprep.subr.mxu0 0.0
        %9321 = vmatpush1.msra.mxu0 0.0
        %9322 = vmatprep.subr.mxu0 0.0
        %9323 = vmatpush1.msra.mxu0 0.0
        %9324 = vmatprep.mubr.f32.mxu0 0.0
        %9325 = vmatmul.mubr.f32.gmra.mrb[0].mxu0 %v3571
        %v9326 = vpop.f32.mrb[0].mxu0
        %v9327 = vadd.f32 0.0, %v9326
        %v9328 = vpop.f32.mrb[0].mxu0
        %9329 = vmatprep.mubr.f32.mxu0 0.0
        %9330 = vmatmul.mubr.f32.gmra.mrb[0].mxu0 %v3574
        %v9331 = vpop.f32.mrb[0].mxu0
        %v9332 = vadd.f32 0.0, %v9331
        %v9333 = vpop.f32.mrb[0].mxu0
        %9334 = vmatprep.mubr.f32.mxu0 0.0
        %9335 = vmatmul.mubr.f32.gmra.mrb[0].mxu0 %v3577
        %v9336 = vpop.f32.mrb[0].mxu0
        %v9337 = vadd.f32 0.0, %v9336
        %v9338 = vpop.f32.mrb[0].mxu0
        %9339 = vmatprep.mubr.f32.mxu0 0.0
        %9340 = vmatmul.mubr.f32.gmra.mrb[0].mxu0 %v3580
        %v9341 = vpop.f32.mrb[0].mxu0
        %v9342 = vadd.f32 0.0, %v9341
        %v9343 = vpop.f32.mrb[0].mxu0
        %9344 = vmatprep.mubr.f32.mxu0 0.0
        %9345 = vmatmul.mubr.f32.gmra.mrb[0].mxu0 %v3583
        %v9346 = vpop.f32.mrb[0].mxu0
        %v9347 = vadd.f32 0.0, %v9346
        %v9348 = vpop.f32.mrb[0].mxu0
        %9349 = vmatprep.mubr.f32.mxu0 0.0
        %9350 = vmatmul.mubr.f32.gmra.mrb[0].mxu0 %v3586
        %v9351 = vpop.f32.mrb[0].mxu0
        %v9352 = vadd.f32 0.0, %v9351
        %v9353 = vpop.f32.mrb[0].mxu0
        %9354 = vmatprep.mubr.f32.mxu0 0.0
        %9355 = vmatmul.mubr.f32.gmra.mrb[0].mxu0 %v3589
        %v9356 = vpop.f32.mrb[0].mxu0
        %v9357 = vadd.f32 0.0, %v9356
        %v9358 = vpop.f32.mrb[0].mxu0
        %9359 = vmatprep.mubr.f32.mxu0 0.0
        %9360 = vmatmul.mubr.f32.gmra.mrb[0].mxu0 %v3592
        %v9361 = vpop.f32.mrb[0].mxu0
        %v9362 = vadd.f32 0.0, %v9361
        %v9363 = vpop.f32.mrb[0].mxu0
        %9364 = vdwg.mxu0
        %9373 = vrot.lane.b32.xlu0 %v9327, 32
        %v9374 = vpop.permute.xlu0 %9373
        %9375 = vrot.lane.b32.xlu0 %v9332, 32
        %v9376 = vpop.permute.xlu0 %9375
        %9377 = vrot.lane.b32.xlu0 %v9337, 32
        %v9378 = vpop.permute.xlu0 %9377
        %9379 = vrot.lane.b32.xlu0 %v9342, 32
        %v9380 = vpop.permute.xlu0 %9379
        %9381 = vrot.lane.b32.xlu0 %v9347, 32
        %v9382 = vpop.permute.xlu0 %9381
        %9383 = vrot.lane.b32.xlu0 %v9352, 32
        %v9384 = vpop.permute.xlu0 %9383
        %9385 = vrot.lane.b32.xlu0 %v9357, 32
        %v9386 = vpop.permute.xlu0 %9385
        %9387 = vrot.lane.b32.xlu0 %v9362, 32
        %v9388 = vpop.permute.xlu0 %9387
        %v9397 = vsel %vm987, %v9190, %v9374
        %v9398 = vsel %vm987, %v9195, %v9376
        %v9399 = vsel %vm987, %v9200, %v9378
        %v9400 = vsel %vm987, %v9205, %v9380
        %v9401 = vsel %vm987, %v9210, %v9382
        %v9402 = vsel %vm987, %v9215, %v9384
        %v9403 = vsel %vm987, %v9220, %v9386
        %v9404 = vsel %vm987, %v9225, %v9388
        %v9405 = vld [vmem:[%s18] sm:$0xff]
        %v9406 = vld [vmem:[%s18 + $0x8] sm:$0xff]
        %v9407 = vld [vmem:[%s18 + $0x10] sm:$0xff]
        %v9408 = vld [vmem:[%s18 + $0x18] sm:$0xff]
        %v9409 = vld [vmem:[%s18 + $0x20] sm:$0xff]
        %v9410 = vld [vmem:[%s18 + $0x28] sm:$0xff]
        %v9411 = vld [vmem:[%s18 + $0x30] sm:$0xff]
        %v9412 = vld [vmem:[%s18 + $0x38] sm:$0xff]
        %v9413 = vld [vmem:[%s19] sm:$0x1]
        %v9415 = vlaneseq
        %v9416 = vshrl.u32 %v9415, 7
        %v9417 = vsub.s32 0, %v9416
        %v9418 = vrot.slane %v9413, %v9417
        %v9421 = vsel %vm996, %v9397, 0
        %v9424 = vsel %vm996, %v9398, 0
        %v9427 = vsel %vm996, %v9399, 0
        %v9430 = vsel %vm996, %v9400, 0
        %v9433 = vsel %vm996, %v9401, 0
        %v9436 = vsel %vm996, %v9402, 0
        %v9439 = vsel %vm996, %v9403, 0
        %v9442 = vsel %vm996, %v9404, 0
        %9444 = vmatprep.subr.mxu0 0.0
        %9445 = vmatpush1.msra.mxu0 %v9405
        %9446 = vmatprep.subr.mxu0 0.0
        %9447 = vmatpush1.msra.mxu0 %v9406
        %9448 = vmatprep.subr.mxu0 0.0
        %9449 = vmatpush1.msra.mxu0 %v9407
        %9450 = vmatprep.subr.mxu0 0.0
        %9451 = vmatpush1.msra.mxu0 %v9408
        %9452 = vmatprep.subr.mxu0 0.0
        %9453 = vmatpush1.msra.mxu0 %v9409
        %9454 = vmatprep.subr.mxu0 0.0
        %9455 = vmatpush1.msra.mxu0 %v9410
        %9456 = vmatprep.subr.mxu0 0.0
        %9457 = vmatpush1.msra.mxu0 %v9411
        %9458 = vmatprep.subr.mxu0 0.0
        %9459 = vmatpush1.msra.mxu0 %v9412
        %9460 = vmatprep.subr.mxu0 0.0
        %9461 = vmatpush1.msra.mxu0 0.0
        %9462 = vmatprep.subr.mxu0 0.0
        %9463 = vmatpush1.msra.mxu0 0.0
        %9464 = vmatprep.subr.mxu0 0.0
        %9465 = vmatpush1.msra.mxu0 0.0
        %9466 = vmatprep.subr.mxu0 0.0
        %9467 = vmatpush1.msra.mxu0 0.0
        %9468 = vmatprep.subr.mxu0 0.0
        %9469 = vmatpush1.msra.mxu0 0.0
        %9470 = vmatprep.subr.mxu0 0.0
        %9471 = vmatpush1.msra.mxu0 0.0
        %9472 = vmatprep.subr.mxu0 0.0
        %9473 = vmatpush1.msra.mxu0 0.0
        %9474 = vmatprep.subr.mxu0 0.0
        %9475 = vmatpush1.msra.mxu0 0.0
        %9476 = vmatprep.subr.mxu0 0.0
        %9477 = vmatpush1.msra.mxu0 0.0
        %9478 = vmatprep.subr.mxu0 0.0
        %9479 = vmatpush1.msra.mxu0 0.0
        %9480 = vmatprep.subr.mxu0 0.0
        %9481 = vmatpush1.msra.mxu0 0.0
        %9482 = vmatprep.subr.mxu0 0.0
        %9483 = vmatpush1.msra.mxu0 0.0
        %9484 = vmatprep.subr.mxu0 0.0
        %9485 = vmatpush1.msra.mxu0 0.0
        %9486 = vmatprep.subr.mxu0 0.0
        %9487 = vmatpush1.msra.mxu0 0.0
        %9488 = vmatprep.subr.mxu0 0.0
        %9489 = vmatpush1.msra.mxu0 0.0
        %9490 = vmatprep.subr.mxu0 0.0
        %9491 = vmatpush1.msra.mxu0 0.0
        %9492 = vmatprep.subr.mxu0 0.0
        %9493 = vmatpush1.msra.mxu0 0.0
        %9494 = vmatprep.subr.mxu0 0.0
        %9495 = vmatpush1.msra.mxu0 0.0
        %9496 = vmatprep.subr.mxu0 0.0
        %9497 = vmatpush1.msra.mxu0 0.0
        %9498 = vmatprep.subr.mxu0 0.0
        %9499 = vmatpush1.msra.mxu0 0.0
        %9500 = vmatprep.subr.mxu0 0.0
        %9501 = vmatpush1.msra.mxu0 0.0
        %9502 = vmatprep.subr.mxu0 0.0
        %9503 = vmatpush1.msra.mxu0 0.0
        %9504 = vmatprep.subr.mxu0 0.0
        %9505 = vmatpush1.msra.mxu0 0.0
        %9506 = vmatprep.subr.mxu0 0.0
        %9507 = vmatpush1.msra.mxu0 0.0
        %9508 = vmatprep.mubr.f32.mxu0 0.0
        %9509 = vmatmul.mubr.f32.gmra.mrb[0].mxu0 %v9421
        %v9510 = vpop.f32.mrb[0].mxu0
        %v9511 = vadd.f32 %v9418, %v9510
        %v9512 = vpop.f32.mrb[0].mxu0
        %9513 = vmatprep.mubr.f32.mxu0 0.0
        %9514 = vmatmul.mubr.f32.gmra.mrb[0].mxu0 %v9424
        %v9515 = vpop.f32.mrb[0].mxu0
        %v9516 = vadd.f32 %v9418, %v9515
        %v9517 = vpop.f32.mrb[0].mxu0
        %9518 = vmatprep.mubr.f32.mxu0 0.0
        %9519 = vmatmul.mubr.f32.gmra.mrb[0].mxu0 %v9427
        %v9520 = vpop.f32.mrb[0].mxu0
        %v9521 = vadd.f32 %v9418, %v9520
        %v9522 = vpop.f32.mrb[0].mxu0
        %9523 = vmatprep.mubr.f32.mxu0 0.0
        %9524 = vmatmul.mubr.f32.gmra.mrb[0].mxu0 %v9430
        %v9525 = vpop.f32.mrb[0].mxu0
        %v9526 = vadd.f32 %v9418, %v9525
        %v9527 = vpop.f32.mrb[0].mxu0
        %9528 = vmatprep.mubr.f32.mxu0 0.0
        %9529 = vmatmul.mubr.f32.gmra.mrb[0].mxu0 %v9433
        %v9530 = vpop.f32.mrb[0].mxu0
        %v9531 = vadd.f32 %v9418, %v9530
        %v9532 = vpop.f32.mrb[0].mxu0
        %9533 = vmatprep.mubr.f32.mxu0 0.0
        %9534 = vmatmul.mubr.f32.gmra.mrb[0].mxu0 %v9436
        %v9535 = vpop.f32.mrb[0].mxu0
        %v9536 = vadd.f32 %v9418, %v9535
        %v9537 = vpop.f32.mrb[0].mxu0
        %9538 = vmatprep.mubr.f32.mxu0 0.0
        %9539 = vmatmul.mubr.f32.gmra.mrb[0].mxu0 %v9439
        %v9540 = vpop.f32.mrb[0].mxu0
        %v9541 = vadd.f32 %v9418, %v9540
        %v9542 = vpop.f32.mrb[0].mxu0
        %9543 = vmatprep.mubr.f32.mxu0 0.0
        %9544 = vmatmul.mubr.f32.gmra.mrb[0].mxu0 %v9442
        %v9545 = vpop.f32.mrb[0].mxu0
        %v9546 = vadd.f32 %v9418, %v9545
        %v9547 = vpop.f32.mrb[0].mxu0
        %9548 = vdwg.mxu0
        %v9549 = vsub.f32 0.0, %v9511
        %v9550 = vsub.f32 0.0, %v9516
        %v9551 = vsub.f32 0.0, %v9521
        %v9552 = vsub.f32 0.0, %v9526
        %v9553 = vsub.f32 0.0, %v9531
        %v9554 = vsub.f32 0.0, %v9536
        %v9555 = vsub.f32 0.0, %v9541
        %v9556 = vsub.f32 0.0, %v9546
        %v9557 = vmul.f32 %v9549, 1.442695
        %v9558 = vpow.pop %v9557
        %v9559 = vmul.f32 %v9550, 1.442695
        %v9560 = vpow.pop %v9559
        %v9561 = vmul.f32 %v9551, 1.442695
        %v9562 = vpow.pop %v9561
        %v9563 = vmul.f32 %v9552, 1.442695
        %v9564 = vpow.pop %v9563
        %v9565 = vmul.f32 %v9553, 1.442695
        %v9566 = vpow.pop %v9565
        %v9567 = vmul.f32 %v9554, 1.442695
        %v9568 = vpow.pop %v9567
        %v9569 = vmul.f32 %v9555, 1.442695
        %v9570 = vpow.pop %v9569
        %v9571 = vmul.f32 %v9556, 1.442695
        %v9572 = vpow.pop %v9571
        %v9573 = vadd.f32 %v9558, 1.0
        %v9574 = vadd.f32 %v9560, 1.0
        %v9575 = vadd.f32 %v9562, 1.0
        %v9576 = vadd.f32 %v9564, 1.0
        %v9577 = vadd.f32 %v9566, 1.0
        %v9578 = vadd.f32 %v9568, 1.0
        %v9579 = vadd.f32 %v9570, 1.0
        %v9580 = vadd.f32 %v9572, 1.0
        %v9581 = vrcp.pop %v9573
        %v9582 = vrcp.pop %v9574
        %v9583 = vrcp.pop %v9575
        %v9584 = vrcp.pop %v9576
        %v9585 = vrcp.pop %v9577
        %v9586 = vrcp.pop %v9578
        %v9587 = vrcp.pop %v9579
        %v9588 = vrcp.pop %v9580
        %v9589 = vmul.f32 %v9511, %v9581
        %v9590 = vmul.f32 %v9516, %v9582
        %v9591 = vmul.f32 %v9521, %v9583
        %v9592 = vmul.f32 %v9526, %v9584
        %v9593 = vmul.f32 %v9531, %v9585
        %v9594 = vmul.f32 %v9536, %v9586
        %v9595 = vmul.f32 %v9541, %v9587
        %v9596 = vmul.f32 %v9546, %v9588
        %v9597 = vmul.f32 %v9589, %v9397
        %v9598 = vmul.f32 %v9590, %v9398
        %v9599 = vmul.f32 %v9591, %v9399
        %v9600 = vmul.f32 %v9592, %v9400
        %v9601 = vmul.f32 %v9593, %v9401
        %v9602 = vmul.f32 %v9594, %v9402
        %v9603 = vmul.f32 %v9595, %v9403
        %v9604 = vmul.f32 %v9596, %v9404
        %v9605 = vld [vmem:[%s20] sm:$0xff]
        %v9606 = vld [vmem:[%s20 + $0x8] sm:$0xff]
        %v9607 = vld [vmem:[%s20 + $0x10] sm:$0xff]
        %v9608 = vld [vmem:[%s20 + $0x18] sm:$0xff]
        %v9609 = vld [vmem:[%s20 + $0x20] sm:$0xff]
        %v9610 = vld [vmem:[%s20 + $0x28] sm:$0xff]
        %v9611 = vld [vmem:[%s20 + $0x30] sm:$0xff]
        %v9612 = vld [vmem:[%s20 + $0x38] sm:$0xff]
        %9613 = vmatprep.subr.mxu0 0.0
        %9614 = vmatpush1.msra.mxu0 %v9605
        %9615 = vmatprep.subr.mxu0 0.0
        %9616 = vmatpush1.msra.mxu0 %v9606
        %9617 = vmatprep.subr.mxu0 0.0
        %9618 = vmatpush1.msra.mxu0 %v9607
        %9619 = vmatprep.subr.mxu0 0.0
        %9620 = vmatpush1.msra.mxu0 %v9608
        %9621 = vmatprep.subr.mxu0 0.0
        %9622 = vmatpush1.msra.mxu0 %v9609
        %9623 = vmatprep.subr.mxu0 0.0
        %9624 = vmatpush1.msra.mxu0 %v9610
        %9625 = vmatprep.subr.mxu0 0.0
        %9626 = vmatpush1.msra.mxu0 %v9611
        %9627 = vmatprep.subr.mxu0 0.0
        %9628 = vmatpush1.msra.mxu0 %v9612
        %9629 = vmatprep.subr.mxu0 0.0
        %9630 = vmatpush1.msra.mxu0 0.0
        %9631 = vmatprep.subr.mxu0 0.0
        %9632 = vmatpush1.msra.mxu0 0.0
        %9633 = vmatprep.subr.mxu0 0.0
        %9634 = vmatpush1.msra.mxu0 0.0
        %9635 = vmatprep.subr.mxu0 0.0
        %9636 = vmatpush1.msra.mxu0 0.0
        %9637 = vmatprep.subr.mxu0 0.0
        %9638 = vmatpush1.msra.mxu0 0.0
        %9639 = vmatprep.subr.mxu0 0.0
        %9640 = vmatpush1.msra.mxu0 0.0
        %9641 = vmatprep.subr.mxu0 0.0
        %9642 = vmatpush1.msra.mxu0 0.0
        %9643 = vmatprep.subr.mxu0 0.0
        %9644 = vmatpush1.msra.mxu0 0.0
        %9645 = vmatprep.subr.mxu0 0.0
        %9646 = vmatpush1.msra.mxu0 0.0
        %9647 = vmatprep.subr.mxu0 0.0
        %9648 = vmatpush1.msra.mxu0 0.0
        %9649 = vmatprep.subr.mxu0 0.0
        %9650 = vmatpush1.msra.mxu0 0.0
        %9651 = vmatprep.subr.mxu0 0.0
        %9652 = vmatpush1.msra.mxu0 0.0
        %9653 = vmatprep.subr.mxu0 0.0
        %9654 = vmatpush1.msra.mxu0 0.0
        %9655 = vmatprep.subr.mxu0 0.0
        %9656 = vmatpush1.msra.mxu0 0.0
        %9657 = vmatprep.subr.mxu0 0.0
        %9658 = vmatpush1.msra.mxu0 0.0
        %9659 = vmatprep.subr.mxu0 0.0
        %9660 = vmatpush1.msra.mxu0 0.0
        %9661 = vmatprep.subr.mxu0 0.0
        %9662 = vmatpush1.msra.mxu0 0.0
        %9663 = vmatprep.subr.mxu0 0.0
        %9664 = vmatpush1.msra.mxu0 0.0
        %9665 = vmatprep.subr.mxu0 0.0
        %9666 = vmatpush1.msra.mxu0 0.0
        %9667 = vmatprep.subr.mxu0 0.0
        %9668 = vmatpush1.msra.mxu0 0.0
        %9669 = vmatprep.subr.mxu0 0.0
        %9670 = vmatpush1.msra.mxu0 0.0
        %9671 = vmatprep.subr.mxu0 0.0
        %9672 = vmatpush1.msra.mxu0 0.0
        %9673 = vmatprep.subr.mxu0 0.0
        %9674 = vmatpush1.msra.mxu0 0.0
        %9675 = vmatprep.subr.mxu0 0.0
        %9676 = vmatpush1.msra.mxu0 0.0
        %9677 = vmatprep.mubr.f32.mxu0 0.0
        %9678 = vmatmul.mubr.f32.gmra.mrb[0].mxu0 %v9421
        %v9679 = vpop.f32.mrb[0].mxu0
        %v9680 = vadd.f32 %v9597, %v9679
        %v9681 = vpop.f32.mrb[0].mxu0
        %9682 = vmatprep.mubr.f32.mxu0 0.0
        %9683 = vmatmul.mubr.f32.gmra.mrb[0].mxu0 %v9424
        %v9684 = vpop.f32.mrb[0].mxu0
        %v9685 = vadd.f32 %v9598, %v9684
        %v9686 = vpop.f32.mrb[0].mxu0
        %9687 = vmatprep.mubr.f32.mxu0 0.0
        %9688 = vmatmul.mubr.f32.gmra.mrb[0].mxu0 %v9427
        %v9689 = vpop.f32.mrb[0].mxu0
        %v9690 = vadd.f32 %v9599, %v9689
        %v9691 = vpop.f32.mrb[0].mxu0
        %9692 = vmatprep.mubr.f32.mxu0 0.0
        %9693 = vmatmul.mubr.f32.gmra.mrb[0].mxu0 %v9430
        %v9694 = vpop.f32.mrb[0].mxu0
        %v9695 = vadd.f32 %v9600, %v9694
        %v9696 = vpop.f32.mrb[0].mxu0
        %9697 = vmatprep.mubr.f32.mxu0 0.0
        %9698 = vmatmul.mubr.f32.gmra.mrb[0].mxu0 %v9433
        %v9699 = vpop.f32.mrb[0].mxu0
        %v9700 = vadd.f32 %v9601, %v9699
        %v9701 = vpop.f32.mrb[0].mxu0
        %9702 = vmatprep.mubr.f32.mxu0 0.0
        %9703 = vmatmul.mubr.f32.gmra.mrb[0].mxu0 %v9436
        %v9704 = vpop.f32.mrb[0].mxu0
        %v9705 = vadd.f32 %v9602, %v9704
        %v9706 = vpop.f32.mrb[0].mxu0
        %9707 = vmatprep.mubr.f32.mxu0 0.0
        %9708 = vmatmul.mubr.f32.gmra.mrb[0].mxu0 %v9439
        %v9709 = vpop.f32.mrb[0].mxu0
        %v9710 = vadd.f32 %v9603, %v9709
        %v9711 = vpop.f32.mrb[0].mxu0
        %9712 = vmatprep.mubr.f32.mxu0 0.0
        %9713 = vmatmul.mubr.f32.gmra.mrb[0].mxu0 %v9442
        %v9714 = vpop.f32.mrb[0].mxu0
        %v9715 = vadd.f32 %v9604, %v9714
        %v9716 = vpop.f32.mrb[0].mxu0
        %9717 = vdwg.mxu0
        %v9718 = vsel %vm996, %v9680, 0.0
        %9719 = vadd.xlane.f32.xlu0 %v9718
        %v9720 = vpop.xlane.xlu0 %9719
        %v9721 = vsel %vm996, %v9685, 0.0
        %9722 = vadd.xlane.f32.xlu0 %v9721
        %v9723 = vpop.xlane.xlu0 %9722
        %v9724 = vsel %vm996, %v9690, 0.0
        %9725 = vadd.xlane.f32.xlu0 %v9724
        %v9726 = vpop.xlane.xlu0 %9725
        %v9727 = vsel %vm996, %v9695, 0.0
        %9728 = vadd.xlane.f32.xlu0 %v9727
        %v9729 = vpop.xlane.xlu0 %9728
        %v9730 = vsel %vm996, %v9700, 0.0
        %9731 = vadd.xlane.f32.xlu0 %v9730
        %v9732 = vpop.xlane.xlu0 %9731
        %v9733 = vsel %vm996, %v9705, 0.0
        %9734 = vadd.xlane.f32.xlu0 %v9733
        %v9735 = vpop.xlane.xlu0 %9734
        %v9736 = vsel %vm996, %v9710, 0.0
        %9737 = vadd.xlane.f32.xlu0 %v9736
        %v9738 = vpop.xlane.xlu0 %9737
        %v9739 = vsel %vm996, %v9715, 0.0
        %9740 = vadd.xlane.f32.xlu0 %v9739
        %v9741 = vpop.xlane.xlu0 %9740
        %v9742 = vrcp.pop 64.0
        %v9743 = vmul.f32 %v9720, %v9742
        %v9744 = vmul.f32 %v9723, %v9742
        %v9745 = vmul.f32 %v9726, %v9742
        %v9746 = vmul.f32 %v9729, %v9742
        %v9747 = vmul.f32 %v9732, %v9742
        %v9748 = vmul.f32 %v9735, %v9742
        %v9749 = vmul.f32 %v9738, %v9742
        %v9750 = vmul.f32 %v9741, %v9742
        %v9751 = vsub.f32 %v9680, %v9743
        %v9752 = vsub.f32 %v9685, %v9744
        %v9753 = vsub.f32 %v9690, %v9745
        %v9754 = vsub.f32 %v9695, %v9746
        %v9755 = vsub.f32 %v9700, %v9747
        %v9756 = vsub.f32 %v9705, %v9748
        %v9757 = vsub.f32 %v9710, %v9749
        %v9758 = vsub.f32 %v9715, %v9750
        %v9759 = vmul.f32 %v9751, %v9751
        %v9760 = vmul.f32 %v9752, %v9752
        %v9761 = vmul.f32 %v9753, %v9753
        %v9762 = vmul.f32 %v9754, %v9754
        %v9763 = vmul.f32 %v9755, %v9755
        %v9764 = vmul.f32 %v9756, %v9756
        %v9765 = vmul.f32 %v9757, %v9757
        %v9766 = vmul.f32 %v9758, %v9758
        %v9767 = vsel %vm996, %v9759, 0.0
        %9768 = vadd.xlane.f32.xlu0 %v9767
        %v9769 = vpop.xlane.xlu0 %9768
        %v9770 = vsel %vm996, %v9760, 0.0
        %9771 = vadd.xlane.f32.xlu0 %v9770
        %v9772 = vpop.xlane.xlu0 %9771
        %v9773 = vsel %vm996, %v9761, 0.0
        %9774 = vadd.xlane.f32.xlu0 %v9773
        %v9775 = vpop.xlane.xlu0 %9774
        %v9776 = vsel %vm996, %v9762, 0.0
        %9777 = vadd.xlane.f32.xlu0 %v9776
        %v9778 = vpop.xlane.xlu0 %9777
        %v9779 = vsel %vm996, %v9763, 0.0
        %9780 = vadd.xlane.f32.xlu0 %v9779
        %v9781 = vpop.xlane.xlu0 %9780
        %v9782 = vsel %vm996, %v9764, 0.0
        %9783 = vadd.xlane.f32.xlu0 %v9782
        %v9784 = vpop.xlane.xlu0 %9783
        %v9785 = vsel %vm996, %v9765, 0.0
        %9786 = vadd.xlane.f32.xlu0 %v9785
        %v9787 = vpop.xlane.xlu0 %9786
        %v9788 = vsel %vm996, %v9766, 0.0
        %9789 = vadd.xlane.f32.xlu0 %v9788
        %v9790 = vpop.xlane.xlu0 %9789
        %v9791 = vmul.f32 %v9769, %v9742
        %v9792 = vmul.f32 %v9772, %v9742
        %v9793 = vmul.f32 %v9775, %v9742
        %v9794 = vmul.f32 %v9778, %v9742
        %v9795 = vmul.f32 %v9781, %v9742
        %v9796 = vmul.f32 %v9784, %v9742
        %v9797 = vmul.f32 %v9787, %v9742
        %v9798 = vmul.f32 %v9790, %v9742
        %v9799 = vadd.f32 %v9791, 1e-05
        %v9800 = vadd.f32 %v9792, 1e-05
        %v9801 = vadd.f32 %v9793, 1e-05
        %v9802 = vadd.f32 %v9794, 1e-05
        %v9803 = vadd.f32 %v9795, 1e-05
        %v9804 = vadd.f32 %v9796, 1e-05
        %v9805 = vadd.f32 %v9797, 1e-05
        %v9806 = vadd.f32 %v9798, 1e-05
        %v9807 = vrsqrt.pop %v9799
        %v9808 = vrsqrt.pop %v9800
        %v9809 = vrsqrt.pop %v9801
        %v9810 = vrsqrt.pop %v9802
        %v9811 = vrsqrt.pop %v9803
        %v9812 = vrsqrt.pop %v9804
        %v9813 = vrsqrt.pop %v9805
        %v9814 = vrsqrt.pop %v9806
        %v9815 = vmul.f32 %v9751, %v9807
        %v9816 = vmul.f32 %v9752, %v9808
        %v9817 = vmul.f32 %v9753, %v9809
        %v9818 = vmul.f32 %v9754, %v9810
        %v9819 = vmul.f32 %v9755, %v9811
        %v9820 = vmul.f32 %v9756, %v9812
        %v9821 = vmul.f32 %v9757, %v9813
        %v9822 = vmul.f32 %v9758, %v9814
        %v9823 = vld [vmem:[%s21] sm:$0x1]
        %v9825 = vlaneseq
        %v9826 = vshrl.u32 %v9825, 7
        %v9827 = vsub.s32 0, %v9826
        %v9828 = vrot.slane %v9823, %v9827
        %v9830 = vmul.f32 %v9815, %v9828
        %v9831 = vmul.f32 %v9816, %v9828
        %v9832 = vmul.f32 %v9817, %v9828
        %v9833 = vmul.f32 %v9818, %v9828
        %v9834 = vmul.f32 %v9819, %v9828
        %v9835 = vmul.f32 %v9820, %v9828
        %v9836 = vmul.f32 %v9821, %v9828
        %v9837 = vmul.f32 %v9822, %v9828
        %v9838 = vld [vmem:[%s22] sm:$0x1]
        %v9840 = vlaneseq
        %v9841 = vshrl.u32 %v9840, 7
        %v9842 = vsub.s32 0, %v9841
        %v9843 = vrot.slane %v9838, %v9842
        %v9845 = vadd.f32 %v9830, %v9843
        %v9846 = vadd.f32 %v9831, %v9843
        %v9847 = vadd.f32 %v9832, %v9843
        %v9848 = vadd.f32 %v9833, %v9843
        %v9849 = vadd.f32 %v9834, %v9843
        %v9850 = vadd.f32 %v9835, %v9843
        %v9851 = vadd.f32 %v9836, %v9843
        %v9852 = vadd.f32 %v9837, %v9843
        %v9853 = vld [vmem:[%s23] sm:$0xff]
        %v9854 = vld [vmem:[%s23 + $0x8] sm:$0xff]
        %v9855 = vld [vmem:[%s23 + $0x10] sm:$0xff]
        %v9856 = vld [vmem:[%s23 + $0x18] sm:$0xff]
        %v9857 = vld [vmem:[%s23 + $0x20] sm:$0xff]
        %v9858 = vld [vmem:[%s23 + $0x28] sm:$0xff]
        %v9859 = vld [vmem:[%s23 + $0x30] sm:$0xff]
        %v9860 = vld [vmem:[%s23 + $0x38] sm:$0xff]
        %v9862 = vsel %vm996, %v9845, 0
        %v9865 = vsel %vm996, %v9846, 0
        %v9868 = vsel %vm996, %v9847, 0
        %v9871 = vsel %vm996, %v9848, 0
        %v9874 = vsel %vm996, %v9849, 0
        %v9877 = vsel %vm996, %v9850, 0
        %v9880 = vsel %vm996, %v9851, 0
        %v9883 = vsel %vm996, %v9852, 0
        %9885 = vmatprep.subr.mxu0 0.0
        %9886 = vmatpush1.msra.mxu0 %v9853
        %9887 = vmatprep.subr.mxu0 0.0
        %9888 = vmatpush1.msra.mxu0 %v9854
        %9889 = vmatprep.subr.mxu0 0.0
        %9890 = vmatpush1.msra.mxu0 %v9855
        %9891 = vmatprep.subr.mxu0 0.0
        %9892 = vmatpush1.msra.mxu0 %v9856
        %9893 = vmatprep.subr.mxu0 0.0
        %9894 = vmatpush1.msra.mxu0 %v9857
        %9895 = vmatprep.subr.mxu0 0.0
        %9896 = vmatpush1.msra.mxu0 %v9858
        %9897 = vmatprep.subr.mxu0 0.0
        %9898 = vmatpush1.msra.mxu0 %v9859
        %9899 = vmatprep.subr.mxu0 0.0
        %9900 = vmatpush1.msra.mxu0 %v9860
        %9901 = vmatprep.subr.mxu0 0.0
        %9902 = vmatpush1.msra.mxu0 0.0
        %9903 = vmatprep.subr.mxu0 0.0
        %9904 = vmatpush1.msra.mxu0 0.0
        %9905 = vmatprep.subr.mxu0 0.0
        %9906 = vmatpush1.msra.mxu0 0.0
        %9907 = vmatprep.subr.mxu0 0.0
        %9908 = vmatpush1.msra.mxu0 0.0
        %9909 = vmatprep.subr.mxu0 0.0
        %9910 = vmatpush1.msra.mxu0 0.0
        %9911 = vmatprep.subr.mxu0 0.0
        %9912 = vmatpush1.msra.mxu0 0.0
        %9913 = vmatprep.subr.mxu0 0.0
        %9914 = vmatpush1.msra.mxu0 0.0
        %9915 = vmatprep.subr.mxu0 0.0
        %9916 = vmatpush1.msra.mxu0 0.0
        %9917 = vmatprep.subr.mxu0 0.0
        %9918 = vmatpush1.msra.mxu0 0.0
        %9919 = vmatprep.subr.mxu0 0.0
        %9920 = vmatpush1.msra.mxu0 0.0
        %9921 = vmatprep.subr.mxu0 0.0
        %9922 = vmatpush1.msra.mxu0 0.0
        %9923 = vmatprep.subr.mxu0 0.0
        %9924 = vmatpush1.msra.mxu0 0.0
        %9925 = vmatprep.subr.mxu0 0.0
        %9926 = vmatpush1.msra.mxu0 0.0
        %9927 = vmatprep.subr.mxu0 0.0
        %9928 = vmatpush1.msra.mxu0 0.0
        %9929 = vmatprep.subr.mxu0 0.0
        %9930 = vmatpush1.msra.mxu0 0.0
        %9931 = vmatprep.subr.mxu0 0.0
        %9932 = vmatpush1.msra.mxu0 0.0
        %9933 = vmatprep.subr.mxu0 0.0
        %9934 = vmatpush1.msra.mxu0 0.0
        %9935 = vmatprep.subr.mxu0 0.0
        %9936 = vmatpush1.msra.mxu0 0.0
        %9937 = vmatprep.subr.mxu0 0.0
        %9938 = vmatpush1.msra.mxu0 0.0
        %9939 = vmatprep.subr.mxu0 0.0
        %9940 = vmatpush1.msra.mxu0 0.0
        %9941 = vmatprep.subr.mxu0 0.0
        %9942 = vmatpush1.msra.mxu0 0.0
        %9943 = vmatprep.subr.mxu0 0.0
        %9944 = vmatpush1.msra.mxu0 0.0
        %9945 = vmatprep.subr.mxu0 0.0
        %9946 = vmatpush1.msra.mxu0 0.0
        %9947 = vmatprep.subr.mxu0 0.0
        %9948 = vmatpush1.msra.mxu0 0.0
        %9949 = vmatprep.mubr.f32.mxu0 0.0
        %9950 = vmatmul.mubr.f32.gmra.mrb[0].mxu0 %v9862
        %v9951 = vpop.f32.mrb[0].mxu0
        %v9952 = vadd.f32 0.0, %v9951
        %v9953 = vpop.f32.mrb[0].mxu0
        %9954 = vmatprep.mubr.f32.mxu0 0.0
        %9955 = vmatmul.mubr.f32.gmra.mrb[0].mxu0 %v9865
        %v9956 = vpop.f32.mrb[0].mxu0
        %v9957 = vadd.f32 0.0, %v9956
        %v9958 = vpop.f32.mrb[0].mxu0
        %9959 = vmatprep.mubr.f32.mxu0 0.0
        %9960 = vmatmul.mubr.f32.gmra.mrb[0].mxu0 %v9868
        %v9961 = vpop.f32.mrb[0].mxu0
        %v9962 = vadd.f32 0.0, %v9961
        %v9963 = vpop.f32.mrb[0].mxu0
        %9964 = vmatprep.mubr.f32.mxu0 0.0
        %9965 = vmatmul.mubr.f32.gmra.mrb[0].mxu0 %v9871
        %v9966 = vpop.f32.mrb[0].mxu0
        %v9967 = vadd.f32 0.0, %v9966
        %v9968 = vpop.f32.mrb[0].mxu0
        %9969 = vmatprep.mubr.f32.mxu0 0.0
        %9970 = vmatmul.mubr.f32.gmra.mrb[0].mxu0 %v9874
        %v9971 = vpop.f32.mrb[0].mxu0
        %v9972 = vadd.f32 0.0, %v9971
        %v9973 = vpop.f32.mrb[0].mxu0
        %9974 = vmatprep.mubr.f32.mxu0 0.0
        %9975 = vmatmul.mubr.f32.gmra.mrb[0].mxu0 %v9877
        %v9976 = vpop.f32.mrb[0].mxu0
        %v9977 = vadd.f32 0.0, %v9976
        %v9978 = vpop.f32.mrb[0].mxu0
        %9979 = vmatprep.mubr.f32.mxu0 0.0
        %9980 = vmatmul.mubr.f32.gmra.mrb[0].mxu0 %v9880
        %v9981 = vpop.f32.mrb[0].mxu0
        %v9982 = vadd.f32 0.0, %v9981
        %v9983 = vpop.f32.mrb[0].mxu0
        %9984 = vmatprep.mubr.f32.mxu0 0.0
        %9985 = vmatmul.mubr.f32.gmra.mrb[0].mxu0 %v9883
        %v9986 = vpop.f32.mrb[0].mxu0
        %v9987 = vadd.f32 0.0, %v9986
        %v9988 = vpop.f32.mrb[0].mxu0
        %9989 = vdwg.mxu0
        %v9990 = vmul.f32 %v9952, %v1529
        %v9991 = vmul.f32 %v9957, %v1534
        %v9992 = vmul.f32 %v9962, %v1539
        %v9993 = vmul.f32 %v9967, %v1544
        %v9994 = vmul.f32 %v9972, %v1549
        %v9995 = vmul.f32 %v9977, %v1554
        %v9996 = vmul.f32 %v9982, %v1559
        %v9997 = vmul.f32 %v9987, %v1564
        %9998 = vxpose.xlu0.b32.start [1/16] %v9990, 128
        %9999 = vxpose.xlu0.b32.cont [2/16] %v9991, 128
        %10000 = vxpose.xlu0.b32.cont [3/16] %v9992, 128
        %10001 = vxpose.xlu0.b32.cont [4/16] %v9993, 128
        %10002 = vxpose.xlu0.b32.cont [5/16] %v9994, 128
        %10003 = vxpose.xlu0.b32.cont [6/16] %v9995, 128
        %10004 = vxpose.xlu0.b32.cont [7/16] %v9996, 128
        %10005 = vxpose.xlu0.b32.cont [8/16] %v9997, 128
        %10006 = vxpose.xlu0.b32.cont [9/16] 0.0, 128
        %10007 = vxpose.xlu0.b32.cont [10/16] 0.0, 128
        %10008 = vxpose.xlu0.b32.cont [11/16] 0.0, 128
        %10009 = vxpose.xlu0.b32.cont [12/16] 0.0, 128
        %10010 = vxpose.xlu0.b32.cont [13/16] 0.0, 128
        %10011 = vxpose.xlu0.b32.cont [14/16] 0.0, 128
        %10012 = vxpose.xlu0.b32.cont [15/16] 0.0, 128
        %10013 = vxpose.xlu0.b32.end [16/16] 0.0, 128
        %v10014 = vpop.trf.xlu0
        %v10015 = vpop.trf.xlu0
        %v10016 = vpop.trf.xlu0
        %v10017 = vpop.trf.xlu0
        %v10018 = vpop.trf.xlu0
        %v10019 = vpop.trf.xlu0
        %v10020 = vpop.trf.xlu0
        %v10021 = vpop.trf.xlu0
        %v10022 = vpop.trf.xlu0
        %v10023 = vpop.trf.xlu0
        %v10024 = vpop.trf.xlu0
        %v10025 = vpop.trf.xlu0
        %v10026 = vpop.trf.xlu0
        %v10027 = vpop.trf.xlu0
        %v10028 = vpop.trf.xlu0
        %v10029 = vpop.trf.xlu0
        %10030 = vst.msk [vmem:[%s789] sm:$0xff] %vm996, %v10014
        %10031 = vst.msk [vmem:[%s789 + $0x8] sm:$0xff] %vm996, %v10015
        %10032 = vst.msk [vmem:[%s789 + $0x10] sm:$0xff] %vm996, %v10016
        %10033 = vst.msk [vmem:[%s789 + $0x18] sm:$0xff] %vm996, %v10017
        %s10034 = sand.u32 %s562, 1
        %s10035 = scalar_lea.sflag [#allocation4], %s10034
        %s10036 = sand.u32 %s562, 1
        %s10037 = smul.addr %s10036, 32
        %s10038 = scalar_lea.vmem [#allocation8], %s10037
        // Predicated region
        $region129: #{tpu_custom_call.1} parent=115 // pred_check
          %p10039 = pneg %p572
        $region130: #{tpu_custom_call.1} parent=115 // pred_check_branch
          %10041 = sbr.rel (%p10039) target = $region132
        $region131: #{tpu_custom_call.1} parent=115 // pred_region
          %s10043 = ssub.s32 512, 512
          %10044 = vsyncadd %s10035, %s10043
          %s10045 = smul.addr %s40, 4
          %s10046 = smul.addr %s10045, 128
          %s10047 = scalar_lea.hbm %s24, %s10046
          %s10048 = sshll.u32 %s10038, 4
          %s10049 = int_to_ptr.vmem [resolvable:$true] %s10048
          %10054 = dma.vmem_to_hbm [thread:$0]  %s10049, 512, %s10047, %s10035, 128, 128, 8
        $region132: #{tpu_custom_call.1} parent=115 // pred_fallthru
          _
      $region116: #{tpu_custom_call.1} parent=5 // pred_fallthru
        _
      %p10055 = scmp.le.s32.totalorder 2, %s35
      // Predicated region
      $region133: #{tpu_custom_call.1} parent=5 // pred_check
        %p10056 = pneg %p10055
      $region134: #{tpu_custom_call.1} parent=5 // pred_check_branch
        %10058 = sbr.rel (%p10056) target = $region136
      $region135: #{tpu_custom_call.1} parent=5 // pred_region
        %s10059 = ssub.s32 %s35, 2
        // Predicated region
        $region137: #{tpu_custom_call.1} parent=135 // pred_check
          %p10060 = pneg %p578
        $region138: #{tpu_custom_call.1} parent=135 // pred_check_branch
          %10062 = sbr.rel (%p10060) target = $region140
        $region139: #{tpu_custom_call.1} parent=135 // pred_region
          %s10063 = sand.u32 %s563, 1
          %s10064 = scalar_lea.sflag [#allocation4], %s10063
          %s10065 = sand.u32 %s563, 1
          %s10066 = smul.addr %s10065, 32
          %s10067 = scalar_lea.vmem [#allocation8], %s10066
          %10068 = dma.done %s10064, 512
        $region140: #{tpu_custom_call.1} parent=135 // pred_fallthru
          _
      $region136: #{tpu_custom_call.1} parent=5 // pred_fallthru
        _
    $region6: #{tpu_custom_call.1} parent=1 // loop_footer
      %s39 = sadd.s32 1, %s35
    $region7: #{tpu_custom_call.1} parent=1 // loop_footer_branch
      %34 = sbr.rel target = $region3
    $region8: #{tpu_custom_call.1} parent=1 // loop_exit
      _
    %10069 = vsyncpa [#allocation3], 1
    %s10070 = scalar_lea.sflag [#allocation3], 1
    %10071 = vsyncpa %s10070, 1
    %10072 = vsyncpa [#allocation6], 1
    %10073 = vsyncpa [#allocation4], 1
    %s10074 = scalar_lea.sflag [#allocation4], 1
    %10075 = vsyncpa %s10074, 1

</llo_original>
